<compile_context>
chip_gen: v7x
topology: tpu7x:2x2x1
jax: 0.10.0
libtpu: 0.0.40
codegen_flags: <defaults>
</compile_context>

<pallas_src>
import functools

import jax
import jax.numpy as jnp
import numpy as np
from jax import lax
from jax.experimental import pallas as pl
from jax.experimental.pallas import tpu as pltpu


def _lstm_encoder_kernel(
    xg0_ref,     # (TC, B, 4*Hp)  precomputed layer-0 input projection (incl. bias)
    lens_ref,    # (B, 1) int32
    w_hh0_ref,   # (Hp, 4*Hp)
    w1_ref,      # (2*Hp, 4*Hp)   [W_ih1 ; W_hh1]
    b1_ref,      # (1, 4*Hp)
    whd_ref,     # (Hp, 2*Hp)     [W_dec | W_graph]
    bhd_ref,     # (1, 2*Hp)
    out_ref,     # (TC, B, Hp)    time-major output chunk
    ct_ref,      # (B, Hp)
    dec_ref,     # (B, Hp)
    gra_ref,     # (B, Hp)
    h0, c0, h1, c1, mx,   # VMEM scratch (B, Hp); persist across grid steps
    *, t_chunk,
):
    chunk = pl.program_id(0)
    n_chunks = pl.num_programs(0)
    hp = h0.shape[-1]

    @pl.when(chunk == 0)
    def _():
        h0[...] = jnp.zeros_like(h0)
        c0[...] = jnp.zeros_like(c0)
        h1[...] = jnp.zeros_like(h1)
        c1[...] = jnp.zeros_like(c1)
        # -inf init is safe: T >= 1 and padded steps contribute exactly 0.
        mx[...] = jnp.full_like(mx, -jnp.inf)

    lens = lens_ref[...]                 # (B, 1) int32
    t_base = chunk * t_chunk

    def step(i, carry):
        valid = (t_base + i) < lens      # (B, 1) bool — packed-sequence mask

        # ---- layer 0 (input projection hoisted; only recurrent matmul here) ----
        h0_prev = h0[...]
        c0_prev = c0[...]
        g0 = xg0_ref[i] + jnp.dot(h0_prev, w_hh0_ref[...],
                                  preferred_element_type=jnp.float32)
        i0 = jax.nn.sigmoid(g0[:, 0 * hp:1 * hp])
        f0 = jax.nn.sigmoid(g0[:, 1 * hp:2 * hp])
        gg0 = jnp.tanh(g0[:, 2 * hp:3 * hp])
        o0 = jax.nn.sigmoid(g0[:, 3 * hp:4 * hp])
        c0_new = f0 * c0_prev + i0 * gg0
        h0_new = o0 * jnp.tanh(c0_new)
        c0_new = jnp.where(valid, c0_new, c0_prev)
        h0_new = jnp.where(valid, h0_new, h0_prev)
        c0[...] = c0_new
        h0[...] = h0_new

        # ---- layer 1 (fused: [h0, h1] @ [W_ih1 ; W_hh1]) ----
        h1_prev = h1[...]
        c1_prev = c1[...]
        hcat = jnp.concatenate([h0_new, h1_prev], axis=1)       # (B, 2*Hp)
        g1 = jnp.dot(hcat, w1_ref[...],
                     preferred_element_type=jnp.float32) + b1_ref[...]
        i1 = jax.nn.sigmoid(g1[:, 0 * hp:1 * hp])
        f1 = jax.nn.sigmoid(g1[:, 1 * hp:2 * hp])
        gg1 = jnp.tanh(g1[:, 2 * hp:3 * hp])
        o1 = jax.nn.sigmoid(g1[:, 3 * hp:4 * hp])
        c1_new = f1 * c1_prev + i1 * gg1
        h1_out = o1 * jnp.tanh(c1_new)
        c1[...] = jnp.where(valid, c1_new, c1_prev)
        h1[...] = jnp.where(valid, h1_out, h1_prev)

        # pad_packed_sequence semantics: padded positions are exactly zero
        out_val = jnp.where(valid, h1_out, jnp.zeros_like(h1_out))
        out_ref[i] = out_val.astype(out_ref.dtype)               # lane-dense (B, Hp) store
        mx[...] = jnp.maximum(mx[...], out_val)
        return carry

    lax.fori_loop(0, t_chunk, step, 0, unroll=True)

    @pl.when(chunk == n_chunks - 1)
    def _():
        ct_ref[...] = c1[...].astype(ct_ref.dtype)               # c_n[-1], written once
        heads = jnp.tanh(
            jnp.dot(mx[...], whd_ref[...], preferred_element_type=jnp.float32)
            + bhd_ref[...]
        )
        dec_ref[...] = heads[:, :hp].astype(dec_ref.dtype)
        gra_ref[...] = heads[:, hp:].astype(gra_ref.dtype)


def _pad_gate_weight(w, d_in_p, hp):
    """PyTorch (4H, d_in) gate weight -> transposed, gate-padded (d_in_p, 4*hp)."""
    four_h, d_in = w.shape
    h = four_h // 4
    w4 = w.reshape(4, h, d_in)                                   # gates i, f, g, o
    out = jnp.zeros((4, hp, d_in_p), w.dtype).at[:, :h, :d_in].set(w4)
    return out.transpose(2, 0, 1).reshape(d_in_p, 4 * hp)


def _pad_gate_bias(b, hp):
    h = b.shape[0] // 4
    out = jnp.zeros((4, hp), b.dtype).at[:, :h].set(b.reshape(4, h))
    return out.reshape(1, 4 * hp)


@jax.jit
def lang_vision_encoder_forward(input_seq, lens, params):
    """Returns (output[B,T,H], initial_decoder[B,H], c_t[B,H], initial_graph[B,H])."""
    emb_table = params["emb"]                        # (V, E)
    B, T = input_seq.shape
    E = emb_table.shape[1]
    H = params["w_hh0"].shape[1]                     # w_hh0: (4H, H)  <-- bugfix
    Hp = ((H + 127) // 128) * 128                    # lane-aligned hidden size
    Gp = 4 * Hp

    # time-chunk size: whole sequence resident when small; otherwise a divisor of T
    t_chunk = T
    if T > 64:
        for cand in (64, 32, 16, 8, 4, 2, 1):
            if T % cand == 0:
                t_chunk = cand
                break
    n_chunks = T // t_chunk

    # ---- glue: embedding lookup (gather), time-major layout ----
    x_bte = jnp.take(emb_table, input_seq, axis=0)                    # (B, T, E)
    x_tbe = jnp.transpose(x_bte, (1, 0, 2)).astype(jnp.float32)       # (T, B, E)
    lens_v = lens.astype(jnp.int32).reshape(B, 1)

    # ---- glue: pad / transpose weights to lane-aligned layouts ----
    w_ih0_p = _pad_gate_weight(params["w_ih0"], E, Hp)                # (E, 4Hp)
    b0_p = _pad_gate_bias(params["b_ih0"] + params["b_hh0"], Hp)      # (1, 4Hp)
    w_hh0_p = _pad_gate_weight(params["w_hh0"], Hp, Hp)               # (Hp, 4Hp)
    w_ih1_p = _pad_gate_weight(params["w_ih1"], Hp, Hp)               # (Hp, 4Hp)
    w_hh1_p = _pad_gate_weight(params["w_hh1"], Hp, Hp)               # (Hp, 4Hp)
    w1_cat = jnp.concatenate([w_ih1_p, w_hh1_p], axis=0)              # (2Hp, 4Hp)
    b1_p = _pad_gate_bias(params["b_ih1"] + params["b_hh1"], Hp)      # (1, 4Hp)

    wd_p = jnp.zeros((Hp, Hp), jnp.float32).at[:H, :H].set(params["wd"].T)
    wg_p = jnp.zeros((Hp, Hp), jnp.float32).at[:H, :H].set(params["wg"].T)
    whd_cat = jnp.concatenate([wd_p, wg_p], axis=1)                   # (Hp, 2Hp)
    bd_p = jnp.zeros((1, Hp), jnp.float32).at[0, :H].set(params["bd"])
    bg_p = jnp.zeros((1, Hp), jnp.float32).at[0, :H].set(params["bg"])
    bhd_cat = jnp.concatenate([bd_p, bg_p], axis=1)                   # (1, 2Hp)

    # ---- hoisted layer-0 input projection: one big (T*B, E) @ (E, 4Hp) matmul ----
    xg0 = jnp.einsum("tbe,eg->tbg", x_tbe, w_ih0_p,
                     precision=lax.Precision.HIGHEST) + b0_p          # (T, B, 4Hp)

    full = lambda c: (0, 0)
    grid_spec = pltpu.PrefetchScalarGridSpec(
        num_scalar_prefetch=0,
        grid=(n_chunks,),
        in_specs=[
            pl.BlockSpec((t_chunk, B, Gp), lambda c: (c, 0, 0)),      # xg0 chunk
            pl.BlockSpec((B, 1), full),                               # lens
            pl.BlockSpec((Hp, Gp), full),                             # W_hh0
            pl.BlockSpec((2 * Hp, Gp), full),                         # [W_ih1; W_hh1]
            pl.BlockSpec((1, Gp), full),                              # b1
            pl.BlockSpec((Hp, 2 * Hp), full),                         # [W_dec | W_graph]
            pl.BlockSpec((1, 2 * Hp), full),                          # [b_dec | b_graph]
        ],
        out_specs=[
            pl.BlockSpec((t_chunk, B, Hp), lambda c: (c, 0, 0)),      # output (time-major)
            pl.BlockSpec((B, Hp), full),                              # c_t
            pl.BlockSpec((B, Hp), full),                              # initial_decoder
            pl.BlockSpec((B, Hp), full),                              # initial_graph
        ],
        scratch_shapes=[pltpu.VMEM((B, Hp), jnp.float32)] * 5,        # h0, c0, h1, c1, mx
    )

    out_tbh, c_t, dec, gra = pl.pallas_call(
        functools.partial(_lstm_encoder_kernel, t_chunk=t_chunk),
        out_shape=(
            jax.ShapeDtypeStruct((T, B, Hp), jnp.float32),
            jax.ShapeDtypeStruct((B, Hp), jnp.float32),
            jax.ShapeDtypeStruct((B, Hp), jnp.float32),
            jax.ShapeDtypeStruct((B, Hp), jnp.float32),
        ),
        grid_spec=grid_spec,
        compiler_params=pltpu.CompilerParams(
            dimension_semantics=("arbitrary",)),     # time recurrence is serial
    )(xg0, lens_v, w_hh0_p, w1_cat, b1_p, whd_cat, bhd_cat)

    output = jnp.transpose(out_tbh[:, :, :H], (1, 0, 2))              # (B, T, H)
    return output, dec[:, :H], c_t[:, :H], gra[:, :H]


# ---------------- pure-JAX reference (mirrors PyTorch eval semantics) ----------------
def _ref_forward(input_seq, lens, params):
    emb = params["emb"][input_seq]                   # (B, T, E)
    B, T, _ = emb.shape
    H = params["w_hh0"].shape[1]
    hi = lax.Precision.HIGHEST
    h0 = c0 = h1 = c1 = jnp.zeros((B, H), jnp.float32)
    b0 = params["b_ih0"] + params["b_hh0"]
    b1 = params["b_ih1"] + params["b_hh1"]
    outs = []
    for t in range(T):
        x = emb[:, t, :]
        valid = (t < lens)[:, None]
        g = (jnp.dot(x, params["w_ih0"].T, precision=hi)
             + jnp.dot(h0, params["w_hh0"].T, precision=hi) + b0)
        i0, f0, g0, o0 = jnp.split(g, 4, axis=1)
        c0n = jax.nn.sigmoid(f0) * c0 + jax.nn.sigmoid(i0) * jnp.tanh(g0)
        h0n = jax.nn.sigmoid(o0) * jnp.tanh(c0n)
        c0 = jnp.where(valid, c0n, c0); h0 = jnp.where(valid, h0n, h0)
        g = (jnp.dot(h0, params["w_ih1"].T, precision=hi)
             + jnp.dot(h1, params["w_hh1"].T, precision=hi) + b1)
        i1, f1, g1, o1 = jnp.split(g, 4, axis=1)
        c1n = jax.nn.sigmoid(f1) * c1 + jax.nn.sigmoid(i1) * jnp.tanh(g1)
        h1n = jax.nn.sigmoid(o1) * jnp.tanh(c1n)
        c1 = jnp.where(valid, c1n, c1); h1 = jnp.where(valid, h1n, h1)
        outs.append(jnp.where(valid, h1n, jnp.zeros_like(h1n)))
    output = jnp.stack(outs, axis=1)                 # (B, T, H)
    mx = output.max(axis=1)
    dec = jnp.tanh(jnp.dot(mx, params["wd"].T, precision=hi) + params["bd"])
    gra = jnp.tanh(jnp.dot(mx, params["wg"].T, precision=hi) + params["bg"])
    return output, dec, c1, gra


if __name__ == "__main__":
    # small, module-consistent sizes
    VOCAB, E, H, PAD = 20, 32, 32, 0
    B, T = 4, 8

    key = jax.random.PRNGKey(0)
    ks = jax.random.split(key, 16)
    s = 0.1
    emb = jax.random.normal(ks[0], (VOCAB, E), jnp.float32) * s
    emb = emb.at[PAD].set(0.0)                       # padding_idx row is zero
    params = {
        "emb": emb,
        "w_ih0": jax.random.normal(ks[1], (4 * H, E), jnp.float32) * s,
        "w_hh0": jax.random.normal(ks[2], (4 * H, H), jnp.float32) * s,
        "b_ih0": jax.random.normal(ks[3], (4 * H,), jnp.float32) * s,
        "b_hh0": jax.random.normal(ks[4], (4 * H,), jnp.float32) * s,
        "w_ih1": jax.random.normal(ks[5], (4 * H, H), jnp.float32) * s,
        "w_hh1": jax.random.normal(ks[6], (4 * H, H), jnp.float32) * s,
        "b_ih1": jax.random.normal(ks[7], (4 * H,), jnp.float32) * s,
        "b_hh1": jax.random.normal(ks[8], (4 * H,), jnp.float32) * s,
        "wd": jax.random.normal(ks[9], (H, H), jnp.float32) * s,
        "bd": jax.random.normal(ks[10], (H,), jnp.float32) * s,
        "wg": jax.random.normal(ks[11], (H, H), jnp.float32) * s,
        "bg": jax.random.normal(ks[12], (H,), jnp.float32) * s,
    }

    # lengths sorted descending (pack_padded_sequence default), tokens padded with PAD
    lens = jnp.array([8, 7, 5, 3], dtype=jnp.int32)
    tokens = jax.random.randint(ks[13], (B, T), 1, VOCAB, dtype=jnp.int32)
    t_idx = jnp.arange(T)[None, :]
    input_seq = jnp.where(t_idx < lens[:, None], tokens, PAD)

    out, dec, c_t, gra = lang_vision_encoder_forward(input_seq, lens, params)
    jax.block_until_ready((out, dec, c_t, gra))

    r_out, r_dec, r_ct, r_gra = _ref_forward(input_seq, lens, params)
    np.testing.assert_allclose(np.asarray(out), np.asarray(r_out), atol=1e-3, rtol=1e-3)
    np.testing.assert_allclose(np.asarray(dec), np.asarray(r_dec), atol=1e-3, rtol=1e-3)
    np.testing.assert_allclose(np.asarray(c_t), np.asarray(r_ct), atol=1e-3, rtol=1e-3)
    np.testing.assert_allclose(np.asarray(gra), np.asarray(r_gra), atol=1e-3, rtol=1e-3)

    print("KERNEL_OK")
</pallas_src>

<mosaic_0001>
module attributes {stable_mosaic.version = 11 : i64} {
  func.func @_lstm_encoder_kernel(%arg0: i32, %arg1: memref<8x4x512xf32, #tpu.memory_space<vmem>>, %arg2: memref<4x1xi32, #tpu.memory_space<vmem>>, %arg3: memref<128x512xf32, #tpu.memory_space<vmem>>, %arg4: memref<256x512xf32, #tpu.memory_space<vmem>>, %arg5: memref<1x512xf32, #tpu.memory_space<vmem>>, %arg6: memref<128x256xf32, #tpu.memory_space<vmem>>, %arg7: memref<1x256xf32, #tpu.memory_space<vmem>>, %arg8: memref<8x4x128xf32, #tpu.memory_space<vmem>>, %arg9: memref<4x128xf32, #tpu.memory_space<vmem>>, %arg10: memref<4x128xf32, #tpu.memory_space<vmem>>, %arg11: memref<4x128xf32, #tpu.memory_space<vmem>>, %arg12: memref<4x128xf32, #tpu.memory_space<vmem>>, %arg13: memref<4x128xf32, #tpu.memory_space<vmem>>, %arg14: memref<4x128xf32, #tpu.memory_space<vmem>>, %arg15: memref<4x128xf32, #tpu.memory_space<vmem>>, %arg16: memref<4x128xf32, #tpu.memory_space<vmem>>) attributes {dimension_semantics = [#tpu.dimension_semantics<arbitrary>], iteration_bounds = array<i64: 1>, scalar_prefetch = 0 : i64, scratch_operands = 5 : i64, tpu.core_type = #tpu.core_type<tc>, window_params = [{transform_indices = @transform_0, window_bounds = array<i64: 8, 4, 512>}, {pipeline_mode = #tpu.pipeline_mode<synchronous>, transform_indices = @transform_1, window_bounds = array<i64: 4, 1>}, {pipeline_mode = #tpu.pipeline_mode<synchronous>, transform_indices = @transform_2, window_bounds = array<i64: 128, 512>}, {pipeline_mode = #tpu.pipeline_mode<synchronous>, transform_indices = @transform_3, window_bounds = array<i64: 256, 512>}, {pipeline_mode = #tpu.pipeline_mode<synchronous>, transform_indices = @transform_4, window_bounds = array<i64: 1, 512>}, {pipeline_mode = #tpu.pipeline_mode<synchronous>, transform_indices = @transform_5, window_bounds = array<i64: 128, 256>}, {pipeline_mode = #tpu.pipeline_mode<synchronous>, transform_indices = @transform_6, window_bounds = array<i64: 1, 256>}, {transform_indices = @transform_7, window_bounds = array<i64: 8, 4, 128>}, {pipeline_mode = #tpu.pipeline_mode<synchronous>, transform_indices = @transform_8, window_bounds = array<i64: 4, 128>}, {pipeline_mode = #tpu.pipeline_mode<synchronous>, transform_indices = @transform_9, window_bounds = array<i64: 4, 128>}, {pipeline_mode = #tpu.pipeline_mode<synchronous>, transform_indices = @transform_10, window_bounds = array<i64: 4, 128>}]} {
    %c0_i32 = arith.constant 0 : i32
    %0 = arith.cmpi eq, %arg0, %c0_i32 : i32
    %1 = arith.extui %0 : i1 to i32
    %c0_i32_0 = arith.constant 0 : i32
    %2 = arith.cmpi ne, %1, %c0_i32_0 : i32
    scf.if %2 {
      %cst_317 = arith.constant 0.000000e+00 : f32
      %776 = vector.broadcast %cst_317 : f32 to vector<4x128xf32>
      %c0_318 = arith.constant 0 : index
      %c0_319 = arith.constant 0 : index
      %777 = vector.load %arg12[%c0_318, %c0_319] : memref<4x128xf32, #tpu.memory_space<vmem>>, vector<4x128xf32>
      tpu.vector_store %arg12[%c0_318, %c0_319], %776 {strides = array<i32>} : memref<4x128xf32, #tpu.memory_space<vmem>>, vector<4x128xf32>,
      %cst_320 = arith.constant 0.000000e+00 : f32
      %778 = vector.broadcast %cst_320 : f32 to vector<4x128xf32>
      %c0_321 = arith.constant 0 : index
      %c0_322 = arith.constant 0 : index
      %779 = vector.load %arg13[%c0_321, %c0_322] : memref<4x128xf32, #tpu.memory_space<vmem>>, vector<4x128xf32>
      tpu.vector_store %arg13[%c0_321, %c0_322], %778 {strides = array<i32>} : memref<4x128xf32, #tpu.memory_space<vmem>>, vector<4x128xf32>,
      %cst_323 = arith.constant 0.000000e+00 : f32
      %780 = vector.broadcast %cst_323 : f32 to vector<4x128xf32>
      %c0_324 = arith.constant 0 : index
      %c0_325 = arith.constant 0 : index
      %781 = vector.load %arg14[%c0_324, %c0_325] : memref<4x128xf32, #tpu.memory_space<vmem>>, vector<4x128xf32>
      tpu.vector_store %arg14[%c0_324, %c0_325], %780 {strides = array<i32>} : memref<4x128xf32, #tpu.memory_space<vmem>>, vector<4x128xf32>,
      %cst_326 = arith.constant 0.000000e+00 : f32
      %782 = vector.broadcast %cst_326 : f32 to vector<4x128xf32>
      %c0_327 = arith.constant 0 : index
      %c0_328 = arith.constant 0 : index
      %783 = vector.load %arg15[%c0_327, %c0_328] : memref<4x128xf32, #tpu.memory_space<vmem>>, vector<4x128xf32>
      tpu.vector_store %arg15[%c0_327, %c0_328], %782 {strides = array<i32>} : memref<4x128xf32, #tpu.memory_space<vmem>>, vector<4x128xf32>,
      %cst_329 = arith.constant 0xFF800000 : f32
      %784 = vector.broadcast %cst_329 : f32 to vector<4x128xf32>
      %c0_330 = arith.constant 0 : index
      %c0_331 = arith.constant 0 : index
      %785 = vector.load %arg16[%c0_330, %c0_331] : memref<4x128xf32, #tpu.memory_space<vmem>>, vector<4x128xf32>
      tpu.vector_store %arg16[%c0_330, %c0_331], %784 {strides = array<i32>} : memref<4x128xf32, #tpu.memory_space<vmem>>, vector<4x128xf32>,
    } else {
    }
    %c0 = arith.constant 0 : index
    %c0_1 = arith.constant 0 : index
    %3 = vector.load %arg2[%c0, %c0_1] : memref<4x1xi32, #tpu.memory_space<vmem>>, vector<4x1xi32>
    %c8_i32 = arith.constant 8 : i32
    %4 = arith.muli %arg0, %c8_i32 : i32
    %c0_i32_2 = arith.constant 0 : i32
    %5 = arith.addi %4, %c0_i32_2 : i32
    %6 = vector.broadcast %5 : i32 to vector<4x1xi32>
    %7 = arith.cmpi slt, %6, %3 : vector<4x1xi32>
    %c0_3 = arith.constant 0 : index
    %c0_4 = arith.constant 0 : index
    %8 = vector.load %arg12[%c0_3, %c0_4] : memref<4x128xf32, #tpu.memory_space<vmem>>, vector<4x128xf32>
    %c0_5 = arith.constant 0 : index
    %c0_6 = arith.constant 0 : index
    %9 = vector.load %arg13[%c0_5, %c0_6] : memref<4x128xf32, #tpu.memory_space<vmem>>, vector<4x128xf32>
    %10 = arith.index_cast %c0_i32_2 : i32 to index
    %c0_7 = arith.constant 0 : index
    %c0_8 = arith.constant 0 : index
    %11 = vector.load %arg1[%10, %c0_7, %c0_8] : memref<8x4x512xf32, #tpu.memory_space<vmem>>, vector<1x4x512xf32>
    %12 = vector.shape_cast %11 : vector<1x4x512xf32> to vector<4x512xf32>
    %c0_9 = arith.constant 0 : index
    %c0_10 = arith.constant 0 : index
    %13 = vector.load %arg3[%c0_9, %c0_10] : memref<128x512xf32, #tpu.memory_space<vmem>>, vector<128x512xf32>
    %cst = arith.constant dense<0.000000e+00> : vector<4x512xf32>
    %14 = tpu.matmul %8, %13, %cst {dimension_numbers = #tpu.dot_dimension_numbers<[1], [0], [0], [1], [0, 0, 1, 1], [], []>} : vector<4x128xf32>, vector<128x512xf32>, vector<4x512xf32> -> vector<4x512xf32>
    %15 = arith.addf %12, %14 : vector<4x512xf32>
    %16 = vector.extract_strided_slice %15 {offsets = [0, 0], sizes = [4, 128], strides = [1, 1]} : vector<4x512xf32> to vector<4x128xf32>
    %17 = arith.negf %16 : vector<4x128xf32>
    %18 = math.exp %17 : vector<4x128xf32>
    %cst_11 = arith.constant 1.000000e+00 : f32
    %19 = vector.broadcast %cst_11 : f32 to vector<4x128xf32>
    %20 = arith.addf %19, %18 : vector<4x128xf32>
    %21 = arith.divf %19, %20 : vector<4x128xf32>
    %22 = vector.extract_strided_slice %15 {offsets = [0, 128], sizes = [4, 128], strides = [1, 1]} : vector<4x512xf32> to vector<4x128xf32>
    %23 = arith.negf %22 : vector<4x128xf32>
    %24 = math.exp %23 : vector<4x128xf32>
    %cst_12 = arith.constant 1.000000e+00 : f32
    %25 = vector.broadcast %cst_12 : f32 to vector<4x128xf32>
    %26 = arith.addf %25, %24 : vector<4x128xf32>
    %27 = arith.divf %25, %26 : vector<4x128xf32>
    %28 = vector.extract_strided_slice %15 {offsets = [0, 256], sizes = [4, 128], strides = [1, 1]} : vector<4x512xf32> to vector<4x128xf32>
    %29 = math.tanh %28 : vector<4x128xf32>
    %30 = vector.extract_strided_slice %15 {offsets = [0, 384], sizes = [4, 128], strides = [1, 1]} : vector<4x512xf32> to vector<4x128xf32>
    %31 = arith.negf %30 : vector<4x128xf32>
    %32 = math.exp %31 : vector<4x128xf32>
    %cst_13 = arith.constant 1.000000e+00 : f32
    %33 = vector.broadcast %cst_13 : f32 to vector<4x128xf32>
    %34 = arith.addf %33, %32 : vector<4x128xf32>
    %35 = arith.divf %33, %34 : vector<4x128xf32>
    %36 = arith.mulf %27, %9 : vector<4x128xf32>
    %37 = arith.mulf %21, %29 : vector<4x128xf32>
    %38 = arith.addf %36, %37 : vector<4x128xf32>
    %39 = math.tanh %38 : vector<4x128xf32>
    %40 = arith.mulf %35, %39 : vector<4x128xf32>
    %41 = vector.shape_cast %7 : vector<4x1xi1> to vector<4x1xi1>
    %42 = vector.broadcast %41 : vector<4x1xi1> to vector<4x128xi1>
    %43 = arith.select %42, %38, %9 : vector<4x128xi1>, vector<4x128xf32>
    %44 = vector.shape_cast %7 : vector<4x1xi1> to vector<4x1xi1>
    %45 = vector.broadcast %44 : vector<4x1xi1> to vector<4x128xi1>
    %46 = arith.select %45, %40, %8 : vector<4x128xi1>, vector<4x128xf32>
    %c0_14 = arith.constant 0 : index
    %c0_15 = arith.constant 0 : index
    %47 = vector.load %arg13[%c0_14, %c0_15] : memref<4x128xf32, #tpu.memory_space<vmem>>, vector<4x128xf32>
    tpu.vector_store %arg13[%c0_14, %c0_15], %43 {strides = array<i32>} : memref<4x128xf32, #tpu.memory_space<vmem>>, vector<4x128xf32>,
    %c0_16 = arith.constant 0 : index
    %c0_17 = arith.constant 0 : index
    %48 = vector.load %arg12[%c0_16, %c0_17] : memref<4x128xf32, #tpu.memory_space<vmem>>, vector<4x128xf32>
    tpu.vector_store %arg12[%c0_16, %c0_17], %46 {strides = array<i32>} : memref<4x128xf32, #tpu.memory_space<vmem>>, vector<4x128xf32>,
    %c0_18 = arith.constant 0 : index
    %c0_19 = arith.constant 0 : index
    %49 = vector.load %arg14[%c0_18, %c0_19] : memref<4x128xf32, #tpu.memory_space<vmem>>, vector<4x128xf32>
    %c0_20 = arith.constant 0 : index
    %c0_21 = arith.constant 0 : index
    %50 = vector.load %arg15[%c0_20, %c0_21] : memref<4x128xf32, #tpu.memory_space<vmem>>, vector<4x128xf32>
    %51 = tpu.concatenate %46, %49 in 1 : vector<4x128xf32>, vector<4x128xf32> -> vector<4x256xf32>
    %c0_22 = arith.constant 0 : index
    %c0_23 = arith.constant 0 : index
    %52 = vector.load %arg4[%c0_22, %c0_23] : memref<256x512xf32, #tpu.memory_space<vmem>>, vector<256x512xf32>
    %cst_24 = arith.constant dense<0.000000e+00> : vector<4x512xf32>
    %53 = tpu.matmul %51, %52, %cst_24 {dimension_numbers = #tpu.dot_dimension_numbers<[1], [0], [0], [1], [0, 0, 1, 1], [], []>} : vector<4x256xf32>, vector<256x512xf32>, vector<4x512xf32> -> vector<4x512xf32>
    %c0_25 = arith.constant 0 : index
    %c0_26 = arith.constant 0 : index
    %54 = vector.load %arg5[%c0_25, %c0_26] : memref<1x512xf32, #tpu.memory_space<vmem>>, vector<1x512xf32>
    %55 = vector.broadcast %54 : vector<1x512xf32> to vector<4x512xf32>
    %56 = arith.addf %53, %55 : vector<4x512xf32>
    %57 = vector.extract_strided_slice %56 {offsets = [0, 0], sizes = [4, 128], strides = [1, 1]} : vector<4x512xf32> to vector<4x128xf32>
    %58 = arith.negf %57 : vector<4x128xf32>
    %59 = math.exp %58 : vector<4x128xf32>
    %cst_27 = arith.constant 1.000000e+00 : f32
    %60 = vector.broadcast %cst_27 : f32 to vector<4x128xf32>
    %61 = arith.addf %60, %59 : vector<4x128xf32>
    %62 = arith.divf %60, %61 : vector<4x128xf32>
    %63 = vector.extract_strided_slice %56 {offsets = [0, 128], sizes = [4, 128], strides = [1, 1]} : vector<4x512xf32> to vector<4x128xf32>
    %64 = arith.negf %63 : vector<4x128xf32>
    %65 = math.exp %64 : vector<4x128xf32>
    %cst_28 = arith.constant 1.000000e+00 : f32
    %66 = vector.broadcast %cst_28 : f32 to vector<4x128xf32>
    %67 = arith.addf %66, %65 : vector<4x128xf32>
    %68 = arith.divf %66, %67 : vector<4x128xf32>
    %69 = vector.extract_strided_slice %56 {offsets = [0, 256], sizes = [4, 128], strides = [1, 1]} : vector<4x512xf32> to vector<4x128xf32>
    %70 = math.tanh %69 : vector<4x128xf32>
    %71 = vector.extract_strided_slice %56 {offsets = [0, 384], sizes = [4, 128], strides = [1, 1]} : vector<4x512xf32> to vector<4x128xf32>
    %72 = arith.negf %71 : vector<4x128xf32>
    %73 = math.exp %72 : vector<4x128xf32>
    %cst_29 = arith.constant 1.000000e+00 : f32
    %74 = vector.broadcast %cst_29 : f32 to vector<4x128xf32>
    %75 = arith.addf %74, %73 : vector<4x128xf32>
    %76 = arith.divf %74, %75 : vector<4x128xf32>
    %77 = arith.mulf %68, %50 : vector<4x128xf32>
    %78 = arith.mulf %62, %70 : vector<4x128xf32>
    %79 = arith.addf %77, %78 : vector<4x128xf32>
    %80 = math.tanh %79 : vector<4x128xf32>
    %81 = arith.mulf %76, %80 : vector<4x128xf32>
    %82 = vector.shape_cast %7 : vector<4x1xi1> to vector<4x1xi1>
    %83 = vector.broadcast %82 : vector<4x1xi1> to vector<4x128xi1>
    %84 = arith.select %83, %79, %50 : vector<4x128xi1>, vector<4x128xf32>
    %c0_30 = arith.constant 0 : index
    %c0_31 = arith.constant 0 : index
    %85 = vector.load %arg15[%c0_30, %c0_31] : memref<4x128xf32, #tpu.memory_space<vmem>>, vector<4x128xf32>
    tpu.vector_store %arg15[%c0_30, %c0_31], %84 {strides = array<i32>} : memref<4x128xf32, #tpu.memory_space<vmem>>, vector<4x128xf32>,
    %86 = vector.shape_cast %7 : vector<4x1xi1> to vector<4x1xi1>
    %87 = vector.broadcast %86 : vector<4x1xi1> to vector<4x128xi1>
    %88 = arith.select %87, %81, %49 : vector<4x128xi1>, vector<4x128xf32>
    %c0_32 = arith.constant 0 : index
    %c0_33 = arith.constant 0 : index
    %89 = vector.load %arg14[%c0_32, %c0_33] : memref<4x128xf32, #tpu.memory_space<vmem>>, vector<4x128xf32>
    tpu.vector_store %arg14[%c0_32, %c0_33], %88 {strides = array<i32>} : memref<4x128xf32, #tpu.memory_space<vmem>>, vector<4x128xf32>,
    %cst_34 = arith.constant 0.000000e+00 : f32
    %90 = vector.broadcast %cst_34 : f32 to vector<4x128xf32>
    %91 = vector.shape_cast %7 : vector<4x1xi1> to vector<4x1xi1>
    %92 = vector.broadcast %91 : vector<4x1xi1> to vector<4x128xi1>
    %93 = arith.select %92, %81, %90 : vector<4x128xi1>, vector<4x128xf32>
    %94 = arith.index_cast %c0_i32_2 : i32 to index
    %c0_35 = arith.constant 0 : index
    %c0_36 = arith.constant 0 : index
    %95 = vector.load %arg8[%94, %c0_35, %c0_36] : memref<8x4x128xf32, #tpu.memory_space<vmem>>, vector<1x4x128xf32>
    %96 = vector.shape_cast %95 : vector<1x4x128xf32> to vector<4x128xf32>
    %97 = vector.shape_cast %93 : vector<4x128xf32> to vector<1x4x128xf32>
    tpu.vector_store %arg8[%94, %c0_35, %c0_36], %97 {strides = array<i32>} : memref<8x4x128xf32, #tpu.memory_space<vmem>>, vector<1x4x128xf32>,
    %c0_37 = arith.constant 0 : index
    %c0_38 = arith.constant 0 : index
    %98 = vector.load %arg16[%c0_37, %c0_38] : memref<4x128xf32, #tpu.memory_space<vmem>>, vector<4x128xf32>
    %99 = arith.maximumf %98, %93 : vector<4x128xf32>
    %c0_39 = arith.constant 0 : index
    %c0_40 = arith.constant 0 : index
    %100 = vector.load %arg16[%c0_39, %c0_40] : memref<4x128xf32, #tpu.memory_space<vmem>>, vector<4x128xf32>
    tpu.vector_store %arg16[%c0_39, %c0_40], %99 {strides = array<i32>} : memref<4x128xf32, #tpu.memory_space<vmem>>, vector<4x128xf32>,
    %c1_i32 = arith.constant 1 : i32
    %101 = arith.addi %4, %c1_i32 : i32
    %102 = vector.broadcast %101 : i32 to vector<4x1xi32>
    %103 = arith.cmpi slt, %102, %3 : vector<4x1xi32>
    %c0_41 = arith.constant 0 : index
    %c0_42 = arith.constant 0 : index
    %104 = vector.load %arg12[%c0_41, %c0_42] : memref<4x128xf32, #tpu.memory_space<vmem>>, vector<4x128xf32>
    %c0_43 = arith.constant 0 : index
    %c0_44 = arith.constant 0 : index
    %105 = vector.load %arg13[%c0_43, %c0_44] : memref<4x128xf32, #tpu.memory_space<vmem>>, vector<4x128xf32>
    %106 = arith.index_cast %c1_i32 : i32 to index
    %c0_45 = arith.constant 0 : index
    %c0_46 = arith.constant 0 : index
    %107 = vector.load %arg1[%106, %c0_45, %c0_46] : memref<8x4x512xf32, #tpu.memory_space<vmem>>, vector<1x4x512xf32>
    %108 = vector.shape_cast %107 : vector<1x4x512xf32> to vector<4x512xf32>
    %c0_47 = arith.constant 0 : index
    %c0_48 = arith.constant 0 : index
    %109 = vector.load %arg3[%c0_47, %c0_48] : memref<128x512xf32, #tpu.memory_space<vmem>>, vector<128x512xf32>
    %cst_49 = arith.constant dense<0.000000e+00> : vector<4x512xf32>
    %110 = tpu.matmul %104, %109, %cst_49 {dimension_numbers = #tpu.dot_dimension_numbers<[1], [0], [0], [1], [0, 0, 1, 1], [], []>} : vector<4x128xf32>, vector<128x512xf32>, vector<4x512xf32> -> vector<4x512xf32>
    %111 = arith.addf %108, %110 : vector<4x512xf32>
    %112 = vector.extract_strided_slice %111 {offsets = [0, 0], sizes = [4, 128], strides = [1, 1]} : vector<4x512xf32> to vector<4x128xf32>
    %113 = arith.negf %112 : vector<4x128xf32>
    %114 = math.exp %113 : vector<4x128xf32>
    %cst_50 = arith.constant 1.000000e+00 : f32
    %115 = vector.broadcast %cst_50 : f32 to vector<4x128xf32>
    %116 = arith.addf %115, %114 : vector<4x128xf32>
    %117 = arith.divf %115, %116 : vector<4x128xf32>
    %118 = vector.extract_strided_slice %111 {offsets = [0, 128], sizes = [4, 128], strides = [1, 1]} : vector<4x512xf32> to vector<4x128xf32>
    %119 = arith.negf %118 : vector<4x128xf32>
    %120 = math.exp %119 : vector<4x128xf32>
    %cst_51 = arith.constant 1.000000e+00 : f32
    %121 = vector.broadcast %cst_51 : f32 to vector<4x128xf32>
    %122 = arith.addf %121, %120 : vector<4x128xf32>
    %123 = arith.divf %121, %122 : vector<4x128xf32>
    %124 = vector.extract_strided_slice %111 {offsets = [0, 256], sizes = [4, 128], strides = [1, 1]} : vector<4x512xf32> to vector<4x128xf32>
    %125 = math.tanh %124 : vector<4x128xf32>
    %126 = vector.extract_strided_slice %111 {offsets = [0, 384], sizes = [4, 128], strides = [1, 1]} : vector<4x512xf32> to vector<4x128xf32>
    %127 = arith.negf %126 : vector<4x128xf32>
    %128 = math.exp %127 : vector<4x128xf32>
    %cst_52 = arith.constant 1.000000e+00 : f32
    %129 = vector.broadcast %cst_52 : f32 to vector<4x128xf32>
    %130 = arith.addf %129, %128 : vector<4x128xf32>
    %131 = arith.divf %129, %130 : vector<4x128xf32>
    %132 = arith.mulf %123, %105 : vector<4x128xf32>
    %133 = arith.mulf %117, %125 : vector<4x128xf32>
    %134 = arith.addf %132, %133 : vector<4x128xf32>
    %135 = math.tanh %134 : vector<4x128xf32>
    %136 = arith.mulf %131, %135 : vector<4x128xf32>
    %137 = vector.shape_cast %103 : vector<4x1xi1> to vector<4x1xi1>
    %138 = vector.broadcast %137 : vector<4x1xi1> to vector<4x128xi1>
    %139 = arith.select %138, %134, %105 : vector<4x128xi1>, vector<4x128xf32>
    %140 = vector.shape_cast %103 : vector<4x1xi1> to vector<4x1xi1>
    %141 = vector.broadcast %140 : vector<4x1xi1> to vector<4x128xi1>
    %142 = arith.select %141, %136, %104 : vector<4x128xi1>, vector<4x128xf32>
    %c0_53 = arith.constant 0 : index
    %c0_54 = arith.constant 0 : index
    %143 = vector.load %arg13[%c0_53, %c0_54] : memref<4x128xf32, #tpu.memory_space<vmem>>, vector<4x128xf32>
    tpu.vector_store %arg13[%c0_53, %c0_54], %139 {strides = array<i32>} : memref<4x128xf32, #tpu.memory_space<vmem>>, vector<4x128xf32>,
    %c0_55 = arith.constant 0 : index
    %c0_56 = arith.constant 0 : index
    %144 = vector.load %arg12[%c0_55, %c0_56] : memref<4x128xf32, #tpu.memory_space<vmem>>, vector<4x128xf32>
    tpu.vector_store %arg12[%c0_55, %c0_56], %142 {strides = array<i32>} : memref<4x128xf32, #tpu.memory_space<vmem>>, vector<4x128xf32>,
    %c0_57 = arith.constant 0 : index
    %c0_58 = arith.constant 0 : index
    %145 = vector.load %arg14[%c0_57, %c0_58] : memref<4x128xf32, #tpu.memory_space<vmem>>, vector<4x128xf32>
    %c0_59 = arith.constant 0 : index
    %c0_60 = arith.constant 0 : index
    %146 = vector.load %arg15[%c0_59, %c0_60] : memref<4x128xf32, #tpu.memory_space<vmem>>, vector<4x128xf32>
    %147 = tpu.concatenate %142, %145 in 1 : vector<4x128xf32>, vector<4x128xf32> -> vector<4x256xf32>
    %c0_61 = arith.constant 0 : index
    %c0_62 = arith.constant 0 : index
    %148 = vector.load %arg4[%c0_61, %c0_62] : memref<256x512xf32, #tpu.memory_space<vmem>>, vector<256x512xf32>
    %cst_63 = arith.constant dense<0.000000e+00> : vector<4x512xf32>
    %149 = tpu.matmul %147, %148, %cst_63 {dimension_numbers = #tpu.dot_dimension_numbers<[1], [0], [0], [1], [0, 0, 1, 1], [], []>} : vector<4x256xf32>, vector<256x512xf32>, vector<4x512xf32> -> vector<4x512xf32>
    %c0_64 = arith.constant 0 : index
    %c0_65 = arith.constant 0 : index
    %150 = vector.load %arg5[%c0_64, %c0_65] : memref<1x512xf32, #tpu.memory_space<vmem>>, vector<1x512xf32>
    %151 = vector.broadcast %150 : vector<1x512xf32> to vector<4x512xf32>
    %152 = arith.addf %149, %151 : vector<4x512xf32>
    %153 = vector.extract_strided_slice %152 {offsets = [0, 0], sizes = [4, 128], strides = [1, 1]} : vector<4x512xf32> to vector<4x128xf32>
    %154 = arith.negf %153 : vector<4x128xf32>
    %155 = math.exp %154 : vector<4x128xf32>
    %cst_66 = arith.constant 1.000000e+00 : f32
    %156 = vector.broadcast %cst_66 : f32 to vector<4x128xf32>
    %157 = arith.addf %156, %155 : vector<4x128xf32>
    %158 = arith.divf %156, %157 : vector<4x128xf32>
    %159 = vector.extract_strided_slice %152 {offsets = [0, 128], sizes = [4, 128], strides = [1, 1]} : vector<4x512xf32> to vector<4x128xf32>
    %160 = arith.negf %159 : vector<4x128xf32>
    %161 = math.exp %160 : vector<4x128xf32>
    %cst_67 = arith.constant 1.000000e+00 : f32
    %162 = vector.broadcast %cst_67 : f32 to vector<4x128xf32>
    %163 = arith.addf %162, %161 : vector<4x128xf32>
    %164 = arith.divf %162, %163 : vector<4x128xf32>
    %165 = vector.extract_strided_slice %152 {offsets = [0, 256], sizes = [4, 128], strides = [1, 1]} : vector<4x512xf32> to vector<4x128xf32>
    %166 = math.tanh %165 : vector<4x128xf32>
    %167 = vector.extract_strided_slice %152 {offsets = [0, 384], sizes = [4, 128], strides = [1, 1]} : vector<4x512xf32> to vector<4x128xf32>
    %168 = arith.negf %167 : vector<4x128xf32>
    %169 = math.exp %168 : vector<4x128xf32>
    %cst_68 = arith.constant 1.000000e+00 : f32
    %170 = vector.broadcast %cst_68 : f32 to vector<4x128xf32>
    %171 = arith.addf %170, %169 : vector<4x128xf32>
    %172 = arith.divf %170, %171 : vector<4x128xf32>
    %173 = arith.mulf %164, %146 : vector<4x128xf32>
    %174 = arith.mulf %158, %166 : vector<4x128xf32>
    %175 = arith.addf %173, %174 : vector<4x128xf32>
    %176 = math.tanh %175 : vector<4x128xf32>
    %177 = arith.mulf %172, %176 : vector<4x128xf32>
    %178 = vector.shape_cast %103 : vector<4x1xi1> to vector<4x1xi1>
    %179 = vector.broadcast %178 : vector<4x1xi1> to vector<4x128xi1>
    %180 = arith.select %179, %175, %146 : vector<4x128xi1>, vector<4x128xf32>
    %c0_69 = arith.constant 0 : index
    %c0_70 = arith.constant 0 : index
    %181 = vector.load %arg15[%c0_69, %c0_70] : memref<4x128xf32, #tpu.memory_space<vmem>>, vector<4x128xf32>
    tpu.vector_store %arg15[%c0_69, %c0_70], %180 {strides = array<i32>} : memref<4x128xf32, #tpu.memory_space<vmem>>, vector<4x128xf32>,
    %182 = vector.shape_cast %103 : vector<4x1xi1> to vector<4x1xi1>
    %183 = vector.broadcast %182 : vector<4x1xi1> to vector<4x128xi1>
    %184 = arith.select %183, %177, %145 : vector<4x128xi1>, vector<4x128xf32>
    %c0_71 = arith.constant 0 : index
    %c0_72 = arith.constant 0 : index
    %185 = vector.load %arg14[%c0_71, %c0_72] : memref<4x128xf32, #tpu.memory_space<vmem>>, vector<4x128xf32>
    tpu.vector_store %arg14[%c0_71, %c0_72], %184 {strides = array<i32>} : memref<4x128xf32, #tpu.memory_space<vmem>>, vector<4x128xf32>,
    %cst_73 = arith.constant 0.000000e+00 : f32
    %186 = vector.broadcast %cst_73 : f32 to vector<4x128xf32>
    %187 = vector.shape_cast %103 : vector<4x1xi1> to vector<4x1xi1>
    %188 = vector.broadcast %187 : vector<4x1xi1> to vector<4x128xi1>
    %189 = arith.select %188, %177, %186 : vector<4x128xi1>, vector<4x128xf32>
    %190 = arith.index_cast %c1_i32 : i32 to index
    %c0_74 = arith.constant 0 : index
    %c0_75 = arith.constant 0 : index
    %191 = vector.load %arg8[%190, %c0_74, %c0_75] : memref<8x4x128xf32, #tpu.memory_space<vmem>>, vector<1x4x128xf32>
    %192 = vector.shape_cast %191 : vector<1x4x128xf32> to vector<4x128xf32>
    %193 = vector.shape_cast %189 : vector<4x128xf32> to vector<1x4x128xf32>
    tpu.vector_store %arg8[%190, %c0_74, %c0_75], %193 {strides = array<i32>} : memref<8x4x128xf32, #tpu.memory_space<vmem>>, vector<1x4x128xf32>,
    %c0_76 = arith.constant 0 : index
    %c0_77 = arith.constant 0 : index
    %194 = vector.load %arg16[%c0_76, %c0_77] : memref<4x128xf32, #tpu.memory_space<vmem>>, vector<4x128xf32>
    %195 = arith.maximumf %194, %189 : vector<4x128xf32>
    %c0_78 = arith.constant 0 : index
    %c0_79 = arith.constant 0 : index
    %196 = vector.load %arg16[%c0_78, %c0_79] : memref<4x128xf32, #tpu.memory_space<vmem>>, vector<4x128xf32>
    tpu.vector_store %arg16[%c0_78, %c0_79], %195 {strides = array<i32>} : memref<4x128xf32, #tpu.memory_space<vmem>>, vector<4x128xf32>,
    %c2_i32 = arith.constant 2 : i32
    %197 = arith.addi %4, %c2_i32 : i32
    %198 = vector.broadcast %197 : i32 to vector<4x1xi32>
    %199 = arith.cmpi slt, %198, %3 : vector<4x1xi32>
    %c0_80 = arith.constant 0 : index
    %c0_81 = arith.constant 0 : index
    %200 = vector.load %arg12[%c0_80, %c0_81] : memref<4x128xf32, #tpu.memory_space<vmem>>, vector<4x128xf32>
    %c0_82 = arith.constant 0 : index
    %c0_83 = arith.constant 0 : index
    %201 = vector.load %arg13[%c0_82, %c0_83] : memref<4x128xf32, #tpu.memory_space<vmem>>, vector<4x128xf32>
    %202 = arith.index_cast %c2_i32 : i32 to index
    %c0_84 = arith.constant 0 : index
    %c0_85 = arith.constant 0 : index
    %203 = vector.load %arg1[%202, %c0_84, %c0_85] : memref<8x4x512xf32, #tpu.memory_space<vmem>>, vector<1x4x512xf32>
    %204 = vector.shape_cast %203 : vector<1x4x512xf32> to vector<4x512xf32>
    %c0_86 = arith.constant 0 : index
    %c0_87 = arith.constant 0 : index
    %205 = vector.load %arg3[%c0_86, %c0_87] : memref<128x512xf32, #tpu.memory_space<vmem>>, vector<128x512xf32>
    %cst_88 = arith.constant dense<0.000000e+00> : vector<4x512xf32>
    %206 = tpu.matmul %200, %205, %cst_88 {dimension_numbers = #tpu.dot_dimension_numbers<[1], [0], [0], [1], [0, 0, 1, 1], [], []>} : vector<4x128xf32>, vector<128x512xf32>, vector<4x512xf32> -> vector<4x512xf32>
    %207 = arith.addf %204, %206 : vector<4x512xf32>
    %208 = vector.extract_strided_slice %207 {offsets = [0, 0], sizes = [4, 128], strides = [1, 1]} : vector<4x512xf32> to vector<4x128xf32>
    %209 = arith.negf %208 : vector<4x128xf32>
    %210 = math.exp %209 : vector<4x128xf32>
    %cst_89 = arith.constant 1.000000e+00 : f32
    %211 = vector.broadcast %cst_89 : f32 to vector<4x128xf32>
    %212 = arith.addf %211, %210 : vector<4x128xf32>
    %213 = arith.divf %211, %212 : vector<4x128xf32>
    %214 = vector.extract_strided_slice %207 {offsets = [0, 128], sizes = [4, 128], strides = [1, 1]} : vector<4x512xf32> to vector<4x128xf32>
    %215 = arith.negf %214 : vector<4x128xf32>
    %216 = math.exp %215 : vector<4x128xf32>
    %cst_90 = arith.constant 1.000000e+00 : f32
    %217 = vector.broadcast %cst_90 : f32 to vector<4x128xf32>
    %218 = arith.addf %217, %216 : vector<4x128xf32>
    %219 = arith.divf %217, %218 : vector<4x128xf32>
    %220 = vector.extract_strided_slice %207 {offsets = [0, 256], sizes = [4, 128], strides = [1, 1]} : vector<4x512xf32> to vector<4x128xf32>
    %221 = math.tanh %220 : vector<4x128xf32>
    %222 = vector.extract_strided_slice %207 {offsets = [0, 384], sizes = [4, 128], strides = [1, 1]} : vector<4x512xf32> to vector<4x128xf32>
    %223 = arith.negf %222 : vector<4x128xf32>
    %224 = math.exp %223 : vector<4x128xf32>
    %cst_91 = arith.constant 1.000000e+00 : f32
    %225 = vector.broadcast %cst_91 : f32 to vector<4x128xf32>
    %226 = arith.addf %225, %224 : vector<4x128xf32>
    %227 = arith.divf %225, %226 : vector<4x128xf32>
    %228 = arith.mulf %219, %201 : vector<4x128xf32>
    %229 = arith.mulf %213, %221 : vector<4x128xf32>
    %230 = arith.addf %228, %229 : vector<4x128xf32>
    %231 = math.tanh %230 : vector<4x128xf32>
    %232 = arith.mulf %227, %231 : vector<4x128xf32>
    %233 = vector.shape_cast %199 : vector<4x1xi1> to vector<4x1xi1>
    %234 = vector.broadcast %233 : vector<4x1xi1> to vector<4x128xi1>
    %235 = arith.select %234, %230, %201 : vector<4x128xi1>, vector<4x128xf32>
    %236 = vector.shape_cast %199 : vector<4x1xi1> to vector<4x1xi1>
    %237 = vector.broadcast %236 : vector<4x1xi1> to vector<4x128xi1>
    %238 = arith.select %237, %232, %200 : vector<4x128xi1>, vector<4x128xf32>
    %c0_92 = arith.constant 0 : index
    %c0_93 = arith.constant 0 : index
    %239 = vector.load %arg13[%c0_92, %c0_93] : memref<4x128xf32, #tpu.memory_space<vmem>>, vector<4x128xf32>
    tpu.vector_store %arg13[%c0_92, %c0_93], %235 {strides = array<i32>} : memref<4x128xf32, #tpu.memory_space<vmem>>, vector<4x128xf32>,
    %c0_94 = arith.constant 0 : index
    %c0_95 = arith.constant 0 : index
    %240 = vector.load %arg12[%c0_94, %c0_95] : memref<4x128xf32, #tpu.memory_space<vmem>>, vector<4x128xf32>
    tpu.vector_store %arg12[%c0_94, %c0_95], %238 {strides = array<i32>} : memref<4x128xf32, #tpu.memory_space<vmem>>, vector<4x128xf32>,
    %c0_96 = arith.constant 0 : index
    %c0_97 = arith.constant 0 : index
    %241 = vector.load %arg14[%c0_96, %c0_97] : memref<4x128xf32, #tpu.memory_space<vmem>>, vector<4x128xf32>
    %c0_98 = arith.constant 0 : index
    %c0_99 = arith.constant 0 : index
    %242 = vector.load %arg15[%c0_98, %c0_99] : memref<4x128xf32, #tpu.memory_space<vmem>>, vector<4x128xf32>
    %243 = tpu.concatenate %238, %241 in 1 : vector<4x128xf32>, vector<4x128xf32> -> vector<4x256xf32>
    %c0_100 = arith.constant 0 : index
    %c0_101 = arith.constant 0 : index
    %244 = vector.load %arg4[%c0_100, %c0_101] : memref<256x512xf32, #tpu.memory_space<vmem>>, vector<256x512xf32>
    %cst_102 = arith.constant dense<0.000000e+00> : vector<4x512xf32>
    %245 = tpu.matmul %243, %244, %cst_102 {dimension_numbers = #tpu.dot_dimension_numbers<[1], [0], [0], [1], [0, 0, 1, 1], [], []>} : vector<4x256xf32>, vector<256x512xf32>, vector<4x512xf32> -> vector<4x512xf32>
    %c0_103 = arith.constant 0 : index
    %c0_104 = arith.constant 0 : index
    %246 = vector.load %arg5[%c0_103, %c0_104] : memref<1x512xf32, #tpu.memory_space<vmem>>, vector<1x512xf32>
    %247 = vector.broadcast %246 : vector<1x512xf32> to vector<4x512xf32>
    %248 = arith.addf %245, %247 : vector<4x512xf32>
    %249 = vector.extract_strided_slice %248 {offsets = [0, 0], sizes = [4, 128], strides = [1, 1]} : vector<4x512xf32> to vector<4x128xf32>
    %250 = arith.negf %249 : vector<4x128xf32>
    %251 = math.exp %250 : vector<4x128xf32>
    %cst_105 = arith.constant 1.000000e+00 : f32
    %252 = vector.broadcast %cst_105 : f32 to vector<4x128xf32>
    %253 = arith.addf %252, %251 : vector<4x128xf32>
    %254 = arith.divf %252, %253 : vector<4x128xf32>
    %255 = vector.extract_strided_slice %248 {offsets = [0, 128], sizes = [4, 128], strides = [1, 1]} : vector<4x512xf32> to vector<4x128xf32>
    %256 = arith.negf %255 : vector<4x128xf32>
    %257 = math.exp %256 : vector<4x128xf32>
    %cst_106 = arith.constant 1.000000e+00 : f32
    %258 = vector.broadcast %cst_106 : f32 to vector<4x128xf32>
    %259 = arith.addf %258, %257 : vector<4x128xf32>
    %260 = arith.divf %258, %259 : vector<4x128xf32>
    %261 = vector.extract_strided_slice %248 {offsets = [0, 256], sizes = [4, 128], strides = [1, 1]} : vector<4x512xf32> to vector<4x128xf32>
    %262 = math.tanh %261 : vector<4x128xf32>
    %263 = vector.extract_strided_slice %248 {offsets = [0, 384], sizes = [4, 128], strides = [1, 1]} : vector<4x512xf32> to vector<4x128xf32>
    %264 = arith.negf %263 : vector<4x128xf32>
    %265 = math.exp %264 : vector<4x128xf32>
    %cst_107 = arith.constant 1.000000e+00 : f32
    %266 = vector.broadcast %cst_107 : f32 to vector<4x128xf32>
    %267 = arith.addf %266, %265 : vector<4x128xf32>
    %268 = arith.divf %266, %267 : vector<4x128xf32>
    %269 = arith.mulf %260, %242 : vector<4x128xf32>
    %270 = arith.mulf %254, %262 : vector<4x128xf32>
    %271 = arith.addf %269, %270 : vector<4x128xf32>
    %272 = math.tanh %271 : vector<4x128xf32>
    %273 = arith.mulf %268, %272 : vector<4x128xf32>
    %274 = vector.shape_cast %199 : vector<4x1xi1> to vector<4x1xi1>
    %275 = vector.broadcast %274 : vector<4x1xi1> to vector<4x128xi1>
    %276 = arith.select %275, %271, %242 : vector<4x128xi1>, vector<4x128xf32>
    %c0_108 = arith.constant 0 : index
    %c0_109 = arith.constant 0 : index
    %277 = vector.load %arg15[%c0_108, %c0_109] : memref<4x128xf32, #tpu.memory_space<vmem>>, vector<4x128xf32>
    tpu.vector_store %arg15[%c0_108, %c0_109], %276 {strides = array<i32>} : memref<4x128xf32, #tpu.memory_space<vmem>>, vector<4x128xf32>,
    %278 = vector.shape_cast %199 : vector<4x1xi1> to vector<4x1xi1>
    %279 = vector.broadcast %278 : vector<4x1xi1> to vector<4x128xi1>
    %280 = arith.select %279, %273, %241 : vector<4x128xi1>, vector<4x128xf32>
    %c0_110 = arith.constant 0 : index
    %c0_111 = arith.constant 0 : index
    %281 = vector.load %arg14[%c0_110, %c0_111] : memref<4x128xf32, #tpu.memory_space<vmem>>, vector<4x128xf32>
    tpu.vector_store %arg14[%c0_110, %c0_111], %280 {strides = array<i32>} : memref<4x128xf32, #tpu.memory_space<vmem>>, vector<4x128xf32>,
    %cst_112 = arith.constant 0.000000e+00 : f32
    %282 = vector.broadcast %cst_112 : f32 to vector<4x128xf32>
    %283 = vector.shape_cast %199 : vector<4x1xi1> to vector<4x1xi1>
    %284 = vector.broadcast %283 : vector<4x1xi1> to vector<4x128xi1>
    %285 = arith.select %284, %273, %282 : vector<4x128xi1>, vector<4x128xf32>
    %286 = arith.index_cast %c2_i32 : i32 to index
    %c0_113 = arith.constant 0 : index
    %c0_114 = arith.constant 0 : index
    %287 = vector.load %arg8[%286, %c0_113, %c0_114] : memref<8x4x128xf32, #tpu.memory_space<vmem>>, vector<1x4x128xf32>
    %288 = vector.shape_cast %287 : vector<1x4x128xf32> to vector<4x128xf32>
    %289 = vector.shape_cast %285 : vector<4x128xf32> to vector<1x4x128xf32>
    tpu.vector_store %arg8[%286, %c0_113, %c0_114], %289 {strides = array<i32>} : memref<8x4x128xf32, #tpu.memory_space<vmem>>, vector<1x4x128xf32>,
    %c0_115 = arith.constant 0 : index
    %c0_116 = arith.constant 0 : index
    %290 = vector.load %arg16[%c0_115, %c0_116] : memref<4x128xf32, #tpu.memory_space<vmem>>, vector<4x128xf32>
    %291 = arith.maximumf %290, %285 : vector<4x128xf32>
    %c0_117 = arith.constant 0 : index
    %c0_118 = arith.constant 0 : index
    %292 = vector.load %arg16[%c0_117, %c0_118] : memref<4x128xf32, #tpu.memory_space<vmem>>, vector<4x128xf32>
    tpu.vector_store %arg16[%c0_117, %c0_118], %291 {strides = array<i32>} : memref<4x128xf32, #tpu.memory_space<vmem>>, vector<4x128xf32>,
    %c3_i32 = arith.constant 3 : i32
    %293 = arith.addi %4, %c3_i32 : i32
    %294 = vector.broadcast %293 : i32 to vector<4x1xi32>
    %295 = arith.cmpi slt, %294, %3 : vector<4x1xi32>
    %c0_119 = arith.constant 0 : index
    %c0_120 = arith.constant 0 : index
    %296 = vector.load %arg12[%c0_119, %c0_120] : memref<4x128xf32, #tpu.memory_space<vmem>>, vector<4x128xf32>
    %c0_121 = arith.constant 0 : index
    %c0_122 = arith.constant 0 : index
    %297 = vector.load %arg13[%c0_121, %c0_122] : memref<4x128xf32, #tpu.memory_space<vmem>>, vector<4x128xf32>
    %298 = arith.index_cast %c3_i32 : i32 to index
    %c0_123 = arith.constant 0 : index
    %c0_124 = arith.constant 0 : index
    %299 = vector.load %arg1[%298, %c0_123, %c0_124] : memref<8x4x512xf32, #tpu.memory_space<vmem>>, vector<1x4x512xf32>
    %300 = vector.shape_cast %299 : vector<1x4x512xf32> to vector<4x512xf32>
    %c0_125 = arith.constant 0 : index
    %c0_126 = arith.constant 0 : index
    %301 = vector.load %arg3[%c0_125, %c0_126] : memref<128x512xf32, #tpu.memory_space<vmem>>, vector<128x512xf32>
    %cst_127 = arith.constant dense<0.000000e+00> : vector<4x512xf32>
    %302 = tpu.matmul %296, %301, %cst_127 {dimension_numbers = #tpu.dot_dimension_numbers<[1], [0], [0], [1], [0, 0, 1, 1], [], []>} : vector<4x128xf32>, vector<128x512xf32>, vector<4x512xf32> -> vector<4x512xf32>
    %303 = arith.addf %300, %302 : vector<4x512xf32>
    %304 = vector.extract_strided_slice %303 {offsets = [0, 0], sizes = [4, 128], strides = [1, 1]} : vector<4x512xf32> to vector<4x128xf32>
    %305 = arith.negf %304 : vector<4x128xf32>
    %306 = math.exp %305 : vector<4x128xf32>
    %cst_128 = arith.constant 1.000000e+00 : f32
    %307 = vector.broadcast %cst_128 : f32 to vector<4x128xf32>
    %308 = arith.addf %307, %306 : vector<4x128xf32>
    %309 = arith.divf %307, %308 : vector<4x128xf32>
    %310 = vector.extract_strided_slice %303 {offsets = [0, 128], sizes = [4, 128], strides = [1, 1]} : vector<4x512xf32> to vector<4x128xf32>
    %311 = arith.negf %310 : vector<4x128xf32>
    %312 = math.exp %311 : vector<4x128xf32>
    %cst_129 = arith.constant 1.000000e+00 : f32
    %313 = vector.broadcast %cst_129 : f32 to vector<4x128xf32>
    %314 = arith.addf %313, %312 : vector<4x128xf32>
    %315 = arith.divf %313, %314 : vector<4x128xf32>
    %316 = vector.extract_strided_slice %303 {offsets = [0, 256], sizes = [4, 128], strides = [1, 1]} : vector<4x512xf32> to vector<4x128xf32>
    %317 = math.tanh %316 : vector<4x128xf32>
    %318 = vector.extract_strided_slice %303 {offsets = [0, 384], sizes = [4, 128], strides = [1, 1]} : vector<4x512xf32> to vector<4x128xf32>
    %319 = arith.negf %318 : vector<4x128xf32>
    %320 = math.exp %319 : vector<4x128xf32>
    %cst_130 = arith.constant 1.000000e+00 : f32
    %321 = vector.broadcast %cst_130 : f32 to vector<4x128xf32>
    %322 = arith.addf %321, %320 : vector<4x128xf32>
    %323 = arith.divf %321, %322 : vector<4x128xf32>
    %324 = arith.mulf %315, %297 : vector<4x128xf32>
    %325 = arith.mulf %309, %317 : vector<4x128xf32>
    %326 = arith.addf %324, %325 : vector<4x128xf32>
    %327 = math.tanh %326 : vector<4x128xf32>
    %328 = arith.mulf %323, %327 : vector<4x128xf32>
    %329 = vector.shape_cast %295 : vector<4x1xi1> to vector<4x1xi1>
    %330 = vector.broadcast %329 : vector<4x1xi1> to vector<4x128xi1>
    %331 = arith.select %330, %326, %297 : vector<4x128xi1>, vector<4x128xf32>
    %332 = vector.shape_cast %295 : vector<4x1xi1> to vector<4x1xi1>
    %333 = vector.broadcast %332 : vector<4x1xi1> to vector<4x128xi1>
    %334 = arith.select %333, %328, %296 : vector<4x128xi1>, vector<4x128xf32>
    %c0_131 = arith.constant 0 : index
    %c0_132 = arith.constant 0 : index
    %335 = vector.load %arg13[%c0_131, %c0_132] : memref<4x128xf32, #tpu.memory_space<vmem>>, vector<4x128xf32>
    tpu.vector_store %arg13[%c0_131, %c0_132], %331 {strides = array<i32>} : memref<4x128xf32, #tpu.memory_space<vmem>>, vector<4x128xf32>,
    %c0_133 = arith.constant 0 : index
    %c0_134 = arith.constant 0 : index
    %336 = vector.load %arg12[%c0_133, %c0_134] : memref<4x128xf32, #tpu.memory_space<vmem>>, vector<4x128xf32>
    tpu.vector_store %arg12[%c0_133, %c0_134], %334 {strides = array<i32>} : memref<4x128xf32, #tpu.memory_space<vmem>>, vector<4x128xf32>,
    %c0_135 = arith.constant 0 : index
    %c0_136 = arith.constant 0 : index
    %337 = vector.load %arg14[%c0_135, %c0_136] : memref<4x128xf32, #tpu.memory_space<vmem>>, vector<4x128xf32>
    %c0_137 = arith.constant 0 : index
    %c0_138 = arith.constant 0 : index
    %338 = vector.load %arg15[%c0_137, %c0_138] : memref<4x128xf32, #tpu.memory_space<vmem>>, vector<4x128xf32>
    %339 = tpu.concatenate %334, %337 in 1 : vector<4x128xf32>, vector<4x128xf32> -> vector<4x256xf32>
    %c0_139 = arith.constant 0 : index
    %c0_140 = arith.constant 0 : index
    %340 = vector.load %arg4[%c0_139, %c0_140] : memref<256x512xf32, #tpu.memory_space<vmem>>, vector<256x512xf32>
    %cst_141 = arith.constant dense<0.000000e+00> : vector<4x512xf32>
    %341 = tpu.matmul %339, %340, %cst_141 {dimension_numbers = #tpu.dot_dimension_numbers<[1], [0], [0], [1], [0, 0, 1, 1], [], []>} : vector<4x256xf32>, vector<256x512xf32>, vector<4x512xf32> -> vector<4x512xf32>
    %c0_142 = arith.constant 0 : index
    %c0_143 = arith.constant 0 : index
    %342 = vector.load %arg5[%c0_142, %c0_143] : memref<1x512xf32, #tpu.memory_space<vmem>>, vector<1x512xf32>
    %343 = vector.broadcast %342 : vector<1x512xf32> to vector<4x512xf32>
    %344 = arith.addf %341, %343 : vector<4x512xf32>
    %345 = vector.extract_strided_slice %344 {offsets = [0, 0], sizes = [4, 128], strides = [1, 1]} : vector<4x512xf32> to vector<4x128xf32>
    %346 = arith.negf %345 : vector<4x128xf32>
    %347 = math.exp %346 : vector<4x128xf32>
    %cst_144 = arith.constant 1.000000e+00 : f32
    %348 = vector.broadcast %cst_144 : f32 to vector<4x128xf32>
    %349 = arith.addf %348, %347 : vector<4x128xf32>
    %350 = arith.divf %348, %349 : vector<4x128xf32>
    %351 = vector.extract_strided_slice %344 {offsets = [0, 128], sizes = [4, 128], strides = [1, 1]} : vector<4x512xf32> to vector<4x128xf32>
    %352 = arith.negf %351 : vector<4x128xf32>
    %353 = math.exp %352 : vector<4x128xf32>
    %cst_145 = arith.constant 1.000000e+00 : f32
    %354 = vector.broadcast %cst_145 : f32 to vector<4x128xf32>
    %355 = arith.addf %354, %353 : vector<4x128xf32>
    %356 = arith.divf %354, %355 : vector<4x128xf32>
    %357 = vector.extract_strided_slice %344 {offsets = [0, 256], sizes = [4, 128], strides = [1, 1]} : vector<4x512xf32> to vector<4x128xf32>
    %358 = math.tanh %357 : vector<4x128xf32>
    %359 = vector.extract_strided_slice %344 {offsets = [0, 384], sizes = [4, 128], strides = [1, 1]} : vector<4x512xf32> to vector<4x128xf32>
    %360 = arith.negf %359 : vector<4x128xf32>
    %361 = math.exp %360 : vector<4x128xf32>
    %cst_146 = arith.constant 1.000000e+00 : f32
    %362 = vector.broadcast %cst_146 : f32 to vector<4x128xf32>
    %363 = arith.addf %362, %361 : vector<4x128xf32>
    %364 = arith.divf %362, %363 : vector<4x128xf32>
    %365 = arith.mulf %356, %338 : vector<4x128xf32>
    %366 = arith.mulf %350, %358 : vector<4x128xf32>
    %367 = arith.addf %365, %366 : vector<4x128xf32>
    %368 = math.tanh %367 : vector<4x128xf32>
    %369 = arith.mulf %364, %368 : vector<4x128xf32>
    %370 = vector.shape_cast %295 : vector<4x1xi1> to vector<4x1xi1>
    %371 = vector.broadcast %370 : vector<4x1xi1> to vector<4x128xi1>
    %372 = arith.select %371, %367, %338 : vector<4x128xi1>, vector<4x128xf32>
    %c0_147 = arith.constant 0 : index
    %c0_148 = arith.constant 0 : index
    %373 = vector.load %arg15[%c0_147, %c0_148] : memref<4x128xf32, #tpu.memory_space<vmem>>, vector<4x128xf32>
    tpu.vector_store %arg15[%c0_147, %c0_148], %372 {strides = array<i32>} : memref<4x128xf32, #tpu.memory_space<vmem>>, vector<4x128xf32>,
    %374 = vector.shape_cast %295 : vector<4x1xi1> to vector<4x1xi1>
    %375 = vector.broadcast %374 : vector<4x1xi1> to vector<4x128xi1>
    %376 = arith.select %375, %369, %337 : vector<4x128xi1>, vector<4x128xf32>
    %c0_149 = arith.constant 0 : index
    %c0_150 = arith.constant 0 : index
    %377 = vector.load %arg14[%c0_149, %c0_150] : memref<4x128xf32, #tpu.memory_space<vmem>>, vector<4x128xf32>
    tpu.vector_store %arg14[%c0_149, %c0_150], %376 {strides = array<i32>} : memref<4x128xf32, #tpu.memory_space<vmem>>, vector<4x128xf32>,
    %cst_151 = arith.constant 0.000000e+00 : f32
    %378 = vector.broadcast %cst_151 : f32 to vector<4x128xf32>
    %379 = vector.shape_cast %295 : vector<4x1xi1> to vector<4x1xi1>
    %380 = vector.broadcast %379 : vector<4x1xi1> to vector<4x128xi1>
    %381 = arith.select %380, %369, %378 : vector<4x128xi1>, vector<4x128xf32>
    %382 = arith.index_cast %c3_i32 : i32 to index
    %c0_152 = arith.constant 0 : index
    %c0_153 = arith.constant 0 : index
    %383 = vector.load %arg8[%382, %c0_152, %c0_153] : memref<8x4x128xf32, #tpu.memory_space<vmem>>, vector<1x4x128xf32>
    %384 = vector.shape_cast %383 : vector<1x4x128xf32> to vector<4x128xf32>
    %385 = vector.shape_cast %381 : vector<4x128xf32> to vector<1x4x128xf32>
    tpu.vector_store %arg8[%382, %c0_152, %c0_153], %385 {strides = array<i32>} : memref<8x4x128xf32, #tpu.memory_space<vmem>>, vector<1x4x128xf32>,
    %c0_154 = arith.constant 0 : index
    %c0_155 = arith.constant 0 : index
    %386 = vector.load %arg16[%c0_154, %c0_155] : memref<4x128xf32, #tpu.memory_space<vmem>>, vector<4x128xf32>
    %387 = arith.maximumf %386, %381 : vector<4x128xf32>
    %c0_156 = arith.constant 0 : index
    %c0_157 = arith.constant 0 : index
    %388 = vector.load %arg16[%c0_156, %c0_157] : memref<4x128xf32, #tpu.memory_space<vmem>>, vector<4x128xf32>
    tpu.vector_store %arg16[%c0_156, %c0_157], %387 {strides = array<i32>} : memref<4x128xf32, #tpu.memory_space<vmem>>, vector<4x128xf32>,
    %c4_i32 = arith.constant 4 : i32
    %389 = arith.addi %4, %c4_i32 : i32
    %390 = vector.broadcast %389 : i32 to vector<4x1xi32>
    %391 = arith.cmpi slt, %390, %3 : vector<4x1xi32>
    %c0_158 = arith.constant 0 : index
    %c0_159 = arith.constant 0 : index
    %392 = vector.load %arg12[%c0_158, %c0_159] : memref<4x128xf32, #tpu.memory_space<vmem>>, vector<4x128xf32>
    %c0_160 = arith.constant 0 : index
    %c0_161 = arith.constant 0 : index
    %393 = vector.load %arg13[%c0_160, %c0_161] : memref<4x128xf32, #tpu.memory_space<vmem>>, vector<4x128xf32>
    %394 = arith.index_cast %c4_i32 : i32 to index
    %c0_162 = arith.constant 0 : index
    %c0_163 = arith.constant 0 : index
    %395 = vector.load %arg1[%394, %c0_162, %c0_163] : memref<8x4x512xf32, #tpu.memory_space<vmem>>, vector<1x4x512xf32>
    %396 = vector.shape_cast %395 : vector<1x4x512xf32> to vector<4x512xf32>
    %c0_164 = arith.constant 0 : index
    %c0_165 = arith.constant 0 : index
    %397 = vector.load %arg3[%c0_164, %c0_165] : memref<128x512xf32, #tpu.memory_space<vmem>>, vector<128x512xf32>
    %cst_166 = arith.constant dense<0.000000e+00> : vector<4x512xf32>
    %398 = tpu.matmul %392, %397, %cst_166 {dimension_numbers = #tpu.dot_dimension_numbers<[1], [0], [0], [1], [0, 0, 1, 1], [], []>} : vector<4x128xf32>, vector<128x512xf32>, vector<4x512xf32> -> vector<4x512xf32>
    %399 = arith.addf %396, %398 : vector<4x512xf32>
    %400 = vector.extract_strided_slice %399 {offsets = [0, 0], sizes = [4, 128], strides = [1, 1]} : vector<4x512xf32> to vector<4x128xf32>
    %401 = arith.negf %400 : vector<4x128xf32>
    %402 = math.exp %401 : vector<4x128xf32>
    %cst_167 = arith.constant 1.000000e+00 : f32
    %403 = vector.broadcast %cst_167 : f32 to vector<4x128xf32>
    %404 = arith.addf %403, %402 : vector<4x128xf32>
    %405 = arith.divf %403, %404 : vector<4x128xf32>
    %406 = vector.extract_strided_slice %399 {offsets = [0, 128], sizes = [4, 128], strides = [1, 1]} : vector<4x512xf32> to vector<4x128xf32>
    %407 = arith.negf %406 : vector<4x128xf32>
    %408 = math.exp %407 : vector<4x128xf32>
    %cst_168 = arith.constant 1.000000e+00 : f32
    %409 = vector.broadcast %cst_168 : f32 to vector<4x128xf32>
    %410 = arith.addf %409, %408 : vector<4x128xf32>
    %411 = arith.divf %409, %410 : vector<4x128xf32>
    %412 = vector.extract_strided_slice %399 {offsets = [0, 256], sizes = [4, 128], strides = [1, 1]} : vector<4x512xf32> to vector<4x128xf32>
    %413 = math.tanh %412 : vector<4x128xf32>
    %414 = vector.extract_strided_slice %399 {offsets = [0, 384], sizes = [4, 128], strides = [1, 1]} : vector<4x512xf32> to vector<4x128xf32>
    %415 = arith.negf %414 : vector<4x128xf32>
    %416 = math.exp %415 : vector<4x128xf32>
    %cst_169 = arith.constant 1.000000e+00 : f32
    %417 = vector.broadcast %cst_169 : f32 to vector<4x128xf32>
    %418 = arith.addf %417, %416 : vector<4x128xf32>
    %419 = arith.divf %417, %418 : vector<4x128xf32>
    %420 = arith.mulf %411, %393 : vector<4x128xf32>
    %421 = arith.mulf %405, %413 : vector<4x128xf32>
    %422 = arith.addf %420, %421 : vector<4x128xf32>
    %423 = math.tanh %422 : vector<4x128xf32>
    %424 = arith.mulf %419, %423 : vector<4x128xf32>
    %425 = vector.shape_cast %391 : vector<4x1xi1> to vector<4x1xi1>
    %426 = vector.broadcast %425 : vector<4x1xi1> to vector<4x128xi1>
    %427 = arith.select %426, %422, %393 : vector<4x128xi1>, vector<4x128xf32>
    %428 = vector.shape_cast %391 : vector<4x1xi1> to vector<4x1xi1>
    %429 = vector.broadcast %428 : vector<4x1xi1> to vector<4x128xi1>
    %430 = arith.select %429, %424, %392 : vector<4x128xi1>, vector<4x128xf32>
    %c0_170 = arith.constant 0 : index
    %c0_171 = arith.constant 0 : index
    %431 = vector.load %arg13[%c0_170, %c0_171] : memref<4x128xf32, #tpu.memory_space<vmem>>, vector<4x128xf32>
    tpu.vector_store %arg13[%c0_170, %c0_171], %427 {strides = array<i32>} : memref<4x128xf32, #tpu.memory_space<vmem>>, vector<4x128xf32>,
    %c0_172 = arith.constant 0 : index
    %c0_173 = arith.constant 0 : index
    %432 = vector.load %arg12[%c0_172, %c0_173] : memref<4x128xf32, #tpu.memory_space<vmem>>, vector<4x128xf32>
    tpu.vector_store %arg12[%c0_172, %c0_173], %430 {strides = array<i32>} : memref<4x128xf32, #tpu.memory_space<vmem>>, vector<4x128xf32>,
    %c0_174 = arith.constant 0 : index
    %c0_175 = arith.constant 0 : index
    %433 = vector.load %arg14[%c0_174, %c0_175] : memref<4x128xf32, #tpu.memory_space<vmem>>, vector<4x128xf32>
    %c0_176 = arith.constant 0 : index
    %c0_177 = arith.constant 0 : index
    %434 = vector.load %arg15[%c0_176, %c0_177] : memref<4x128xf32, #tpu.memory_space<vmem>>, vector<4x128xf32>
    %435 = tpu.concatenate %430, %433 in 1 : vector<4x128xf32>, vector<4x128xf32> -> vector<4x256xf32>
    %c0_178 = arith.constant 0 : index
    %c0_179 = arith.constant 0 : index
    %436 = vector.load %arg4[%c0_178, %c0_179] : memref<256x512xf32, #tpu.memory_space<vmem>>, vector<256x512xf32>
    %cst_180 = arith.constant dense<0.000000e+00> : vector<4x512xf32>
    %437 = tpu.matmul %435, %436, %cst_180 {dimension_numbers = #tpu.dot_dimension_numbers<[1], [0], [0], [1], [0, 0, 1, 1], [], []>} : vector<4x256xf32>, vector<256x512xf32>, vector<4x512xf32> -> vector<4x512xf32>
    %c0_181 = arith.constant 0 : index
    %c0_182 = arith.constant 0 : index
    %438 = vector.load %arg5[%c0_181, %c0_182] : memref<1x512xf32, #tpu.memory_space<vmem>>, vector<1x512xf32>
    %439 = vector.broadcast %438 : vector<1x512xf32> to vector<4x512xf32>
    %440 = arith.addf %437, %439 : vector<4x512xf32>
    %441 = vector.extract_strided_slice %440 {offsets = [0, 0], sizes = [4, 128], strides = [1, 1]} : vector<4x512xf32> to vector<4x128xf32>
    %442 = arith.negf %441 : vector<4x128xf32>
    %443 = math.exp %442 : vector<4x128xf32>
    %cst_183 = arith.constant 1.000000e+00 : f32
    %444 = vector.broadcast %cst_183 : f32 to vector<4x128xf32>
    %445 = arith.addf %444, %443 : vector<4x128xf32>
    %446 = arith.divf %444, %445 : vector<4x128xf32>
    %447 = vector.extract_strided_slice %440 {offsets = [0, 128], sizes = [4, 128], strides = [1, 1]} : vector<4x512xf32> to vector<4x128xf32>
    %448 = arith.negf %447 : vector<4x128xf32>
    %449 = math.exp %448 : vector<4x128xf32>
    %cst_184 = arith.constant 1.000000e+00 : f32
    %450 = vector.broadcast %cst_184 : f32 to vector<4x128xf32>
    %451 = arith.addf %450, %449 : vector<4x128xf32>
    %452 = arith.divf %450, %451 : vector<4x128xf32>
    %453 = vector.extract_strided_slice %440 {offsets = [0, 256], sizes = [4, 128], strides = [1, 1]} : vector<4x512xf32> to vector<4x128xf32>
    %454 = math.tanh %453 : vector<4x128xf32>
    %455 = vector.extract_strided_slice %440 {offsets = [0, 384], sizes = [4, 128], strides = [1, 1]} : vector<4x512xf32> to vector<4x128xf32>
    %456 = arith.negf %455 : vector<4x128xf32>
    %457 = math.exp %456 : vector<4x128xf32>
    %cst_185 = arith.constant 1.000000e+00 : f32
    %458 = vector.broadcast %cst_185 : f32 to vector<4x128xf32>
    %459 = arith.addf %458, %457 : vector<4x128xf32>
    %460 = arith.divf %458, %459 : vector<4x128xf32>
    %461 = arith.mulf %452, %434 : vector<4x128xf32>
    %462 = arith.mulf %446, %454 : vector<4x128xf32>
    %463 = arith.addf %461, %462 : vector<4x128xf32>
    %464 = math.tanh %463 : vector<4x128xf32>
    %465 = arith.mulf %460, %464 : vector<4x128xf32>
    %466 = vector.shape_cast %391 : vector<4x1xi1> to vector<4x1xi1>
    %467 = vector.broadcast %466 : vector<4x1xi1> to vector<4x128xi1>
    %468 = arith.select %467, %463, %434 : vector<4x128xi1>, vector<4x128xf32>
    %c0_186 = arith.constant 0 : index
    %c0_187 = arith.constant 0 : index
    %469 = vector.load %arg15[%c0_186, %c0_187] : memref<4x128xf32, #tpu.memory_space<vmem>>, vector<4x128xf32>
    tpu.vector_store %arg15[%c0_186, %c0_187], %468 {strides = array<i32>} : memref<4x128xf32, #tpu.memory_space<vmem>>, vector<4x128xf32>,
    %470 = vector.shape_cast %391 : vector<4x1xi1> to vector<4x1xi1>
    %471 = vector.broadcast %470 : vector<4x1xi1> to vector<4x128xi1>
    %472 = arith.select %471, %465, %433 : vector<4x128xi1>, vector<4x128xf32>
    %c0_188 = arith.constant 0 : index
    %c0_189 = arith.constant 0 : index
    %473 = vector.load %arg14[%c0_188, %c0_189] : memref<4x128xf32, #tpu.memory_space<vmem>>, vector<4x128xf32>
    tpu.vector_store %arg14[%c0_188, %c0_189], %472 {strides = array<i32>} : memref<4x128xf32, #tpu.memory_space<vmem>>, vector<4x128xf32>,
    %cst_190 = arith.constant 0.000000e+00 : f32
    %474 = vector.broadcast %cst_190 : f32 to vector<4x128xf32>
    %475 = vector.shape_cast %391 : vector<4x1xi1> to vector<4x1xi1>
    %476 = vector.broadcast %475 : vector<4x1xi1> to vector<4x128xi1>
    %477 = arith.select %476, %465, %474 : vector<4x128xi1>, vector<4x128xf32>
    %478 = arith.index_cast %c4_i32 : i32 to index
    %c0_191 = arith.constant 0 : index
    %c0_192 = arith.constant 0 : index
    %479 = vector.load %arg8[%478, %c0_191, %c0_192] : memref<8x4x128xf32, #tpu.memory_space<vmem>>, vector<1x4x128xf32>
    %480 = vector.shape_cast %479 : vector<1x4x128xf32> to vector<4x128xf32>
    %481 = vector.shape_cast %477 : vector<4x128xf32> to vector<1x4x128xf32>
    tpu.vector_store %arg8[%478, %c0_191, %c0_192], %481 {strides = array<i32>} : memref<8x4x128xf32, #tpu.memory_space<vmem>>, vector<1x4x128xf32>,
    %c0_193 = arith.constant 0 : index
    %c0_194 = arith.constant 0 : index
    %482 = vector.load %arg16[%c0_193, %c0_194] : memref<4x128xf32, #tpu.memory_space<vmem>>, vector<4x128xf32>
    %483 = arith.maximumf %482, %477 : vector<4x128xf32>
    %c0_195 = arith.constant 0 : index
    %c0_196 = arith.constant 0 : index
    %484 = vector.load %arg16[%c0_195, %c0_196] : memref<4x128xf32, #tpu.memory_space<vmem>>, vector<4x128xf32>
    tpu.vector_store %arg16[%c0_195, %c0_196], %483 {strides = array<i32>} : memref<4x128xf32, #tpu.memory_space<vmem>>, vector<4x128xf32>,
    %c5_i32 = arith.constant 5 : i32
    %485 = arith.addi %4, %c5_i32 : i32
    %486 = vector.broadcast %485 : i32 to vector<4x1xi32>
    %487 = arith.cmpi slt, %486, %3 : vector<4x1xi32>
    %c0_197 = arith.constant 0 : index
    %c0_198 = arith.constant 0 : index
    %488 = vector.load %arg12[%c0_197, %c0_198] : memref<4x128xf32, #tpu.memory_space<vmem>>, vector<4x128xf32>
    %c0_199 = arith.constant 0 : index
    %c0_200 = arith.constant 0 : index
    %489 = vector.load %arg13[%c0_199, %c0_200] : memref<4x128xf32, #tpu.memory_space<vmem>>, vector<4x128xf32>
    %490 = arith.index_cast %c5_i32 : i32 to index
    %c0_201 = arith.constant 0 : index
    %c0_202 = arith.constant 0 : index
    %491 = vector.load %arg1[%490, %c0_201, %c0_202] : memref<8x4x512xf32, #tpu.memory_space<vmem>>, vector<1x4x512xf32>
    %492 = vector.shape_cast %491 : vector<1x4x512xf32> to vector<4x512xf32>
    %c0_203 = arith.constant 0 : index
    %c0_204 = arith.constant 0 : index
    %493 = vector.load %arg3[%c0_203, %c0_204] : memref<128x512xf32, #tpu.memory_space<vmem>>, vector<128x512xf32>
    %cst_205 = arith.constant dense<0.000000e+00> : vector<4x512xf32>
    %494 = tpu.matmul %488, %493, %cst_205 {dimension_numbers = #tpu.dot_dimension_numbers<[1], [0], [0], [1], [0, 0, 1, 1], [], []>} : vector<4x128xf32>, vector<128x512xf32>, vector<4x512xf32> -> vector<4x512xf32>
    %495 = arith.addf %492, %494 : vector<4x512xf32>
    %496 = vector.extract_strided_slice %495 {offsets = [0, 0], sizes = [4, 128], strides = [1, 1]} : vector<4x512xf32> to vector<4x128xf32>
    %497 = arith.negf %496 : vector<4x128xf32>
    %498 = math.exp %497 : vector<4x128xf32>
    %cst_206 = arith.constant 1.000000e+00 : f32
    %499 = vector.broadcast %cst_206 : f32 to vector<4x128xf32>
    %500 = arith.addf %499, %498 : vector<4x128xf32>
    %501 = arith.divf %499, %500 : vector<4x128xf32>
    %502 = vector.extract_strided_slice %495 {offsets = [0, 128], sizes = [4, 128], strides = [1, 1]} : vector<4x512xf32> to vector<4x128xf32>
    %503 = arith.negf %502 : vector<4x128xf32>
    %504 = math.exp %503 : vector<4x128xf32>
    %cst_207 = arith.constant 1.000000e+00 : f32
    %505 = vector.broadcast %cst_207 : f32 to vector<4x128xf32>
    %506 = arith.addf %505, %504 : vector<4x128xf32>
    %507 = arith.divf %505, %506 : vector<4x128xf32>
    %508 = vector.extract_strided_slice %495 {offsets = [0, 256], sizes = [4, 128], strides = [1, 1]} : vector<4x512xf32> to vector<4x128xf32>
    %509 = math.tanh %508 : vector<4x128xf32>
    %510 = vector.extract_strided_slice %495 {offsets = [0, 384], sizes = [4, 128], strides = [1, 1]} : vector<4x512xf32> to vector<4x128xf32>
    %511 = arith.negf %510 : vector<4x128xf32>
    %512 = math.exp %511 : vector<4x128xf32>
    %cst_208 = arith.constant 1.000000e+00 : f32
    %513 = vector.broadcast %cst_208 : f32 to vector<4x128xf32>
    %514 = arith.addf %513, %512 : vector<4x128xf32>
    %515 = arith.divf %513, %514 : vector<4x128xf32>
    %516 = arith.mulf %507, %489 : vector<4x128xf32>
    %517 = arith.mulf %501, %509 : vector<4x128xf32>
    %518 = arith.addf %516, %517 : vector<4x128xf32>
    %519 = math.tanh %518 : vector<4x128xf32>
    %520 = arith.mulf %515, %519 : vector<4x128xf32>
    %521 = vector.shape_cast %487 : vector<4x1xi1> to vector<4x1xi1>
    %522 = vector.broadcast %521 : vector<4x1xi1> to vector<4x128xi1>
    %523 = arith.select %522, %518, %489 : vector<4x128xi1>, vector<4x128xf32>
    %524 = vector.shape_cast %487 : vector<4x1xi1> to vector<4x1xi1>
    %525 = vector.broadcast %524 : vector<4x1xi1> to vector<4x128xi1>
    %526 = arith.select %525, %520, %488 : vector<4x128xi1>, vector<4x128xf32>
    %c0_209 = arith.constant 0 : index
    %c0_210 = arith.constant 0 : index
    %527 = vector.load %arg13[%c0_209, %c0_210] : memref<4x128xf32, #tpu.memory_space<vmem>>, vector<4x128xf32>
    tpu.vector_store %arg13[%c0_209, %c0_210], %523 {strides = array<i32>} : memref<4x128xf32, #tpu.memory_space<vmem>>, vector<4x128xf32>,
    %c0_211 = arith.constant 0 : index
    %c0_212 = arith.constant 0 : index
    %528 = vector.load %arg12[%c0_211, %c0_212] : memref<4x128xf32, #tpu.memory_space<vmem>>, vector<4x128xf32>
    tpu.vector_store %arg12[%c0_211, %c0_212], %526 {strides = array<i32>} : memref<4x128xf32, #tpu.memory_space<vmem>>, vector<4x128xf32>,
    %c0_213 = arith.constant 0 : index
    %c0_214 = arith.constant 0 : index
    %529 = vector.load %arg14[%c0_213, %c0_214] : memref<4x128xf32, #tpu.memory_space<vmem>>, vector<4x128xf32>
    %c0_215 = arith.constant 0 : index
    %c0_216 = arith.constant 0 : index
    %530 = vector.load %arg15[%c0_215, %c0_216] : memref<4x128xf32, #tpu.memory_space<vmem>>, vector<4x128xf32>
    %531 = tpu.concatenate %526, %529 in 1 : vector<4x128xf32>, vector<4x128xf32> -> vector<4x256xf32>
    %c0_217 = arith.constant 0 : index
    %c0_218 = arith.constant 0 : index
    %532 = vector.load %arg4[%c0_217, %c0_218] : memref<256x512xf32, #tpu.memory_space<vmem>>, vector<256x512xf32>
    %cst_219 = arith.constant dense<0.000000e+00> : vector<4x512xf32>
    %533 = tpu.matmul %531, %532, %cst_219 {dimension_numbers = #tpu.dot_dimension_numbers<[1], [0], [0], [1], [0, 0, 1, 1], [], []>} : vector<4x256xf32>, vector<256x512xf32>, vector<4x512xf32> -> vector<4x512xf32>
    %c0_220 = arith.constant 0 : index
    %c0_221 = arith.constant 0 : index
    %534 = vector.load %arg5[%c0_220, %c0_221] : memref<1x512xf32, #tpu.memory_space<vmem>>, vector<1x512xf32>
    %535 = vector.broadcast %534 : vector<1x512xf32> to vector<4x512xf32>
    %536 = arith.addf %533, %535 : vector<4x512xf32>
    %537 = vector.extract_strided_slice %536 {offsets = [0, 0], sizes = [4, 128], strides = [1, 1]} : vector<4x512xf32> to vector<4x128xf32>
    %538 = arith.negf %537 : vector<4x128xf32>
    %539 = math.exp %538 : vector<4x128xf32>
    %cst_222 = arith.constant 1.000000e+00 : f32
    %540 = vector.broadcast %cst_222 : f32 to vector<4x128xf32>
    %541 = arith.addf %540, %539 : vector<4x128xf32>
    %542 = arith.divf %540, %541 : vector<4x128xf32>
    %543 = vector.extract_strided_slice %536 {offsets = [0, 128], sizes = [4, 128], strides = [1, 1]} : vector<4x512xf32> to vector<4x128xf32>
    %544 = arith.negf %543 : vector<4x128xf32>
    %545 = math.exp %544 : vector<4x128xf32>
    %cst_223 = arith.constant 1.000000e+00 : f32
    %546 = vector.broadcast %cst_223 : f32 to vector<4x128xf32>
    %547 = arith.addf %546, %545 : vector<4x128xf32>
    %548 = arith.divf %546, %547 : vector<4x128xf32>
    %549 = vector.extract_strided_slice %536 {offsets = [0, 256], sizes = [4, 128], strides = [1, 1]} : vector<4x512xf32> to vector<4x128xf32>
    %550 = math.tanh %549 : vector<4x128xf32>
    %551 = vector.extract_strided_slice %536 {offsets = [0, 384], sizes = [4, 128], strides = [1, 1]} : vector<4x512xf32> to vector<4x128xf32>
    %552 = arith.negf %551 : vector<4x128xf32>
    %553 = math.exp %552 : vector<4x128xf32>
    %cst_224 = arith.constant 1.000000e+00 : f32
    %554 = vector.broadcast %cst_224 : f32 to vector<4x128xf32>
    %555 = arith.addf %554, %553 : vector<4x128xf32>
    %556 = arith.divf %554, %555 : vector<4x128xf32>
    %557 = arith.mulf %548, %530 : vector<4x128xf32>
    %558 = arith.mulf %542, %550 : vector<4x128xf32>
    %559 = arith.addf %557, %558 : vector<4x128xf32>
    %560 = math.tanh %559 : vector<4x128xf32>
    %561 = arith.mulf %556, %560 : vector<4x128xf32>
    %562 = vector.shape_cast %487 : vector<4x1xi1> to vector<4x1xi1>
    %563 = vector.broadcast %562 : vector<4x1xi1> to vector<4x128xi1>
    %564 = arith.select %563, %559, %530 : vector<4x128xi1>, vector<4x128xf32>
    %c0_225 = arith.constant 0 : index
    %c0_226 = arith.constant 0 : index
    %565 = vector.load %arg15[%c0_225, %c0_226] : memref<4x128xf32, #tpu.memory_space<vmem>>, vector<4x128xf32>
    tpu.vector_store %arg15[%c0_225, %c0_226], %564 {strides = array<i32>} : memref<4x128xf32, #tpu.memory_space<vmem>>, vector<4x128xf32>,
    %566 = vector.shape_cast %487 : vector<4x1xi1> to vector<4x1xi1>
    %567 = vector.broadcast %566 : vector<4x1xi1> to vector<4x128xi1>
    %568 = arith.select %567, %561, %529 : vector<4x128xi1>, vector<4x128xf32>
    %c0_227 = arith.constant 0 : index
    %c0_228 = arith.constant 0 : index
    %569 = vector.load %arg14[%c0_227, %c0_228] : memref<4x128xf32, #tpu.memory_space<vmem>>, vector<4x128xf32>
    tpu.vector_store %arg14[%c0_227, %c0_228], %568 {strides = array<i32>} : memref<4x128xf32, #tpu.memory_space<vmem>>, vector<4x128xf32>,
    %cst_229 = arith.constant 0.000000e+00 : f32
    %570 = vector.broadcast %cst_229 : f32 to vector<4x128xf32>
    %571 = vector.shape_cast %487 : vector<4x1xi1> to vector<4x1xi1>
    %572 = vector.broadcast %571 : vector<4x1xi1> to vector<4x128xi1>
    %573 = arith.select %572, %561, %570 : vector<4x128xi1>, vector<4x128xf32>
    %574 = arith.index_cast %c5_i32 : i32 to index
    %c0_230 = arith.constant 0 : index
    %c0_231 = arith.constant 0 : index
    %575 = vector.load %arg8[%574, %c0_230, %c0_231] : memref<8x4x128xf32, #tpu.memory_space<vmem>>, vector<1x4x128xf32>
    %576 = vector.shape_cast %575 : vector<1x4x128xf32> to vector<4x128xf32>
    %577 = vector.shape_cast %573 : vector<4x128xf32> to vector<1x4x128xf32>
    tpu.vector_store %arg8[%574, %c0_230, %c0_231], %577 {strides = array<i32>} : memref<8x4x128xf32, #tpu.memory_space<vmem>>, vector<1x4x128xf32>,
    %c0_232 = arith.constant 0 : index
    %c0_233 = arith.constant 0 : index
    %578 = vector.load %arg16[%c0_232, %c0_233] : memref<4x128xf32, #tpu.memory_space<vmem>>, vector<4x128xf32>
    %579 = arith.maximumf %578, %573 : vector<4x128xf32>
    %c0_234 = arith.constant 0 : index
    %c0_235 = arith.constant 0 : index
    %580 = vector.load %arg16[%c0_234, %c0_235] : memref<4x128xf32, #tpu.memory_space<vmem>>, vector<4x128xf32>
    tpu.vector_store %arg16[%c0_234, %c0_235], %579 {strides = array<i32>} : memref<4x128xf32, #tpu.memory_space<vmem>>, vector<4x128xf32>,
    %c6_i32 = arith.constant 6 : i32
    %581 = arith.addi %4, %c6_i32 : i32
    %582 = vector.broadcast %581 : i32 to vector<4x1xi32>
    %583 = arith.cmpi slt, %582, %3 : vector<4x1xi32>
    %c0_236 = arith.constant 0 : index
    %c0_237 = arith.constant 0 : index
    %584 = vector.load %arg12[%c0_236, %c0_237] : memref<4x128xf32, #tpu.memory_space<vmem>>, vector<4x128xf32>
    %c0_238 = arith.constant 0 : index
    %c0_239 = arith.constant 0 : index
    %585 = vector.load %arg13[%c0_238, %c0_239] : memref<4x128xf32, #tpu.memory_space<vmem>>, vector<4x128xf32>
    %586 = arith.index_cast %c6_i32 : i32 to index
    %c0_240 = arith.constant 0 : index
    %c0_241 = arith.constant 0 : index
    %587 = vector.load %arg1[%586, %c0_240, %c0_241] : memref<8x4x512xf32, #tpu.memory_space<vmem>>, vector<1x4x512xf32>
    %588 = vector.shape_cast %587 : vector<1x4x512xf32> to vector<4x512xf32>
    %c0_242 = arith.constant 0 : index
    %c0_243 = arith.constant 0 : index
    %589 = vector.load %arg3[%c0_242, %c0_243] : memref<128x512xf32, #tpu.memory_space<vmem>>, vector<128x512xf32>
    %cst_244 = arith.constant dense<0.000000e+00> : vector<4x512xf32>
    %590 = tpu.matmul %584, %589, %cst_244 {dimension_numbers = #tpu.dot_dimension_numbers<[1], [0], [0], [1], [0, 0, 1, 1], [], []>} : vector<4x128xf32>, vector<128x512xf32>, vector<4x512xf32> -> vector<4x512xf32>
    %591 = arith.addf %588, %590 : vector<4x512xf32>
    %592 = vector.extract_strided_slice %591 {offsets = [0, 0], sizes = [4, 128], strides = [1, 1]} : vector<4x512xf32> to vector<4x128xf32>
    %593 = arith.negf %592 : vector<4x128xf32>
    %594 = math.exp %593 : vector<4x128xf32>
    %cst_245 = arith.constant 1.000000e+00 : f32
    %595 = vector.broadcast %cst_245 : f32 to vector<4x128xf32>
    %596 = arith.addf %595, %594 : vector<4x128xf32>
    %597 = arith.divf %595, %596 : vector<4x128xf32>
    %598 = vector.extract_strided_slice %591 {offsets = [0, 128], sizes = [4, 128], strides = [1, 1]} : vector<4x512xf32> to vector<4x128xf32>
    %599 = arith.negf %598 : vector<4x128xf32>
    %600 = math.exp %599 : vector<4x128xf32>
    %cst_246 = arith.constant 1.000000e+00 : f32
    %601 = vector.broadcast %cst_246 : f32 to vector<4x128xf32>
    %602 = arith.addf %601, %600 : vector<4x128xf32>
    %603 = arith.divf %601, %602 : vector<4x128xf32>
    %604 = vector.extract_strided_slice %591 {offsets = [0, 256], sizes = [4, 128], strides = [1, 1]} : vector<4x512xf32> to vector<4x128xf32>
    %605 = math.tanh %604 : vector<4x128xf32>
    %606 = vector.extract_strided_slice %591 {offsets = [0, 384], sizes = [4, 128], strides = [1, 1]} : vector<4x512xf32> to vector<4x128xf32>
    %607 = arith.negf %606 : vector<4x128xf32>
    %608 = math.exp %607 : vector<4x128xf32>
    %cst_247 = arith.constant 1.000000e+00 : f32
    %609 = vector.broadcast %cst_247 : f32 to vector<4x128xf32>
    %610 = arith.addf %609, %608 : vector<4x128xf32>
    %611 = arith.divf %609, %610 : vector<4x128xf32>
    %612 = arith.mulf %603, %585 : vector<4x128xf32>
    %613 = arith.mulf %597, %605 : vector<4x128xf32>
    %614 = arith.addf %612, %613 : vector<4x128xf32>
    %615 = math.tanh %614 : vector<4x128xf32>
    %616 = arith.mulf %611, %615 : vector<4x128xf32>
    %617 = vector.shape_cast %583 : vector<4x1xi1> to vector<4x1xi1>
    %618 = vector.broadcast %617 : vector<4x1xi1> to vector<4x128xi1>
    %619 = arith.select %618, %614, %585 : vector<4x128xi1>, vector<4x128xf32>
    %620 = vector.shape_cast %583 : vector<4x1xi1> to vector<4x1xi1>
    %621 = vector.broadcast %620 : vector<4x1xi1> to vector<4x128xi1>
    %622 = arith.select %621, %616, %584 : vector<4x128xi1>, vector<4x128xf32>
    %c0_248 = arith.constant 0 : index
    %c0_249 = arith.constant 0 : index
    %623 = vector.load %arg13[%c0_248, %c0_249] : memref<4x128xf32, #tpu.memory_space<vmem>>, vector<4x128xf32>
    tpu.vector_store %arg13[%c0_248, %c0_249], %619 {strides = array<i32>} : memref<4x128xf32, #tpu.memory_space<vmem>>, vector<4x128xf32>,
    %c0_250 = arith.constant 0 : index
    %c0_251 = arith.constant 0 : index
    %624 = vector.load %arg12[%c0_250, %c0_251] : memref<4x128xf32, #tpu.memory_space<vmem>>, vector<4x128xf32>
    tpu.vector_store %arg12[%c0_250, %c0_251], %622 {strides = array<i32>} : memref<4x128xf32, #tpu.memory_space<vmem>>, vector<4x128xf32>,
    %c0_252 = arith.constant 0 : index
    %c0_253 = arith.constant 0 : index
    %625 = vector.load %arg14[%c0_252, %c0_253] : memref<4x128xf32, #tpu.memory_space<vmem>>, vector<4x128xf32>
    %c0_254 = arith.constant 0 : index
    %c0_255 = arith.constant 0 : index
    %626 = vector.load %arg15[%c0_254, %c0_255] : memref<4x128xf32, #tpu.memory_space<vmem>>, vector<4x128xf32>
    %627 = tpu.concatenate %622, %625 in 1 : vector<4x128xf32>, vector<4x128xf32> -> vector<4x256xf32>
    %c0_256 = arith.constant 0 : index
    %c0_257 = arith.constant 0 : index
    %628 = vector.load %arg4[%c0_256, %c0_257] : memref<256x512xf32, #tpu.memory_space<vmem>>, vector<256x512xf32>
    %cst_258 = arith.constant dense<0.000000e+00> : vector<4x512xf32>
    %629 = tpu.matmul %627, %628, %cst_258 {dimension_numbers = #tpu.dot_dimension_numbers<[1], [0], [0], [1], [0, 0, 1, 1], [], []>} : vector<4x256xf32>, vector<256x512xf32>, vector<4x512xf32> -> vector<4x512xf32>
    %c0_259 = arith.constant 0 : index
    %c0_260 = arith.constant 0 : index
    %630 = vector.load %arg5[%c0_259, %c0_260] : memref<1x512xf32, #tpu.memory_space<vmem>>, vector<1x512xf32>
    %631 = vector.broadcast %630 : vector<1x512xf32> to vector<4x512xf32>
    %632 = arith.addf %629, %631 : vector<4x512xf32>
    %633 = vector.extract_strided_slice %632 {offsets = [0, 0], sizes = [4, 128], strides = [1, 1]} : vector<4x512xf32> to vector<4x128xf32>
    %634 = arith.negf %633 : vector<4x128xf32>
    %635 = math.exp %634 : vector<4x128xf32>
    %cst_261 = arith.constant 1.000000e+00 : f32
    %636 = vector.broadcast %cst_261 : f32 to vector<4x128xf32>
    %637 = arith.addf %636, %635 : vector<4x128xf32>
    %638 = arith.divf %636, %637 : vector<4x128xf32>
    %639 = vector.extract_strided_slice %632 {offsets = [0, 128], sizes = [4, 128], strides = [1, 1]} : vector<4x512xf32> to vector<4x128xf32>
    %640 = arith.negf %639 : vector<4x128xf32>
    %641 = math.exp %640 : vector<4x128xf32>
    %cst_262 = arith.constant 1.000000e+00 : f32
    %642 = vector.broadcast %cst_262 : f32 to vector<4x128xf32>
    %643 = arith.addf %642, %641 : vector<4x128xf32>
    %644 = arith.divf %642, %643 : vector<4x128xf32>
    %645 = vector.extract_strided_slice %632 {offsets = [0, 256], sizes = [4, 128], strides = [1, 1]} : vector<4x512xf32> to vector<4x128xf32>
    %646 = math.tanh %645 : vector<4x128xf32>
    %647 = vector.extract_strided_slice %632 {offsets = [0, 384], sizes = [4, 128], strides = [1, 1]} : vector<4x512xf32> to vector<4x128xf32>
    %648 = arith.negf %647 : vector<4x128xf32>
    %649 = math.exp %648 : vector<4x128xf32>
    %cst_263 = arith.constant 1.000000e+00 : f32
    %650 = vector.broadcast %cst_263 : f32 to vector<4x128xf32>
    %651 = arith.addf %650, %649 : vector<4x128xf32>
    %652 = arith.divf %650, %651 : vector<4x128xf32>
    %653 = arith.mulf %644, %626 : vector<4x128xf32>
    %654 = arith.mulf %638, %646 : vector<4x128xf32>
    %655 = arith.addf %653, %654 : vector<4x128xf32>
    %656 = math.tanh %655 : vector<4x128xf32>
    %657 = arith.mulf %652, %656 : vector<4x128xf32>
    %658 = vector.shape_cast %583 : vector<4x1xi1> to vector<4x1xi1>
    %659 = vector.broadcast %658 : vector<4x1xi1> to vector<4x128xi1>
    %660 = arith.select %659, %655, %626 : vector<4x128xi1>, vector<4x128xf32>
    %c0_264 = arith.constant 0 : index
    %c0_265 = arith.constant 0 : index
    %661 = vector.load %arg15[%c0_264, %c0_265] : memref<4x128xf32, #tpu.memory_space<vmem>>, vector<4x128xf32>
    tpu.vector_store %arg15[%c0_264, %c0_265], %660 {strides = array<i32>} : memref<4x128xf32, #tpu.memory_space<vmem>>, vector<4x128xf32>,
    %662 = vector.shape_cast %583 : vector<4x1xi1> to vector<4x1xi1>
    %663 = vector.broadcast %662 : vector<4x1xi1> to vector<4x128xi1>
    %664 = arith.select %663, %657, %625 : vector<4x128xi1>, vector<4x128xf32>
    %c0_266 = arith.constant 0 : index
    %c0_267 = arith.constant 0 : index
    %665 = vector.load %arg14[%c0_266, %c0_267] : memref<4x128xf32, #tpu.memory_space<vmem>>, vector<4x128xf32>
    tpu.vector_store %arg14[%c0_266, %c0_267], %664 {strides = array<i32>} : memref<4x128xf32, #tpu.memory_space<vmem>>, vector<4x128xf32>,
    %cst_268 = arith.constant 0.000000e+00 : f32
    %666 = vector.broadcast %cst_268 : f32 to vector<4x128xf32>
    %667 = vector.shape_cast %583 : vector<4x1xi1> to vector<4x1xi1>
    %668 = vector.broadcast %667 : vector<4x1xi1> to vector<4x128xi1>
    %669 = arith.select %668, %657, %666 : vector<4x128xi1>, vector<4x128xf32>
    %670 = arith.index_cast %c6_i32 : i32 to index
    %c0_269 = arith.constant 0 : index
    %c0_270 = arith.constant 0 : index
    %671 = vector.load %arg8[%670, %c0_269, %c0_270] : memref<8x4x128xf32, #tpu.memory_space<vmem>>, vector<1x4x128xf32>
    %672 = vector.shape_cast %671 : vector<1x4x128xf32> to vector<4x128xf32>
    %673 = vector.shape_cast %669 : vector<4x128xf32> to vector<1x4x128xf32>
    tpu.vector_store %arg8[%670, %c0_269, %c0_270], %673 {strides = array<i32>} : memref<8x4x128xf32, #tpu.memory_space<vmem>>, vector<1x4x128xf32>,
    %c0_271 = arith.constant 0 : index
    %c0_272 = arith.constant 0 : index
    %674 = vector.load %arg16[%c0_271, %c0_272] : memref<4x128xf32, #tpu.memory_space<vmem>>, vector<4x128xf32>
    %675 = arith.maximumf %674, %669 : vector<4x128xf32>
    %c0_273 = arith.constant 0 : index
    %c0_274 = arith.constant 0 : index
    %676 = vector.load %arg16[%c0_273, %c0_274] : memref<4x128xf32, #tpu.memory_space<vmem>>, vector<4x128xf32>
    tpu.vector_store %arg16[%c0_273, %c0_274], %675 {strides = array<i32>} : memref<4x128xf32, #tpu.memory_space<vmem>>, vector<4x128xf32>,
    %c7_i32 = arith.constant 7 : i32
    %677 = arith.addi %4, %c7_i32 : i32
    %678 = vector.broadcast %677 : i32 to vector<4x1xi32>
    %679 = arith.cmpi slt, %678, %3 : vector<4x1xi32>
    %c0_275 = arith.constant 0 : index
    %c0_276 = arith.constant 0 : index
    %680 = vector.load %arg12[%c0_275, %c0_276] : memref<4x128xf32, #tpu.memory_space<vmem>>, vector<4x128xf32>
    %c0_277 = arith.constant 0 : index
    %c0_278 = arith.constant 0 : index
    %681 = vector.load %arg13[%c0_277, %c0_278] : memref<4x128xf32, #tpu.memory_space<vmem>>, vector<4x128xf32>
    %682 = arith.index_cast %c7_i32 : i32 to index
    %c0_279 = arith.constant 0 : index
    %c0_280 = arith.constant 0 : index
    %683 = vector.load %arg1[%682, %c0_279, %c0_280] : memref<8x4x512xf32, #tpu.memory_space<vmem>>, vector<1x4x512xf32>
    %684 = vector.shape_cast %683 : vector<1x4x512xf32> to vector<4x512xf32>
    %c0_281 = arith.constant 0 : index
    %c0_282 = arith.constant 0 : index
    %685 = vector.load %arg3[%c0_281, %c0_282] : memref<128x512xf32, #tpu.memory_space<vmem>>, vector<128x512xf32>
    %cst_283 = arith.constant dense<0.000000e+00> : vector<4x512xf32>
    %686 = tpu.matmul %680, %685, %cst_283 {dimension_numbers = #tpu.dot_dimension_numbers<[1], [0], [0], [1], [0, 0, 1, 1], [], []>} : vector<4x128xf32>, vector<128x512xf32>, vector<4x512xf32> -> vector<4x512xf32>
    %687 = arith.addf %684, %686 : vector<4x512xf32>
    %688 = vector.extract_strided_slice %687 {offsets = [0, 0], sizes = [4, 128], strides = [1, 1]} : vector<4x512xf32> to vector<4x128xf32>
    %689 = arith.negf %688 : vector<4x128xf32>
    %690 = math.exp %689 : vector<4x128xf32>
    %cst_284 = arith.constant 1.000000e+00 : f32
    %691 = vector.broadcast %cst_284 : f32 to vector<4x128xf32>
    %692 = arith.addf %691, %690 : vector<4x128xf32>
    %693 = arith.divf %691, %692 : vector<4x128xf32>
    %694 = vector.extract_strided_slice %687 {offsets = [0, 128], sizes = [4, 128], strides = [1, 1]} : vector<4x512xf32> to vector<4x128xf32>
    %695 = arith.negf %694 : vector<4x128xf32>
    %696 = math.exp %695 : vector<4x128xf32>
    %cst_285 = arith.constant 1.000000e+00 : f32
    %697 = vector.broadcast %cst_285 : f32 to vector<4x128xf32>
    %698 = arith.addf %697, %696 : vector<4x128xf32>
    %699 = arith.divf %697, %698 : vector<4x128xf32>
    %700 = vector.extract_strided_slice %687 {offsets = [0, 256], sizes = [4, 128], strides = [1, 1]} : vector<4x512xf32> to vector<4x128xf32>
    %701 = math.tanh %700 : vector<4x128xf32>
    %702 = vector.extract_strided_slice %687 {offsets = [0, 384], sizes = [4, 128], strides = [1, 1]} : vector<4x512xf32> to vector<4x128xf32>
    %703 = arith.negf %702 : vector<4x128xf32>
    %704 = math.exp %703 : vector<4x128xf32>
    %cst_286 = arith.constant 1.000000e+00 : f32
    %705 = vector.broadcast %cst_286 : f32 to vector<4x128xf32>
    %706 = arith.addf %705, %704 : vector<4x128xf32>
    %707 = arith.divf %705, %706 : vector<4x128xf32>
    %708 = arith.mulf %699, %681 : vector<4x128xf32>
    %709 = arith.mulf %693, %701 : vector<4x128xf32>
    %710 = arith.addf %708, %709 : vector<4x128xf32>
    %711 = math.tanh %710 : vector<4x128xf32>
    %712 = arith.mulf %707, %711 : vector<4x128xf32>
    %713 = vector.shape_cast %679 : vector<4x1xi1> to vector<4x1xi1>
    %714 = vector.broadcast %713 : vector<4x1xi1> to vector<4x128xi1>
    %715 = arith.select %714, %710, %681 : vector<4x128xi1>, vector<4x128xf32>
    %716 = vector.shape_cast %679 : vector<4x1xi1> to vector<4x1xi1>
    %717 = vector.broadcast %716 : vector<4x1xi1> to vector<4x128xi1>
    %718 = arith.select %717, %712, %680 : vector<4x128xi1>, vector<4x128xf32>
    %c0_287 = arith.constant 0 : index
    %c0_288 = arith.constant 0 : index
    %719 = vector.load %arg13[%c0_287, %c0_288] : memref<4x128xf32, #tpu.memory_space<vmem>>, vector<4x128xf32>
    tpu.vector_store %arg13[%c0_287, %c0_288], %715 {strides = array<i32>} : memref<4x128xf32, #tpu.memory_space<vmem>>, vector<4x128xf32>,
    %c0_289 = arith.constant 0 : index
    %c0_290 = arith.constant 0 : index
    %720 = vector.load %arg12[%c0_289, %c0_290] : memref<4x128xf32, #tpu.memory_space<vmem>>, vector<4x128xf32>
    tpu.vector_store %arg12[%c0_289, %c0_290], %718 {strides = array<i32>} : memref<4x128xf32, #tpu.memory_space<vmem>>, vector<4x128xf32>,
    %c0_291 = arith.constant 0 : index
    %c0_292 = arith.constant 0 : index
    %721 = vector.load %arg14[%c0_291, %c0_292] : memref<4x128xf32, #tpu.memory_space<vmem>>, vector<4x128xf32>
    %c0_293 = arith.constant 0 : index
    %c0_294 = arith.constant 0 : index
    %722 = vector.load %arg15[%c0_293, %c0_294] : memref<4x128xf32, #tpu.memory_space<vmem>>, vector<4x128xf32>
    %723 = tpu.concatenate %718, %721 in 1 : vector<4x128xf32>, vector<4x128xf32> -> vector<4x256xf32>
    %c0_295 = arith.constant 0 : index
    %c0_296 = arith.constant 0 : index
    %724 = vector.load %arg4[%c0_295, %c0_296] : memref<256x512xf32, #tpu.memory_space<vmem>>, vector<256x512xf32>
    %cst_297 = arith.constant dense<0.000000e+00> : vector<4x512xf32>
    %725 = tpu.matmul %723, %724, %cst_297 {dimension_numbers = #tpu.dot_dimension_numbers<[1], [0], [0], [1], [0, 0, 1, 1], [], []>} : vector<4x256xf32>, vector<256x512xf32>, vector<4x512xf32> -> vector<4x512xf32>
    %c0_298 = arith.constant 0 : index
    %c0_299 = arith.constant 0 : index
    %726 = vector.load %arg5[%c0_298, %c0_299] : memref<1x512xf32, #tpu.memory_space<vmem>>, vector<1x512xf32>
    %727 = vector.broadcast %726 : vector<1x512xf32> to vector<4x512xf32>
    %728 = arith.addf %725, %727 : vector<4x512xf32>
    %729 = vector.extract_strided_slice %728 {offsets = [0, 0], sizes = [4, 128], strides = [1, 1]} : vector<4x512xf32> to vector<4x128xf32>
    %730 = arith.negf %729 : vector<4x128xf32>
    %731 = math.exp %730 : vector<4x128xf32>
    %cst_300 = arith.constant 1.000000e+00 : f32
    %732 = vector.broadcast %cst_300 : f32 to vector<4x128xf32>
    %733 = arith.addf %732, %731 : vector<4x128xf32>
    %734 = arith.divf %732, %733 : vector<4x128xf32>
    %735 = vector.extract_strided_slice %728 {offsets = [0, 128], sizes = [4, 128], strides = [1, 1]} : vector<4x512xf32> to vector<4x128xf32>
    %736 = arith.negf %735 : vector<4x128xf32>
    %737 = math.exp %736 : vector<4x128xf32>
    %cst_301 = arith.constant 1.000000e+00 : f32
    %738 = vector.broadcast %cst_301 : f32 to vector<4x128xf32>
    %739 = arith.addf %738, %737 : vector<4x128xf32>
    %740 = arith.divf %738, %739 : vector<4x128xf32>
    %741 = vector.extract_strided_slice %728 {offsets = [0, 256], sizes = [4, 128], strides = [1, 1]} : vector<4x512xf32> to vector<4x128xf32>
    %742 = math.tanh %741 : vector<4x128xf32>
    %743 = vector.extract_strided_slice %728 {offsets = [0, 384], sizes = [4, 128], strides = [1, 1]} : vector<4x512xf32> to vector<4x128xf32>
    %744 = arith.negf %743 : vector<4x128xf32>
    %745 = math.exp %744 : vector<4x128xf32>
    %cst_302 = arith.constant 1.000000e+00 : f32
    %746 = vector.broadcast %cst_302 : f32 to vector<4x128xf32>
    %747 = arith.addf %746, %745 : vector<4x128xf32>
    %748 = arith.divf %746, %747 : vector<4x128xf32>
    %749 = arith.mulf %740, %722 : vector<4x128xf32>
    %750 = arith.mulf %734, %742 : vector<4x128xf32>
    %751 = arith.addf %749, %750 : vector<4x128xf32>
    %752 = math.tanh %751 : vector<4x128xf32>
    %753 = arith.mulf %748, %752 : vector<4x128xf32>
    %754 = vector.shape_cast %679 : vector<4x1xi1> to vector<4x1xi1>
    %755 = vector.broadcast %754 : vector<4x1xi1> to vector<4x128xi1>
    %756 = arith.select %755, %751, %722 : vector<4x128xi1>, vector<4x128xf32>
    %c0_303 = arith.constant 0 : index
    %c0_304 = arith.constant 0 : index
    %757 = vector.load %arg15[%c0_303, %c0_304] : memref<4x128xf32, #tpu.memory_space<vmem>>, vector<4x128xf32>
    tpu.vector_store %arg15[%c0_303, %c0_304], %756 {strides = array<i32>} : memref<4x128xf32, #tpu.memory_space<vmem>>, vector<4x128xf32>,
    %758 = vector.shape_cast %679 : vector<4x1xi1> to vector<4x1xi1>
    %759 = vector.broadcast %758 : vector<4x1xi1> to vector<4x128xi1>
    %760 = arith.select %759, %753, %721 : vector<4x128xi1>, vector<4x128xf32>
    %c0_305 = arith.constant 0 : index
    %c0_306 = arith.constant 0 : index
    %761 = vector.load %arg14[%c0_305, %c0_306] : memref<4x128xf32, #tpu.memory_space<vmem>>, vector<4x128xf32>
    tpu.vector_store %arg14[%c0_305, %c0_306], %760 {strides = array<i32>} : memref<4x128xf32, #tpu.memory_space<vmem>>, vector<4x128xf32>,
    %cst_307 = arith.constant 0.000000e+00 : f32
    %762 = vector.broadcast %cst_307 : f32 to vector<4x128xf32>
    %763 = vector.shape_cast %679 : vector<4x1xi1> to vector<4x1xi1>
    %764 = vector.broadcast %763 : vector<4x1xi1> to vector<4x128xi1>
    %765 = arith.select %764, %753, %762 : vector<4x128xi1>, vector<4x128xf32>
    %766 = arith.index_cast %c7_i32 : i32 to index
    %c0_308 = arith.constant 0 : index
    %c0_309 = arith.constant 0 : index
    %767 = vector.load %arg8[%766, %c0_308, %c0_309] : memref<8x4x128xf32, #tpu.memory_space<vmem>>, vector<1x4x128xf32>
    %768 = vector.shape_cast %767 : vector<1x4x128xf32> to vector<4x128xf32>
    %769 = vector.shape_cast %765 : vector<4x128xf32> to vector<1x4x128xf32>
    tpu.vector_store %arg8[%766, %c0_308, %c0_309], %769 {strides = array<i32>} : memref<8x4x128xf32, #tpu.memory_space<vmem>>, vector<1x4x128xf32>,
    %c0_310 = arith.constant 0 : index
    %c0_311 = arith.constant 0 : index
    %770 = vector.load %arg16[%c0_310, %c0_311] : memref<4x128xf32, #tpu.memory_space<vmem>>, vector<4x128xf32>
    %771 = arith.maximumf %770, %765 : vector<4x128xf32>
    %c0_312 = arith.constant 0 : index
    %c0_313 = arith.constant 0 : index
    %772 = vector.load %arg16[%c0_312, %c0_313] : memref<4x128xf32, #tpu.memory_space<vmem>>, vector<4x128xf32>
    tpu.vector_store %arg16[%c0_312, %c0_313], %771 {strides = array<i32>} : memref<4x128xf32, #tpu.memory_space<vmem>>, vector<4x128xf32>,
    %c8_i32_314 = arith.constant 8 : i32
    %c0_i32_315 = arith.constant 0 : i32
    %773 = arith.cmpi eq, %arg0, %c0_i32_315 : i32
    %774 = arith.extui %773 : i1 to i32
    %c0_i32_316 = arith.constant 0 : i32
    %775 = arith.cmpi ne, %774, %c0_i32_316 : i32
    scf.if %775 {
      %c0_317 = arith.constant 0 : index
      %c0_318 = arith.constant 0 : index
      %776 = vector.load %arg15[%c0_317, %c0_318] : memref<4x128xf32, #tpu.memory_space<vmem>>, vector<4x128xf32>
      %c0_319 = arith.constant 0 : index
      %c0_320 = arith.constant 0 : index
      %777 = vector.load %arg9[%c0_319, %c0_320] : memref<4x128xf32, #tpu.memory_space<vmem>>, vector<4x128xf32>
      tpu.vector_store %arg9[%c0_319, %c0_320], %776 {strides = array<i32>} : memref<4x128xf32, #tpu.memory_space<vmem>>, vector<4x128xf32>,
      %c0_321 = arith.constant 0 : index
      %c0_322 = arith.constant 0 : index
      %778 = vector.load %arg16[%c0_321, %c0_322] : memref<4x128xf32, #tpu.memory_space<vmem>>, vector<4x128xf32>
      %c0_323 = arith.constant 0 : index
      %c0_324 = arith.constant 0 : index
      %779 = vector.load %arg6[%c0_323, %c0_324] : memref<128x256xf32, #tpu.memory_space<vmem>>, vector<128x256xf32>
      %cst_325 = arith.constant dense<0.000000e+00> : vector<4x256xf32>
      %780 = tpu.matmul %778, %779, %cst_325 {dimension_numbers = #tpu.dot_dimension_numbers<[1], [0], [0], [1], [0, 0, 1, 1], [], []>} : vector<4x128xf32>, vector<128x256xf32>, vector<4x256xf32> -> vector<4x256xf32>
      %c0_326 = arith.constant 0 : index
      %c0_327 = arith.constant 0 : index
      %781 = vector.load %arg7[%c0_326, %c0_327] : memref<1x256xf32, #tpu.memory_space<vmem>>, vector<1x256xf32>
      %782 = vector.broadcast %781 : vector<1x256xf32> to vector<4x256xf32>
      %783 = arith.addf %780, %782 : vector<4x256xf32>
      %784 = math.tanh %783 : vector<4x256xf32>
      %785 = vector.extract_strided_slice %784 {offsets = [0, 0], sizes = [4, 128], strides = [1, 1]} : vector<4x256xf32> to vector<4x128xf32>
      %c0_328 = arith.constant 0 : index
      %c0_329 = arith.constant 0 : index
      %786 = vector.load %arg10[%c0_328, %c0_329] : memref<4x128xf32, #tpu.memory_space<vmem>>, vector<4x128xf32>
      tpu.vector_store %arg10[%c0_328, %c0_329], %785 {strides = array<i32>} : memref<4x128xf32, #tpu.memory_space<vmem>>, vector<4x128xf32>,
      %787 = vector.extract_strided_slice %784 {offsets = [0, 128], sizes = [4, 128], strides = [1, 1]} : vector<4x256xf32> to vector<4x128xf32>
      %c0_330 = arith.constant 0 : index
      %c0_331 = arith.constant 0 : index
      %788 = vector.load %arg11[%c0_330, %c0_331] : memref<4x128xf32, #tpu.memory_space<vmem>>, vector<4x128xf32>
      tpu.vector_store %arg11[%c0_330, %c0_331], %787 {strides = array<i32>} : memref<4x128xf32, #tpu.memory_space<vmem>>, vector<4x128xf32>,
    } else {
    }
    return
  }
  func.func @transform_0(%arg0: i32) -> (i32, i32, i32) {
    %c0_i32 = arith.constant 0 : i32
    %c0_i32_0 = arith.constant 0 : i32
    %c0_i32_1 = arith.constant 0 : i32
    return %arg0, %c0_i32, %c0_i32_0 : i32, i32, i32
  }
  func.func @transform_1(%arg0: i32) -> (i32, i32) {
    %c0_i32 = arith.constant 0 : i32
    %c0_i32_0 = arith.constant 0 : i32
    %c0_i32_1 = arith.constant 0 : i32
    return %c0_i32, %c0_i32_0 : i32, i32
  }
  func.func @transform_2(%arg0: i32) -> (i32, i32) {
    %c0_i32 = arith.constant 0 : i32
    %c0_i32_0 = arith.constant 0 : i32
    %c0_i32_1 = arith.constant 0 : i32
    return %c0_i32, %c0_i32_0 : i32, i32
  }
  func.func @transform_3(%arg0: i32) -> (i32, i32) {
    %c0_i32 = arith.constant 0 : i32
    %c0_i32_0 = arith.constant 0 : i32
    %c0_i32_1 = arith.constant 0 : i32
    return %c0_i32, %c0_i32_0 : i32, i32
  }
  func.func @transform_4(%arg0: i32) -> (i32, i32) {
    %c0_i32 = arith.constant 0 : i32
    %c0_i32_0 = arith.constant 0 : i32
    %c0_i32_1 = arith.constant 0 : i32
    return %c0_i32, %c0_i32_0 : i32, i32
  }
  func.func @transform_5(%arg0: i32) -> (i32, i32) {
    %c0_i32 = arith.constant 0 : i32
    %c0_i32_0 = arith.constant 0 : i32
    %c0_i32_1 = arith.constant 0 : i32
    return %c0_i32, %c0_i32_0 : i32, i32
  }
  func.func @transform_6(%arg0: i32) -> (i32, i32) {
    %c0_i32 = arith.constant 0 : i32
    %c0_i32_0 = arith.constant 0 : i32
    %c0_i32_1 = arith.constant 0 : i32
    return %c0_i32, %c0_i32_0 : i32, i32
  }
  func.func @transform_7(%arg0: i32) -> (i32, i32, i32) {
    %c0_i32 = arith.constant 0 : i32
    %c0_i32_0 = arith.constant 0 : i32
    %c0_i32_1 = arith.constant 0 : i32
    return %arg0, %c0_i32, %c0_i32_0 : i32, i32, i32
  }
  func.func @transform_8(%arg0: i32) -> (i32, i32) {
    %c0_i32 = arith.constant 0 : i32
    %c0_i32_0 = arith.constant 0 : i32
    %c0_i32_1 = arith.constant 0 : i32
    return %c0_i32, %c0_i32_0 : i32, i32
  }
  func.func @transform_9(%arg0: i32) -> (i32, i32) {
    %c0_i32 = arith.constant 0 : i32
    %c0_i32_0 = arith.constant 0 : i32
    %c0_i32_1 = arith.constant 0 : i32
    return %c0_i32, %c0_i32_0 : i32, i32
  }
  func.func @transform_10(%arg0: i32) -> (i32, i32) {
    %c0_i32 = arith.constant 0 : i32
    %c0_i32_0 = arith.constant 0 : i32
    %c0_i32_1 = arith.constant 0 : i32
    return %c0_i32, %c0_i32_0 : i32, i32
  }
}

</mosaic_0001>

<llo_original>
// kernel: lang_vision_encoder_forward.1
$region0: #{lang_vision_encoder_forward.1}
  #allocation0 [shape = 'u32[]', space=smem, size = 0x4, offset = 0x4, fixed_abs, tag = 'smem constant byte address 0x4 - core index']
  #allocation1 [shape = 'u32[144,128]{1,0:T(1,128)}', space=vmem, size = 0x12000, scoped, tag = 'internal scratch']
  #allocation2 [shape = 'f32[4,128]{1,0:T(4,128)}', space=vmem, size = 0x800, scoped, tag = 'scratch operand']
  #allocation3 [shape = 'f32[4,128]{1,0:T(4,128)}', space=vmem, size = 0x800, scoped, tag = 'scratch operand']
  #allocation4 [shape = 'f32[4,128]{1,0:T(4,128)}', space=vmem, size = 0x800, scoped, tag = 'scratch operand']
  #allocation5 [shape = 'f32[4,128]{1,0:T(4,128)}', space=vmem, size = 0x800, scoped, tag = 'scratch operand']
  #allocation6 [shape = 'f32[4,128]{1,0:T(4,128)}', space=vmem, size = 0x800, scoped, tag = 'scratch operand']
  %s0 = inlined_call_operand.vmem [shape: f32[8,4,512], index: 0, kind: input, shape index: {}]
  %s1 = inlined_call_operand.vmem [shape: s32[4,1], index: 1, kind: input, shape index: {}]
  %s2 = inlined_call_operand.vmem [shape: f32[128,512], index: 2, kind: input, shape index: {}]
  %s3 = inlined_call_operand.vmem [shape: f32[256,512], index: 3, kind: input, shape index: {}]
  %s4 = inlined_call_operand.vmem [shape: f32[1,512], index: 4, kind: input, shape index: {}]
  %s5 = inlined_call_operand.vmem [shape: f32[128,256], index: 5, kind: input, shape index: {}]
  %s6 = inlined_call_operand.vmem [shape: f32[1,256], index: 6, kind: input, shape index: {}]
  %s7 = inlined_call_operand.vmem [shape: f32[8,4,128], index: 7, kind: output, shape index: {0}]
  %s8 = inlined_call_operand.hbm [shape: f32[4,128], index: 8, kind: output, shape index: {1}]
  %s9 = inlined_call_operand.hbm [shape: f32[4,128], index: 9, kind: output, shape index: {2}]
  %s10 = inlined_call_operand.hbm [shape: f32[4,128], index: 10, kind: output, shape index: {3}]
  %11 = xla_tuple %s7, %s8, %s9, %s10
  %s12 = sld [smem:[#allocation0]]
  $region70: #{lang_vision_encoder_forward.1} parent=0
    _
  %s14 = ssub.s32 1, %s12
  %s15 = scalar_select 0, %s14, %s12
  $region1: #{lang_vision_encoder_forward.1} parent=0
    #allocation7 [shape = 'u8[2048]{0}', space=vmem, size = 0x800, scoped, tag = 'output window, operand 1, single buffered']
    #allocation8 [shape = 's32[1]{0}', space=sflag, size = 0x4, scoped, tag = 'scoped memory for lang_vision_encoder_forward.1']
    #allocation9 [shape = 'u8[2048]{0}', space=vmem, size = 0x800, scoped, tag = 'output window, operand 2, single buffered']
    #allocation10 [shape = 's32[1]{0}', space=sflag, size = 0x4, scoped, tag = 'scoped memory for lang_vision_encoder_forward.1']
    #allocation11 [shape = 'u8[2048]{0}', space=vmem, size = 0x800, scoped, tag = 'output window, operand 3, single buffered']
    %16 = vsyncpa [#allocation8], 0
    %17 = vsyncpa [#allocation10], 0
    // Predicated region
    $region2: #{lang_vision_encoder_forward.1} parent=1 // pred_check
      _
    $region3: #{lang_vision_encoder_forward.1} parent=1 // pred_check_branch
      %19 = sbr.rel (0) target = $region5
    $region4: #{lang_vision_encoder_forward.1} parent=1 // pred_region
      _
    $region5: #{lang_vision_encoder_forward.1} parent=1 // pred_fallthru
      _
    // Predicated region
    $region6: #{lang_vision_encoder_forward.1} parent=1 // pred_check
      _
    $region7: #{lang_vision_encoder_forward.1} parent=1 // pred_check_branch
      %21 = sbr.rel (0) target = $region9
    $region8: #{lang_vision_encoder_forward.1} parent=1 // pred_region
      _
    $region9: #{lang_vision_encoder_forward.1} parent=1 // pred_fallthru
      _
    // Predicated region
    $region10: #{lang_vision_encoder_forward.1} parent=1 // pred_check
      _
    $region11: #{lang_vision_encoder_forward.1} parent=1 // pred_check_branch
      %23 = sbr.rel (0) target = $region13
    $region12: #{lang_vision_encoder_forward.1} parent=1 // pred_region
      _
    $region13: #{lang_vision_encoder_forward.1} parent=1 // pred_fallthru
      _
    // Predicated region
    $region14: #{lang_vision_encoder_forward.1} parent=1 // pred_check
      _
    $region15: #{lang_vision_encoder_forward.1} parent=1 // pred_check_branch
      %25 = sbr.rel (0) target = $region17
    $region16: #{lang_vision_encoder_forward.1} parent=1 // pred_region
      _
    $region17: #{lang_vision_encoder_forward.1} parent=1 // pred_fallthru
      _
    // Predicated region
    $region18: #{lang_vision_encoder_forward.1} parent=1 // pred_check
      _
    $region19: #{lang_vision_encoder_forward.1} parent=1 // pred_check_branch
      %27 = sbr.rel (0) target = $region21
    $region20: #{lang_vision_encoder_forward.1} parent=1 // pred_region
      _
    $region21: #{lang_vision_encoder_forward.1} parent=1 // pred_fallthru
      _
    // Predicated region
    $region22: #{lang_vision_encoder_forward.1} parent=1 // pred_check
      _
    $region23: #{lang_vision_encoder_forward.1} parent=1 // pred_check_branch
      %29 = sbr.rel (0) target = $region25
    $region24: #{lang_vision_encoder_forward.1} parent=1 // pred_region
      _
    $region25: #{lang_vision_encoder_forward.1} parent=1 // pred_fallthru
      _
    // Predicated region
    $region26: #{lang_vision_encoder_forward.1} parent=1 // pred_check
      _
    $region27: #{lang_vision_encoder_forward.1} parent=1 // pred_check_branch
      %31 = sbr.rel (0) target = $region29
    $region28: #{lang_vision_encoder_forward.1} parent=1 // pred_region
      _
    $region29: #{lang_vision_encoder_forward.1} parent=1 // pred_fallthru
      _
    %p32 = scmp.eq.s32.totalorder 0, 0
    // Predicated region
    $region30: #{lang_vision_encoder_forward.1} parent=1 // pred_check
      %p33 = pneg %p32
    $region31: #{lang_vision_encoder_forward.1} parent=1 // pred_check_branch
      %35 = sbr.rel (%p33) target = $region33
    $region32: #{lang_vision_encoder_forward.1} parent=1 // pred_region
      %36 = vst [vmem:[#allocation2] sm:$0xf] 0.0
      %37 = vst [vmem:[#allocation3] sm:$0xf] 0.0
      %38 = vst [vmem:[#allocation4] sm:$0xf] 0.0
      %39 = vst [vmem:[#allocation5] sm:$0xf] 0.0
      %40 = vst [vmem:[#allocation6] sm:$0xf] -inf
    $region33: #{lang_vision_encoder_forward.1} parent=1 // pred_fallthru
      _
    %v41 = vld [vmem:[%s1] sm:$0xf]
    %s42 = smul.u32 0, 8
    %v43 = vstv %s42
    %vm44 = vcmp.lt.s32.totalorder %v43, %v41
    %v45 = vld [vmem:[#allocation2] sm:$0xf]
    %v46 = vld [vmem:[#allocation3] sm:$0xf]
    %v47 = vld [vmem:[%s0] sm:$0xff]
    %v48 = vld [vmem:[%s0 + $0x8] sm:$0xff]
    %v49 = vld [vmem:[%s2] sm:$0xff]
    %v50 = vld [vmem:[%s2 + $0x8] sm:$0xff]
    %v51 = vld [vmem:[%s2 + $0x10] sm:$0xff]
    %v52 = vld [vmem:[%s2 + $0x18] sm:$0xff]
    %v53 = vld [vmem:[%s2 + $0x20] sm:$0xff]
    %v54 = vld [vmem:[%s2 + $0x28] sm:$0xff]
    %v55 = vld [vmem:[%s2 + $0x30] sm:$0xff]
    %v56 = vld [vmem:[%s2 + $0x38] sm:$0xff]
    %v57 = vld [vmem:[%s2 + $0x40] sm:$0xff]
    %v58 = vld [vmem:[%s2 + $0x48] sm:$0xff]
    %v59 = vld [vmem:[%s2 + $0x50] sm:$0xff]
    %v60 = vld [vmem:[%s2 + $0x58] sm:$0xff]
    %v61 = vld [vmem:[%s2 + $0x60] sm:$0xff]
    %v62 = vld [vmem:[%s2 + $0x68] sm:$0xff]
    %v63 = vld [vmem:[%s2 + $0x70] sm:$0xff]
    %v64 = vld [vmem:[%s2 + $0x78] sm:$0xff]
    %v65 = vld [vmem:[%s2 + $0x80] sm:$0xff]
    %v66 = vld [vmem:[%s2 + $0x88] sm:$0xff]
    %v67 = vld [vmem:[%s2 + $0x90] sm:$0xff]
    %v68 = vld [vmem:[%s2 + $0x98] sm:$0xff]
    %v69 = vld [vmem:[%s2 + $0xa0] sm:$0xff]
    %v70 = vld [vmem:[%s2 + $0xa8] sm:$0xff]
    %v71 = vld [vmem:[%s2 + $0xb0] sm:$0xff]
    %v72 = vld [vmem:[%s2 + $0xb8] sm:$0xff]
    %v73 = vld [vmem:[%s2 + $0xc0] sm:$0xff]
    %v74 = vld [vmem:[%s2 + $0xc8] sm:$0xff]
    %v75 = vld [vmem:[%s2 + $0xd0] sm:$0xff]
    %v76 = vld [vmem:[%s2 + $0xd8] sm:$0xff]
    %v77 = vld [vmem:[%s2 + $0xe0] sm:$0xff]
    %v78 = vld [vmem:[%s2 + $0xe8] sm:$0xff]
    %v79 = vld [vmem:[%s2 + $0xf0] sm:$0xff]
    %v80 = vld [vmem:[%s2 + $0xf8] sm:$0xff]
    %v81 = vld [vmem:[%s2 + $0x100] sm:$0xff]
    %v82 = vld [vmem:[%s2 + $0x108] sm:$0xff]
    %v83 = vld [vmem:[%s2 + $0x110] sm:$0xff]
    %v84 = vld [vmem:[%s2 + $0x118] sm:$0xff]
    %v85 = vld [vmem:[%s2 + $0x120] sm:$0xff]
    %v86 = vld [vmem:[%s2 + $0x128] sm:$0xff]
    %v87 = vld [vmem:[%s2 + $0x130] sm:$0xff]
    %v88 = vld [vmem:[%s2 + $0x138] sm:$0xff]
    %v89 = vld [vmem:[%s2 + $0x140] sm:$0xff]
    %v90 = vld [vmem:[%s2 + $0x148] sm:$0xff]
    %v91 = vld [vmem:[%s2 + $0x150] sm:$0xff]
    %v92 = vld [vmem:[%s2 + $0x158] sm:$0xff]
    %v93 = vld [vmem:[%s2 + $0x160] sm:$0xff]
    %v94 = vld [vmem:[%s2 + $0x168] sm:$0xff]
    %v95 = vld [vmem:[%s2 + $0x170] sm:$0xff]
    %v96 = vld [vmem:[%s2 + $0x178] sm:$0xff]
    %v97 = vld [vmem:[%s2 + $0x180] sm:$0xff]
    %v98 = vld [vmem:[%s2 + $0x188] sm:$0xff]
    %v99 = vld [vmem:[%s2 + $0x190] sm:$0xff]
    %v100 = vld [vmem:[%s2 + $0x198] sm:$0xff]
    %v101 = vld [vmem:[%s2 + $0x1a0] sm:$0xff]
    %v102 = vld [vmem:[%s2 + $0x1a8] sm:$0xff]
    %v103 = vld [vmem:[%s2 + $0x1b0] sm:$0xff]
    %v104 = vld [vmem:[%s2 + $0x1b8] sm:$0xff]
    %v105 = vld [vmem:[%s2 + $0x1c0] sm:$0xff]
    %v106 = vld [vmem:[%s2 + $0x1c8] sm:$0xff]
    %v107 = vld [vmem:[%s2 + $0x1d0] sm:$0xff]
    %v108 = vld [vmem:[%s2 + $0x1d8] sm:$0xff]
    %v109 = vld [vmem:[%s2 + $0x1e0] sm:$0xff]
    %v110 = vld [vmem:[%s2 + $0x1e8] sm:$0xff]
    %v111 = vld [vmem:[%s2 + $0x1f0] sm:$0xff]
    %v112 = vld [vmem:[%s2 + $0x1f8] sm:$0xff]
    %113 = vmatprep.subr.mxu0 %v50
    %114 = vmatpush1.msra.mxu0 %v49
    %115 = vmatprep.subr.mxu0 %v54
    %116 = vmatpush1.msra.mxu0 %v53
    %117 = vmatprep.subr.mxu0 %v58
    %118 = vmatpush1.msra.mxu0 %v57
    %119 = vmatprep.subr.mxu0 %v62
    %120 = vmatpush1.msra.mxu0 %v61
    %121 = vmatprep.subr.mxu0 %v66
    %122 = vmatpush1.msra.mxu0 %v65
    %123 = vmatprep.subr.mxu0 %v70
    %124 = vmatpush1.msra.mxu0 %v69
    %125 = vmatprep.subr.mxu0 %v74
    %126 = vmatpush1.msra.mxu0 %v73
    %127 = vmatprep.subr.mxu0 %v78
    %128 = vmatpush1.msra.mxu0 %v77
    %129 = vmatprep.subr.mxu0 %v82
    %130 = vmatpush1.msra.mxu0 %v81
    %131 = vmatprep.subr.mxu0 %v86
    %132 = vmatpush1.msra.mxu0 %v85
    %133 = vmatprep.subr.mxu0 %v90
    %134 = vmatpush1.msra.mxu0 %v89
    %135 = vmatprep.subr.mxu0 %v94
    %136 = vmatpush1.msra.mxu0 %v93
    %137 = vmatprep.subr.mxu0 %v98
    %138 = vmatpush1.msra.mxu0 %v97
    %139 = vmatprep.subr.mxu0 %v102
    %140 = vmatpush1.msra.mxu0 %v101
    %141 = vmatprep.subr.mxu0 %v106
    %142 = vmatpush1.msra.mxu0 %v105
    %143 = vmatprep.subr.mxu0 %v110
    %144 = vmatpush1.msra.mxu0 %v109
    %145 = vmatprep.subr.mxu0 0.0
    %146 = vmatpush1.msra.mxu0 0.0
    %147 = vmatprep.subr.mxu0 0.0
    %148 = vmatpush1.msra.mxu0 0.0
    %149 = vmatprep.subr.mxu0 0.0
    %150 = vmatpush1.msra.mxu0 0.0
    %151 = vmatprep.subr.mxu0 0.0
    %152 = vmatpush1.msra.mxu0 0.0
    %153 = vmatprep.subr.mxu0 0.0
    %154 = vmatpush1.msra.mxu0 0.0
    %155 = vmatprep.subr.mxu0 0.0
    %156 = vmatpush1.msra.mxu0 0.0
    %157 = vmatprep.subr.mxu0 0.0
    %158 = vmatpush1.msra.mxu0 0.0
    %159 = vmatprep.subr.mxu0 0.0
    %160 = vmatpush1.msra.mxu0 0.0
    %161 = vmatprep.subr.mxu0 0.0
    %162 = vmatpush1.msra.mxu0 0.0
    %163 = vmatprep.subr.mxu0 0.0
    %164 = vmatpush1.msra.mxu0 0.0
    %165 = vmatprep.subr.mxu0 0.0
    %166 = vmatpush1.msra.mxu0 0.0
    %167 = vmatprep.subr.mxu0 0.0
    %168 = vmatpush1.msra.mxu0 0.0
    %169 = vmatprep.subr.mxu0 0.0
    %170 = vmatpush1.msra.mxu0 0.0
    %171 = vmatprep.subr.mxu0 0.0
    %172 = vmatpush1.msra.mxu0 0.0
    %173 = vmatprep.subr.mxu0 0.0
    %174 = vmatpush1.msra.mxu0 0.0
    %175 = vmatprep.subr.mxu0 0.0
    %176 = vmatpush1.msra.mxu0 0.0
    %177 = vmatprep.mubr.f32.mxu0 0.0
    %178 = vmatmul.mubr.f32.gmra.mrb[0].mxu0 %v45
    %v179 = vpop.f32.mrb[0].mxu0
    %v180 = vadd.f32 0.0, %v179
    %v181 = vpop.f32.mrb[0].mxu0
    %v182 = vadd.f32 0.0, %v181
    %183 = vdwg.mxu0
    %184 = vmatprep.subr.mxu0 %v52
    %185 = vmatpush1.msra.mxu0 %v51
    %186 = vmatprep.subr.mxu0 %v56
    %187 = vmatpush1.msra.mxu0 %v55
    %188 = vmatprep.subr.mxu0 %v60
    %189 = vmatpush1.msra.mxu0 %v59
    %190 = vmatprep.subr.mxu0 %v64
    %191 = vmatpush1.msra.mxu0 %v63
    %192 = vmatprep.subr.mxu0 %v68
    %193 = vmatpush1.msra.mxu0 %v67
    %194 = vmatprep.subr.mxu0 %v72
    %195 = vmatpush1.msra.mxu0 %v71
    %196 = vmatprep.subr.mxu0 %v76
    %197 = vmatpush1.msra.mxu0 %v75
    %198 = vmatprep.subr.mxu0 %v80
    %199 = vmatpush1.msra.mxu0 %v79
    %200 = vmatprep.subr.mxu0 %v84
    %201 = vmatpush1.msra.mxu0 %v83
    %202 = vmatprep.subr.mxu0 %v88
    %203 = vmatpush1.msra.mxu0 %v87
    %204 = vmatprep.subr.mxu0 %v92
    %205 = vmatpush1.msra.mxu0 %v91
    %206 = vmatprep.subr.mxu0 %v96
    %207 = vmatpush1.msra.mxu0 %v95
    %208 = vmatprep.subr.mxu0 %v100
    %209 = vmatpush1.msra.mxu0 %v99
    %210 = vmatprep.subr.mxu0 %v104
    %211 = vmatpush1.msra.mxu0 %v103
    %212 = vmatprep.subr.mxu0 %v108
    %213 = vmatpush1.msra.mxu0 %v107
    %214 = vmatprep.subr.mxu0 %v112
    %215 = vmatpush1.msra.mxu0 %v111
    %216 = vmatprep.subr.mxu0 0.0
    %217 = vmatpush1.msra.mxu0 0.0
    %218 = vmatprep.subr.mxu0 0.0
    %219 = vmatpush1.msra.mxu0 0.0
    %220 = vmatprep.subr.mxu0 0.0
    %221 = vmatpush1.msra.mxu0 0.0
    %222 = vmatprep.subr.mxu0 0.0
    %223 = vmatpush1.msra.mxu0 0.0
    %224 = vmatprep.subr.mxu0 0.0
    %225 = vmatpush1.msra.mxu0 0.0
    %226 = vmatprep.subr.mxu0 0.0
    %227 = vmatpush1.msra.mxu0 0.0
    %228 = vmatprep.subr.mxu0 0.0
    %229 = vmatpush1.msra.mxu0 0.0
    %230 = vmatprep.subr.mxu0 0.0
    %231 = vmatpush1.msra.mxu0 0.0
    %232 = vmatprep.subr.mxu0 0.0
    %233 = vmatpush1.msra.mxu0 0.0
    %234 = vmatprep.subr.mxu0 0.0
    %235 = vmatpush1.msra.mxu0 0.0
    %236 = vmatprep.subr.mxu0 0.0
    %237 = vmatpush1.msra.mxu0 0.0
    %238 = vmatprep.subr.mxu0 0.0
    %239 = vmatpush1.msra.mxu0 0.0
    %240 = vmatprep.subr.mxu0 0.0
    %241 = vmatpush1.msra.mxu0 0.0
    %242 = vmatprep.subr.mxu0 0.0
    %243 = vmatpush1.msra.mxu0 0.0
    %244 = vmatprep.subr.mxu0 0.0
    %245 = vmatpush1.msra.mxu0 0.0
    %246 = vmatprep.subr.mxu0 0.0
    %247 = vmatpush1.msra.mxu0 0.0
    %248 = vmatprep.mubr.f32.mxu0 0.0
    %249 = vmatmul.mubr.f32.gmra.mrb[0].mxu0 %v45
    %v250 = vpop.f32.mrb[0].mxu0
    %v251 = vadd.f32 0.0, %v250
    %v252 = vpop.f32.mrb[0].mxu0
    %v253 = vadd.f32 0.0, %v252
    %254 = vdwg.mxu0
    %v259 = vcombine.low %v180, %v182
    %v260 = vcombine.low %v251, %v253
    %v263 = vadd.f32 %v47, %v259
    %v264 = vadd.f32 %v48, %v260
    %v265 = vxor.u32 %v263, 2147483648
    %v266 = vmul.f32 %v265, 1.442695
    %v267 = vpow.pop %v266
    %v268 = vadd.f32 %v267, 1.0
    %v269 = vrcp.pop %v268
    %v270 = vmul.f32 1.0, %v269
    %v272 = vrot.slane %v263, 4
    %v274 = vxor.u32 %v272, 2147483648
    %v275 = vmul.f32 %v274, 1.442695
    %v276 = vpow.pop %v275
    %v277 = vadd.f32 %v276, 1.0
    %v278 = vrcp.pop %v277
    %v279 = vmul.f32 1.0, %v278
    %v280 = vtanh.pop %v264
    %v282 = vrot.slane %v264, 4
    %v284 = vxor.u32 %v282, 2147483648
    %v285 = vmul.f32 %v284, 1.442695
    %v286 = vpow.pop %v285
    %v287 = vadd.f32 %v286, 1.0
    %v288 = vrcp.pop %v287
    %v289 = vmul.f32 1.0, %v288
    %v290 = vmul.f32 %v279, %v46
    %v291 = vmul.f32 %v270, %v280
    %v292 = vadd.f32 %v290, %v291
    %v293 = vtanh.pop %v292
    %v294 = vmul.f32 %v289, %v293
    %v295 = vsel %vm44, 1, 0
    %296 = vset.pattern.permute.xlu0 0
    %297 = vperm.xlu0 %296, %v295
    %v298 = vpop.permute.xlu0 %297
    %vm299 = vcmp.eq.s32.totalorder %v298, 1
    %v300 = vsel %vm299, %v292, %v46
    %v301 = vsel %vm299, %v294, %v45
    %302 = vst [vmem:[#allocation3] sm:$0xf] %v300
    %303 = vst [vmem:[#allocation2] sm:$0xf] %v301
    %v304 = vld [vmem:[#allocation4] sm:$0xf]
    %v305 = vld [vmem:[#allocation5] sm:$0xf]
    %v306 = vld [vmem:[%s3] sm:$0xff]
    %v307 = vld [vmem:[%s3 + $0x8] sm:$0xff]
    %v308 = vld [vmem:[%s3 + $0x10] sm:$0xff]
    %v309 = vld [vmem:[%s3 + $0x18] sm:$0xff]
    %v310 = vld [vmem:[%s3 + $0x20] sm:$0xff]
    %v311 = vld [vmem:[%s3 + $0x28] sm:$0xff]
    %v312 = vld [vmem:[%s3 + $0x30] sm:$0xff]
    %v313 = vld [vmem:[%s3 + $0x38] sm:$0xff]
    %v314 = vld [vmem:[%s3 + $0x40] sm:$0xff]
    %v315 = vld [vmem:[%s3 + $0x48] sm:$0xff]
    %v316 = vld [vmem:[%s3 + $0x50] sm:$0xff]
    %v317 = vld [vmem:[%s3 + $0x58] sm:$0xff]
    %v318 = vld [vmem:[%s3 + $0x60] sm:$0xff]
    %v319 = vld [vmem:[%s3 + $0x68] sm:$0xff]
    %v320 = vld [vmem:[%s3 + $0x70] sm:$0xff]
    %v321 = vld [vmem:[%s3 + $0x78] sm:$0xff]
    %v322 = vld [vmem:[%s3 + $0x80] sm:$0xff]
    %v323 = vld [vmem:[%s3 + $0x88] sm:$0xff]
    %v324 = vld [vmem:[%s3 + $0x90] sm:$0xff]
    %v325 = vld [vmem:[%s3 + $0x98] sm:$0xff]
    %v326 = vld [vmem:[%s3 + $0xa0] sm:$0xff]
    %v327 = vld [vmem:[%s3 + $0xa8] sm:$0xff]
    %v328 = vld [vmem:[%s3 + $0xb0] sm:$0xff]
    %v329 = vld [vmem:[%s3 + $0xb8] sm:$0xff]
    %v330 = vld [vmem:[%s3 + $0xc0] sm:$0xff]
    %v331 = vld [vmem:[%s3 + $0xc8] sm:$0xff]
    %v332 = vld [vmem:[%s3 + $0xd0] sm:$0xff]
    %v333 = vld [vmem:[%s3 + $0xd8] sm:$0xff]
    %v334 = vld [vmem:[%s3 + $0xe0] sm:$0xff]
    %v335 = vld [vmem:[%s3 + $0xe8] sm:$0xff]
    %v336 = vld [vmem:[%s3 + $0xf0] sm:$0xff]
    %v337 = vld [vmem:[%s3 + $0xf8] sm:$0xff]
    %v338 = vld [vmem:[%s3 + $0x100] sm:$0xff]
    %v339 = vld [vmem:[%s3 + $0x108] sm:$0xff]
    %v340 = vld [vmem:[%s3 + $0x110] sm:$0xff]
    %v341 = vld [vmem:[%s3 + $0x118] sm:$0xff]
    %v342 = vld [vmem:[%s3 + $0x120] sm:$0xff]
    %v343 = vld [vmem:[%s3 + $0x128] sm:$0xff]
    %v344 = vld [vmem:[%s3 + $0x130] sm:$0xff]
    %v345 = vld [vmem:[%s3 + $0x138] sm:$0xff]
    %v346 = vld [vmem:[%s3 + $0x140] sm:$0xff]
    %v347 = vld [vmem:[%s3 + $0x148] sm:$0xff]
    %v348 = vld [vmem:[%s3 + $0x150] sm:$0xff]
    %v349 = vld [vmem:[%s3 + $0x158] sm:$0xff]
    %v350 = vld [vmem:[%s3 + $0x160] sm:$0xff]
    %v351 = vld [vmem:[%s3 + $0x168] sm:$0xff]
    %v352 = vld [vmem:[%s3 + $0x170] sm:$0xff]
    %v353 = vld [vmem:[%s3 + $0x178] sm:$0xff]
    %v354 = vld [vmem:[%s3 + $0x180] sm:$0xff]
    %v355 = vld [vmem:[%s3 + $0x188] sm:$0xff]
    %v356 = vld [vmem:[%s3 + $0x190] sm:$0xff]
    %v357 = vld [vmem:[%s3 + $0x198] sm:$0xff]
    %v358 = vld [vmem:[%s3 + $0x1a0] sm:$0xff]
    %v359 = vld [vmem:[%s3 + $0x1a8] sm:$0xff]
    %v360 = vld [vmem:[%s3 + $0x1b0] sm:$0xff]
    %v361 = vld [vmem:[%s3 + $0x1b8] sm:$0xff]
    %v362 = vld [vmem:[%s3 + $0x1c0] sm:$0xff]
    %v363 = vld [vmem:[%s3 + $0x1c8] sm:$0xff]
    %v364 = vld [vmem:[%s3 + $0x1d0] sm:$0xff]
    %v365 = vld [vmem:[%s3 + $0x1d8] sm:$0xff]
    %v366 = vld [vmem:[%s3 + $0x1e0] sm:$0xff]
    %v367 = vld [vmem:[%s3 + $0x1e8] sm:$0xff]
    %v368 = vld [vmem:[%s3 + $0x1f0] sm:$0xff]
    %v369 = vld [vmem:[%s3 + $0x1f8] sm:$0xff]
    %v370 = vld [vmem:[%s3 + $0x200] sm:$0xff]
    %v371 = vld [vmem:[%s3 + $0x208] sm:$0xff]
    %v372 = vld [vmem:[%s3 + $0x210] sm:$0xff]
    %v373 = vld [vmem:[%s3 + $0x218] sm:$0xff]
    %v374 = vld [vmem:[%s3 + $0x220] sm:$0xff]
    %v375 = vld [vmem:[%s3 + $0x228] sm:$0xff]
    %v376 = vld [vmem:[%s3 + $0x230] sm:$0xff]
    %v377 = vld [vmem:[%s3 + $0x238] sm:$0xff]
    %v378 = vld [vmem:[%s3 + $0x240] sm:$0xff]
    %v379 = vld [vmem:[%s3 + $0x248] sm:$0xff]
    %v380 = vld [vmem:[%s3 + $0x250] sm:$0xff]
    %v381 = vld [vmem:[%s3 + $0x258] sm:$0xff]
    %v382 = vld [vmem:[%s3 + $0x260] sm:$0xff]
    %v383 = vld [vmem:[%s3 + $0x268] sm:$0xff]
    %v384 = vld [vmem:[%s3 + $0x270] sm:$0xff]
    %v385 = vld [vmem:[%s3 + $0x278] sm:$0xff]
    %v386 = vld [vmem:[%s3 + $0x280] sm:$0xff]
    %v387 = vld [vmem:[%s3 + $0x288] sm:$0xff]
    %v388 = vld [vmem:[%s3 + $0x290] sm:$0xff]
    %v389 = vld [vmem:[%s3 + $0x298] sm:$0xff]
    %v390 = vld [vmem:[%s3 + $0x2a0] sm:$0xff]
    %v391 = vld [vmem:[%s3 + $0x2a8] sm:$0xff]
    %v392 = vld [vmem:[%s3 + $0x2b0] sm:$0xff]
    %v393 = vld [vmem:[%s3 + $0x2b8] sm:$0xff]
    %v394 = vld [vmem:[%s3 + $0x2c0] sm:$0xff]
    %v395 = vld [vmem:[%s3 + $0x2c8] sm:$0xff]
    %v396 = vld [vmem:[%s3 + $0x2d0] sm:$0xff]
    %v397 = vld [vmem:[%s3 + $0x2d8] sm:$0xff]
    %v398 = vld [vmem:[%s3 + $0x2e0] sm:$0xff]
    %v399 = vld [vmem:[%s3 + $0x2e8] sm:$0xff]
    %v400 = vld [vmem:[%s3 + $0x2f0] sm:$0xff]
    %v401 = vld [vmem:[%s3 + $0x2f8] sm:$0xff]
    %v402 = vld [vmem:[%s3 + $0x300] sm:$0xff]
    %v403 = vld [vmem:[%s3 + $0x308] sm:$0xff]
    %v404 = vld [vmem:[%s3 + $0x310] sm:$0xff]
    %v405 = vld [vmem:[%s3 + $0x318] sm:$0xff]
    %v406 = vld [vmem:[%s3 + $0x320] sm:$0xff]
    %v407 = vld [vmem:[%s3 + $0x328] sm:$0xff]
    %v408 = vld [vmem:[%s3 + $0x330] sm:$0xff]
    %v409 = vld [vmem:[%s3 + $0x338] sm:$0xff]
    %v410 = vld [vmem:[%s3 + $0x340] sm:$0xff]
    %v411 = vld [vmem:[%s3 + $0x348] sm:$0xff]
    %v412 = vld [vmem:[%s3 + $0x350] sm:$0xff]
    %v413 = vld [vmem:[%s3 + $0x358] sm:$0xff]
    %v414 = vld [vmem:[%s3 + $0x360] sm:$0xff]
    %v415 = vld [vmem:[%s3 + $0x368] sm:$0xff]
    %v416 = vld [vmem:[%s3 + $0x370] sm:$0xff]
    %v417 = vld [vmem:[%s3 + $0x378] sm:$0xff]
    %v418 = vld [vmem:[%s3 + $0x380] sm:$0xff]
    %v419 = vld [vmem:[%s3 + $0x388] sm:$0xff]
    %v420 = vld [vmem:[%s3 + $0x390] sm:$0xff]
    %v421 = vld [vmem:[%s3 + $0x398] sm:$0xff]
    %v422 = vld [vmem:[%s3 + $0x3a0] sm:$0xff]
    %v423 = vld [vmem:[%s3 + $0x3a8] sm:$0xff]
    %v424 = vld [vmem:[%s3 + $0x3b0] sm:$0xff]
    %v425 = vld [vmem:[%s3 + $0x3b8] sm:$0xff]
    %v426 = vld [vmem:[%s3 + $0x3c0] sm:$0xff]
    %v427 = vld [vmem:[%s3 + $0x3c8] sm:$0xff]
    %v428 = vld [vmem:[%s3 + $0x3d0] sm:$0xff]
    %v429 = vld [vmem:[%s3 + $0x3d8] sm:$0xff]
    %v430 = vld [vmem:[%s3 + $0x3e0] sm:$0xff]
    %v431 = vld [vmem:[%s3 + $0x3e8] sm:$0xff]
    %v432 = vld [vmem:[%s3 + $0x3f0] sm:$0xff]
    %v433 = vld [vmem:[%s3 + $0x3f8] sm:$0xff]
    %v434 = vld [vmem:[%s4] sm:$0xf]
    %v436 = vlaneseq
    %v437 = vshrl.u32 %v436, 7
    %v438 = vsub.s32 0, %v437
    %v439 = vrot.slane %v434, %v438
    %v440 = vlaneseq
    %v441 = vshrl.u32 %v440, 7
    %v442 = vsub.s32 1, %v441
    %v443 = vrot.slane %v434, %v442
    %v444 = vlaneseq
    %v445 = vshrl.u32 %v444, 7
    %v446 = vsub.s32 2, %v445
    %v447 = vrot.slane %v434, %v446
    %v448 = vlaneseq
    %v449 = vshrl.u32 %v448, 7
    %v450 = vsub.s32 3, %v449
    %v451 = vrot.slane %v434, %v450
    %456 = vmatprep.subr.mxu0 %v307
    %457 = vmatpush1.msra.mxu0 %v306
    %458 = vmatprep.subr.mxu0 %v311
    %459 = vmatpush1.msra.mxu0 %v310
    %460 = vmatprep.subr.mxu0 %v315
    %461 = vmatpush1.msra.mxu0 %v314
    %462 = vmatprep.subr.mxu0 %v319
    %463 = vmatpush1.msra.mxu0 %v318
    %464 = vmatprep.subr.mxu0 %v323
    %465 = vmatpush1.msra.mxu0 %v322
    %466 = vmatprep.subr.mxu0 %v327
    %467 = vmatpush1.msra.mxu0 %v326
    %468 = vmatprep.subr.mxu0 %v331
    %469 = vmatpush1.msra.mxu0 %v330
    %470 = vmatprep.subr.mxu0 %v335
    %471 = vmatpush1.msra.mxu0 %v334
    %472 = vmatprep.subr.mxu0 %v339
    %473 = vmatpush1.msra.mxu0 %v338
    %474 = vmatprep.subr.mxu0 %v343
    %475 = vmatpush1.msra.mxu0 %v342
    %476 = vmatprep.subr.mxu0 %v347
    %477 = vmatpush1.msra.mxu0 %v346
    %478 = vmatprep.subr.mxu0 %v351
    %479 = vmatpush1.msra.mxu0 %v350
    %480 = vmatprep.subr.mxu0 %v355
    %481 = vmatpush1.msra.mxu0 %v354
    %482 = vmatprep.subr.mxu0 %v359
    %483 = vmatpush1.msra.mxu0 %v358
    %484 = vmatprep.subr.mxu0 %v363
    %485 = vmatpush1.msra.mxu0 %v362
    %486 = vmatprep.subr.mxu0 %v367
    %487 = vmatpush1.msra.mxu0 %v366
    %488 = vmatprep.subr.mxu0 %v371
    %489 = vmatpush1.msra.mxu0 %v370
    %490 = vmatprep.subr.mxu0 %v375
    %491 = vmatpush1.msra.mxu0 %v374
    %492 = vmatprep.subr.mxu0 %v379
    %493 = vmatpush1.msra.mxu0 %v378
    %494 = vmatprep.subr.mxu0 %v383
    %495 = vmatpush1.msra.mxu0 %v382
    %496 = vmatprep.subr.mxu0 %v387
    %497 = vmatpush1.msra.mxu0 %v386
    %498 = vmatprep.subr.mxu0 %v391
    %499 = vmatpush1.msra.mxu0 %v390
    %500 = vmatprep.subr.mxu0 %v395
    %501 = vmatpush1.msra.mxu0 %v394
    %502 = vmatprep.subr.mxu0 %v399
    %503 = vmatpush1.msra.mxu0 %v398
    %504 = vmatprep.subr.mxu0 %v403
    %505 = vmatpush1.msra.mxu0 %v402
    %506 = vmatprep.subr.mxu0 %v407
    %507 = vmatpush1.msra.mxu0 %v406
    %508 = vmatprep.subr.mxu0 %v411
    %509 = vmatpush1.msra.mxu0 %v410
    %510 = vmatprep.subr.mxu0 %v415
    %511 = vmatpush1.msra.mxu0 %v414
    %512 = vmatprep.subr.mxu0 %v419
    %513 = vmatpush1.msra.mxu0 %v418
    %514 = vmatprep.subr.mxu0 %v423
    %515 = vmatpush1.msra.mxu0 %v422
    %516 = vmatprep.subr.mxu0 %v427
    %517 = vmatpush1.msra.mxu0 %v426
    %518 = vmatprep.subr.mxu0 %v431
    %519 = vmatpush1.msra.mxu0 %v430
    %520 = vmatprep.mubr.f32.mxu0 %v304
    %521 = vmatmul.mubr.f32.gmra.mrb[0].mxu0 %v301
    %v522 = vpop.f32.mrb[0].mxu0
    %v523 = vadd.f32 %v439, %v522
    %v524 = vpop.f32.mrb[0].mxu0
    %v525 = vadd.f32 %v443, %v524
    %526 = vdwg.mxu0
    %527 = vmatprep.subr.mxu0 %v309
    %528 = vmatpush1.msra.mxu0 %v308
    %529 = vmatprep.subr.mxu0 %v313
    %530 = vmatpush1.msra.mxu0 %v312
    %531 = vmatprep.subr.mxu0 %v317
    %532 = vmatpush1.msra.mxu0 %v316
    %533 = vmatprep.subr.mxu0 %v321
    %534 = vmatpush1.msra.mxu0 %v320
    %535 = vmatprep.subr.mxu0 %v325
    %536 = vmatpush1.msra.mxu0 %v324
    %537 = vmatprep.subr.mxu0 %v329
    %538 = vmatpush1.msra.mxu0 %v328
    %539 = vmatprep.subr.mxu0 %v333
    %540 = vmatpush1.msra.mxu0 %v332
    %541 = vmatprep.subr.mxu0 %v337
    %542 = vmatpush1.msra.mxu0 %v336
    %543 = vmatprep.subr.mxu0 %v341
    %544 = vmatpush1.msra.mxu0 %v340
    %545 = vmatprep.subr.mxu0 %v345
    %546 = vmatpush1.msra.mxu0 %v344
    %547 = vmatprep.subr.mxu0 %v349
    %548 = vmatpush1.msra.mxu0 %v348
    %549 = vmatprep.subr.mxu0 %v353
    %550 = vmatpush1.msra.mxu0 %v352
    %551 = vmatprep.subr.mxu0 %v357
    %552 = vmatpush1.msra.mxu0 %v356
    %553 = vmatprep.subr.mxu0 %v361
    %554 = vmatpush1.msra.mxu0 %v360
    %555 = vmatprep.subr.mxu0 %v365
    %556 = vmatpush1.msra.mxu0 %v364
    %557 = vmatprep.subr.mxu0 %v369
    %558 = vmatpush1.msra.mxu0 %v368
    %559 = vmatprep.subr.mxu0 %v373
    %560 = vmatpush1.msra.mxu0 %v372
    %561 = vmatprep.subr.mxu0 %v377
    %562 = vmatpush1.msra.mxu0 %v376
    %563 = vmatprep.subr.mxu0 %v381
    %564 = vmatpush1.msra.mxu0 %v380
    %565 = vmatprep.subr.mxu0 %v385
    %566 = vmatpush1.msra.mxu0 %v384
    %567 = vmatprep.subr.mxu0 %v389
    %568 = vmatpush1.msra.mxu0 %v388
    %569 = vmatprep.subr.mxu0 %v393
    %570 = vmatpush1.msra.mxu0 %v392
    %571 = vmatprep.subr.mxu0 %v397
    %572 = vmatpush1.msra.mxu0 %v396
    %573 = vmatprep.subr.mxu0 %v401
    %574 = vmatpush1.msra.mxu0 %v400
    %575 = vmatprep.subr.mxu0 %v405
    %576 = vmatpush1.msra.mxu0 %v404
    %577 = vmatprep.subr.mxu0 %v409
    %578 = vmatpush1.msra.mxu0 %v408
    %579 = vmatprep.subr.mxu0 %v413
    %580 = vmatpush1.msra.mxu0 %v412
    %581 = vmatprep.subr.mxu0 %v417
    %582 = vmatpush1.msra.mxu0 %v416
    %583 = vmatprep.subr.mxu0 %v421
    %584 = vmatpush1.msra.mxu0 %v420
    %585 = vmatprep.subr.mxu0 %v425
    %586 = vmatpush1.msra.mxu0 %v424
    %587 = vmatprep.subr.mxu0 %v429
    %588 = vmatpush1.msra.mxu0 %v428
    %589 = vmatprep.subr.mxu0 %v433
    %590 = vmatpush1.msra.mxu0 %v432
    %591 = vmatprep.mubr.f32.mxu0 %v304
    %592 = vmatmul.mubr.f32.gmra.mrb[0].mxu0 %v301
    %v593 = vpop.f32.mrb[0].mxu0
    %v594 = vadd.f32 %v447, %v593
    %v595 = vpop.f32.mrb[0].mxu0
    %v596 = vadd.f32 %v451, %v595
    %597 = vdwg.mxu0
    %v598 = vxor.u32 %v523, 2147483648
    %v599 = vmul.f32 %v598, 1.442695
    %v600 = vpow.pop %v599
    %v601 = vadd.f32 %v600, 1.0
    %v602 = vrcp.pop %v601
    %v603 = vmul.f32 1.0, %v602
    %v604 = vxor.u32 %v525, 2147483648
    %v605 = vmul.f32 %v604, 1.442695
    %v606 = vpow.pop %v605
    %v607 = vadd.f32 %v606, 1.0
    %v608 = vrcp.pop %v607
    %v609 = vmul.f32 1.0, %v608
    %v610 = vtanh.pop %v594
    %v611 = vxor.u32 %v596, 2147483648
    %v612 = vmul.f32 %v611, 1.442695
    %v613 = vpow.pop %v612
    %v614 = vadd.f32 %v613, 1.0
    %v615 = vrcp.pop %v614
    %v616 = vmul.f32 1.0, %v615
    %v617 = vmul.f32 %v609, %v305
    %v618 = vmul.f32 %v603, %v610
    %v619 = vadd.f32 %v617, %v618
    %v620 = vtanh.pop %v619
    %v621 = vmul.f32 %v616, %v620
    %v622 = vsel %vm299, %v619, %v305
    %623 = vst [vmem:[#allocation5] sm:$0xf] %v622
    %v624 = vsel %vm299, %v621, %v304
    %625 = vst [vmem:[#allocation4] sm:$0xf] %v624
    %v626 = vsel %vm299, %v621, 0.0
    %627 = vst [vmem:[%s7] sm:$0xf] %v626
    %v628 = vld [vmem:[#allocation6] sm:$0xf]
    %v629 = vmax.f32 %v628, %v626
    %630 = vst [vmem:[#allocation6] sm:$0xf] %v629
    %s631 = sadd.s32 %s42, 1
    %v632 = vstv %s631
    %vm633 = vcmp.lt.s32.totalorder %v632, %v41
    %v634 = vld [vmem:[#allocation2] sm:$0xf]
    %v635 = vld [vmem:[#allocation3] sm:$0xf]
    %s636 = scalar_lea.vmem %s0, 16
    %v637 = vld [vmem:[%s636] sm:$0xff]
    %v638 = vld [vmem:[%s636 + $0x8] sm:$0xff]
    %v639 = vld [vmem:[%s2] sm:$0xff]
    %v640 = vld [vmem:[%s2 + $0x8] sm:$0xff]
    %v641 = vld [vmem:[%s2 + $0x10] sm:$0xff]
    %v642 = vld [vmem:[%s2 + $0x18] sm:$0xff]
    %v643 = vld [vmem:[%s2 + $0x20] sm:$0xff]
    %v644 = vld [vmem:[%s2 + $0x28] sm:$0xff]
    %v645 = vld [vmem:[%s2 + $0x30] sm:$0xff]
    %v646 = vld [vmem:[%s2 + $0x38] sm:$0xff]
    %v647 = vld [vmem:[%s2 + $0x40] sm:$0xff]
    %v648 = vld [vmem:[%s2 + $0x48] sm:$0xff]
    %v649 = vld [vmem:[%s2 + $0x50] sm:$0xff]
    %v650 = vld [vmem:[%s2 + $0x58] sm:$0xff]
    %v651 = vld [vmem:[%s2 + $0x60] sm:$0xff]
    %v652 = vld [vmem:[%s2 + $0x68] sm:$0xff]
    %v653 = vld [vmem:[%s2 + $0x70] sm:$0xff]
    %v654 = vld [vmem:[%s2 + $0x78] sm:$0xff]
    %v655 = vld [vmem:[%s2 + $0x80] sm:$0xff]
    %v656 = vld [vmem:[%s2 + $0x88] sm:$0xff]
    %v657 = vld [vmem:[%s2 + $0x90] sm:$0xff]
    %v658 = vld [vmem:[%s2 + $0x98] sm:$0xff]
    %v659 = vld [vmem:[%s2 + $0xa0] sm:$0xff]
    %v660 = vld [vmem:[%s2 + $0xa8] sm:$0xff]
    %v661 = vld [vmem:[%s2 + $0xb0] sm:$0xff]
    %v662 = vld [vmem:[%s2 + $0xb8] sm:$0xff]
    %v663 = vld [vmem:[%s2 + $0xc0] sm:$0xff]
    %v664 = vld [vmem:[%s2 + $0xc8] sm:$0xff]
    %v665 = vld [vmem:[%s2 + $0xd0] sm:$0xff]
    %v666 = vld [vmem:[%s2 + $0xd8] sm:$0xff]
    %v667 = vld [vmem:[%s2 + $0xe0] sm:$0xff]
    %v668 = vld [vmem:[%s2 + $0xe8] sm:$0xff]
    %v669 = vld [vmem:[%s2 + $0xf0] sm:$0xff]
    %v670 = vld [vmem:[%s2 + $0xf8] sm:$0xff]
    %v671 = vld [vmem:[%s2 + $0x100] sm:$0xff]
    %v672 = vld [vmem:[%s2 + $0x108] sm:$0xff]
    %v673 = vld [vmem:[%s2 + $0x110] sm:$0xff]
    %v674 = vld [vmem:[%s2 + $0x118] sm:$0xff]
    %v675 = vld [vmem:[%s2 + $0x120] sm:$0xff]
    %v676 = vld [vmem:[%s2 + $0x128] sm:$0xff]
    %v677 = vld [vmem:[%s2 + $0x130] sm:$0xff]
    %v678 = vld [vmem:[%s2 + $0x138] sm:$0xff]
    %v679 = vld [vmem:[%s2 + $0x140] sm:$0xff]
    %v680 = vld [vmem:[%s2 + $0x148] sm:$0xff]
    %v681 = vld [vmem:[%s2 + $0x150] sm:$0xff]
    %v682 = vld [vmem:[%s2 + $0x158] sm:$0xff]
    %v683 = vld [vmem:[%s2 + $0x160] sm:$0xff]
    %v684 = vld [vmem:[%s2 + $0x168] sm:$0xff]
    %v685 = vld [vmem:[%s2 + $0x170] sm:$0xff]
    %v686 = vld [vmem:[%s2 + $0x178] sm:$0xff]
    %v687 = vld [vmem:[%s2 + $0x180] sm:$0xff]
    %v688 = vld [vmem:[%s2 + $0x188] sm:$0xff]
    %v689 = vld [vmem:[%s2 + $0x190] sm:$0xff]
    %v690 = vld [vmem:[%s2 + $0x198] sm:$0xff]
    %v691 = vld [vmem:[%s2 + $0x1a0] sm:$0xff]
    %v692 = vld [vmem:[%s2 + $0x1a8] sm:$0xff]
    %v693 = vld [vmem:[%s2 + $0x1b0] sm:$0xff]
    %v694 = vld [vmem:[%s2 + $0x1b8] sm:$0xff]
    %v695 = vld [vmem:[%s2 + $0x1c0] sm:$0xff]
    %v696 = vld [vmem:[%s2 + $0x1c8] sm:$0xff]
    %v697 = vld [vmem:[%s2 + $0x1d0] sm:$0xff]
    %v698 = vld [vmem:[%s2 + $0x1d8] sm:$0xff]
    %v699 = vld [vmem:[%s2 + $0x1e0] sm:$0xff]
    %v700 = vld [vmem:[%s2 + $0x1e8] sm:$0xff]
    %v701 = vld [vmem:[%s2 + $0x1f0] sm:$0xff]
    %v702 = vld [vmem:[%s2 + $0x1f8] sm:$0xff]
    %703 = vmatprep.subr.mxu0 %v640
    %704 = vmatpush1.msra.mxu0 %v639
    %705 = vmatprep.subr.mxu0 %v644
    %706 = vmatpush1.msra.mxu0 %v643
    %707 = vmatprep.subr.mxu0 %v648
    %708 = vmatpush1.msra.mxu0 %v647
    %709 = vmatprep.subr.mxu0 %v652
    %710 = vmatpush1.msra.mxu0 %v651
    %711 = vmatprep.subr.mxu0 %v656
    %712 = vmatpush1.msra.mxu0 %v655
    %713 = vmatprep.subr.mxu0 %v660
    %714 = vmatpush1.msra.mxu0 %v659
    %715 = vmatprep.subr.mxu0 %v664
    %716 = vmatpush1.msra.mxu0 %v663
    %717 = vmatprep.subr.mxu0 %v668
    %718 = vmatpush1.msra.mxu0 %v667
    %719 = vmatprep.subr.mxu0 %v672
    %720 = vmatpush1.msra.mxu0 %v671
    %721 = vmatprep.subr.mxu0 %v676
    %722 = vmatpush1.msra.mxu0 %v675
    %723 = vmatprep.subr.mxu0 %v680
    %724 = vmatpush1.msra.mxu0 %v679
    %725 = vmatprep.subr.mxu0 %v684
    %726 = vmatpush1.msra.mxu0 %v683
    %727 = vmatprep.subr.mxu0 %v688
    %728 = vmatpush1.msra.mxu0 %v687
    %729 = vmatprep.subr.mxu0 %v692
    %730 = vmatpush1.msra.mxu0 %v691
    %731 = vmatprep.subr.mxu0 %v696
    %732 = vmatpush1.msra.mxu0 %v695
    %733 = vmatprep.subr.mxu0 %v700
    %734 = vmatpush1.msra.mxu0 %v699
    %735 = vmatprep.subr.mxu0 0.0
    %736 = vmatpush1.msra.mxu0 0.0
    %737 = vmatprep.subr.mxu0 0.0
    %738 = vmatpush1.msra.mxu0 0.0
    %739 = vmatprep.subr.mxu0 0.0
    %740 = vmatpush1.msra.mxu0 0.0
    %741 = vmatprep.subr.mxu0 0.0
    %742 = vmatpush1.msra.mxu0 0.0
    %743 = vmatprep.subr.mxu0 0.0
    %744 = vmatpush1.msra.mxu0 0.0
    %745 = vmatprep.subr.mxu0 0.0
    %746 = vmatpush1.msra.mxu0 0.0
    %747 = vmatprep.subr.mxu0 0.0
    %748 = vmatpush1.msra.mxu0 0.0
    %749 = vmatprep.subr.mxu0 0.0
    %750 = vmatpush1.msra.mxu0 0.0
    %751 = vmatprep.subr.mxu0 0.0
    %752 = vmatpush1.msra.mxu0 0.0
    %753 = vmatprep.subr.mxu0 0.0
    %754 = vmatpush1.msra.mxu0 0.0
    %755 = vmatprep.subr.mxu0 0.0
    %756 = vmatpush1.msra.mxu0 0.0
    %757 = vmatprep.subr.mxu0 0.0
    %758 = vmatpush1.msra.mxu0 0.0
    %759 = vmatprep.subr.mxu0 0.0
    %760 = vmatpush1.msra.mxu0 0.0
    %761 = vmatprep.subr.mxu0 0.0
    %762 = vmatpush1.msra.mxu0 0.0
    %763 = vmatprep.subr.mxu0 0.0
    %764 = vmatpush1.msra.mxu0 0.0
    %765 = vmatprep.subr.mxu0 0.0
    %766 = vmatpush1.msra.mxu0 0.0
    %767 = vmatprep.mubr.f32.mxu0 0.0
    %768 = vmatmul.mubr.f32.gmra.mrb[0].mxu0 %v634
    %v769 = vpop.f32.mrb[0].mxu0
    %v770 = vadd.f32 0.0, %v769
    %v771 = vpop.f32.mrb[0].mxu0
    %v772 = vadd.f32 0.0, %v771
    %773 = vdwg.mxu0
    %774 = vmatprep.subr.mxu0 %v642
    %775 = vmatpush1.msra.mxu0 %v641
    %776 = vmatprep.subr.mxu0 %v646
    %777 = vmatpush1.msra.mxu0 %v645
    %778 = vmatprep.subr.mxu0 %v650
    %779 = vmatpush1.msra.mxu0 %v649
    %780 = vmatprep.subr.mxu0 %v654
    %781 = vmatpush1.msra.mxu0 %v653
    %782 = vmatprep.subr.mxu0 %v658
    %783 = vmatpush1.msra.mxu0 %v657
    %784 = vmatprep.subr.mxu0 %v662
    %785 = vmatpush1.msra.mxu0 %v661
    %786 = vmatprep.subr.mxu0 %v666
    %787 = vmatpush1.msra.mxu0 %v665
    %788 = vmatprep.subr.mxu0 %v670
    %789 = vmatpush1.msra.mxu0 %v669
    %790 = vmatprep.subr.mxu0 %v674
    %791 = vmatpush1.msra.mxu0 %v673
    %792 = vmatprep.subr.mxu0 %v678
    %793 = vmatpush1.msra.mxu0 %v677
    %794 = vmatprep.subr.mxu0 %v682
    %795 = vmatpush1.msra.mxu0 %v681
    %796 = vmatprep.subr.mxu0 %v686
    %797 = vmatpush1.msra.mxu0 %v685
    %798 = vmatprep.subr.mxu0 %v690
    %799 = vmatpush1.msra.mxu0 %v689
    %800 = vmatprep.subr.mxu0 %v694
    %801 = vmatpush1.msra.mxu0 %v693
    %802 = vmatprep.subr.mxu0 %v698
    %803 = vmatpush1.msra.mxu0 %v697
    %804 = vmatprep.subr.mxu0 %v702
    %805 = vmatpush1.msra.mxu0 %v701
    %806 = vmatprep.subr.mxu0 0.0
    %807 = vmatpush1.msra.mxu0 0.0
    %808 = vmatprep.subr.mxu0 0.0
    %809 = vmatpush1.msra.mxu0 0.0
    %810 = vmatprep.subr.mxu0 0.0
    %811 = vmatpush1.msra.mxu0 0.0
    %812 = vmatprep.subr.mxu0 0.0
    %813 = vmatpush1.msra.mxu0 0.0
    %814 = vmatprep.subr.mxu0 0.0
    %815 = vmatpush1.msra.mxu0 0.0
    %816 = vmatprep.subr.mxu0 0.0
    %817 = vmatpush1.msra.mxu0 0.0
    %818 = vmatprep.subr.mxu0 0.0
    %819 = vmatpush1.msra.mxu0 0.0
    %820 = vmatprep.subr.mxu0 0.0
    %821 = vmatpush1.msra.mxu0 0.0
    %822 = vmatprep.subr.mxu0 0.0
    %823 = vmatpush1.msra.mxu0 0.0
    %824 = vmatprep.subr.mxu0 0.0
    %825 = vmatpush1.msra.mxu0 0.0
    %826 = vmatprep.subr.mxu0 0.0
    %827 = vmatpush1.msra.mxu0 0.0
    %828 = vmatprep.subr.mxu0 0.0
    %829 = vmatpush1.msra.mxu0 0.0
    %830 = vmatprep.subr.mxu0 0.0
    %831 = vmatpush1.msra.mxu0 0.0
    %832 = vmatprep.subr.mxu0 0.0
    %833 = vmatpush1.msra.mxu0 0.0
    %834 = vmatprep.subr.mxu0 0.0
    %835 = vmatpush1.msra.mxu0 0.0
    %836 = vmatprep.subr.mxu0 0.0
    %837 = vmatpush1.msra.mxu0 0.0
    %838 = vmatprep.mubr.f32.mxu0 0.0
    %839 = vmatmul.mubr.f32.gmra.mrb[0].mxu0 %v634
    %v840 = vpop.f32.mrb[0].mxu0
    %v841 = vadd.f32 0.0, %v840
    %v842 = vpop.f32.mrb[0].mxu0
    %v843 = vadd.f32 0.0, %v842
    %844 = vdwg.mxu0
    %v849 = vcombine.low %v770, %v772
    %v850 = vcombine.low %v841, %v843
    %v853 = vadd.f32 %v637, %v849
    %v854 = vadd.f32 %v638, %v850
    %v855 = vxor.u32 %v853, 2147483648
    %v856 = vmul.f32 %v855, 1.442695
    %v857 = vpow.pop %v856
    %v858 = vadd.f32 %v857, 1.0
    %v859 = vrcp.pop %v858
    %v860 = vmul.f32 1.0, %v859
    %v862 = vrot.slane %v853, 4
    %v864 = vxor.u32 %v862, 2147483648
    %v865 = vmul.f32 %v864, 1.442695
    %v866 = vpow.pop %v865
    %v867 = vadd.f32 %v866, 1.0
    %v868 = vrcp.pop %v867
    %v869 = vmul.f32 1.0, %v868
    %v870 = vtanh.pop %v854
    %v872 = vrot.slane %v854, 4
    %v874 = vxor.u32 %v872, 2147483648
    %v875 = vmul.f32 %v874, 1.442695
    %v876 = vpow.pop %v875
    %v877 = vadd.f32 %v876, 1.0
    %v878 = vrcp.pop %v877
    %v879 = vmul.f32 1.0, %v878
    %v880 = vmul.f32 %v869, %v635
    %v881 = vmul.f32 %v860, %v870
    %v882 = vadd.f32 %v880, %v881
    %v883 = vtanh.pop %v882
    %v884 = vmul.f32 %v879, %v883
    %v885 = vsel %vm633, 1, 0
    %886 = vset.pattern.permute.xlu0 0
    %887 = vperm.xlu0 %886, %v885
    %v888 = vpop.permute.xlu0 %887
    %vm889 = vcmp.eq.s32.totalorder %v888, 1
    %v890 = vsel %vm889, %v882, %v635
    %v891 = vsel %vm889, %v884, %v634
    %892 = vst [vmem:[#allocation3] sm:$0xf] %v890
    %893 = vst [vmem:[#allocation2] sm:$0xf] %v891
    %v894 = vld [vmem:[#allocation4] sm:$0xf]
    %v895 = vld [vmem:[#allocation5] sm:$0xf]
    %v896 = vld [vmem:[%s3] sm:$0xff]
    %v897 = vld [vmem:[%s3 + $0x8] sm:$0xff]
    %v898 = vld [vmem:[%s3 + $0x10] sm:$0xff]
    %v899 = vld [vmem:[%s3 + $0x18] sm:$0xff]
    %v900 = vld [vmem:[%s3 + $0x20] sm:$0xff]
    %v901 = vld [vmem:[%s3 + $0x28] sm:$0xff]
    %v902 = vld [vmem:[%s3 + $0x30] sm:$0xff]
    %v903 = vld [vmem:[%s3 + $0x38] sm:$0xff]
    %v904 = vld [vmem:[%s3 + $0x40] sm:$0xff]
    %v905 = vld [vmem:[%s3 + $0x48] sm:$0xff]
    %v906 = vld [vmem:[%s3 + $0x50] sm:$0xff]
    %v907 = vld [vmem:[%s3 + $0x58] sm:$0xff]
    %v908 = vld [vmem:[%s3 + $0x60] sm:$0xff]
    %v909 = vld [vmem:[%s3 + $0x68] sm:$0xff]
    %v910 = vld [vmem:[%s3 + $0x70] sm:$0xff]
    %v911 = vld [vmem:[%s3 + $0x78] sm:$0xff]
    %v912 = vld [vmem:[%s3 + $0x80] sm:$0xff]
    %v913 = vld [vmem:[%s3 + $0x88] sm:$0xff]
    %v914 = vld [vmem:[%s3 + $0x90] sm:$0xff]
    %v915 = vld [vmem:[%s3 + $0x98] sm:$0xff]
    %v916 = vld [vmem:[%s3 + $0xa0] sm:$0xff]
    %v917 = vld [vmem:[%s3 + $0xa8] sm:$0xff]
    %v918 = vld [vmem:[%s3 + $0xb0] sm:$0xff]
    %v919 = vld [vmem:[%s3 + $0xb8] sm:$0xff]
    %v920 = vld [vmem:[%s3 + $0xc0] sm:$0xff]
    %v921 = vld [vmem:[%s3 + $0xc8] sm:$0xff]
    %v922 = vld [vmem:[%s3 + $0xd0] sm:$0xff]
    %v923 = vld [vmem:[%s3 + $0xd8] sm:$0xff]
    %v924 = vld [vmem:[%s3 + $0xe0] sm:$0xff]
    %v925 = vld [vmem:[%s3 + $0xe8] sm:$0xff]
    %v926 = vld [vmem:[%s3 + $0xf0] sm:$0xff]
    %v927 = vld [vmem:[%s3 + $0xf8] sm:$0xff]
    %v928 = vld [vmem:[%s3 + $0x100] sm:$0xff]
    %v929 = vld [vmem:[%s3 + $0x108] sm:$0xff]
    %v930 = vld [vmem:[%s3 + $0x110] sm:$0xff]
    %v931 = vld [vmem:[%s3 + $0x118] sm:$0xff]
    %v932 = vld [vmem:[%s3 + $0x120] sm:$0xff]
    %v933 = vld [vmem:[%s3 + $0x128] sm:$0xff]
    %v934 = vld [vmem:[%s3 + $0x130] sm:$0xff]
    %v935 = vld [vmem:[%s3 + $0x138] sm:$0xff]
    %v936 = vld [vmem:[%s3 + $0x140] sm:$0xff]
    %v937 = vld [vmem:[%s3 + $0x148] sm:$0xff]
    %v938 = vld [vmem:[%s3 + $0x150] sm:$0xff]
    %v939 = vld [vmem:[%s3 + $0x158] sm:$0xff]
    %v940 = vld [vmem:[%s3 + $0x160] sm:$0xff]
    %v941 = vld [vmem:[%s3 + $0x168] sm:$0xff]
    %v942 = vld [vmem:[%s3 + $0x170] sm:$0xff]
    %v943 = vld [vmem:[%s3 + $0x178] sm:$0xff]
    %v944 = vld [vmem:[%s3 + $0x180] sm:$0xff]
    %v945 = vld [vmem:[%s3 + $0x188] sm:$0xff]
    %v946 = vld [vmem:[%s3 + $0x190] sm:$0xff]
    %v947 = vld [vmem:[%s3 + $0x198] sm:$0xff]
    %v948 = vld [vmem:[%s3 + $0x1a0] sm:$0xff]
    %v949 = vld [vmem:[%s3 + $0x1a8] sm:$0xff]
    %v950 = vld [vmem:[%s3 + $0x1b0] sm:$0xff]
    %v951 = vld [vmem:[%s3 + $0x1b8] sm:$0xff]
    %v952 = vld [vmem:[%s3 + $0x1c0] sm:$0xff]
    %v953 = vld [vmem:[%s3 + $0x1c8] sm:$0xff]
    %v954 = vld [vmem:[%s3 + $0x1d0] sm:$0xff]
    %v955 = vld [vmem:[%s3 + $0x1d8] sm:$0xff]
    %v956 = vld [vmem:[%s3 + $0x1e0] sm:$0xff]
    %v957 = vld [vmem:[%s3 + $0x1e8] sm:$0xff]
    %v958 = vld [vmem:[%s3 + $0x1f0] sm:$0xff]
    %v959 = vld [vmem:[%s3 + $0x1f8] sm:$0xff]
    %v960 = vld [vmem:[%s3 + $0x200] sm:$0xff]
    %v961 = vld [vmem:[%s3 + $0x208] sm:$0xff]
    %v962 = vld [vmem:[%s3 + $0x210] sm:$0xff]
    %v963 = vld [vmem:[%s3 + $0x218] sm:$0xff]
    %v964 = vld [vmem:[%s3 + $0x220] sm:$0xff]
    %v965 = vld [vmem:[%s3 + $0x228] sm:$0xff]
    %v966 = vld [vmem:[%s3 + $0x230] sm:$0xff]
    %v967 = vld [vmem:[%s3 + $0x238] sm:$0xff]
    %v968 = vld [vmem:[%s3 + $0x240] sm:$0xff]
    %v969 = vld [vmem:[%s3 + $0x248] sm:$0xff]
    %v970 = vld [vmem:[%s3 + $0x250] sm:$0xff]
    %v971 = vld [vmem:[%s3 + $0x258] sm:$0xff]
    %v972 = vld [vmem:[%s3 + $0x260] sm:$0xff]
    %v973 = vld [vmem:[%s3 + $0x268] sm:$0xff]
    %v974 = vld [vmem:[%s3 + $0x270] sm:$0xff]
    %v975 = vld [vmem:[%s3 + $0x278] sm:$0xff]
    %v976 = vld [vmem:[%s3 + $0x280] sm:$0xff]
    %v977 = vld [vmem:[%s3 + $0x288] sm:$0xff]
    %v978 = vld [vmem:[%s3 + $0x290] sm:$0xff]
    %v979 = vld [vmem:[%s3 + $0x298] sm:$0xff]
    %v980 = vld [vmem:[%s3 + $0x2a0] sm:$0xff]
    %v981 = vld [vmem:[%s3 + $0x2a8] sm:$0xff]
    %v982 = vld [vmem:[%s3 + $0x2b0] sm:$0xff]
    %v983 = vld [vmem:[%s3 + $0x2b8] sm:$0xff]
    %v984 = vld [vmem:[%s3 + $0x2c0] sm:$0xff]
    %v985 = vld [vmem:[%s3 + $0x2c8] sm:$0xff]
    %v986 = vld [vmem:[%s3 + $0x2d0] sm:$0xff]
    %v987 = vld [vmem:[%s3 + $0x2d8] sm:$0xff]
    %v988 = vld [vmem:[%s3 + $0x2e0] sm:$0xff]
    %v989 = vld [vmem:[%s3 + $0x2e8] sm:$0xff]
    %v990 = vld [vmem:[%s3 + $0x2f0] sm:$0xff]
    %v991 = vld [vmem:[%s3 + $0x2f8] sm:$0xff]
    %v992 = vld [vmem:[%s3 + $0x300] sm:$0xff]
    %v993 = vld [vmem:[%s3 + $0x308] sm:$0xff]
    %v994 = vld [vmem:[%s3 + $0x310] sm:$0xff]
    %v995 = vld [vmem:[%s3 + $0x318] sm:$0xff]
    %v996 = vld [vmem:[%s3 + $0x320] sm:$0xff]
    %v997 = vld [vmem:[%s3 + $0x328] sm:$0xff]
    %v998 = vld [vmem:[%s3 + $0x330] sm:$0xff]
    %v999 = vld [vmem:[%s3 + $0x338] sm:$0xff]
    %v1000 = vld [vmem:[%s3 + $0x340] sm:$0xff]
    %v1001 = vld [vmem:[%s3 + $0x348] sm:$0xff]
    %v1002 = vld [vmem:[%s3 + $0x350] sm:$0xff]
    %v1003 = vld [vmem:[%s3 + $0x358] sm:$0xff]
    %v1004 = vld [vmem:[%s3 + $0x360] sm:$0xff]
    %v1005 = vld [vmem:[%s3 + $0x368] sm:$0xff]
    %v1006 = vld [vmem:[%s3 + $0x370] sm:$0xff]
    %v1007 = vld [vmem:[%s3 + $0x378] sm:$0xff]
    %v1008 = vld [vmem:[%s3 + $0x380] sm:$0xff]
    %v1009 = vld [vmem:[%s3 + $0x388] sm:$0xff]
    %v1010 = vld [vmem:[%s3 + $0x390] sm:$0xff]
    %v1011 = vld [vmem:[%s3 + $0x398] sm:$0xff]
    %v1012 = vld [vmem:[%s3 + $0x3a0] sm:$0xff]
    %v1013 = vld [vmem:[%s3 + $0x3a8] sm:$0xff]
    %v1014 = vld [vmem:[%s3 + $0x3b0] sm:$0xff]
    %v1015 = vld [vmem:[%s3 + $0x3b8] sm:$0xff]
    %v1016 = vld [vmem:[%s3 + $0x3c0] sm:$0xff]
    %v1017 = vld [vmem:[%s3 + $0x3c8] sm:$0xff]
    %v1018 = vld [vmem:[%s3 + $0x3d0] sm:$0xff]
    %v1019 = vld [vmem:[%s3 + $0x3d8] sm:$0xff]
    %v1020 = vld [vmem:[%s3 + $0x3e0] sm:$0xff]
    %v1021 = vld [vmem:[%s3 + $0x3e8] sm:$0xff]
    %v1022 = vld [vmem:[%s3 + $0x3f0] sm:$0xff]
    %v1023 = vld [vmem:[%s3 + $0x3f8] sm:$0xff]
    %v1024 = vld [vmem:[%s4] sm:$0xf]
    %v1026 = vlaneseq
    %v1027 = vshrl.u32 %v1026, 7
    %v1028 = vsub.s32 0, %v1027
    %v1029 = vrot.slane %v1024, %v1028
    %v1030 = vlaneseq
    %v1031 = vshrl.u32 %v1030, 7
    %v1032 = vsub.s32 1, %v1031
    %v1033 = vrot.slane %v1024, %v1032
    %v1034 = vlaneseq
    %v1035 = vshrl.u32 %v1034, 7
    %v1036 = vsub.s32 2, %v1035
    %v1037 = vrot.slane %v1024, %v1036
    %v1038 = vlaneseq
    %v1039 = vshrl.u32 %v1038, 7
    %v1040 = vsub.s32 3, %v1039
    %v1041 = vrot.slane %v1024, %v1040
    %1046 = vmatprep.subr.mxu0 %v897
    %1047 = vmatpush1.msra.mxu0 %v896
    %1048 = vmatprep.subr.mxu0 %v901
    %1049 = vmatpush1.msra.mxu0 %v900
    %1050 = vmatprep.subr.mxu0 %v905
    %1051 = vmatpush1.msra.mxu0 %v904
    %1052 = vmatprep.subr.mxu0 %v909
    %1053 = vmatpush1.msra.mxu0 %v908
    %1054 = vmatprep.subr.mxu0 %v913
    %1055 = vmatpush1.msra.mxu0 %v912
    %1056 = vmatprep.subr.mxu0 %v917
    %1057 = vmatpush1.msra.mxu0 %v916
    %1058 = vmatprep.subr.mxu0 %v921
    %1059 = vmatpush1.msra.mxu0 %v920
    %1060 = vmatprep.subr.mxu0 %v925
    %1061 = vmatpush1.msra.mxu0 %v924
    %1062 = vmatprep.subr.mxu0 %v929
    %1063 = vmatpush1.msra.mxu0 %v928
    %1064 = vmatprep.subr.mxu0 %v933
    %1065 = vmatpush1.msra.mxu0 %v932
    %1066 = vmatprep.subr.mxu0 %v937
    %1067 = vmatpush1.msra.mxu0 %v936
    %1068 = vmatprep.subr.mxu0 %v941
    %1069 = vmatpush1.msra.mxu0 %v940
    %1070 = vmatprep.subr.mxu0 %v945
    %1071 = vmatpush1.msra.mxu0 %v944
    %1072 = vmatprep.subr.mxu0 %v949
    %1073 = vmatpush1.msra.mxu0 %v948
    %1074 = vmatprep.subr.mxu0 %v953
    %1075 = vmatpush1.msra.mxu0 %v952
    %1076 = vmatprep.subr.mxu0 %v957
    %1077 = vmatpush1.msra.mxu0 %v956
    %1078 = vmatprep.subr.mxu0 %v961
    %1079 = vmatpush1.msra.mxu0 %v960
    %1080 = vmatprep.subr.mxu0 %v965
    %1081 = vmatpush1.msra.mxu0 %v964
    %1082 = vmatprep.subr.mxu0 %v969
    %1083 = vmatpush1.msra.mxu0 %v968
    %1084 = vmatprep.subr.mxu0 %v973
    %1085 = vmatpush1.msra.mxu0 %v972
    %1086 = vmatprep.subr.mxu0 %v977
    %1087 = vmatpush1.msra.mxu0 %v976
    %1088 = vmatprep.subr.mxu0 %v981
    %1089 = vmatpush1.msra.mxu0 %v980
    %1090 = vmatprep.subr.mxu0 %v985
    %1091 = vmatpush1.msra.mxu0 %v984
    %1092 = vmatprep.subr.mxu0 %v989
    %1093 = vmatpush1.msra.mxu0 %v988
    %1094 = vmatprep.subr.mxu0 %v993
    %1095 = vmatpush1.msra.mxu0 %v992
    %1096 = vmatprep.subr.mxu0 %v997
    %1097 = vmatpush1.msra.mxu0 %v996
    %1098 = vmatprep.subr.mxu0 %v1001
    %1099 = vmatpush1.msra.mxu0 %v1000
    %1100 = vmatprep.subr.mxu0 %v1005
    %1101 = vmatpush1.msra.mxu0 %v1004
    %1102 = vmatprep.subr.mxu0 %v1009
    %1103 = vmatpush1.msra.mxu0 %v1008
    %1104 = vmatprep.subr.mxu0 %v1013
    %1105 = vmatpush1.msra.mxu0 %v1012
    %1106 = vmatprep.subr.mxu0 %v1017
    %1107 = vmatpush1.msra.mxu0 %v1016
    %1108 = vmatprep.subr.mxu0 %v1021
    %1109 = vmatpush1.msra.mxu0 %v1020
    %1110 = vmatprep.mubr.f32.mxu0 %v894
    %1111 = vmatmul.mubr.f32.gmra.mrb[0].mxu0 %v891
    %v1112 = vpop.f32.mrb[0].mxu0
    %v1113 = vadd.f32 %v1029, %v1112
    %v1114 = vpop.f32.mrb[0].mxu0
    %v1115 = vadd.f32 %v1033, %v1114
    %1116 = vdwg.mxu0
    %1117 = vmatprep.subr.mxu0 %v899
    %1118 = vmatpush1.msra.mxu0 %v898
    %1119 = vmatprep.subr.mxu0 %v903
    %1120 = vmatpush1.msra.mxu0 %v902
    %1121 = vmatprep.subr.mxu0 %v907
    %1122 = vmatpush1.msra.mxu0 %v906
    %1123 = vmatprep.subr.mxu0 %v911
    %1124 = vmatpush1.msra.mxu0 %v910
    %1125 = vmatprep.subr.mxu0 %v915
    %1126 = vmatpush1.msra.mxu0 %v914
    %1127 = vmatprep.subr.mxu0 %v919
    %1128 = vmatpush1.msra.mxu0 %v918
    %1129 = vmatprep.subr.mxu0 %v923
    %1130 = vmatpush1.msra.mxu0 %v922
    %1131 = vmatprep.subr.mxu0 %v927
    %1132 = vmatpush1.msra.mxu0 %v926
    %1133 = vmatprep.subr.mxu0 %v931
    %1134 = vmatpush1.msra.mxu0 %v930
    %1135 = vmatprep.subr.mxu0 %v935
    %1136 = vmatpush1.msra.mxu0 %v934
    %1137 = vmatprep.subr.mxu0 %v939
    %1138 = vmatpush1.msra.mxu0 %v938
    %1139 = vmatprep.subr.mxu0 %v943
    %1140 = vmatpush1.msra.mxu0 %v942
    %1141 = vmatprep.subr.mxu0 %v947
    %1142 = vmatpush1.msra.mxu0 %v946
    %1143 = vmatprep.subr.mxu0 %v951
    %1144 = vmatpush1.msra.mxu0 %v950
    %1145 = vmatprep.subr.mxu0 %v955
    %1146 = vmatpush1.msra.mxu0 %v954
    %1147 = vmatprep.subr.mxu0 %v959
    %1148 = vmatpush1.msra.mxu0 %v958
    %1149 = vmatprep.subr.mxu0 %v963
    %1150 = vmatpush1.msra.mxu0 %v962
    %1151 = vmatprep.subr.mxu0 %v967
    %1152 = vmatpush1.msra.mxu0 %v966
    %1153 = vmatprep.subr.mxu0 %v971
    %1154 = vmatpush1.msra.mxu0 %v970
    %1155 = vmatprep.subr.mxu0 %v975
    %1156 = vmatpush1.msra.mxu0 %v974
    %1157 = vmatprep.subr.mxu0 %v979
    %1158 = vmatpush1.msra.mxu0 %v978
    %1159 = vmatprep.subr.mxu0 %v983
    %1160 = vmatpush1.msra.mxu0 %v982
    %1161 = vmatprep.subr.mxu0 %v987
    %1162 = vmatpush1.msra.mxu0 %v986
    %1163 = vmatprep.subr.mxu0 %v991
    %1164 = vmatpush1.msra.mxu0 %v990
    %1165 = vmatprep.subr.mxu0 %v995
    %1166 = vmatpush1.msra.mxu0 %v994
    %1167 = vmatprep.subr.mxu0 %v999
    %1168 = vmatpush1.msra.mxu0 %v998
    %1169 = vmatprep.subr.mxu0 %v1003
    %1170 = vmatpush1.msra.mxu0 %v1002
    %1171 = vmatprep.subr.mxu0 %v1007
    %1172 = vmatpush1.msra.mxu0 %v1006
    %1173 = vmatprep.subr.mxu0 %v1011
    %1174 = vmatpush1.msra.mxu0 %v1010
    %1175 = vmatprep.subr.mxu0 %v1015
    %1176 = vmatpush1.msra.mxu0 %v1014
    %1177 = vmatprep.subr.mxu0 %v1019
    %1178 = vmatpush1.msra.mxu0 %v1018
    %1179 = vmatprep.subr.mxu0 %v1023
    %1180 = vmatpush1.msra.mxu0 %v1022
    %1181 = vmatprep.mubr.f32.mxu0 %v894
    %1182 = vmatmul.mubr.f32.gmra.mrb[0].mxu0 %v891
    %v1183 = vpop.f32.mrb[0].mxu0
    %v1184 = vadd.f32 %v1037, %v1183
    %v1185 = vpop.f32.mrb[0].mxu0
    %v1186 = vadd.f32 %v1041, %v1185
    %1187 = vdwg.mxu0
    %v1188 = vxor.u32 %v1113, 2147483648
    %v1189 = vmul.f32 %v1188, 1.442695
    %v1190 = vpow.pop %v1189
    %v1191 = vadd.f32 %v1190, 1.0
    %v1192 = vrcp.pop %v1191
    %v1193 = vmul.f32 1.0, %v1192
    %v1194 = vxor.u32 %v1115, 2147483648
    %v1195 = vmul.f32 %v1194, 1.442695
    %v1196 = vpow.pop %v1195
    %v1197 = vadd.f32 %v1196, 1.0
    %v1198 = vrcp.pop %v1197
    %v1199 = vmul.f32 1.0, %v1198
    %v1200 = vtanh.pop %v1184
    %v1201 = vxor.u32 %v1186, 2147483648
    %v1202 = vmul.f32 %v1201, 1.442695
    %v1203 = vpow.pop %v1202
    %v1204 = vadd.f32 %v1203, 1.0
    %v1205 = vrcp.pop %v1204
    %v1206 = vmul.f32 1.0, %v1205
    %v1207 = vmul.f32 %v1199, %v895
    %v1208 = vmul.f32 %v1193, %v1200
    %v1209 = vadd.f32 %v1207, %v1208
    %v1210 = vtanh.pop %v1209
    %v1211 = vmul.f32 %v1206, %v1210
    %v1212 = vsel %vm889, %v1209, %v895
    %1213 = vst [vmem:[#allocation5] sm:$0xf] %v1212
    %v1214 = vsel %vm889, %v1211, %v894
    %1215 = vst [vmem:[#allocation4] sm:$0xf] %v1214
    %v1216 = vsel %vm889, %v1211, 0.0
    %s1217 = scalar_lea.vmem %s7, 4
    %1218 = vst [vmem:[%s1217] sm:$0xf] %v1216
    %v1219 = vld [vmem:[#allocation6] sm:$0xf]
    %v1220 = vmax.f32 %v1219, %v1216
    %1221 = vst [vmem:[#allocation6] sm:$0xf] %v1220
    %s1222 = sadd.s32 %s42, 2
    %v1223 = vstv %s1222
    %vm1224 = vcmp.lt.s32.totalorder %v1223, %v41
    %v1225 = vld [vmem:[#allocation2] sm:$0xf]
    %v1226 = vld [vmem:[#allocation3] sm:$0xf]
    %s1227 = scalar_lea.vmem %s0, 32
    %v1228 = vld [vmem:[%s1227] sm:$0xff]
    %v1229 = vld [vmem:[%s1227 + $0x8] sm:$0xff]
    %v1230 = vld [vmem:[%s2] sm:$0xff]
    %v1231 = vld [vmem:[%s2 + $0x8] sm:$0xff]
    %v1232 = vld [vmem:[%s2 + $0x10] sm:$0xff]
    %v1233 = vld [vmem:[%s2 + $0x18] sm:$0xff]
    %v1234 = vld [vmem:[%s2 + $0x20] sm:$0xff]
    %v1235 = vld [vmem:[%s2 + $0x28] sm:$0xff]
    %v1236 = vld [vmem:[%s2 + $0x30] sm:$0xff]
    %v1237 = vld [vmem:[%s2 + $0x38] sm:$0xff]
    %v1238 = vld [vmem:[%s2 + $0x40] sm:$0xff]
    %v1239 = vld [vmem:[%s2 + $0x48] sm:$0xff]
    %v1240 = vld [vmem:[%s2 + $0x50] sm:$0xff]
    %v1241 = vld [vmem:[%s2 + $0x58] sm:$0xff]
    %v1242 = vld [vmem:[%s2 + $0x60] sm:$0xff]
    %v1243 = vld [vmem:[%s2 + $0x68] sm:$0xff]
    %v1244 = vld [vmem:[%s2 + $0x70] sm:$0xff]
    %v1245 = vld [vmem:[%s2 + $0x78] sm:$0xff]
    %v1246 = vld [vmem:[%s2 + $0x80] sm:$0xff]
    %v1247 = vld [vmem:[%s2 + $0x88] sm:$0xff]
    %v1248 = vld [vmem:[%s2 + $0x90] sm:$0xff]
    %v1249 = vld [vmem:[%s2 + $0x98] sm:$0xff]
    %v1250 = vld [vmem:[%s2 + $0xa0] sm:$0xff]
    %v1251 = vld [vmem:[%s2 + $0xa8] sm:$0xff]
    %v1252 = vld [vmem:[%s2 + $0xb0] sm:$0xff]
    %v1253 = vld [vmem:[%s2 + $0xb8] sm:$0xff]
    %v1254 = vld [vmem:[%s2 + $0xc0] sm:$0xff]
    %v1255 = vld [vmem:[%s2 + $0xc8] sm:$0xff]
    %v1256 = vld [vmem:[%s2 + $0xd0] sm:$0xff]
    %v1257 = vld [vmem:[%s2 + $0xd8] sm:$0xff]
    %v1258 = vld [vmem:[%s2 + $0xe0] sm:$0xff]
    %v1259 = vld [vmem:[%s2 + $0xe8] sm:$0xff]
    %v1260 = vld [vmem:[%s2 + $0xf0] sm:$0xff]
    %v1261 = vld [vmem:[%s2 + $0xf8] sm:$0xff]
    %v1262 = vld [vmem:[%s2 + $0x100] sm:$0xff]
    %v1263 = vld [vmem:[%s2 + $0x108] sm:$0xff]
    %v1264 = vld [vmem:[%s2 + $0x110] sm:$0xff]
    %v1265 = vld [vmem:[%s2 + $0x118] sm:$0xff]
    %v1266 = vld [vmem:[%s2 + $0x120] sm:$0xff]
    %v1267 = vld [vmem:[%s2 + $0x128] sm:$0xff]
    %v1268 = vld [vmem:[%s2 + $0x130] sm:$0xff]
    %v1269 = vld [vmem:[%s2 + $0x138] sm:$0xff]
    %v1270 = vld [vmem:[%s2 + $0x140] sm:$0xff]
    %v1271 = vld [vmem:[%s2 + $0x148] sm:$0xff]
    %v1272 = vld [vmem:[%s2 + $0x150] sm:$0xff]
    %v1273 = vld [vmem:[%s2 + $0x158] sm:$0xff]
    %v1274 = vld [vmem:[%s2 + $0x160] sm:$0xff]
    %v1275 = vld [vmem:[%s2 + $0x168] sm:$0xff]
    %v1276 = vld [vmem:[%s2 + $0x170] sm:$0xff]
    %v1277 = vld [vmem:[%s2 + $0x178] sm:$0xff]
    %v1278 = vld [vmem:[%s2 + $0x180] sm:$0xff]
    %v1279 = vld [vmem:[%s2 + $0x188] sm:$0xff]
    %v1280 = vld [vmem:[%s2 + $0x190] sm:$0xff]
    %v1281 = vld [vmem:[%s2 + $0x198] sm:$0xff]
    %v1282 = vld [vmem:[%s2 + $0x1a0] sm:$0xff]
    %v1283 = vld [vmem:[%s2 + $0x1a8] sm:$0xff]
    %v1284 = vld [vmem:[%s2 + $0x1b0] sm:$0xff]
    %v1285 = vld [vmem:[%s2 + $0x1b8] sm:$0xff]
    %v1286 = vld [vmem:[%s2 + $0x1c0] sm:$0xff]
    %v1287 = vld [vmem:[%s2 + $0x1c8] sm:$0xff]
    %v1288 = vld [vmem:[%s2 + $0x1d0] sm:$0xff]
    %v1289 = vld [vmem:[%s2 + $0x1d8] sm:$0xff]
    %v1290 = vld [vmem:[%s2 + $0x1e0] sm:$0xff]
    %v1291 = vld [vmem:[%s2 + $0x1e8] sm:$0xff]
    %v1292 = vld [vmem:[%s2 + $0x1f0] sm:$0xff]
    %v1293 = vld [vmem:[%s2 + $0x1f8] sm:$0xff]
    %1294 = vmatprep.subr.mxu0 %v1231
    %1295 = vmatpush1.msra.mxu0 %v1230
    %1296 = vmatprep.subr.mxu0 %v1235
    %1297 = vmatpush1.msra.mxu0 %v1234
    %1298 = vmatprep.subr.mxu0 %v1239
    %1299 = vmatpush1.msra.mxu0 %v1238
    %1300 = vmatprep.subr.mxu0 %v1243
    %1301 = vmatpush1.msra.mxu0 %v1242
    %1302 = vmatprep.subr.mxu0 %v1247
    %1303 = vmatpush1.msra.mxu0 %v1246
    %1304 = vmatprep.subr.mxu0 %v1251
    %1305 = vmatpush1.msra.mxu0 %v1250
    %1306 = vmatprep.subr.mxu0 %v1255
    %1307 = vmatpush1.msra.mxu0 %v1254
    %1308 = vmatprep.subr.mxu0 %v1259
    %1309 = vmatpush1.msra.mxu0 %v1258
    %1310 = vmatprep.subr.mxu0 %v1263
    %1311 = vmatpush1.msra.mxu0 %v1262
    %1312 = vmatprep.subr.mxu0 %v1267
    %1313 = vmatpush1.msra.mxu0 %v1266
    %1314 = vmatprep.subr.mxu0 %v1271
    %1315 = vmatpush1.msra.mxu0 %v1270
    %1316 = vmatprep.subr.mxu0 %v1275
    %1317 = vmatpush1.msra.mxu0 %v1274
    %1318 = vmatprep.subr.mxu0 %v1279
    %1319 = vmatpush1.msra.mxu0 %v1278
    %1320 = vmatprep.subr.mxu0 %v1283
    %1321 = vmatpush1.msra.mxu0 %v1282
    %1322 = vmatprep.subr.mxu0 %v1287
    %1323 = vmatpush1.msra.mxu0 %v1286
    %1324 = vmatprep.subr.mxu0 %v1291
    %1325 = vmatpush1.msra.mxu0 %v1290
    %1326 = vmatprep.subr.mxu0 0.0
    %1327 = vmatpush1.msra.mxu0 0.0
    %1328 = vmatprep.subr.mxu0 0.0
    %1329 = vmatpush1.msra.mxu0 0.0
    %1330 = vmatprep.subr.mxu0 0.0
    %1331 = vmatpush1.msra.mxu0 0.0
    %1332 = vmatprep.subr.mxu0 0.0
    %1333 = vmatpush1.msra.mxu0 0.0
    %1334 = vmatprep.subr.mxu0 0.0
    %1335 = vmatpush1.msra.mxu0 0.0
    %1336 = vmatprep.subr.mxu0 0.0
    %1337 = vmatpush1.msra.mxu0 0.0
    %1338 = vmatprep.subr.mxu0 0.0
    %1339 = vmatpush1.msra.mxu0 0.0
    %1340 = vmatprep.subr.mxu0 0.0
    %1341 = vmatpush1.msra.mxu0 0.0
    %1342 = vmatprep.subr.mxu0 0.0
    %1343 = vmatpush1.msra.mxu0 0.0
    %1344 = vmatprep.subr.mxu0 0.0
    %1345 = vmatpush1.msra.mxu0 0.0
    %1346 = vmatprep.subr.mxu0 0.0
    %1347 = vmatpush1.msra.mxu0 0.0
    %1348 = vmatprep.subr.mxu0 0.0
    %1349 = vmatpush1.msra.mxu0 0.0
    %1350 = vmatprep.subr.mxu0 0.0
    %1351 = vmatpush1.msra.mxu0 0.0
    %1352 = vmatprep.subr.mxu0 0.0
    %1353 = vmatpush1.msra.mxu0 0.0
    %1354 = vmatprep.subr.mxu0 0.0
    %1355 = vmatpush1.msra.mxu0 0.0
    %1356 = vmatprep.subr.mxu0 0.0
    %1357 = vmatpush1.msra.mxu0 0.0
    %1358 = vmatprep.mubr.f32.mxu0 0.0
    %1359 = vmatmul.mubr.f32.gmra.mrb[0].mxu0 %v1225
    %v1360 = vpop.f32.mrb[0].mxu0
    %v1361 = vadd.f32 0.0, %v1360
    %v1362 = vpop.f32.mrb[0].mxu0
    %v1363 = vadd.f32 0.0, %v1362
    %1364 = vdwg.mxu0
    %1365 = vmatprep.subr.mxu0 %v1233
    %1366 = vmatpush1.msra.mxu0 %v1232
    %1367 = vmatprep.subr.mxu0 %v1237
    %1368 = vmatpush1.msra.mxu0 %v1236
    %1369 = vmatprep.subr.mxu0 %v1241
    %1370 = vmatpush1.msra.mxu0 %v1240
    %1371 = vmatprep.subr.mxu0 %v1245
    %1372 = vmatpush1.msra.mxu0 %v1244
    %1373 = vmatprep.subr.mxu0 %v1249
    %1374 = vmatpush1.msra.mxu0 %v1248
    %1375 = vmatprep.subr.mxu0 %v1253
    %1376 = vmatpush1.msra.mxu0 %v1252
    %1377 = vmatprep.subr.mxu0 %v1257
    %1378 = vmatpush1.msra.mxu0 %v1256
    %1379 = vmatprep.subr.mxu0 %v1261
    %1380 = vmatpush1.msra.mxu0 %v1260
    %1381 = vmatprep.subr.mxu0 %v1265
    %1382 = vmatpush1.msra.mxu0 %v1264
    %1383 = vmatprep.subr.mxu0 %v1269
    %1384 = vmatpush1.msra.mxu0 %v1268
    %1385 = vmatprep.subr.mxu0 %v1273
    %1386 = vmatpush1.msra.mxu0 %v1272
    %1387 = vmatprep.subr.mxu0 %v1277
    %1388 = vmatpush1.msra.mxu0 %v1276
    %1389 = vmatprep.subr.mxu0 %v1281
    %1390 = vmatpush1.msra.mxu0 %v1280
    %1391 = vmatprep.subr.mxu0 %v1285
    %1392 = vmatpush1.msra.mxu0 %v1284
    %1393 = vmatprep.subr.mxu0 %v1289
    %1394 = vmatpush1.msra.mxu0 %v1288
    %1395 = vmatprep.subr.mxu0 %v1293
    %1396 = vmatpush1.msra.mxu0 %v1292
    %1397 = vmatprep.subr.mxu0 0.0
    %1398 = vmatpush1.msra.mxu0 0.0
    %1399 = vmatprep.subr.mxu0 0.0
    %1400 = vmatpush1.msra.mxu0 0.0
    %1401 = vmatprep.subr.mxu0 0.0
    %1402 = vmatpush1.msra.mxu0 0.0
    %1403 = vmatprep.subr.mxu0 0.0
    %1404 = vmatpush1.msra.mxu0 0.0
    %1405 = vmatprep.subr.mxu0 0.0
    %1406 = vmatpush1.msra.mxu0 0.0
    %1407 = vmatprep.subr.mxu0 0.0
    %1408 = vmatpush1.msra.mxu0 0.0
    %1409 = vmatprep.subr.mxu0 0.0
    %1410 = vmatpush1.msra.mxu0 0.0
    %1411 = vmatprep.subr.mxu0 0.0
    %1412 = vmatpush1.msra.mxu0 0.0
    %1413 = vmatprep.subr.mxu0 0.0
    %1414 = vmatpush1.msra.mxu0 0.0
    %1415 = vmatprep.subr.mxu0 0.0
    %1416 = vmatpush1.msra.mxu0 0.0
    %1417 = vmatprep.subr.mxu0 0.0
    %1418 = vmatpush1.msra.mxu0 0.0
    %1419 = vmatprep.subr.mxu0 0.0
    %1420 = vmatpush1.msra.mxu0 0.0
    %1421 = vmatprep.subr.mxu0 0.0
    %1422 = vmatpush1.msra.mxu0 0.0
    %1423 = vmatprep.subr.mxu0 0.0
    %1424 = vmatpush1.msra.mxu0 0.0
    %1425 = vmatprep.subr.mxu0 0.0
    %1426 = vmatpush1.msra.mxu0 0.0
    %1427 = vmatprep.subr.mxu0 0.0
    %1428 = vmatpush1.msra.mxu0 0.0
    %1429 = vmatprep.mubr.f32.mxu0 0.0
    %1430 = vmatmul.mubr.f32.gmra.mrb[0].mxu0 %v1225
    %v1431 = vpop.f32.mrb[0].mxu0
    %v1432 = vadd.f32 0.0, %v1431
    %v1433 = vpop.f32.mrb[0].mxu0
    %v1434 = vadd.f32 0.0, %v1433
    %1435 = vdwg.mxu0
    %v1440 = vcombine.low %v1361, %v1363
    %v1441 = vcombine.low %v1432, %v1434
    %v1444 = vadd.f32 %v1228, %v1440
    %v1445 = vadd.f32 %v1229, %v1441
    %v1446 = vxor.u32 %v1444, 2147483648
    %v1447 = vmul.f32 %v1446, 1.442695
    %v1448 = vpow.pop %v1447
    %v1449 = vadd.f32 %v1448, 1.0
    %v1450 = vrcp.pop %v1449
    %v1451 = vmul.f32 1.0, %v1450
    %v1453 = vrot.slane %v1444, 4
    %v1455 = vxor.u32 %v1453, 2147483648
    %v1456 = vmul.f32 %v1455, 1.442695
    %v1457 = vpow.pop %v1456
    %v1458 = vadd.f32 %v1457, 1.0
    %v1459 = vrcp.pop %v1458
    %v1460 = vmul.f32 1.0, %v1459
    %v1461 = vtanh.pop %v1445
    %v1463 = vrot.slane %v1445, 4
    %v1465 = vxor.u32 %v1463, 2147483648
    %v1466 = vmul.f32 %v1465, 1.442695
    %v1467 = vpow.pop %v1466
    %v1468 = vadd.f32 %v1467, 1.0
    %v1469 = vrcp.pop %v1468
    %v1470 = vmul.f32 1.0, %v1469
    %v1471 = vmul.f32 %v1460, %v1226
    %v1472 = vmul.f32 %v1451, %v1461
    %v1473 = vadd.f32 %v1471, %v1472
    %v1474 = vtanh.pop %v1473
    %v1475 = vmul.f32 %v1470, %v1474
    %v1476 = vsel %vm1224, 1, 0
    %1477 = vset.pattern.permute.xlu0 0
    %1478 = vperm.xlu0 %1477, %v1476
    %v1479 = vpop.permute.xlu0 %1478
    %vm1480 = vcmp.eq.s32.totalorder %v1479, 1
    %v1481 = vsel %vm1480, %v1473, %v1226
    %v1482 = vsel %vm1480, %v1475, %v1225
    %1483 = vst [vmem:[#allocation3] sm:$0xf] %v1481
    %1484 = vst [vmem:[#allocation2] sm:$0xf] %v1482
    %v1485 = vld [vmem:[#allocation4] sm:$0xf]
    %v1486 = vld [vmem:[#allocation5] sm:$0xf]
    %v1487 = vld [vmem:[%s3] sm:$0xff]
    %v1488 = vld [vmem:[%s3 + $0x8] sm:$0xff]
    %v1489 = vld [vmem:[%s3 + $0x10] sm:$0xff]
    %v1490 = vld [vmem:[%s3 + $0x18] sm:$0xff]
    %v1491 = vld [vmem:[%s3 + $0x20] sm:$0xff]
    %v1492 = vld [vmem:[%s3 + $0x28] sm:$0xff]
    %v1493 = vld [vmem:[%s3 + $0x30] sm:$0xff]
    %v1494 = vld [vmem:[%s3 + $0x38] sm:$0xff]
    %v1495 = vld [vmem:[%s3 + $0x40] sm:$0xff]
    %v1496 = vld [vmem:[%s3 + $0x48] sm:$0xff]
    %v1497 = vld [vmem:[%s3 + $0x50] sm:$0xff]
    %v1498 = vld [vmem:[%s3 + $0x58] sm:$0xff]
    %v1499 = vld [vmem:[%s3 + $0x60] sm:$0xff]
    %v1500 = vld [vmem:[%s3 + $0x68] sm:$0xff]
    %v1501 = vld [vmem:[%s3 + $0x70] sm:$0xff]
    %v1502 = vld [vmem:[%s3 + $0x78] sm:$0xff]
    %v1503 = vld [vmem:[%s3 + $0x80] sm:$0xff]
    %v1504 = vld [vmem:[%s3 + $0x88] sm:$0xff]
    %v1505 = vld [vmem:[%s3 + $0x90] sm:$0xff]
    %v1506 = vld [vmem:[%s3 + $0x98] sm:$0xff]
    %v1507 = vld [vmem:[%s3 + $0xa0] sm:$0xff]
    %v1508 = vld [vmem:[%s3 + $0xa8] sm:$0xff]
    %v1509 = vld [vmem:[%s3 + $0xb0] sm:$0xff]
    %v1510 = vld [vmem:[%s3 + $0xb8] sm:$0xff]
    %v1511 = vld [vmem:[%s3 + $0xc0] sm:$0xff]
    %v1512 = vld [vmem:[%s3 + $0xc8] sm:$0xff]
    %v1513 = vld [vmem:[%s3 + $0xd0] sm:$0xff]
    %v1514 = vld [vmem:[%s3 + $0xd8] sm:$0xff]
    %v1515 = vld [vmem:[%s3 + $0xe0] sm:$0xff]
    %v1516 = vld [vmem:[%s3 + $0xe8] sm:$0xff]
    %v1517 = vld [vmem:[%s3 + $0xf0] sm:$0xff]
    %v1518 = vld [vmem:[%s3 + $0xf8] sm:$0xff]
    %v1519 = vld [vmem:[%s3 + $0x100] sm:$0xff]
    %v1520 = vld [vmem:[%s3 + $0x108] sm:$0xff]
    %v1521 = vld [vmem:[%s3 + $0x110] sm:$0xff]
    %v1522 = vld [vmem:[%s3 + $0x118] sm:$0xff]
    %v1523 = vld [vmem:[%s3 + $0x120] sm:$0xff]
    %v1524 = vld [vmem:[%s3 + $0x128] sm:$0xff]
    %v1525 = vld [vmem:[%s3 + $0x130] sm:$0xff]
    %v1526 = vld [vmem:[%s3 + $0x138] sm:$0xff]
    %v1527 = vld [vmem:[%s3 + $0x140] sm:$0xff]
    %v1528 = vld [vmem:[%s3 + $0x148] sm:$0xff]
    %v1529 = vld [vmem:[%s3 + $0x150] sm:$0xff]
    %v1530 = vld [vmem:[%s3 + $0x158] sm:$0xff]
    %v1531 = vld [vmem:[%s3 + $0x160] sm:$0xff]
    %v1532 = vld [vmem:[%s3 + $0x168] sm:$0xff]
    %v1533 = vld [vmem:[%s3 + $0x170] sm:$0xff]
    %v1534 = vld [vmem:[%s3 + $0x178] sm:$0xff]
    %v1535 = vld [vmem:[%s3 + $0x180] sm:$0xff]
    %v1536 = vld [vmem:[%s3 + $0x188] sm:$0xff]
    %v1537 = vld [vmem:[%s3 + $0x190] sm:$0xff]
    %v1538 = vld [vmem:[%s3 + $0x198] sm:$0xff]
    %v1539 = vld [vmem:[%s3 + $0x1a0] sm:$0xff]
    %v1540 = vld [vmem:[%s3 + $0x1a8] sm:$0xff]
    %v1541 = vld [vmem:[%s3 + $0x1b0] sm:$0xff]
    %v1542 = vld [vmem:[%s3 + $0x1b8] sm:$0xff]
    %v1543 = vld [vmem:[%s3 + $0x1c0] sm:$0xff]
    %v1544 = vld [vmem:[%s3 + $0x1c8] sm:$0xff]
    %v1545 = vld [vmem:[%s3 + $0x1d0] sm:$0xff]
    %v1546 = vld [vmem:[%s3 + $0x1d8] sm:$0xff]
    %v1547 = vld [vmem:[%s3 + $0x1e0] sm:$0xff]
    %v1548 = vld [vmem:[%s3 + $0x1e8] sm:$0xff]
    %v1549 = vld [vmem:[%s3 + $0x1f0] sm:$0xff]
    %v1550 = vld [vmem:[%s3 + $0x1f8] sm:$0xff]
    %v1551 = vld [vmem:[%s3 + $0x200] sm:$0xff]
    %v1552 = vld [vmem:[%s3 + $0x208] sm:$0xff]
    %v1553 = vld [vmem:[%s3 + $0x210] sm:$0xff]
    %v1554 = vld [vmem:[%s3 + $0x218] sm:$0xff]
    %v1555 = vld [vmem:[%s3 + $0x220] sm:$0xff]
    %v1556 = vld [vmem:[%s3 + $0x228] sm:$0xff]
    %v1557 = vld [vmem:[%s3 + $0x230] sm:$0xff]
    %v1558 = vld [vmem:[%s3 + $0x238] sm:$0xff]
    %v1559 = vld [vmem:[%s3 + $0x240] sm:$0xff]
    %v1560 = vld [vmem:[%s3 + $0x248] sm:$0xff]
    %v1561 = vld [vmem:[%s3 + $0x250] sm:$0xff]
    %v1562 = vld [vmem:[%s3 + $0x258] sm:$0xff]
    %v1563 = vld [vmem:[%s3 + $0x260] sm:$0xff]
    %v1564 = vld [vmem:[%s3 + $0x268] sm:$0xff]
    %v1565 = vld [vmem:[%s3 + $0x270] sm:$0xff]
    %v1566 = vld [vmem:[%s3 + $0x278] sm:$0xff]
    %v1567 = vld [vmem:[%s3 + $0x280] sm:$0xff]
    %v1568 = vld [vmem:[%s3 + $0x288] sm:$0xff]
    %v1569 = vld [vmem:[%s3 + $0x290] sm:$0xff]
    %v1570 = vld [vmem:[%s3 + $0x298] sm:$0xff]
    %v1571 = vld [vmem:[%s3 + $0x2a0] sm:$0xff]
    %v1572 = vld [vmem:[%s3 + $0x2a8] sm:$0xff]
    %v1573 = vld [vmem:[%s3 + $0x2b0] sm:$0xff]
    %v1574 = vld [vmem:[%s3 + $0x2b8] sm:$0xff]
    %v1575 = vld [vmem:[%s3 + $0x2c0] sm:$0xff]
    %v1576 = vld [vmem:[%s3 + $0x2c8] sm:$0xff]
    %v1577 = vld [vmem:[%s3 + $0x2d0] sm:$0xff]
    %v1578 = vld [vmem:[%s3 + $0x2d8] sm:$0xff]
    %v1579 = vld [vmem:[%s3 + $0x2e0] sm:$0xff]
    %v1580 = vld [vmem:[%s3 + $0x2e8] sm:$0xff]
    %v1581 = vld [vmem:[%s3 + $0x2f0] sm:$0xff]
    %v1582 = vld [vmem:[%s3 + $0x2f8] sm:$0xff]
    %v1583 = vld [vmem:[%s3 + $0x300] sm:$0xff]
    %v1584 = vld [vmem:[%s3 + $0x308] sm:$0xff]
    %v1585 = vld [vmem:[%s3 + $0x310] sm:$0xff]
    %v1586 = vld [vmem:[%s3 + $0x318] sm:$0xff]
    %v1587 = vld [vmem:[%s3 + $0x320] sm:$0xff]
    %v1588 = vld [vmem:[%s3 + $0x328] sm:$0xff]
    %v1589 = vld [vmem:[%s3 + $0x330] sm:$0xff]
    %v1590 = vld [vmem:[%s3 + $0x338] sm:$0xff]
    %v1591 = vld [vmem:[%s3 + $0x340] sm:$0xff]
    %v1592 = vld [vmem:[%s3 + $0x348] sm:$0xff]
    %v1593 = vld [vmem:[%s3 + $0x350] sm:$0xff]
    %v1594 = vld [vmem:[%s3 + $0x358] sm:$0xff]
    %v1595 = vld [vmem:[%s3 + $0x360] sm:$0xff]
    %v1596 = vld [vmem:[%s3 + $0x368] sm:$0xff]
    %v1597 = vld [vmem:[%s3 + $0x370] sm:$0xff]
    %v1598 = vld [vmem:[%s3 + $0x378] sm:$0xff]
    %v1599 = vld [vmem:[%s3 + $0x380] sm:$0xff]
    %v1600 = vld [vmem:[%s3 + $0x388] sm:$0xff]
    %v1601 = vld [vmem:[%s3 + $0x390] sm:$0xff]
    %v1602 = vld [vmem:[%s3 + $0x398] sm:$0xff]
    %v1603 = vld [vmem:[%s3 + $0x3a0] sm:$0xff]
    %v1604 = vld [vmem:[%s3 + $0x3a8] sm:$0xff]
    %v1605 = vld [vmem:[%s3 + $0x3b0] sm:$0xff]
    %v1606 = vld [vmem:[%s3 + $0x3b8] sm:$0xff]
    %v1607 = vld [vmem:[%s3 + $0x3c0] sm:$0xff]
    %v1608 = vld [vmem:[%s3 + $0x3c8] sm:$0xff]
    %v1609 = vld [vmem:[%s3 + $0x3d0] sm:$0xff]
    %v1610 = vld [vmem:[%s3 + $0x3d8] sm:$0xff]
    %v1611 = vld [vmem:[%s3 + $0x3e0] sm:$0xff]
    %v1612 = vld [vmem:[%s3 + $0x3e8] sm:$0xff]
    %v1613 = vld [vmem:[%s3 + $0x3f0] sm:$0xff]
    %v1614 = vld [vmem:[%s3 + $0x3f8] sm:$0xff]
    %v1615 = vld [vmem:[%s4] sm:$0xf]
    %v1617 = vlaneseq
    %v1618 = vshrl.u32 %v1617, 7
    %v1619 = vsub.s32 0, %v1618
    %v1620 = vrot.slane %v1615, %v1619
    %v1621 = vlaneseq
    %v1622 = vshrl.u32 %v1621, 7
    %v1623 = vsub.s32 1, %v1622
    %v1624 = vrot.slane %v1615, %v1623
    %v1625 = vlaneseq
    %v1626 = vshrl.u32 %v1625, 7
    %v1627 = vsub.s32 2, %v1626
    %v1628 = vrot.slane %v1615, %v1627
    %v1629 = vlaneseq
    %v1630 = vshrl.u32 %v1629, 7
    %v1631 = vsub.s32 3, %v1630
    %v1632 = vrot.slane %v1615, %v1631
    %1637 = vmatprep.subr.mxu0 %v1488
    %1638 = vmatpush1.msra.mxu0 %v1487
    %1639 = vmatprep.subr.mxu0 %v1492
    %1640 = vmatpush1.msra.mxu0 %v1491
    %1641 = vmatprep.subr.mxu0 %v1496
    %1642 = vmatpush1.msra.mxu0 %v1495
    %1643 = vmatprep.subr.mxu0 %v1500
    %1644 = vmatpush1.msra.mxu0 %v1499
    %1645 = vmatprep.subr.mxu0 %v1504
    %1646 = vmatpush1.msra.mxu0 %v1503
    %1647 = vmatprep.subr.mxu0 %v1508
    %1648 = vmatpush1.msra.mxu0 %v1507
    %1649 = vmatprep.subr.mxu0 %v1512
    %1650 = vmatpush1.msra.mxu0 %v1511
    %1651 = vmatprep.subr.mxu0 %v1516
    %1652 = vmatpush1.msra.mxu0 %v1515
    %1653 = vmatprep.subr.mxu0 %v1520
    %1654 = vmatpush1.msra.mxu0 %v1519
    %1655 = vmatprep.subr.mxu0 %v1524
    %1656 = vmatpush1.msra.mxu0 %v1523
    %1657 = vmatprep.subr.mxu0 %v1528
    %1658 = vmatpush1.msra.mxu0 %v1527
    %1659 = vmatprep.subr.mxu0 %v1532
    %1660 = vmatpush1.msra.mxu0 %v1531
    %1661 = vmatprep.subr.mxu0 %v1536
    %1662 = vmatpush1.msra.mxu0 %v1535
    %1663 = vmatprep.subr.mxu0 %v1540
    %1664 = vmatpush1.msra.mxu0 %v1539
    %1665 = vmatprep.subr.mxu0 %v1544
    %1666 = vmatpush1.msra.mxu0 %v1543
    %1667 = vmatprep.subr.mxu0 %v1548
    %1668 = vmatpush1.msra.mxu0 %v1547
    %1669 = vmatprep.subr.mxu0 %v1552
    %1670 = vmatpush1.msra.mxu0 %v1551
    %1671 = vmatprep.subr.mxu0 %v1556
    %1672 = vmatpush1.msra.mxu0 %v1555
    %1673 = vmatprep.subr.mxu0 %v1560
    %1674 = vmatpush1.msra.mxu0 %v1559
    %1675 = vmatprep.subr.mxu0 %v1564
    %1676 = vmatpush1.msra.mxu0 %v1563
    %1677 = vmatprep.subr.mxu0 %v1568
    %1678 = vmatpush1.msra.mxu0 %v1567
    %1679 = vmatprep.subr.mxu0 %v1572
    %1680 = vmatpush1.msra.mxu0 %v1571
    %1681 = vmatprep.subr.mxu0 %v1576
    %1682 = vmatpush1.msra.mxu0 %v1575
    %1683 = vmatprep.subr.mxu0 %v1580
    %1684 = vmatpush1.msra.mxu0 %v1579
    %1685 = vmatprep.subr.mxu0 %v1584
    %1686 = vmatpush1.msra.mxu0 %v1583
    %1687 = vmatprep.subr.mxu0 %v1588
    %1688 = vmatpush1.msra.mxu0 %v1587
    %1689 = vmatprep.subr.mxu0 %v1592
    %1690 = vmatpush1.msra.mxu0 %v1591
    %1691 = vmatprep.subr.mxu0 %v1596
    %1692 = vmatpush1.msra.mxu0 %v1595
    %1693 = vmatprep.subr.mxu0 %v1600
    %1694 = vmatpush1.msra.mxu0 %v1599
    %1695 = vmatprep.subr.mxu0 %v1604
    %1696 = vmatpush1.msra.mxu0 %v1603
    %1697 = vmatprep.subr.mxu0 %v1608
    %1698 = vmatpush1.msra.mxu0 %v1607
    %1699 = vmatprep.subr.mxu0 %v1612
    %1700 = vmatpush1.msra.mxu0 %v1611
    %1701 = vmatprep.mubr.f32.mxu0 %v1485
    %1702 = vmatmul.mubr.f32.gmra.mrb[0].mxu0 %v1482
    %v1703 = vpop.f32.mrb[0].mxu0
    %v1704 = vadd.f32 %v1620, %v1703
    %v1705 = vpop.f32.mrb[0].mxu0
    %v1706 = vadd.f32 %v1624, %v1705
    %1707 = vdwg.mxu0
    %1708 = vmatprep.subr.mxu0 %v1490
    %1709 = vmatpush1.msra.mxu0 %v1489
    %1710 = vmatprep.subr.mxu0 %v1494
    %1711 = vmatpush1.msra.mxu0 %v1493
    %1712 = vmatprep.subr.mxu0 %v1498
    %1713 = vmatpush1.msra.mxu0 %v1497
    %1714 = vmatprep.subr.mxu0 %v1502
    %1715 = vmatpush1.msra.mxu0 %v1501
    %1716 = vmatprep.subr.mxu0 %v1506
    %1717 = vmatpush1.msra.mxu0 %v1505
    %1718 = vmatprep.subr.mxu0 %v1510
    %1719 = vmatpush1.msra.mxu0 %v1509
    %1720 = vmatprep.subr.mxu0 %v1514
    %1721 = vmatpush1.msra.mxu0 %v1513
    %1722 = vmatprep.subr.mxu0 %v1518
    %1723 = vmatpush1.msra.mxu0 %v1517
    %1724 = vmatprep.subr.mxu0 %v1522
    %1725 = vmatpush1.msra.mxu0 %v1521
    %1726 = vmatprep.subr.mxu0 %v1526
    %1727 = vmatpush1.msra.mxu0 %v1525
    %1728 = vmatprep.subr.mxu0 %v1530
    %1729 = vmatpush1.msra.mxu0 %v1529
    %1730 = vmatprep.subr.mxu0 %v1534
    %1731 = vmatpush1.msra.mxu0 %v1533
    %1732 = vmatprep.subr.mxu0 %v1538
    %1733 = vmatpush1.msra.mxu0 %v1537
    %1734 = vmatprep.subr.mxu0 %v1542
    %1735 = vmatpush1.msra.mxu0 %v1541
    %1736 = vmatprep.subr.mxu0 %v1546
    %1737 = vmatpush1.msra.mxu0 %v1545
    %1738 = vmatprep.subr.mxu0 %v1550
    %1739 = vmatpush1.msra.mxu0 %v1549
    %1740 = vmatprep.subr.mxu0 %v1554
    %1741 = vmatpush1.msra.mxu0 %v1553
    %1742 = vmatprep.subr.mxu0 %v1558
    %1743 = vmatpush1.msra.mxu0 %v1557
    %1744 = vmatprep.subr.mxu0 %v1562
    %1745 = vmatpush1.msra.mxu0 %v1561
    %1746 = vmatprep.subr.mxu0 %v1566
    %1747 = vmatpush1.msra.mxu0 %v1565
    %1748 = vmatprep.subr.mxu0 %v1570
    %1749 = vmatpush1.msra.mxu0 %v1569
    %1750 = vmatprep.subr.mxu0 %v1574
    %1751 = vmatpush1.msra.mxu0 %v1573
    %1752 = vmatprep.subr.mxu0 %v1578
    %1753 = vmatpush1.msra.mxu0 %v1577
    %1754 = vmatprep.subr.mxu0 %v1582
    %1755 = vmatpush1.msra.mxu0 %v1581
    %1756 = vmatprep.subr.mxu0 %v1586
    %1757 = vmatpush1.msra.mxu0 %v1585
    %1758 = vmatprep.subr.mxu0 %v1590
    %1759 = vmatpush1.msra.mxu0 %v1589
    %1760 = vmatprep.subr.mxu0 %v1594
    %1761 = vmatpush1.msra.mxu0 %v1593
    %1762 = vmatprep.subr.mxu0 %v1598
    %1763 = vmatpush1.msra.mxu0 %v1597
    %1764 = vmatprep.subr.mxu0 %v1602
    %1765 = vmatpush1.msra.mxu0 %v1601
    %1766 = vmatprep.subr.mxu0 %v1606
    %1767 = vmatpush1.msra.mxu0 %v1605
    %1768 = vmatprep.subr.mxu0 %v1610
    %1769 = vmatpush1.msra.mxu0 %v1609
    %1770 = vmatprep.subr.mxu0 %v1614
    %1771 = vmatpush1.msra.mxu0 %v1613
    %1772 = vmatprep.mubr.f32.mxu0 %v1485
    %1773 = vmatmul.mubr.f32.gmra.mrb[0].mxu0 %v1482
    %v1774 = vpop.f32.mrb[0].mxu0
    %v1775 = vadd.f32 %v1628, %v1774
    %v1776 = vpop.f32.mrb[0].mxu0
    %v1777 = vadd.f32 %v1632, %v1776
    %1778 = vdwg.mxu0
    %v1779 = vxor.u32 %v1704, 2147483648
    %v1780 = vmul.f32 %v1779, 1.442695
    %v1781 = vpow.pop %v1780
    %v1782 = vadd.f32 %v1781, 1.0
    %v1783 = vrcp.pop %v1782
    %v1784 = vmul.f32 1.0, %v1783
    %v1785 = vxor.u32 %v1706, 2147483648
    %v1786 = vmul.f32 %v1785, 1.442695
    %v1787 = vpow.pop %v1786
    %v1788 = vadd.f32 %v1787, 1.0
    %v1789 = vrcp.pop %v1788
    %v1790 = vmul.f32 1.0, %v1789
    %v1791 = vtanh.pop %v1775
    %v1792 = vxor.u32 %v1777, 2147483648
    %v1793 = vmul.f32 %v1792, 1.442695
    %v1794 = vpow.pop %v1793
    %v1795 = vadd.f32 %v1794, 1.0
    %v1796 = vrcp.pop %v1795
    %v1797 = vmul.f32 1.0, %v1796
    %v1798 = vmul.f32 %v1790, %v1486
    %v1799 = vmul.f32 %v1784, %v1791
    %v1800 = vadd.f32 %v1798, %v1799
    %v1801 = vtanh.pop %v1800
    %v1802 = vmul.f32 %v1797, %v1801
    %v1803 = vsel %vm1480, %v1800, %v1486
    %1804 = vst [vmem:[#allocation5] sm:$0xf] %v1803
    %v1805 = vsel %vm1480, %v1802, %v1485
    %1806 = vst [vmem:[#allocation4] sm:$0xf] %v1805
    %v1807 = vsel %vm1480, %v1802, 0.0
    %s1808 = scalar_lea.vmem %s7, 8
    %1809 = vst [vmem:[%s1808] sm:$0xf] %v1807
    %v1810 = vld [vmem:[#allocation6] sm:$0xf]
    %v1811 = vmax.f32 %v1810, %v1807
    %1812 = vst [vmem:[#allocation6] sm:$0xf] %v1811
    %s1813 = sadd.s32 %s42, 3
    %v1814 = vstv %s1813
    %vm1815 = vcmp.lt.s32.totalorder %v1814, %v41
    %v1816 = vld [vmem:[#allocation2] sm:$0xf]
    %v1817 = vld [vmem:[#allocation3] sm:$0xf]
    %s1818 = scalar_lea.vmem %s0, 48
    %v1819 = vld [vmem:[%s1818] sm:$0xff]
    %v1820 = vld [vmem:[%s1818 + $0x8] sm:$0xff]
    %v1821 = vld [vmem:[%s2] sm:$0xff]
    %v1822 = vld [vmem:[%s2 + $0x8] sm:$0xff]
    %v1823 = vld [vmem:[%s2 + $0x10] sm:$0xff]
    %v1824 = vld [vmem:[%s2 + $0x18] sm:$0xff]
    %v1825 = vld [vmem:[%s2 + $0x20] sm:$0xff]
    %v1826 = vld [vmem:[%s2 + $0x28] sm:$0xff]
    %v1827 = vld [vmem:[%s2 + $0x30] sm:$0xff]
    %v1828 = vld [vmem:[%s2 + $0x38] sm:$0xff]
    %v1829 = vld [vmem:[%s2 + $0x40] sm:$0xff]
    %v1830 = vld [vmem:[%s2 + $0x48] sm:$0xff]
    %v1831 = vld [vmem:[%s2 + $0x50] sm:$0xff]
    %v1832 = vld [vmem:[%s2 + $0x58] sm:$0xff]
    %v1833 = vld [vmem:[%s2 + $0x60] sm:$0xff]
    %v1834 = vld [vmem:[%s2 + $0x68] sm:$0xff]
    %v1835 = vld [vmem:[%s2 + $0x70] sm:$0xff]
    %v1836 = vld [vmem:[%s2 + $0x78] sm:$0xff]
    %v1837 = vld [vmem:[%s2 + $0x80] sm:$0xff]
    %v1838 = vld [vmem:[%s2 + $0x88] sm:$0xff]
    %v1839 = vld [vmem:[%s2 + $0x90] sm:$0xff]
    %v1840 = vld [vmem:[%s2 + $0x98] sm:$0xff]
    %v1841 = vld [vmem:[%s2 + $0xa0] sm:$0xff]
    %v1842 = vld [vmem:[%s2 + $0xa8] sm:$0xff]
    %v1843 = vld [vmem:[%s2 + $0xb0] sm:$0xff]
    %v1844 = vld [vmem:[%s2 + $0xb8] sm:$0xff]
    %v1845 = vld [vmem:[%s2 + $0xc0] sm:$0xff]
    %v1846 = vld [vmem:[%s2 + $0xc8] sm:$0xff]
    %v1847 = vld [vmem:[%s2 + $0xd0] sm:$0xff]
    %v1848 = vld [vmem:[%s2 + $0xd8] sm:$0xff]
    %v1849 = vld [vmem:[%s2 + $0xe0] sm:$0xff]
    %v1850 = vld [vmem:[%s2 + $0xe8] sm:$0xff]
    %v1851 = vld [vmem:[%s2 + $0xf0] sm:$0xff]
    %v1852 = vld [vmem:[%s2 + $0xf8] sm:$0xff]
    %v1853 = vld [vmem:[%s2 + $0x100] sm:$0xff]
    %v1854 = vld [vmem:[%s2 + $0x108] sm:$0xff]
    %v1855 = vld [vmem:[%s2 + $0x110] sm:$0xff]
    %v1856 = vld [vmem:[%s2 + $0x118] sm:$0xff]
    %v1857 = vld [vmem:[%s2 + $0x120] sm:$0xff]
    %v1858 = vld [vmem:[%s2 + $0x128] sm:$0xff]
    %v1859 = vld [vmem:[%s2 + $0x130] sm:$0xff]
    %v1860 = vld [vmem:[%s2 + $0x138] sm:$0xff]
    %v1861 = vld [vmem:[%s2 + $0x140] sm:$0xff]
    %v1862 = vld [vmem:[%s2 + $0x148] sm:$0xff]
    %v1863 = vld [vmem:[%s2 + $0x150] sm:$0xff]
    %v1864 = vld [vmem:[%s2 + $0x158] sm:$0xff]
    %v1865 = vld [vmem:[%s2 + $0x160] sm:$0xff]
    %v1866 = vld [vmem:[%s2 + $0x168] sm:$0xff]
    %v1867 = vld [vmem:[%s2 + $0x170] sm:$0xff]
    %v1868 = vld [vmem:[%s2 + $0x178] sm:$0xff]
    %v1869 = vld [vmem:[%s2 + $0x180] sm:$0xff]
    %v1870 = vld [vmem:[%s2 + $0x188] sm:$0xff]
    %v1871 = vld [vmem:[%s2 + $0x190] sm:$0xff]
    %v1872 = vld [vmem:[%s2 + $0x198] sm:$0xff]
    %v1873 = vld [vmem:[%s2 + $0x1a0] sm:$0xff]
    %v1874 = vld [vmem:[%s2 + $0x1a8] sm:$0xff]
    %v1875 = vld [vmem:[%s2 + $0x1b0] sm:$0xff]
    %v1876 = vld [vmem:[%s2 + $0x1b8] sm:$0xff]
    %v1877 = vld [vmem:[%s2 + $0x1c0] sm:$0xff]
    %v1878 = vld [vmem:[%s2 + $0x1c8] sm:$0xff]
    %v1879 = vld [vmem:[%s2 + $0x1d0] sm:$0xff]
    %v1880 = vld [vmem:[%s2 + $0x1d8] sm:$0xff]
    %v1881 = vld [vmem:[%s2 + $0x1e0] sm:$0xff]
    %v1882 = vld [vmem:[%s2 + $0x1e8] sm:$0xff]
    %v1883 = vld [vmem:[%s2 + $0x1f0] sm:$0xff]
    %v1884 = vld [vmem:[%s2 + $0x1f8] sm:$0xff]
    %1885 = vmatprep.subr.mxu0 %v1822
    %1886 = vmatpush1.msra.mxu0 %v1821
    %1887 = vmatprep.subr.mxu0 %v1826
    %1888 = vmatpush1.msra.mxu0 %v1825
    %1889 = vmatprep.subr.mxu0 %v1830
    %1890 = vmatpush1.msra.mxu0 %v1829
    %1891 = vmatprep.subr.mxu0 %v1834
    %1892 = vmatpush1.msra.mxu0 %v1833
    %1893 = vmatprep.subr.mxu0 %v1838
    %1894 = vmatpush1.msra.mxu0 %v1837
    %1895 = vmatprep.subr.mxu0 %v1842
    %1896 = vmatpush1.msra.mxu0 %v1841
    %1897 = vmatprep.subr.mxu0 %v1846
    %1898 = vmatpush1.msra.mxu0 %v1845
    %1899 = vmatprep.subr.mxu0 %v1850
    %1900 = vmatpush1.msra.mxu0 %v1849
    %1901 = vmatprep.subr.mxu0 %v1854
    %1902 = vmatpush1.msra.mxu0 %v1853
    %1903 = vmatprep.subr.mxu0 %v1858
    %1904 = vmatpush1.msra.mxu0 %v1857
    %1905 = vmatprep.subr.mxu0 %v1862
    %1906 = vmatpush1.msra.mxu0 %v1861
    %1907 = vmatprep.subr.mxu0 %v1866
    %1908 = vmatpush1.msra.mxu0 %v1865
    %1909 = vmatprep.subr.mxu0 %v1870
    %1910 = vmatpush1.msra.mxu0 %v1869
    %1911 = vmatprep.subr.mxu0 %v1874
    %1912 = vmatpush1.msra.mxu0 %v1873
    %1913 = vmatprep.subr.mxu0 %v1878
    %1914 = vmatpush1.msra.mxu0 %v1877
    %1915 = vmatprep.subr.mxu0 %v1882
    %1916 = vmatpush1.msra.mxu0 %v1881
    %1917 = vmatprep.subr.mxu0 0.0
    %1918 = vmatpush1.msra.mxu0 0.0
    %1919 = vmatprep.subr.mxu0 0.0
    %1920 = vmatpush1.msra.mxu0 0.0
    %1921 = vmatprep.subr.mxu0 0.0
    %1922 = vmatpush1.msra.mxu0 0.0
    %1923 = vmatprep.subr.mxu0 0.0
    %1924 = vmatpush1.msra.mxu0 0.0
    %1925 = vmatprep.subr.mxu0 0.0
    %1926 = vmatpush1.msra.mxu0 0.0
    %1927 = vmatprep.subr.mxu0 0.0
    %1928 = vmatpush1.msra.mxu0 0.0
    %1929 = vmatprep.subr.mxu0 0.0
    %1930 = vmatpush1.msra.mxu0 0.0
    %1931 = vmatprep.subr.mxu0 0.0
    %1932 = vmatpush1.msra.mxu0 0.0
    %1933 = vmatprep.subr.mxu0 0.0
    %1934 = vmatpush1.msra.mxu0 0.0
    %1935 = vmatprep.subr.mxu0 0.0
    %1936 = vmatpush1.msra.mxu0 0.0
    %1937 = vmatprep.subr.mxu0 0.0
    %1938 = vmatpush1.msra.mxu0 0.0
    %1939 = vmatprep.subr.mxu0 0.0
    %1940 = vmatpush1.msra.mxu0 0.0
    %1941 = vmatprep.subr.mxu0 0.0
    %1942 = vmatpush1.msra.mxu0 0.0
    %1943 = vmatprep.subr.mxu0 0.0
    %1944 = vmatpush1.msra.mxu0 0.0
    %1945 = vmatprep.subr.mxu0 0.0
    %1946 = vmatpush1.msra.mxu0 0.0
    %1947 = vmatprep.subr.mxu0 0.0
    %1948 = vmatpush1.msra.mxu0 0.0
    %1949 = vmatprep.mubr.f32.mxu0 0.0
    %1950 = vmatmul.mubr.f32.gmra.mrb[0].mxu0 %v1816
    %v1951 = vpop.f32.mrb[0].mxu0
    %v1952 = vadd.f32 0.0, %v1951
    %v1953 = vpop.f32.mrb[0].mxu0
    %v1954 = vadd.f32 0.0, %v1953
    %1955 = vdwg.mxu0
    %1956 = vmatprep.subr.mxu0 %v1824
    %1957 = vmatpush1.msra.mxu0 %v1823
    %1958 = vmatprep.subr.mxu0 %v1828
    %1959 = vmatpush1.msra.mxu0 %v1827
    %1960 = vmatprep.subr.mxu0 %v1832
    %1961 = vmatpush1.msra.mxu0 %v1831
    %1962 = vmatprep.subr.mxu0 %v1836
    %1963 = vmatpush1.msra.mxu0 %v1835
    %1964 = vmatprep.subr.mxu0 %v1840
    %1965 = vmatpush1.msra.mxu0 %v1839
    %1966 = vmatprep.subr.mxu0 %v1844
    %1967 = vmatpush1.msra.mxu0 %v1843
    %1968 = vmatprep.subr.mxu0 %v1848
    %1969 = vmatpush1.msra.mxu0 %v1847
    %1970 = vmatprep.subr.mxu0 %v1852
    %1971 = vmatpush1.msra.mxu0 %v1851
    %1972 = vmatprep.subr.mxu0 %v1856
    %1973 = vmatpush1.msra.mxu0 %v1855
    %1974 = vmatprep.subr.mxu0 %v1860
    %1975 = vmatpush1.msra.mxu0 %v1859
    %1976 = vmatprep.subr.mxu0 %v1864
    %1977 = vmatpush1.msra.mxu0 %v1863
    %1978 = vmatprep.subr.mxu0 %v1868
    %1979 = vmatpush1.msra.mxu0 %v1867
    %1980 = vmatprep.subr.mxu0 %v1872
    %1981 = vmatpush1.msra.mxu0 %v1871
    %1982 = vmatprep.subr.mxu0 %v1876
    %1983 = vmatpush1.msra.mxu0 %v1875
    %1984 = vmatprep.subr.mxu0 %v1880
    %1985 = vmatpush1.msra.mxu0 %v1879
    %1986 = vmatprep.subr.mxu0 %v1884
    %1987 = vmatpush1.msra.mxu0 %v1883
    %1988 = vmatprep.subr.mxu0 0.0
    %1989 = vmatpush1.msra.mxu0 0.0
    %1990 = vmatprep.subr.mxu0 0.0
    %1991 = vmatpush1.msra.mxu0 0.0
    %1992 = vmatprep.subr.mxu0 0.0
    %1993 = vmatpush1.msra.mxu0 0.0
    %1994 = vmatprep.subr.mxu0 0.0
    %1995 = vmatpush1.msra.mxu0 0.0
    %1996 = vmatprep.subr.mxu0 0.0
    %1997 = vmatpush1.msra.mxu0 0.0
    %1998 = vmatprep.subr.mxu0 0.0
    %1999 = vmatpush1.msra.mxu0 0.0
    %2000 = vmatprep.subr.mxu0 0.0
    %2001 = vmatpush1.msra.mxu0 0.0
    %2002 = vmatprep.subr.mxu0 0.0
    %2003 = vmatpush1.msra.mxu0 0.0
    %2004 = vmatprep.subr.mxu0 0.0
    %2005 = vmatpush1.msra.mxu0 0.0
    %2006 = vmatprep.subr.mxu0 0.0
    %2007 = vmatpush1.msra.mxu0 0.0
    %2008 = vmatprep.subr.mxu0 0.0
    %2009 = vmatpush1.msra.mxu0 0.0
    %2010 = vmatprep.subr.mxu0 0.0
    %2011 = vmatpush1.msra.mxu0 0.0
    %2012 = vmatprep.subr.mxu0 0.0
    %2013 = vmatpush1.msra.mxu0 0.0
    %2014 = vmatprep.subr.mxu0 0.0
    %2015 = vmatpush1.msra.mxu0 0.0
    %2016 = vmatprep.subr.mxu0 0.0
    %2017 = vmatpush1.msra.mxu0 0.0
    %2018 = vmatprep.subr.mxu0 0.0
    %2019 = vmatpush1.msra.mxu0 0.0
    %2020 = vmatprep.mubr.f32.mxu0 0.0
    %2021 = vmatmul.mubr.f32.gmra.mrb[0].mxu0 %v1816
    %v2022 = vpop.f32.mrb[0].mxu0
    %v2023 = vadd.f32 0.0, %v2022
    %v2024 = vpop.f32.mrb[0].mxu0
    %v2025 = vadd.f32 0.0, %v2024
    %2026 = vdwg.mxu0
    %v2031 = vcombine.low %v1952, %v1954
    %v2032 = vcombine.low %v2023, %v2025
    %v2035 = vadd.f32 %v1819, %v2031
    %v2036 = vadd.f32 %v1820, %v2032
    %v2037 = vxor.u32 %v2035, 2147483648
    %v2038 = vmul.f32 %v2037, 1.442695
    %v2039 = vpow.pop %v2038
    %v2040 = vadd.f32 %v2039, 1.0
    %v2041 = vrcp.pop %v2040
    %v2042 = vmul.f32 1.0, %v2041
    %v2044 = vrot.slane %v2035, 4
    %v2046 = vxor.u32 %v2044, 2147483648
    %v2047 = vmul.f32 %v2046, 1.442695
    %v2048 = vpow.pop %v2047
    %v2049 = vadd.f32 %v2048, 1.0
    %v2050 = vrcp.pop %v2049
    %v2051 = vmul.f32 1.0, %v2050
    %v2052 = vtanh.pop %v2036
    %v2054 = vrot.slane %v2036, 4
    %v2056 = vxor.u32 %v2054, 2147483648
    %v2057 = vmul.f32 %v2056, 1.442695
    %v2058 = vpow.pop %v2057
    %v2059 = vadd.f32 %v2058, 1.0
    %v2060 = vrcp.pop %v2059
    %v2061 = vmul.f32 1.0, %v2060
    %v2062 = vmul.f32 %v2051, %v1817
    %v2063 = vmul.f32 %v2042, %v2052
    %v2064 = vadd.f32 %v2062, %v2063
    %v2065 = vtanh.pop %v2064
    %v2066 = vmul.f32 %v2061, %v2065
    %v2067 = vsel %vm1815, 1, 0
    %2068 = vset.pattern.permute.xlu0 0
    %2069 = vperm.xlu0 %2068, %v2067
    %v2070 = vpop.permute.xlu0 %2069
    %vm2071 = vcmp.eq.s32.totalorder %v2070, 1
    %v2072 = vsel %vm2071, %v2064, %v1817
    %v2073 = vsel %vm2071, %v2066, %v1816
    %2074 = vst [vmem:[#allocation3] sm:$0xf] %v2072
    %2075 = vst [vmem:[#allocation2] sm:$0xf] %v2073
    %v2076 = vld [vmem:[#allocation4] sm:$0xf]
    %v2077 = vld [vmem:[#allocation5] sm:$0xf]
    %v2078 = vld [vmem:[%s3] sm:$0xff]
    %v2079 = vld [vmem:[%s3 + $0x8] sm:$0xff]
    %v2080 = vld [vmem:[%s3 + $0x10] sm:$0xff]
    %v2081 = vld [vmem:[%s3 + $0x18] sm:$0xff]
    %v2082 = vld [vmem:[%s3 + $0x20] sm:$0xff]
    %v2083 = vld [vmem:[%s3 + $0x28] sm:$0xff]
    %v2084 = vld [vmem:[%s3 + $0x30] sm:$0xff]
    %v2085 = vld [vmem:[%s3 + $0x38] sm:$0xff]
    %v2086 = vld [vmem:[%s3 + $0x40] sm:$0xff]
    %v2087 = vld [vmem:[%s3 + $0x48] sm:$0xff]
    %v2088 = vld [vmem:[%s3 + $0x50] sm:$0xff]
    %v2089 = vld [vmem:[%s3 + $0x58] sm:$0xff]
    %v2090 = vld [vmem:[%s3 + $0x60] sm:$0xff]
    %v2091 = vld [vmem:[%s3 + $0x68] sm:$0xff]
    %v2092 = vld [vmem:[%s3 + $0x70] sm:$0xff]
    %v2093 = vld [vmem:[%s3 + $0x78] sm:$0xff]
    %v2094 = vld [vmem:[%s3 + $0x80] sm:$0xff]
    %v2095 = vld [vmem:[%s3 + $0x88] sm:$0xff]
    %v2096 = vld [vmem:[%s3 + $0x90] sm:$0xff]
    %v2097 = vld [vmem:[%s3 + $0x98] sm:$0xff]
    %v2098 = vld [vmem:[%s3 + $0xa0] sm:$0xff]
    %v2099 = vld [vmem:[%s3 + $0xa8] sm:$0xff]
    %v2100 = vld [vmem:[%s3 + $0xb0] sm:$0xff]
    %v2101 = vld [vmem:[%s3 + $0xb8] sm:$0xff]
    %v2102 = vld [vmem:[%s3 + $0xc0] sm:$0xff]
    %v2103 = vld [vmem:[%s3 + $0xc8] sm:$0xff]
    %v2104 = vld [vmem:[%s3 + $0xd0] sm:$0xff]
    %v2105 = vld [vmem:[%s3 + $0xd8] sm:$0xff]
    %v2106 = vld [vmem:[%s3 + $0xe0] sm:$0xff]
    %v2107 = vld [vmem:[%s3 + $0xe8] sm:$0xff]
    %v2108 = vld [vmem:[%s3 + $0xf0] sm:$0xff]
    %v2109 = vld [vmem:[%s3 + $0xf8] sm:$0xff]
    %v2110 = vld [vmem:[%s3 + $0x100] sm:$0xff]
    %v2111 = vld [vmem:[%s3 + $0x108] sm:$0xff]
    %v2112 = vld [vmem:[%s3 + $0x110] sm:$0xff]
    %v2113 = vld [vmem:[%s3 + $0x118] sm:$0xff]
    %v2114 = vld [vmem:[%s3 + $0x120] sm:$0xff]
    %v2115 = vld [vmem:[%s3 + $0x128] sm:$0xff]
    %v2116 = vld [vmem:[%s3 + $0x130] sm:$0xff]
    %v2117 = vld [vmem:[%s3 + $0x138] sm:$0xff]
    %v2118 = vld [vmem:[%s3 + $0x140] sm:$0xff]
    %v2119 = vld [vmem:[%s3 + $0x148] sm:$0xff]
    %v2120 = vld [vmem:[%s3 + $0x150] sm:$0xff]
    %v2121 = vld [vmem:[%s3 + $0x158] sm:$0xff]
    %v2122 = vld [vmem:[%s3 + $0x160] sm:$0xff]
    %v2123 = vld [vmem:[%s3 + $0x168] sm:$0xff]
    %v2124 = vld [vmem:[%s3 + $0x170] sm:$0xff]
    %v2125 = vld [vmem:[%s3 + $0x178] sm:$0xff]
    %v2126 = vld [vmem:[%s3 + $0x180] sm:$0xff]
    %v2127 = vld [vmem:[%s3 + $0x188] sm:$0xff]
    %v2128 = vld [vmem:[%s3 + $0x190] sm:$0xff]
    %v2129 = vld [vmem:[%s3 + $0x198] sm:$0xff]
    %v2130 = vld [vmem:[%s3 + $0x1a0] sm:$0xff]
    %v2131 = vld [vmem:[%s3 + $0x1a8] sm:$0xff]
    %v2132 = vld [vmem:[%s3 + $0x1b0] sm:$0xff]
    %v2133 = vld [vmem:[%s3 + $0x1b8] sm:$0xff]
    %v2134 = vld [vmem:[%s3 + $0x1c0] sm:$0xff]
    %v2135 = vld [vmem:[%s3 + $0x1c8] sm:$0xff]
    %v2136 = vld [vmem:[%s3 + $0x1d0] sm:$0xff]
    %v2137 = vld [vmem:[%s3 + $0x1d8] sm:$0xff]
    %v2138 = vld [vmem:[%s3 + $0x1e0] sm:$0xff]
    %v2139 = vld [vmem:[%s3 + $0x1e8] sm:$0xff]
    %v2140 = vld [vmem:[%s3 + $0x1f0] sm:$0xff]
    %v2141 = vld [vmem:[%s3 + $0x1f8] sm:$0xff]
    %v2142 = vld [vmem:[%s3 + $0x200] sm:$0xff]
    %v2143 = vld [vmem:[%s3 + $0x208] sm:$0xff]
    %v2144 = vld [vmem:[%s3 + $0x210] sm:$0xff]
    %v2145 = vld [vmem:[%s3 + $0x218] sm:$0xff]
    %v2146 = vld [vmem:[%s3 + $0x220] sm:$0xff]
    %v2147 = vld [vmem:[%s3 + $0x228] sm:$0xff]
    %v2148 = vld [vmem:[%s3 + $0x230] sm:$0xff]
    %v2149 = vld [vmem:[%s3 + $0x238] sm:$0xff]
    %v2150 = vld [vmem:[%s3 + $0x240] sm:$0xff]
    %v2151 = vld [vmem:[%s3 + $0x248] sm:$0xff]
    %v2152 = vld [vmem:[%s3 + $0x250] sm:$0xff]
    %v2153 = vld [vmem:[%s3 + $0x258] sm:$0xff]
    %v2154 = vld [vmem:[%s3 + $0x260] sm:$0xff]
    %v2155 = vld [vmem:[%s3 + $0x268] sm:$0xff]
    %v2156 = vld [vmem:[%s3 + $0x270] sm:$0xff]
    %v2157 = vld [vmem:[%s3 + $0x278] sm:$0xff]
    %v2158 = vld [vmem:[%s3 + $0x280] sm:$0xff]
    %v2159 = vld [vmem:[%s3 + $0x288] sm:$0xff]
    %v2160 = vld [vmem:[%s3 + $0x290] sm:$0xff]
    %v2161 = vld [vmem:[%s3 + $0x298] sm:$0xff]
    %v2162 = vld [vmem:[%s3 + $0x2a0] sm:$0xff]
    %v2163 = vld [vmem:[%s3 + $0x2a8] sm:$0xff]
    %v2164 = vld [vmem:[%s3 + $0x2b0] sm:$0xff]
    %v2165 = vld [vmem:[%s3 + $0x2b8] sm:$0xff]
    %v2166 = vld [vmem:[%s3 + $0x2c0] sm:$0xff]
    %v2167 = vld [vmem:[%s3 + $0x2c8] sm:$0xff]
    %v2168 = vld [vmem:[%s3 + $0x2d0] sm:$0xff]
    %v2169 = vld [vmem:[%s3 + $0x2d8] sm:$0xff]
    %v2170 = vld [vmem:[%s3 + $0x2e0] sm:$0xff]
    %v2171 = vld [vmem:[%s3 + $0x2e8] sm:$0xff]
    %v2172 = vld [vmem:[%s3 + $0x2f0] sm:$0xff]
    %v2173 = vld [vmem:[%s3 + $0x2f8] sm:$0xff]
    %v2174 = vld [vmem:[%s3 + $0x300] sm:$0xff]
    %v2175 = vld [vmem:[%s3 + $0x308] sm:$0xff]
    %v2176 = vld [vmem:[%s3 + $0x310] sm:$0xff]
    %v2177 = vld [vmem:[%s3 + $0x318] sm:$0xff]
    %v2178 = vld [vmem:[%s3 + $0x320] sm:$0xff]
    %v2179 = vld [vmem:[%s3 + $0x328] sm:$0xff]
    %v2180 = vld [vmem:[%s3 + $0x330] sm:$0xff]
    %v2181 = vld [vmem:[%s3 + $0x338] sm:$0xff]
    %v2182 = vld [vmem:[%s3 + $0x340] sm:$0xff]
    %v2183 = vld [vmem:[%s3 + $0x348] sm:$0xff]
    %v2184 = vld [vmem:[%s3 + $0x350] sm:$0xff]
    %v2185 = vld [vmem:[%s3 + $0x358] sm:$0xff]
    %v2186 = vld [vmem:[%s3 + $0x360] sm:$0xff]
    %v2187 = vld [vmem:[%s3 + $0x368] sm:$0xff]
    %v2188 = vld [vmem:[%s3 + $0x370] sm:$0xff]
    %v2189 = vld [vmem:[%s3 + $0x378] sm:$0xff]
    %v2190 = vld [vmem:[%s3 + $0x380] sm:$0xff]
    %v2191 = vld [vmem:[%s3 + $0x388] sm:$0xff]
    %v2192 = vld [vmem:[%s3 + $0x390] sm:$0xff]
    %v2193 = vld [vmem:[%s3 + $0x398] sm:$0xff]
    %v2194 = vld [vmem:[%s3 + $0x3a0] sm:$0xff]
    %v2195 = vld [vmem:[%s3 + $0x3a8] sm:$0xff]
    %v2196 = vld [vmem:[%s3 + $0x3b0] sm:$0xff]
    %v2197 = vld [vmem:[%s3 + $0x3b8] sm:$0xff]
    %v2198 = vld [vmem:[%s3 + $0x3c0] sm:$0xff]
    %v2199 = vld [vmem:[%s3 + $0x3c8] sm:$0xff]
    %v2200 = vld [vmem:[%s3 + $0x3d0] sm:$0xff]
    %v2201 = vld [vmem:[%s3 + $0x3d8] sm:$0xff]
    %v2202 = vld [vmem:[%s3 + $0x3e0] sm:$0xff]
    %v2203 = vld [vmem:[%s3 + $0x3e8] sm:$0xff]
    %v2204 = vld [vmem:[%s3 + $0x3f0] sm:$0xff]
    %v2205 = vld [vmem:[%s3 + $0x3f8] sm:$0xff]
    %v2206 = vld [vmem:[%s4] sm:$0xf]
    %v2208 = vlaneseq
    %v2209 = vshrl.u32 %v2208, 7
    %v2210 = vsub.s32 0, %v2209
    %v2211 = vrot.slane %v2206, %v2210
    %v2212 = vlaneseq
    %v2213 = vshrl.u32 %v2212, 7
    %v2214 = vsub.s32 1, %v2213
    %v2215 = vrot.slane %v2206, %v2214
    %v2216 = vlaneseq
    %v2217 = vshrl.u32 %v2216, 7
    %v2218 = vsub.s32 2, %v2217
    %v2219 = vrot.slane %v2206, %v2218
    %v2220 = vlaneseq
    %v2221 = vshrl.u32 %v2220, 7
    %v2222 = vsub.s32 3, %v2221
    %v2223 = vrot.slane %v2206, %v2222
    %2228 = vmatprep.subr.mxu0 %v2079
    %2229 = vmatpush1.msra.mxu0 %v2078
    %2230 = vmatprep.subr.mxu0 %v2083
    %2231 = vmatpush1.msra.mxu0 %v2082
    %2232 = vmatprep.subr.mxu0 %v2087
    %2233 = vmatpush1.msra.mxu0 %v2086
    %2234 = vmatprep.subr.mxu0 %v2091
    %2235 = vmatpush1.msra.mxu0 %v2090
    %2236 = vmatprep.subr.mxu0 %v2095
    %2237 = vmatpush1.msra.mxu0 %v2094
    %2238 = vmatprep.subr.mxu0 %v2099
    %2239 = vmatpush1.msra.mxu0 %v2098
    %2240 = vmatprep.subr.mxu0 %v2103
    %2241 = vmatpush1.msra.mxu0 %v2102
    %2242 = vmatprep.subr.mxu0 %v2107
    %2243 = vmatpush1.msra.mxu0 %v2106
    %2244 = vmatprep.subr.mxu0 %v2111
    %2245 = vmatpush1.msra.mxu0 %v2110
    %2246 = vmatprep.subr.mxu0 %v2115
    %2247 = vmatpush1.msra.mxu0 %v2114
    %2248 = vmatprep.subr.mxu0 %v2119
    %2249 = vmatpush1.msra.mxu0 %v2118
    %2250 = vmatprep.subr.mxu0 %v2123
    %2251 = vmatpush1.msra.mxu0 %v2122
    %2252 = vmatprep.subr.mxu0 %v2127
    %2253 = vmatpush1.msra.mxu0 %v2126
    %2254 = vmatprep.subr.mxu0 %v2131
    %2255 = vmatpush1.msra.mxu0 %v2130
    %2256 = vmatprep.subr.mxu0 %v2135
    %2257 = vmatpush1.msra.mxu0 %v2134
    %2258 = vmatprep.subr.mxu0 %v2139
    %2259 = vmatpush1.msra.mxu0 %v2138
    %2260 = vmatprep.subr.mxu0 %v2143
    %2261 = vmatpush1.msra.mxu0 %v2142
    %2262 = vmatprep.subr.mxu0 %v2147
    %2263 = vmatpush1.msra.mxu0 %v2146
    %2264 = vmatprep.subr.mxu0 %v2151
    %2265 = vmatpush1.msra.mxu0 %v2150
    %2266 = vmatprep.subr.mxu0 %v2155
    %2267 = vmatpush1.msra.mxu0 %v2154
    %2268 = vmatprep.subr.mxu0 %v2159
    %2269 = vmatpush1.msra.mxu0 %v2158
    %2270 = vmatprep.subr.mxu0 %v2163
    %2271 = vmatpush1.msra.mxu0 %v2162
    %2272 = vmatprep.subr.mxu0 %v2167
    %2273 = vmatpush1.msra.mxu0 %v2166
    %2274 = vmatprep.subr.mxu0 %v2171
    %2275 = vmatpush1.msra.mxu0 %v2170
    %2276 = vmatprep.subr.mxu0 %v2175
    %2277 = vmatpush1.msra.mxu0 %v2174
    %2278 = vmatprep.subr.mxu0 %v2179
    %2279 = vmatpush1.msra.mxu0 %v2178
    %2280 = vmatprep.subr.mxu0 %v2183
    %2281 = vmatpush1.msra.mxu0 %v2182
    %2282 = vmatprep.subr.mxu0 %v2187
    %2283 = vmatpush1.msra.mxu0 %v2186
    %2284 = vmatprep.subr.mxu0 %v2191
    %2285 = vmatpush1.msra.mxu0 %v2190
    %2286 = vmatprep.subr.mxu0 %v2195
    %2287 = vmatpush1.msra.mxu0 %v2194
    %2288 = vmatprep.subr.mxu0 %v2199
    %2289 = vmatpush1.msra.mxu0 %v2198
    %2290 = vmatprep.subr.mxu0 %v2203
    %2291 = vmatpush1.msra.mxu0 %v2202
    %2292 = vmatprep.mubr.f32.mxu0 %v2076
    %2293 = vmatmul.mubr.f32.gmra.mrb[0].mxu0 %v2073
    %v2294 = vpop.f32.mrb[0].mxu0
    %v2295 = vadd.f32 %v2211, %v2294
    %v2296 = vpop.f32.mrb[0].mxu0
    %v2297 = vadd.f32 %v2215, %v2296
    %2298 = vdwg.mxu0
    %2299 = vmatprep.subr.mxu0 %v2081
    %2300 = vmatpush1.msra.mxu0 %v2080
    %2301 = vmatprep.subr.mxu0 %v2085
    %2302 = vmatpush1.msra.mxu0 %v2084
    %2303 = vmatprep.subr.mxu0 %v2089
    %2304 = vmatpush1.msra.mxu0 %v2088
    %2305 = vmatprep.subr.mxu0 %v2093
    %2306 = vmatpush1.msra.mxu0 %v2092
    %2307 = vmatprep.subr.mxu0 %v2097
    %2308 = vmatpush1.msra.mxu0 %v2096
    %2309 = vmatprep.subr.mxu0 %v2101
    %2310 = vmatpush1.msra.mxu0 %v2100
    %2311 = vmatprep.subr.mxu0 %v2105
    %2312 = vmatpush1.msra.mxu0 %v2104
    %2313 = vmatprep.subr.mxu0 %v2109
    %2314 = vmatpush1.msra.mxu0 %v2108
    %2315 = vmatprep.subr.mxu0 %v2113
    %2316 = vmatpush1.msra.mxu0 %v2112
    %2317 = vmatprep.subr.mxu0 %v2117
    %2318 = vmatpush1.msra.mxu0 %v2116
    %2319 = vmatprep.subr.mxu0 %v2121
    %2320 = vmatpush1.msra.mxu0 %v2120
    %2321 = vmatprep.subr.mxu0 %v2125
    %2322 = vmatpush1.msra.mxu0 %v2124
    %2323 = vmatprep.subr.mxu0 %v2129
    %2324 = vmatpush1.msra.mxu0 %v2128
    %2325 = vmatprep.subr.mxu0 %v2133
    %2326 = vmatpush1.msra.mxu0 %v2132
    %2327 = vmatprep.subr.mxu0 %v2137
    %2328 = vmatpush1.msra.mxu0 %v2136
    %2329 = vmatprep.subr.mxu0 %v2141
    %2330 = vmatpush1.msra.mxu0 %v2140
    %2331 = vmatprep.subr.mxu0 %v2145
    %2332 = vmatpush1.msra.mxu0 %v2144
    %2333 = vmatprep.subr.mxu0 %v2149
    %2334 = vmatpush1.msra.mxu0 %v2148
    %2335 = vmatprep.subr.mxu0 %v2153
    %2336 = vmatpush1.msra.mxu0 %v2152
    %2337 = vmatprep.subr.mxu0 %v2157
    %2338 = vmatpush1.msra.mxu0 %v2156
    %2339 = vmatprep.subr.mxu0 %v2161
    %2340 = vmatpush1.msra.mxu0 %v2160
    %2341 = vmatprep.subr.mxu0 %v2165
    %2342 = vmatpush1.msra.mxu0 %v2164
    %2343 = vmatprep.subr.mxu0 %v2169
    %2344 = vmatpush1.msra.mxu0 %v2168
    %2345 = vmatprep.subr.mxu0 %v2173
    %2346 = vmatpush1.msra.mxu0 %v2172
    %2347 = vmatprep.subr.mxu0 %v2177
    %2348 = vmatpush1.msra.mxu0 %v2176
    %2349 = vmatprep.subr.mxu0 %v2181
    %2350 = vmatpush1.msra.mxu0 %v2180
    %2351 = vmatprep.subr.mxu0 %v2185
    %2352 = vmatpush1.msra.mxu0 %v2184
    %2353 = vmatprep.subr.mxu0 %v2189
    %2354 = vmatpush1.msra.mxu0 %v2188
    %2355 = vmatprep.subr.mxu0 %v2193
    %2356 = vmatpush1.msra.mxu0 %v2192
    %2357 = vmatprep.subr.mxu0 %v2197
    %2358 = vmatpush1.msra.mxu0 %v2196
    %2359 = vmatprep.subr.mxu0 %v2201
    %2360 = vmatpush1.msra.mxu0 %v2200
    %2361 = vmatprep.subr.mxu0 %v2205
    %2362 = vmatpush1.msra.mxu0 %v2204
    %2363 = vmatprep.mubr.f32.mxu0 %v2076
    %2364 = vmatmul.mubr.f32.gmra.mrb[0].mxu0 %v2073
    %v2365 = vpop.f32.mrb[0].mxu0
    %v2366 = vadd.f32 %v2219, %v2365
    %v2367 = vpop.f32.mrb[0].mxu0
    %v2368 = vadd.f32 %v2223, %v2367
    %2369 = vdwg.mxu0
    %v2370 = vxor.u32 %v2295, 2147483648
    %v2371 = vmul.f32 %v2370, 1.442695
    %v2372 = vpow.pop %v2371
    %v2373 = vadd.f32 %v2372, 1.0
    %v2374 = vrcp.pop %v2373
    %v2375 = vmul.f32 1.0, %v2374
    %v2376 = vxor.u32 %v2297, 2147483648
    %v2377 = vmul.f32 %v2376, 1.442695
    %v2378 = vpow.pop %v2377
    %v2379 = vadd.f32 %v2378, 1.0
    %v2380 = vrcp.pop %v2379
    %v2381 = vmul.f32 1.0, %v2380
    %v2382 = vtanh.pop %v2366
    %v2383 = vxor.u32 %v2368, 2147483648
    %v2384 = vmul.f32 %v2383, 1.442695
    %v2385 = vpow.pop %v2384
    %v2386 = vadd.f32 %v2385, 1.0
    %v2387 = vrcp.pop %v2386
    %v2388 = vmul.f32 1.0, %v2387
    %v2389 = vmul.f32 %v2381, %v2077
    %v2390 = vmul.f32 %v2375, %v2382
    %v2391 = vadd.f32 %v2389, %v2390
    %v2392 = vtanh.pop %v2391
    %v2393 = vmul.f32 %v2388, %v2392
    %v2394 = vsel %vm2071, %v2391, %v2077
    %2395 = vst [vmem:[#allocation5] sm:$0xf] %v2394
    %v2396 = vsel %vm2071, %v2393, %v2076
    %2397 = vst [vmem:[#allocation4] sm:$0xf] %v2396
    %v2398 = vsel %vm2071, %v2393, 0.0
    %s2399 = scalar_lea.vmem %s7, 12
    %2400 = vst [vmem:[%s2399] sm:$0xf] %v2398
    %v2401 = vld [vmem:[#allocation6] sm:$0xf]
    %v2402 = vmax.f32 %v2401, %v2398
    %2403 = vst [vmem:[#allocation6] sm:$0xf] %v2402
    %s2404 = sadd.s32 %s42, 4
    %v2405 = vstv %s2404
    %vm2406 = vcmp.lt.s32.totalorder %v2405, %v41
    %v2407 = vld [vmem:[#allocation2] sm:$0xf]
    %v2408 = vld [vmem:[#allocation3] sm:$0xf]
    %s2409 = scalar_lea.vmem %s0, 64
    %v2410 = vld [vmem:[%s2409] sm:$0xff]
    %v2411 = vld [vmem:[%s2409 + $0x8] sm:$0xff]
    %v2412 = vld [vmem:[%s2] sm:$0xff]
    %v2413 = vld [vmem:[%s2 + $0x8] sm:$0xff]
    %v2414 = vld [vmem:[%s2 + $0x10] sm:$0xff]
    %v2415 = vld [vmem:[%s2 + $0x18] sm:$0xff]
    %v2416 = vld [vmem:[%s2 + $0x20] sm:$0xff]
    %v2417 = vld [vmem:[%s2 + $0x28] sm:$0xff]
    %v2418 = vld [vmem:[%s2 + $0x30] sm:$0xff]
    %v2419 = vld [vmem:[%s2 + $0x38] sm:$0xff]
    %v2420 = vld [vmem:[%s2 + $0x40] sm:$0xff]
    %v2421 = vld [vmem:[%s2 + $0x48] sm:$0xff]
    %v2422 = vld [vmem:[%s2 + $0x50] sm:$0xff]
    %v2423 = vld [vmem:[%s2 + $0x58] sm:$0xff]
    %v2424 = vld [vmem:[%s2 + $0x60] sm:$0xff]
    %v2425 = vld [vmem:[%s2 + $0x68] sm:$0xff]
    %v2426 = vld [vmem:[%s2 + $0x70] sm:$0xff]
    %v2427 = vld [vmem:[%s2 + $0x78] sm:$0xff]
    %v2428 = vld [vmem:[%s2 + $0x80] sm:$0xff]
    %v2429 = vld [vmem:[%s2 + $0x88] sm:$0xff]
    %v2430 = vld [vmem:[%s2 + $0x90] sm:$0xff]
    %v2431 = vld [vmem:[%s2 + $0x98] sm:$0xff]
    %v2432 = vld [vmem:[%s2 + $0xa0] sm:$0xff]
    %v2433 = vld [vmem:[%s2 + $0xa8] sm:$0xff]
    %v2434 = vld [vmem:[%s2 + $0xb0] sm:$0xff]
    %v2435 = vld [vmem:[%s2 + $0xb8] sm:$0xff]
    %v2436 = vld [vmem:[%s2 + $0xc0] sm:$0xff]
    %v2437 = vld [vmem:[%s2 + $0xc8] sm:$0xff]
    %v2438 = vld [vmem:[%s2 + $0xd0] sm:$0xff]
    %v2439 = vld [vmem:[%s2 + $0xd8] sm:$0xff]
    %v2440 = vld [vmem:[%s2 + $0xe0] sm:$0xff]
    %v2441 = vld [vmem:[%s2 + $0xe8] sm:$0xff]
    %v2442 = vld [vmem:[%s2 + $0xf0] sm:$0xff]
    %v2443 = vld [vmem:[%s2 + $0xf8] sm:$0xff]
    %v2444 = vld [vmem:[%s2 + $0x100] sm:$0xff]
    %v2445 = vld [vmem:[%s2 + $0x108] sm:$0xff]
    %v2446 = vld [vmem:[%s2 + $0x110] sm:$0xff]
    %v2447 = vld [vmem:[%s2 + $0x118] sm:$0xff]
    %v2448 = vld [vmem:[%s2 + $0x120] sm:$0xff]
    %v2449 = vld [vmem:[%s2 + $0x128] sm:$0xff]
    %v2450 = vld [vmem:[%s2 + $0x130] sm:$0xff]
    %v2451 = vld [vmem:[%s2 + $0x138] sm:$0xff]
    %v2452 = vld [vmem:[%s2 + $0x140] sm:$0xff]
    %v2453 = vld [vmem:[%s2 + $0x148] sm:$0xff]
    %v2454 = vld [vmem:[%s2 + $0x150] sm:$0xff]
    %v2455 = vld [vmem:[%s2 + $0x158] sm:$0xff]
    %v2456 = vld [vmem:[%s2 + $0x160] sm:$0xff]
    %v2457 = vld [vmem:[%s2 + $0x168] sm:$0xff]
    %v2458 = vld [vmem:[%s2 + $0x170] sm:$0xff]
    %v2459 = vld [vmem:[%s2 + $0x178] sm:$0xff]
    %v2460 = vld [vmem:[%s2 + $0x180] sm:$0xff]
    %v2461 = vld [vmem:[%s2 + $0x188] sm:$0xff]
    %v2462 = vld [vmem:[%s2 + $0x190] sm:$0xff]
    %v2463 = vld [vmem:[%s2 + $0x198] sm:$0xff]
    %v2464 = vld [vmem:[%s2 + $0x1a0] sm:$0xff]
    %v2465 = vld [vmem:[%s2 + $0x1a8] sm:$0xff]
    %v2466 = vld [vmem:[%s2 + $0x1b0] sm:$0xff]
    %v2467 = vld [vmem:[%s2 + $0x1b8] sm:$0xff]
    %v2468 = vld [vmem:[%s2 + $0x1c0] sm:$0xff]
    %v2469 = vld [vmem:[%s2 + $0x1c8] sm:$0xff]
    %v2470 = vld [vmem:[%s2 + $0x1d0] sm:$0xff]
    %v2471 = vld [vmem:[%s2 + $0x1d8] sm:$0xff]
    %v2472 = vld [vmem:[%s2 + $0x1e0] sm:$0xff]
    %v2473 = vld [vmem:[%s2 + $0x1e8] sm:$0xff]
    %v2474 = vld [vmem:[%s2 + $0x1f0] sm:$0xff]
    %v2475 = vld [vmem:[%s2 + $0x1f8] sm:$0xff]
    %2476 = vmatprep.subr.mxu0 %v2413
    %2477 = vmatpush1.msra.mxu0 %v2412
    %2478 = vmatprep.subr.mxu0 %v2417
    %2479 = vmatpush1.msra.mxu0 %v2416
    %2480 = vmatprep.subr.mxu0 %v2421
    %2481 = vmatpush1.msra.mxu0 %v2420
    %2482 = vmatprep.subr.mxu0 %v2425
    %2483 = vmatpush1.msra.mxu0 %v2424
    %2484 = vmatprep.subr.mxu0 %v2429
    %2485 = vmatpush1.msra.mxu0 %v2428
    %2486 = vmatprep.subr.mxu0 %v2433
    %2487 = vmatpush1.msra.mxu0 %v2432
    %2488 = vmatprep.subr.mxu0 %v2437
    %2489 = vmatpush1.msra.mxu0 %v2436
    %2490 = vmatprep.subr.mxu0 %v2441
    %2491 = vmatpush1.msra.mxu0 %v2440
    %2492 = vmatprep.subr.mxu0 %v2445
    %2493 = vmatpush1.msra.mxu0 %v2444
    %2494 = vmatprep.subr.mxu0 %v2449
    %2495 = vmatpush1.msra.mxu0 %v2448
    %2496 = vmatprep.subr.mxu0 %v2453
    %2497 = vmatpush1.msra.mxu0 %v2452
    %2498 = vmatprep.subr.mxu0 %v2457
    %2499 = vmatpush1.msra.mxu0 %v2456
    %2500 = vmatprep.subr.mxu0 %v2461
    %2501 = vmatpush1.msra.mxu0 %v2460
    %2502 = vmatprep.subr.mxu0 %v2465
    %2503 = vmatpush1.msra.mxu0 %v2464
    %2504 = vmatprep.subr.mxu0 %v2469
    %2505 = vmatpush1.msra.mxu0 %v2468
    %2506 = vmatprep.subr.mxu0 %v2473
    %2507 = vmatpush1.msra.mxu0 %v2472
    %2508 = vmatprep.subr.mxu0 0.0
    %2509 = vmatpush1.msra.mxu0 0.0
    %2510 = vmatprep.subr.mxu0 0.0
    %2511 = vmatpush1.msra.mxu0 0.0
    %2512 = vmatprep.subr.mxu0 0.0
    %2513 = vmatpush1.msra.mxu0 0.0
    %2514 = vmatprep.subr.mxu0 0.0
    %2515 = vmatpush1.msra.mxu0 0.0
    %2516 = vmatprep.subr.mxu0 0.0
    %2517 = vmatpush1.msra.mxu0 0.0
    %2518 = vmatprep.subr.mxu0 0.0
    %2519 = vmatpush1.msra.mxu0 0.0
    %2520 = vmatprep.subr.mxu0 0.0
    %2521 = vmatpush1.msra.mxu0 0.0
    %2522 = vmatprep.subr.mxu0 0.0
    %2523 = vmatpush1.msra.mxu0 0.0
    %2524 = vmatprep.subr.mxu0 0.0
    %2525 = vmatpush1.msra.mxu0 0.0
    %2526 = vmatprep.subr.mxu0 0.0
    %2527 = vmatpush1.msra.mxu0 0.0
    %2528 = vmatprep.subr.mxu0 0.0
    %2529 = vmatpush1.msra.mxu0 0.0
    %2530 = vmatprep.subr.mxu0 0.0
    %2531 = vmatpush1.msra.mxu0 0.0
    %2532 = vmatprep.subr.mxu0 0.0
    %2533 = vmatpush1.msra.mxu0 0.0
    %2534 = vmatprep.subr.mxu0 0.0
    %2535 = vmatpush1.msra.mxu0 0.0
    %2536 = vmatprep.subr.mxu0 0.0
    %2537 = vmatpush1.msra.mxu0 0.0
    %2538 = vmatprep.subr.mxu0 0.0
    %2539 = vmatpush1.msra.mxu0 0.0
    %2540 = vmatprep.mubr.f32.mxu0 0.0
    %2541 = vmatmul.mubr.f32.gmra.mrb[0].mxu0 %v2407
    %v2542 = vpop.f32.mrb[0].mxu0
    %v2543 = vadd.f32 0.0, %v2542
    %v2544 = vpop.f32.mrb[0].mxu0
    %v2545 = vadd.f32 0.0, %v2544
    %2546 = vdwg.mxu0
    %2547 = vmatprep.subr.mxu0 %v2415
    %2548 = vmatpush1.msra.mxu0 %v2414
    %2549 = vmatprep.subr.mxu0 %v2419
    %2550 = vmatpush1.msra.mxu0 %v2418
    %2551 = vmatprep.subr.mxu0 %v2423
    %2552 = vmatpush1.msra.mxu0 %v2422
    %2553 = vmatprep.subr.mxu0 %v2427
    %2554 = vmatpush1.msra.mxu0 %v2426
    %2555 = vmatprep.subr.mxu0 %v2431
    %2556 = vmatpush1.msra.mxu0 %v2430
    %2557 = vmatprep.subr.mxu0 %v2435
    %2558 = vmatpush1.msra.mxu0 %v2434
    %2559 = vmatprep.subr.mxu0 %v2439
    %2560 = vmatpush1.msra.mxu0 %v2438
    %2561 = vmatprep.subr.mxu0 %v2443
    %2562 = vmatpush1.msra.mxu0 %v2442
    %2563 = vmatprep.subr.mxu0 %v2447
    %2564 = vmatpush1.msra.mxu0 %v2446
    %2565 = vmatprep.subr.mxu0 %v2451
    %2566 = vmatpush1.msra.mxu0 %v2450
    %2567 = vmatprep.subr.mxu0 %v2455
    %2568 = vmatpush1.msra.mxu0 %v2454
    %2569 = vmatprep.subr.mxu0 %v2459
    %2570 = vmatpush1.msra.mxu0 %v2458
    %2571 = vmatprep.subr.mxu0 %v2463
    %2572 = vmatpush1.msra.mxu0 %v2462
    %2573 = vmatprep.subr.mxu0 %v2467
    %2574 = vmatpush1.msra.mxu0 %v2466
    %2575 = vmatprep.subr.mxu0 %v2471
    %2576 = vmatpush1.msra.mxu0 %v2470
    %2577 = vmatprep.subr.mxu0 %v2475
    %2578 = vmatpush1.msra.mxu0 %v2474
    %2579 = vmatprep.subr.mxu0 0.0
    %2580 = vmatpush1.msra.mxu0 0.0
    %2581 = vmatprep.subr.mxu0 0.0
    %2582 = vmatpush1.msra.mxu0 0.0
    %2583 = vmatprep.subr.mxu0 0.0
    %2584 = vmatpush1.msra.mxu0 0.0
    %2585 = vmatprep.subr.mxu0 0.0
    %2586 = vmatpush1.msra.mxu0 0.0
    %2587 = vmatprep.subr.mxu0 0.0
    %2588 = vmatpush1.msra.mxu0 0.0
    %2589 = vmatprep.subr.mxu0 0.0
    %2590 = vmatpush1.msra.mxu0 0.0
    %2591 = vmatprep.subr.mxu0 0.0
    %2592 = vmatpush1.msra.mxu0 0.0
    %2593 = vmatprep.subr.mxu0 0.0
    %2594 = vmatpush1.msra.mxu0 0.0
    %2595 = vmatprep.subr.mxu0 0.0
    %2596 = vmatpush1.msra.mxu0 0.0
    %2597 = vmatprep.subr.mxu0 0.0
    %2598 = vmatpush1.msra.mxu0 0.0
    %2599 = vmatprep.subr.mxu0 0.0
    %2600 = vmatpush1.msra.mxu0 0.0
    %2601 = vmatprep.subr.mxu0 0.0
    %2602 = vmatpush1.msra.mxu0 0.0
    %2603 = vmatprep.subr.mxu0 0.0
    %2604 = vmatpush1.msra.mxu0 0.0
    %2605 = vmatprep.subr.mxu0 0.0
    %2606 = vmatpush1.msra.mxu0 0.0
    %2607 = vmatprep.subr.mxu0 0.0
    %2608 = vmatpush1.msra.mxu0 0.0
    %2609 = vmatprep.subr.mxu0 0.0
    %2610 = vmatpush1.msra.mxu0 0.0
    %2611 = vmatprep.mubr.f32.mxu0 0.0
    %2612 = vmatmul.mubr.f32.gmra.mrb[0].mxu0 %v2407
    %v2613 = vpop.f32.mrb[0].mxu0
    %v2614 = vadd.f32 0.0, %v2613
    %v2615 = vpop.f32.mrb[0].mxu0
    %v2616 = vadd.f32 0.0, %v2615
    %2617 = vdwg.mxu0
    %v2622 = vcombine.low %v2543, %v2545
    %v2623 = vcombine.low %v2614, %v2616
    %v2626 = vadd.f32 %v2410, %v2622
    %v2627 = vadd.f32 %v2411, %v2623
    %v2628 = vxor.u32 %v2626, 2147483648
    %v2629 = vmul.f32 %v2628, 1.442695
    %v2630 = vpow.pop %v2629
    %v2631 = vadd.f32 %v2630, 1.0
    %v2632 = vrcp.pop %v2631
    %v2633 = vmul.f32 1.0, %v2632
    %v2635 = vrot.slane %v2626, 4
    %v2637 = vxor.u32 %v2635, 2147483648
    %v2638 = vmul.f32 %v2637, 1.442695
    %v2639 = vpow.pop %v2638
    %v2640 = vadd.f32 %v2639, 1.0
    %v2641 = vrcp.pop %v2640
    %v2642 = vmul.f32 1.0, %v2641
    %v2643 = vtanh.pop %v2627
    %v2645 = vrot.slane %v2627, 4
    %v2647 = vxor.u32 %v2645, 2147483648
    %v2648 = vmul.f32 %v2647, 1.442695
    %v2649 = vpow.pop %v2648
    %v2650 = vadd.f32 %v2649, 1.0
    %v2651 = vrcp.pop %v2650
    %v2652 = vmul.f32 1.0, %v2651
    %v2653 = vmul.f32 %v2642, %v2408
    %v2654 = vmul.f32 %v2633, %v2643
    %v2655 = vadd.f32 %v2653, %v2654
    %v2656 = vtanh.pop %v2655
    %v2657 = vmul.f32 %v2652, %v2656
    %v2658 = vsel %vm2406, 1, 0
    %2659 = vset.pattern.permute.xlu0 0
    %2660 = vperm.xlu0 %2659, %v2658
    %v2661 = vpop.permute.xlu0 %2660
    %vm2662 = vcmp.eq.s32.totalorder %v2661, 1
    %v2663 = vsel %vm2662, %v2655, %v2408
    %v2664 = vsel %vm2662, %v2657, %v2407
    %2665 = vst [vmem:[#allocation3] sm:$0xf] %v2663
    %2666 = vst [vmem:[#allocation2] sm:$0xf] %v2664
    %v2667 = vld [vmem:[#allocation4] sm:$0xf]
    %v2668 = vld [vmem:[#allocation5] sm:$0xf]
    %v2669 = vld [vmem:[%s3] sm:$0xff]
    %v2670 = vld [vmem:[%s3 + $0x8] sm:$0xff]
    %v2671 = vld [vmem:[%s3 + $0x10] sm:$0xff]
    %v2672 = vld [vmem:[%s3 + $0x18] sm:$0xff]
    %v2673 = vld [vmem:[%s3 + $0x20] sm:$0xff]
    %v2674 = vld [vmem:[%s3 + $0x28] sm:$0xff]
    %v2675 = vld [vmem:[%s3 + $0x30] sm:$0xff]
    %v2676 = vld [vmem:[%s3 + $0x38] sm:$0xff]
    %v2677 = vld [vmem:[%s3 + $0x40] sm:$0xff]
    %v2678 = vld [vmem:[%s3 + $0x48] sm:$0xff]
    %v2679 = vld [vmem:[%s3 + $0x50] sm:$0xff]
    %v2680 = vld [vmem:[%s3 + $0x58] sm:$0xff]
    %v2681 = vld [vmem:[%s3 + $0x60] sm:$0xff]
    %v2682 = vld [vmem:[%s3 + $0x68] sm:$0xff]
    %v2683 = vld [vmem:[%s3 + $0x70] sm:$0xff]
    %v2684 = vld [vmem:[%s3 + $0x78] sm:$0xff]
    %v2685 = vld [vmem:[%s3 + $0x80] sm:$0xff]
    %v2686 = vld [vmem:[%s3 + $0x88] sm:$0xff]
    %v2687 = vld [vmem:[%s3 + $0x90] sm:$0xff]
    %v2688 = vld [vmem:[%s3 + $0x98] sm:$0xff]
    %v2689 = vld [vmem:[%s3 + $0xa0] sm:$0xff]
    %v2690 = vld [vmem:[%s3 + $0xa8] sm:$0xff]
    %v2691 = vld [vmem:[%s3 + $0xb0] sm:$0xff]
    %v2692 = vld [vmem:[%s3 + $0xb8] sm:$0xff]
    %v2693 = vld [vmem:[%s3 + $0xc0] sm:$0xff]
    %v2694 = vld [vmem:[%s3 + $0xc8] sm:$0xff]
    %v2695 = vld [vmem:[%s3 + $0xd0] sm:$0xff]
    %v2696 = vld [vmem:[%s3 + $0xd8] sm:$0xff]
    %v2697 = vld [vmem:[%s3 + $0xe0] sm:$0xff]
    %v2698 = vld [vmem:[%s3 + $0xe8] sm:$0xff]
    %v2699 = vld [vmem:[%s3 + $0xf0] sm:$0xff]
    %v2700 = vld [vmem:[%s3 + $0xf8] sm:$0xff]
    %v2701 = vld [vmem:[%s3 + $0x100] sm:$0xff]
    %v2702 = vld [vmem:[%s3 + $0x108] sm:$0xff]
    %v2703 = vld [vmem:[%s3 + $0x110] sm:$0xff]
    %v2704 = vld [vmem:[%s3 + $0x118] sm:$0xff]
    %v2705 = vld [vmem:[%s3 + $0x120] sm:$0xff]
    %v2706 = vld [vmem:[%s3 + $0x128] sm:$0xff]
    %v2707 = vld [vmem:[%s3 + $0x130] sm:$0xff]
    %v2708 = vld [vmem:[%s3 + $0x138] sm:$0xff]
    %v2709 = vld [vmem:[%s3 + $0x140] sm:$0xff]
    %v2710 = vld [vmem:[%s3 + $0x148] sm:$0xff]
    %v2711 = vld [vmem:[%s3 + $0x150] sm:$0xff]
    %v2712 = vld [vmem:[%s3 + $0x158] sm:$0xff]
    %v2713 = vld [vmem:[%s3 + $0x160] sm:$0xff]
    %v2714 = vld [vmem:[%s3 + $0x168] sm:$0xff]
    %v2715 = vld [vmem:[%s3 + $0x170] sm:$0xff]
    %v2716 = vld [vmem:[%s3 + $0x178] sm:$0xff]
    %v2717 = vld [vmem:[%s3 + $0x180] sm:$0xff]
    %v2718 = vld [vmem:[%s3 + $0x188] sm:$0xff]
    %v2719 = vld [vmem:[%s3 + $0x190] sm:$0xff]
    %v2720 = vld [vmem:[%s3 + $0x198] sm:$0xff]
    %v2721 = vld [vmem:[%s3 + $0x1a0] sm:$0xff]
    %v2722 = vld [vmem:[%s3 + $0x1a8] sm:$0xff]
    %v2723 = vld [vmem:[%s3 + $0x1b0] sm:$0xff]
    %v2724 = vld [vmem:[%s3 + $0x1b8] sm:$0xff]
    %v2725 = vld [vmem:[%s3 + $0x1c0] sm:$0xff]
    %v2726 = vld [vmem:[%s3 + $0x1c8] sm:$0xff]
    %v2727 = vld [vmem:[%s3 + $0x1d0] sm:$0xff]
    %v2728 = vld [vmem:[%s3 + $0x1d8] sm:$0xff]
    %v2729 = vld [vmem:[%s3 + $0x1e0] sm:$0xff]
    %v2730 = vld [vmem:[%s3 + $0x1e8] sm:$0xff]
    %v2731 = vld [vmem:[%s3 + $0x1f0] sm:$0xff]
    %v2732 = vld [vmem:[%s3 + $0x1f8] sm:$0xff]
    %v2733 = vld [vmem:[%s3 + $0x200] sm:$0xff]
    %v2734 = vld [vmem:[%s3 + $0x208] sm:$0xff]
    %v2735 = vld [vmem:[%s3 + $0x210] sm:$0xff]
    %v2736 = vld [vmem:[%s3 + $0x218] sm:$0xff]
    %v2737 = vld [vmem:[%s3 + $0x220] sm:$0xff]
    %v2738 = vld [vmem:[%s3 + $0x228] sm:$0xff]
    %v2739 = vld [vmem:[%s3 + $0x230] sm:$0xff]
    %v2740 = vld [vmem:[%s3 + $0x238] sm:$0xff]
    %v2741 = vld [vmem:[%s3 + $0x240] sm:$0xff]
    %v2742 = vld [vmem:[%s3 + $0x248] sm:$0xff]
    %v2743 = vld [vmem:[%s3 + $0x250] sm:$0xff]
    %v2744 = vld [vmem:[%s3 + $0x258] sm:$0xff]
    %v2745 = vld [vmem:[%s3 + $0x260] sm:$0xff]
    %v2746 = vld [vmem:[%s3 + $0x268] sm:$0xff]
    %v2747 = vld [vmem:[%s3 + $0x270] sm:$0xff]
    %v2748 = vld [vmem:[%s3 + $0x278] sm:$0xff]
    %v2749 = vld [vmem:[%s3 + $0x280] sm:$0xff]
    %v2750 = vld [vmem:[%s3 + $0x288] sm:$0xff]
    %v2751 = vld [vmem:[%s3 + $0x290] sm:$0xff]
    %v2752 = vld [vmem:[%s3 + $0x298] sm:$0xff]
    %v2753 = vld [vmem:[%s3 + $0x2a0] sm:$0xff]
    %v2754 = vld [vmem:[%s3 + $0x2a8] sm:$0xff]
    %v2755 = vld [vmem:[%s3 + $0x2b0] sm:$0xff]
    %v2756 = vld [vmem:[%s3 + $0x2b8] sm:$0xff]
    %v2757 = vld [vmem:[%s3 + $0x2c0] sm:$0xff]
    %v2758 = vld [vmem:[%s3 + $0x2c8] sm:$0xff]
    %v2759 = vld [vmem:[%s3 + $0x2d0] sm:$0xff]
    %v2760 = vld [vmem:[%s3 + $0x2d8] sm:$0xff]
    %v2761 = vld [vmem:[%s3 + $0x2e0] sm:$0xff]
    %v2762 = vld [vmem:[%s3 + $0x2e8] sm:$0xff]
    %v2763 = vld [vmem:[%s3 + $0x2f0] sm:$0xff]
    %v2764 = vld [vmem:[%s3 + $0x2f8] sm:$0xff]
    %v2765 = vld [vmem:[%s3 + $0x300] sm:$0xff]
    %v2766 = vld [vmem:[%s3 + $0x308] sm:$0xff]
    %v2767 = vld [vmem:[%s3 + $0x310] sm:$0xff]
    %v2768 = vld [vmem:[%s3 + $0x318] sm:$0xff]
    %v2769 = vld [vmem:[%s3 + $0x320] sm:$0xff]
    %v2770 = vld [vmem:[%s3 + $0x328] sm:$0xff]
    %v2771 = vld [vmem:[%s3 + $0x330] sm:$0xff]
    %v2772 = vld [vmem:[%s3 + $0x338] sm:$0xff]
    %v2773 = vld [vmem:[%s3 + $0x340] sm:$0xff]
    %v2774 = vld [vmem:[%s3 + $0x348] sm:$0xff]
    %v2775 = vld [vmem:[%s3 + $0x350] sm:$0xff]
    %v2776 = vld [vmem:[%s3 + $0x358] sm:$0xff]
    %v2777 = vld [vmem:[%s3 + $0x360] sm:$0xff]
    %v2778 = vld [vmem:[%s3 + $0x368] sm:$0xff]
    %v2779 = vld [vmem:[%s3 + $0x370] sm:$0xff]
    %v2780 = vld [vmem:[%s3 + $0x378] sm:$0xff]
    %v2781 = vld [vmem:[%s3 + $0x380] sm:$0xff]
    %v2782 = vld [vmem:[%s3 + $0x388] sm:$0xff]
    %v2783 = vld [vmem:[%s3 + $0x390] sm:$0xff]
    %v2784 = vld [vmem:[%s3 + $0x398] sm:$0xff]
    %v2785 = vld [vmem:[%s3 + $0x3a0] sm:$0xff]
    %v2786 = vld [vmem:[%s3 + $0x3a8] sm:$0xff]
    %v2787 = vld [vmem:[%s3 + $0x3b0] sm:$0xff]
    %v2788 = vld [vmem:[%s3 + $0x3b8] sm:$0xff]
    %v2789 = vld [vmem:[%s3 + $0x3c0] sm:$0xff]
    %v2790 = vld [vmem:[%s3 + $0x3c8] sm:$0xff]
    %v2791 = vld [vmem:[%s3 + $0x3d0] sm:$0xff]
    %v2792 = vld [vmem:[%s3 + $0x3d8] sm:$0xff]
    %v2793 = vld [vmem:[%s3 + $0x3e0] sm:$0xff]
    %v2794 = vld [vmem:[%s3 + $0x3e8] sm:$0xff]
    %v2795 = vld [vmem:[%s3 + $0x3f0] sm:$0xff]
    %v2796 = vld [vmem:[%s3 + $0x3f8] sm:$0xff]
    %v2797 = vld [vmem:[%s4] sm:$0xf]
    %v2799 = vlaneseq
    %v2800 = vshrl.u32 %v2799, 7
    %v2801 = vsub.s32 0, %v2800
    %v2802 = vrot.slane %v2797, %v2801
    %v2803 = vlaneseq
    %v2804 = vshrl.u32 %v2803, 7
    %v2805 = vsub.s32 1, %v2804
    %v2806 = vrot.slane %v2797, %v2805
    %v2807 = vlaneseq
    %v2808 = vshrl.u32 %v2807, 7
    %v2809 = vsub.s32 2, %v2808
    %v2810 = vrot.slane %v2797, %v2809
    %v2811 = vlaneseq
    %v2812 = vshrl.u32 %v2811, 7
    %v2813 = vsub.s32 3, %v2812
    %v2814 = vrot.slane %v2797, %v2813
    %2819 = vmatprep.subr.mxu0 %v2670
    %2820 = vmatpush1.msra.mxu0 %v2669
    %2821 = vmatprep.subr.mxu0 %v2674
    %2822 = vmatpush1.msra.mxu0 %v2673
    %2823 = vmatprep.subr.mxu0 %v2678
    %2824 = vmatpush1.msra.mxu0 %v2677
    %2825 = vmatprep.subr.mxu0 %v2682
    %2826 = vmatpush1.msra.mxu0 %v2681
    %2827 = vmatprep.subr.mxu0 %v2686
    %2828 = vmatpush1.msra.mxu0 %v2685
    %2829 = vmatprep.subr.mxu0 %v2690
    %2830 = vmatpush1.msra.mxu0 %v2689
    %2831 = vmatprep.subr.mxu0 %v2694
    %2832 = vmatpush1.msra.mxu0 %v2693
    %2833 = vmatprep.subr.mxu0 %v2698
    %2834 = vmatpush1.msra.mxu0 %v2697
    %2835 = vmatprep.subr.mxu0 %v2702
    %2836 = vmatpush1.msra.mxu0 %v2701
    %2837 = vmatprep.subr.mxu0 %v2706
    %2838 = vmatpush1.msra.mxu0 %v2705
    %2839 = vmatprep.subr.mxu0 %v2710
    %2840 = vmatpush1.msra.mxu0 %v2709
    %2841 = vmatprep.subr.mxu0 %v2714
    %2842 = vmatpush1.msra.mxu0 %v2713
    %2843 = vmatprep.subr.mxu0 %v2718
    %2844 = vmatpush1.msra.mxu0 %v2717
    %2845 = vmatprep.subr.mxu0 %v2722
    %2846 = vmatpush1.msra.mxu0 %v2721
    %2847 = vmatprep.subr.mxu0 %v2726
    %2848 = vmatpush1.msra.mxu0 %v2725
    %2849 = vmatprep.subr.mxu0 %v2730
    %2850 = vmatpush1.msra.mxu0 %v2729
    %2851 = vmatprep.subr.mxu0 %v2734
    %2852 = vmatpush1.msra.mxu0 %v2733
    %2853 = vmatprep.subr.mxu0 %v2738
    %2854 = vmatpush1.msra.mxu0 %v2737
    %2855 = vmatprep.subr.mxu0 %v2742
    %2856 = vmatpush1.msra.mxu0 %v2741
    %2857 = vmatprep.subr.mxu0 %v2746
    %2858 = vmatpush1.msra.mxu0 %v2745
    %2859 = vmatprep.subr.mxu0 %v2750
    %2860 = vmatpush1.msra.mxu0 %v2749
    %2861 = vmatprep.subr.mxu0 %v2754
    %2862 = vmatpush1.msra.mxu0 %v2753
    %2863 = vmatprep.subr.mxu0 %v2758
    %2864 = vmatpush1.msra.mxu0 %v2757
    %2865 = vmatprep.subr.mxu0 %v2762
    %2866 = vmatpush1.msra.mxu0 %v2761
    %2867 = vmatprep.subr.mxu0 %v2766
    %2868 = vmatpush1.msra.mxu0 %v2765
    %2869 = vmatprep.subr.mxu0 %v2770
    %2870 = vmatpush1.msra.mxu0 %v2769
    %2871 = vmatprep.subr.mxu0 %v2774
    %2872 = vmatpush1.msra.mxu0 %v2773
    %2873 = vmatprep.subr.mxu0 %v2778
    %2874 = vmatpush1.msra.mxu0 %v2777
    %2875 = vmatprep.subr.mxu0 %v2782
    %2876 = vmatpush1.msra.mxu0 %v2781
    %2877 = vmatprep.subr.mxu0 %v2786
    %2878 = vmatpush1.msra.mxu0 %v2785
    %2879 = vmatprep.subr.mxu0 %v2790
    %2880 = vmatpush1.msra.mxu0 %v2789
    %2881 = vmatprep.subr.mxu0 %v2794
    %2882 = vmatpush1.msra.mxu0 %v2793
    %2883 = vmatprep.mubr.f32.mxu0 %v2667
    %2884 = vmatmul.mubr.f32.gmra.mrb[0].mxu0 %v2664
    %v2885 = vpop.f32.mrb[0].mxu0
    %v2886 = vadd.f32 %v2802, %v2885
    %v2887 = vpop.f32.mrb[0].mxu0
    %v2888 = vadd.f32 %v2806, %v2887
    %2889 = vdwg.mxu0
    %2890 = vmatprep.subr.mxu0 %v2672
    %2891 = vmatpush1.msra.mxu0 %v2671
    %2892 = vmatprep.subr.mxu0 %v2676
    %2893 = vmatpush1.msra.mxu0 %v2675
    %2894 = vmatprep.subr.mxu0 %v2680
    %2895 = vmatpush1.msra.mxu0 %v2679
    %2896 = vmatprep.subr.mxu0 %v2684
    %2897 = vmatpush1.msra.mxu0 %v2683
    %2898 = vmatprep.subr.mxu0 %v2688
    %2899 = vmatpush1.msra.mxu0 %v2687
    %2900 = vmatprep.subr.mxu0 %v2692
    %2901 = vmatpush1.msra.mxu0 %v2691
    %2902 = vmatprep.subr.mxu0 %v2696
    %2903 = vmatpush1.msra.mxu0 %v2695
    %2904 = vmatprep.subr.mxu0 %v2700
    %2905 = vmatpush1.msra.mxu0 %v2699
    %2906 = vmatprep.subr.mxu0 %v2704
    %2907 = vmatpush1.msra.mxu0 %v2703
    %2908 = vmatprep.subr.mxu0 %v2708
    %2909 = vmatpush1.msra.mxu0 %v2707
    %2910 = vmatprep.subr.mxu0 %v2712
    %2911 = vmatpush1.msra.mxu0 %v2711
    %2912 = vmatprep.subr.mxu0 %v2716
    %2913 = vmatpush1.msra.mxu0 %v2715
    %2914 = vmatprep.subr.mxu0 %v2720
    %2915 = vmatpush1.msra.mxu0 %v2719
    %2916 = vmatprep.subr.mxu0 %v2724
    %2917 = vmatpush1.msra.mxu0 %v2723
    %2918 = vmatprep.subr.mxu0 %v2728
    %2919 = vmatpush1.msra.mxu0 %v2727
    %2920 = vmatprep.subr.mxu0 %v2732
    %2921 = vmatpush1.msra.mxu0 %v2731
    %2922 = vmatprep.subr.mxu0 %v2736
    %2923 = vmatpush1.msra.mxu0 %v2735
    %2924 = vmatprep.subr.mxu0 %v2740
    %2925 = vmatpush1.msra.mxu0 %v2739
    %2926 = vmatprep.subr.mxu0 %v2744
    %2927 = vmatpush1.msra.mxu0 %v2743
    %2928 = vmatprep.subr.mxu0 %v2748
    %2929 = vmatpush1.msra.mxu0 %v2747
    %2930 = vmatprep.subr.mxu0 %v2752
    %2931 = vmatpush1.msra.mxu0 %v2751
    %2932 = vmatprep.subr.mxu0 %v2756
    %2933 = vmatpush1.msra.mxu0 %v2755
    %2934 = vmatprep.subr.mxu0 %v2760
    %2935 = vmatpush1.msra.mxu0 %v2759
    %2936 = vmatprep.subr.mxu0 %v2764
    %2937 = vmatpush1.msra.mxu0 %v2763
    %2938 = vmatprep.subr.mxu0 %v2768
    %2939 = vmatpush1.msra.mxu0 %v2767
    %2940 = vmatprep.subr.mxu0 %v2772
    %2941 = vmatpush1.msra.mxu0 %v2771
    %2942 = vmatprep.subr.mxu0 %v2776
    %2943 = vmatpush1.msra.mxu0 %v2775
    %2944 = vmatprep.subr.mxu0 %v2780
    %2945 = vmatpush1.msra.mxu0 %v2779
    %2946 = vmatprep.subr.mxu0 %v2784
    %2947 = vmatpush1.msra.mxu0 %v2783
    %2948 = vmatprep.subr.mxu0 %v2788
    %2949 = vmatpush1.msra.mxu0 %v2787
    %2950 = vmatprep.subr.mxu0 %v2792
    %2951 = vmatpush1.msra.mxu0 %v2791
    %2952 = vmatprep.subr.mxu0 %v2796
    %2953 = vmatpush1.msra.mxu0 %v2795
    %2954 = vmatprep.mubr.f32.mxu0 %v2667
    %2955 = vmatmul.mubr.f32.gmra.mrb[0].mxu0 %v2664
    %v2956 = vpop.f32.mrb[0].mxu0
    %v2957 = vadd.f32 %v2810, %v2956
    %v2958 = vpop.f32.mrb[0].mxu0
    %v2959 = vadd.f32 %v2814, %v2958
    %2960 = vdwg.mxu0
    %v2961 = vxor.u32 %v2886, 2147483648
    %v2962 = vmul.f32 %v2961, 1.442695
    %v2963 = vpow.pop %v2962
    %v2964 = vadd.f32 %v2963, 1.0
    %v2965 = vrcp.pop %v2964
    %v2966 = vmul.f32 1.0, %v2965
    %v2967 = vxor.u32 %v2888, 2147483648
    %v2968 = vmul.f32 %v2967, 1.442695
    %v2969 = vpow.pop %v2968
    %v2970 = vadd.f32 %v2969, 1.0
    %v2971 = vrcp.pop %v2970
    %v2972 = vmul.f32 1.0, %v2971
    %v2973 = vtanh.pop %v2957
    %v2974 = vxor.u32 %v2959, 2147483648
    %v2975 = vmul.f32 %v2974, 1.442695
    %v2976 = vpow.pop %v2975
    %v2977 = vadd.f32 %v2976, 1.0
    %v2978 = vrcp.pop %v2977
    %v2979 = vmul.f32 1.0, %v2978
    %v2980 = vmul.f32 %v2972, %v2668
    %v2981 = vmul.f32 %v2966, %v2973
    %v2982 = vadd.f32 %v2980, %v2981
    %v2983 = vtanh.pop %v2982
    %v2984 = vmul.f32 %v2979, %v2983
    %v2985 = vsel %vm2662, %v2982, %v2668
    %2986 = vst [vmem:[#allocation5] sm:$0xf] %v2985
    %v2987 = vsel %vm2662, %v2984, %v2667
    %2988 = vst [vmem:[#allocation4] sm:$0xf] %v2987
    %v2989 = vsel %vm2662, %v2984, 0.0
    %s2990 = scalar_lea.vmem %s7, 16
    %2991 = vst [vmem:[%s2990] sm:$0xf] %v2989
    %v2992 = vld [vmem:[#allocation6] sm:$0xf]
    %v2993 = vmax.f32 %v2992, %v2989
    %2994 = vst [vmem:[#allocation6] sm:$0xf] %v2993
    %s2995 = sadd.s32 %s42, 5
    %v2996 = vstv %s2995
    %vm2997 = vcmp.lt.s32.totalorder %v2996, %v41
    %v2998 = vld [vmem:[#allocation2] sm:$0xf]
    %v2999 = vld [vmem:[#allocation3] sm:$0xf]
    %s3000 = scalar_lea.vmem %s0, 80
    %v3001 = vld [vmem:[%s3000] sm:$0xff]
    %v3002 = vld [vmem:[%s3000 + $0x8] sm:$0xff]
    %v3003 = vld [vmem:[%s2] sm:$0xff]
    %v3004 = vld [vmem:[%s2 + $0x8] sm:$0xff]
    %v3005 = vld [vmem:[%s2 + $0x10] sm:$0xff]
    %v3006 = vld [vmem:[%s2 + $0x18] sm:$0xff]
    %v3007 = vld [vmem:[%s2 + $0x20] sm:$0xff]
    %v3008 = vld [vmem:[%s2 + $0x28] sm:$0xff]
    %v3009 = vld [vmem:[%s2 + $0x30] sm:$0xff]
    %v3010 = vld [vmem:[%s2 + $0x38] sm:$0xff]
    %v3011 = vld [vmem:[%s2 + $0x40] sm:$0xff]
    %v3012 = vld [vmem:[%s2 + $0x48] sm:$0xff]
    %v3013 = vld [vmem:[%s2 + $0x50] sm:$0xff]
    %v3014 = vld [vmem:[%s2 + $0x58] sm:$0xff]
    %v3015 = vld [vmem:[%s2 + $0x60] sm:$0xff]
    %v3016 = vld [vmem:[%s2 + $0x68] sm:$0xff]
    %v3017 = vld [vmem:[%s2 + $0x70] sm:$0xff]
    %v3018 = vld [vmem:[%s2 + $0x78] sm:$0xff]
    %v3019 = vld [vmem:[%s2 + $0x80] sm:$0xff]
    %v3020 = vld [vmem:[%s2 + $0x88] sm:$0xff]
    %v3021 = vld [vmem:[%s2 + $0x90] sm:$0xff]
    %v3022 = vld [vmem:[%s2 + $0x98] sm:$0xff]
    %v3023 = vld [vmem:[%s2 + $0xa0] sm:$0xff]
    %v3024 = vld [vmem:[%s2 + $0xa8] sm:$0xff]
    %v3025 = vld [vmem:[%s2 + $0xb0] sm:$0xff]
    %v3026 = vld [vmem:[%s2 + $0xb8] sm:$0xff]
    %v3027 = vld [vmem:[%s2 + $0xc0] sm:$0xff]
    %v3028 = vld [vmem:[%s2 + $0xc8] sm:$0xff]
    %v3029 = vld [vmem:[%s2 + $0xd0] sm:$0xff]
    %v3030 = vld [vmem:[%s2 + $0xd8] sm:$0xff]
    %v3031 = vld [vmem:[%s2 + $0xe0] sm:$0xff]
    %v3032 = vld [vmem:[%s2 + $0xe8] sm:$0xff]
    %v3033 = vld [vmem:[%s2 + $0xf0] sm:$0xff]
    %v3034 = vld [vmem:[%s2 + $0xf8] sm:$0xff]
    %v3035 = vld [vmem:[%s2 + $0x100] sm:$0xff]
    %v3036 = vld [vmem:[%s2 + $0x108] sm:$0xff]
    %v3037 = vld [vmem:[%s2 + $0x110] sm:$0xff]
    %v3038 = vld [vmem:[%s2 + $0x118] sm:$0xff]
    %v3039 = vld [vmem:[%s2 + $0x120] sm:$0xff]
    %v3040 = vld [vmem:[%s2 + $0x128] sm:$0xff]
    %v3041 = vld [vmem:[%s2 + $0x130] sm:$0xff]
    %v3042 = vld [vmem:[%s2 + $0x138] sm:$0xff]
    %v3043 = vld [vmem:[%s2 + $0x140] sm:$0xff]
    %v3044 = vld [vmem:[%s2 + $0x148] sm:$0xff]
    %v3045 = vld [vmem:[%s2 + $0x150] sm:$0xff]
    %v3046 = vld [vmem:[%s2 + $0x158] sm:$0xff]
    %v3047 = vld [vmem:[%s2 + $0x160] sm:$0xff]
    %v3048 = vld [vmem:[%s2 + $0x168] sm:$0xff]
    %v3049 = vld [vmem:[%s2 + $0x170] sm:$0xff]
    %v3050 = vld [vmem:[%s2 + $0x178] sm:$0xff]
    %v3051 = vld [vmem:[%s2 + $0x180] sm:$0xff]
    %v3052 = vld [vmem:[%s2 + $0x188] sm:$0xff]
    %v3053 = vld [vmem:[%s2 + $0x190] sm:$0xff]
    %v3054 = vld [vmem:[%s2 + $0x198] sm:$0xff]
    %v3055 = vld [vmem:[%s2 + $0x1a0] sm:$0xff]
    %v3056 = vld [vmem:[%s2 + $0x1a8] sm:$0xff]
    %v3057 = vld [vmem:[%s2 + $0x1b0] sm:$0xff]
    %v3058 = vld [vmem:[%s2 + $0x1b8] sm:$0xff]
    %v3059 = vld [vmem:[%s2 + $0x1c0] sm:$0xff]
    %v3060 = vld [vmem:[%s2 + $0x1c8] sm:$0xff]
    %v3061 = vld [vmem:[%s2 + $0x1d0] sm:$0xff]
    %v3062 = vld [vmem:[%s2 + $0x1d8] sm:$0xff]
    %v3063 = vld [vmem:[%s2 + $0x1e0] sm:$0xff]
    %v3064 = vld [vmem:[%s2 + $0x1e8] sm:$0xff]
    %v3065 = vld [vmem:[%s2 + $0x1f0] sm:$0xff]
    %v3066 = vld [vmem:[%s2 + $0x1f8] sm:$0xff]
    %3067 = vmatprep.subr.mxu0 %v3004
    %3068 = vmatpush1.msra.mxu0 %v3003
    %3069 = vmatprep.subr.mxu0 %v3008
    %3070 = vmatpush1.msra.mxu0 %v3007
    %3071 = vmatprep.subr.mxu0 %v3012
    %3072 = vmatpush1.msra.mxu0 %v3011
    %3073 = vmatprep.subr.mxu0 %v3016
    %3074 = vmatpush1.msra.mxu0 %v3015
    %3075 = vmatprep.subr.mxu0 %v3020
    %3076 = vmatpush1.msra.mxu0 %v3019
    %3077 = vmatprep.subr.mxu0 %v3024
    %3078 = vmatpush1.msra.mxu0 %v3023
    %3079 = vmatprep.subr.mxu0 %v3028
    %3080 = vmatpush1.msra.mxu0 %v3027
    %3081 = vmatprep.subr.mxu0 %v3032
    %3082 = vmatpush1.msra.mxu0 %v3031
    %3083 = vmatprep.subr.mxu0 %v3036
    %3084 = vmatpush1.msra.mxu0 %v3035
    %3085 = vmatprep.subr.mxu0 %v3040
    %3086 = vmatpush1.msra.mxu0 %v3039
    %3087 = vmatprep.subr.mxu0 %v3044
    %3088 = vmatpush1.msra.mxu0 %v3043
    %3089 = vmatprep.subr.mxu0 %v3048
    %3090 = vmatpush1.msra.mxu0 %v3047
    %3091 = vmatprep.subr.mxu0 %v3052
    %3092 = vmatpush1.msra.mxu0 %v3051
    %3093 = vmatprep.subr.mxu0 %v3056
    %3094 = vmatpush1.msra.mxu0 %v3055
    %3095 = vmatprep.subr.mxu0 %v3060
    %3096 = vmatpush1.msra.mxu0 %v3059
    %3097 = vmatprep.subr.mxu0 %v3064
    %3098 = vmatpush1.msra.mxu0 %v3063
    %3099 = vmatprep.subr.mxu0 0.0
    %3100 = vmatpush1.msra.mxu0 0.0
    %3101 = vmatprep.subr.mxu0 0.0
    %3102 = vmatpush1.msra.mxu0 0.0
    %3103 = vmatprep.subr.mxu0 0.0
    %3104 = vmatpush1.msra.mxu0 0.0
    %3105 = vmatprep.subr.mxu0 0.0
    %3106 = vmatpush1.msra.mxu0 0.0
    %3107 = vmatprep.subr.mxu0 0.0
    %3108 = vmatpush1.msra.mxu0 0.0
    %3109 = vmatprep.subr.mxu0 0.0
    %3110 = vmatpush1.msra.mxu0 0.0
    %3111 = vmatprep.subr.mxu0 0.0
    %3112 = vmatpush1.msra.mxu0 0.0
    %3113 = vmatprep.subr.mxu0 0.0
    %3114 = vmatpush1.msra.mxu0 0.0
    %3115 = vmatprep.subr.mxu0 0.0
    %3116 = vmatpush1.msra.mxu0 0.0
    %3117 = vmatprep.subr.mxu0 0.0
    %3118 = vmatpush1.msra.mxu0 0.0
    %3119 = vmatprep.subr.mxu0 0.0
    %3120 = vmatpush1.msra.mxu0 0.0
    %3121 = vmatprep.subr.mxu0 0.0
    %3122 = vmatpush1.msra.mxu0 0.0
    %3123 = vmatprep.subr.mxu0 0.0
    %3124 = vmatpush1.msra.mxu0 0.0
    %3125 = vmatprep.subr.mxu0 0.0
    %3126 = vmatpush1.msra.mxu0 0.0
    %3127 = vmatprep.subr.mxu0 0.0
    %3128 = vmatpush1.msra.mxu0 0.0
    %3129 = vmatprep.subr.mxu0 0.0
    %3130 = vmatpush1.msra.mxu0 0.0
    %3131 = vmatprep.mubr.f32.mxu0 0.0
    %3132 = vmatmul.mubr.f32.gmra.mrb[0].mxu0 %v2998
    %v3133 = vpop.f32.mrb[0].mxu0
    %v3134 = vadd.f32 0.0, %v3133
    %v3135 = vpop.f32.mrb[0].mxu0
    %v3136 = vadd.f32 0.0, %v3135
    %3137 = vdwg.mxu0
    %3138 = vmatprep.subr.mxu0 %v3006
    %3139 = vmatpush1.msra.mxu0 %v3005
    %3140 = vmatprep.subr.mxu0 %v3010
    %3141 = vmatpush1.msra.mxu0 %v3009
    %3142 = vmatprep.subr.mxu0 %v3014
    %3143 = vmatpush1.msra.mxu0 %v3013
    %3144 = vmatprep.subr.mxu0 %v3018
    %3145 = vmatpush1.msra.mxu0 %v3017
    %3146 = vmatprep.subr.mxu0 %v3022
    %3147 = vmatpush1.msra.mxu0 %v3021
    %3148 = vmatprep.subr.mxu0 %v3026
    %3149 = vmatpush1.msra.mxu0 %v3025
    %3150 = vmatprep.subr.mxu0 %v3030
    %3151 = vmatpush1.msra.mxu0 %v3029
    %3152 = vmatprep.subr.mxu0 %v3034
    %3153 = vmatpush1.msra.mxu0 %v3033
    %3154 = vmatprep.subr.mxu0 %v3038
    %3155 = vmatpush1.msra.mxu0 %v3037
    %3156 = vmatprep.subr.mxu0 %v3042
    %3157 = vmatpush1.msra.mxu0 %v3041
    %3158 = vmatprep.subr.mxu0 %v3046
    %3159 = vmatpush1.msra.mxu0 %v3045
    %3160 = vmatprep.subr.mxu0 %v3050
    %3161 = vmatpush1.msra.mxu0 %v3049
    %3162 = vmatprep.subr.mxu0 %v3054
    %3163 = vmatpush1.msra.mxu0 %v3053
    %3164 = vmatprep.subr.mxu0 %v3058
    %3165 = vmatpush1.msra.mxu0 %v3057
    %3166 = vmatprep.subr.mxu0 %v3062
    %3167 = vmatpush1.msra.mxu0 %v3061
    %3168 = vmatprep.subr.mxu0 %v3066
    %3169 = vmatpush1.msra.mxu0 %v3065
    %3170 = vmatprep.subr.mxu0 0.0
    %3171 = vmatpush1.msra.mxu0 0.0
    %3172 = vmatprep.subr.mxu0 0.0
    %3173 = vmatpush1.msra.mxu0 0.0
    %3174 = vmatprep.subr.mxu0 0.0
    %3175 = vmatpush1.msra.mxu0 0.0
    %3176 = vmatprep.subr.mxu0 0.0
    %3177 = vmatpush1.msra.mxu0 0.0
    %3178 = vmatprep.subr.mxu0 0.0
    %3179 = vmatpush1.msra.mxu0 0.0
    %3180 = vmatprep.subr.mxu0 0.0
    %3181 = vmatpush1.msra.mxu0 0.0
    %3182 = vmatprep.subr.mxu0 0.0
    %3183 = vmatpush1.msra.mxu0 0.0
    %3184 = vmatprep.subr.mxu0 0.0
    %3185 = vmatpush1.msra.mxu0 0.0
    %3186 = vmatprep.subr.mxu0 0.0
    %3187 = vmatpush1.msra.mxu0 0.0
    %3188 = vmatprep.subr.mxu0 0.0
    %3189 = vmatpush1.msra.mxu0 0.0
    %3190 = vmatprep.subr.mxu0 0.0
    %3191 = vmatpush1.msra.mxu0 0.0
    %3192 = vmatprep.subr.mxu0 0.0
    %3193 = vmatpush1.msra.mxu0 0.0
    %3194 = vmatprep.subr.mxu0 0.0
    %3195 = vmatpush1.msra.mxu0 0.0
    %3196 = vmatprep.subr.mxu0 0.0
    %3197 = vmatpush1.msra.mxu0 0.0
    %3198 = vmatprep.subr.mxu0 0.0
    %3199 = vmatpush1.msra.mxu0 0.0
    %3200 = vmatprep.subr.mxu0 0.0
    %3201 = vmatpush1.msra.mxu0 0.0
    %3202 = vmatprep.mubr.f32.mxu0 0.0
    %3203 = vmatmul.mubr.f32.gmra.mrb[0].mxu0 %v2998
    %v3204 = vpop.f32.mrb[0].mxu0
    %v3205 = vadd.f32 0.0, %v3204
    %v3206 = vpop.f32.mrb[0].mxu0
    %v3207 = vadd.f32 0.0, %v3206
    %3208 = vdwg.mxu0
    %v3213 = vcombine.low %v3134, %v3136
    %v3214 = vcombine.low %v3205, %v3207
    %v3217 = vadd.f32 %v3001, %v3213
    %v3218 = vadd.f32 %v3002, %v3214
    %v3219 = vxor.u32 %v3217, 2147483648
    %v3220 = vmul.f32 %v3219, 1.442695
    %v3221 = vpow.pop %v3220
    %v3222 = vadd.f32 %v3221, 1.0
    %v3223 = vrcp.pop %v3222
    %v3224 = vmul.f32 1.0, %v3223
    %v3226 = vrot.slane %v3217, 4
    %v3228 = vxor.u32 %v3226, 2147483648
    %v3229 = vmul.f32 %v3228, 1.442695
    %v3230 = vpow.pop %v3229
    %v3231 = vadd.f32 %v3230, 1.0
    %v3232 = vrcp.pop %v3231
    %v3233 = vmul.f32 1.0, %v3232
    %v3234 = vtanh.pop %v3218
    %v3236 = vrot.slane %v3218, 4
    %v3238 = vxor.u32 %v3236, 2147483648
    %v3239 = vmul.f32 %v3238, 1.442695
    %v3240 = vpow.pop %v3239
    %v3241 = vadd.f32 %v3240, 1.0
    %v3242 = vrcp.pop %v3241
    %v3243 = vmul.f32 1.0, %v3242
    %v3244 = vmul.f32 %v3233, %v2999
    %v3245 = vmul.f32 %v3224, %v3234
    %v3246 = vadd.f32 %v3244, %v3245
    %v3247 = vtanh.pop %v3246
    %v3248 = vmul.f32 %v3243, %v3247
    %v3249 = vsel %vm2997, 1, 0
    %3250 = vset.pattern.permute.xlu0 0
    %3251 = vperm.xlu0 %3250, %v3249
    %v3252 = vpop.permute.xlu0 %3251
    %vm3253 = vcmp.eq.s32.totalorder %v3252, 1
    %v3254 = vsel %vm3253, %v3246, %v2999
    %v3255 = vsel %vm3253, %v3248, %v2998
    %3256 = vst [vmem:[#allocation3] sm:$0xf] %v3254
    %3257 = vst [vmem:[#allocation2] sm:$0xf] %v3255
    %v3258 = vld [vmem:[#allocation4] sm:$0xf]
    %v3259 = vld [vmem:[#allocation5] sm:$0xf]
    %v3260 = vld [vmem:[%s3] sm:$0xff]
    %v3261 = vld [vmem:[%s3 + $0x8] sm:$0xff]
    %v3262 = vld [vmem:[%s3 + $0x10] sm:$0xff]
    %v3263 = vld [vmem:[%s3 + $0x18] sm:$0xff]
    %v3264 = vld [vmem:[%s3 + $0x20] sm:$0xff]
    %v3265 = vld [vmem:[%s3 + $0x28] sm:$0xff]
    %v3266 = vld [vmem:[%s3 + $0x30] sm:$0xff]
    %v3267 = vld [vmem:[%s3 + $0x38] sm:$0xff]
    %v3268 = vld [vmem:[%s3 + $0x40] sm:$0xff]
    %v3269 = vld [vmem:[%s3 + $0x48] sm:$0xff]
    %v3270 = vld [vmem:[%s3 + $0x50] sm:$0xff]
    %v3271 = vld [vmem:[%s3 + $0x58] sm:$0xff]
    %v3272 = vld [vmem:[%s3 + $0x60] sm:$0xff]
    %v3273 = vld [vmem:[%s3 + $0x68] sm:$0xff]
    %v3274 = vld [vmem:[%s3 + $0x70] sm:$0xff]
    %v3275 = vld [vmem:[%s3 + $0x78] sm:$0xff]
    %v3276 = vld [vmem:[%s3 + $0x80] sm:$0xff]
    %v3277 = vld [vmem:[%s3 + $0x88] sm:$0xff]
    %v3278 = vld [vmem:[%s3 + $0x90] sm:$0xff]
    %v3279 = vld [vmem:[%s3 + $0x98] sm:$0xff]
    %v3280 = vld [vmem:[%s3 + $0xa0] sm:$0xff]
    %v3281 = vld [vmem:[%s3 + $0xa8] sm:$0xff]
    %v3282 = vld [vmem:[%s3 + $0xb0] sm:$0xff]
    %v3283 = vld [vmem:[%s3 + $0xb8] sm:$0xff]
    %v3284 = vld [vmem:[%s3 + $0xc0] sm:$0xff]
    %v3285 = vld [vmem:[%s3 + $0xc8] sm:$0xff]
    %v3286 = vld [vmem:[%s3 + $0xd0] sm:$0xff]
    %v3287 = vld [vmem:[%s3 + $0xd8] sm:$0xff]
    %v3288 = vld [vmem:[%s3 + $0xe0] sm:$0xff]
    %v3289 = vld [vmem:[%s3 + $0xe8] sm:$0xff]
    %v3290 = vld [vmem:[%s3 + $0xf0] sm:$0xff]
    %v3291 = vld [vmem:[%s3 + $0xf8] sm:$0xff]
    %v3292 = vld [vmem:[%s3 + $0x100] sm:$0xff]
    %v3293 = vld [vmem:[%s3 + $0x108] sm:$0xff]
    %v3294 = vld [vmem:[%s3 + $0x110] sm:$0xff]
    %v3295 = vld [vmem:[%s3 + $0x118] sm:$0xff]
    %v3296 = vld [vmem:[%s3 + $0x120] sm:$0xff]
    %v3297 = vld [vmem:[%s3 + $0x128] sm:$0xff]
    %v3298 = vld [vmem:[%s3 + $0x130] sm:$0xff]
    %v3299 = vld [vmem:[%s3 + $0x138] sm:$0xff]
    %v3300 = vld [vmem:[%s3 + $0x140] sm:$0xff]
    %v3301 = vld [vmem:[%s3 + $0x148] sm:$0xff]
    %v3302 = vld [vmem:[%s3 + $0x150] sm:$0xff]
    %v3303 = vld [vmem:[%s3 + $0x158] sm:$0xff]
    %v3304 = vld [vmem:[%s3 + $0x160] sm:$0xff]
    %v3305 = vld [vmem:[%s3 + $0x168] sm:$0xff]
    %v3306 = vld [vmem:[%s3 + $0x170] sm:$0xff]
    %v3307 = vld [vmem:[%s3 + $0x178] sm:$0xff]
    %v3308 = vld [vmem:[%s3 + $0x180] sm:$0xff]
    %v3309 = vld [vmem:[%s3 + $0x188] sm:$0xff]
    %v3310 = vld [vmem:[%s3 + $0x190] sm:$0xff]
    %v3311 = vld [vmem:[%s3 + $0x198] sm:$0xff]
    %v3312 = vld [vmem:[%s3 + $0x1a0] sm:$0xff]
    %v3313 = vld [vmem:[%s3 + $0x1a8] sm:$0xff]
    %v3314 = vld [vmem:[%s3 + $0x1b0] sm:$0xff]
    %v3315 = vld [vmem:[%s3 + $0x1b8] sm:$0xff]
    %v3316 = vld [vmem:[%s3 + $0x1c0] sm:$0xff]
    %v3317 = vld [vmem:[%s3 + $0x1c8] sm:$0xff]
    %v3318 = vld [vmem:[%s3 + $0x1d0] sm:$0xff]
    %v3319 = vld [vmem:[%s3 + $0x1d8] sm:$0xff]
    %v3320 = vld [vmem:[%s3 + $0x1e0] sm:$0xff]
    %v3321 = vld [vmem:[%s3 + $0x1e8] sm:$0xff]
    %v3322 = vld [vmem:[%s3 + $0x1f0] sm:$0xff]
    %v3323 = vld [vmem:[%s3 + $0x1f8] sm:$0xff]
    %v3324 = vld [vmem:[%s3 + $0x200] sm:$0xff]
    %v3325 = vld [vmem:[%s3 + $0x208] sm:$0xff]
    %v3326 = vld [vmem:[%s3 + $0x210] sm:$0xff]
    %v3327 = vld [vmem:[%s3 + $0x218] sm:$0xff]
    %v3328 = vld [vmem:[%s3 + $0x220] sm:$0xff]
    %v3329 = vld [vmem:[%s3 + $0x228] sm:$0xff]
    %v3330 = vld [vmem:[%s3 + $0x230] sm:$0xff]
    %v3331 = vld [vmem:[%s3 + $0x238] sm:$0xff]
    %v3332 = vld [vmem:[%s3 + $0x240] sm:$0xff]
    %v3333 = vld [vmem:[%s3 + $0x248] sm:$0xff]
    %v3334 = vld [vmem:[%s3 + $0x250] sm:$0xff]
    %v3335 = vld [vmem:[%s3 + $0x258] sm:$0xff]
    %v3336 = vld [vmem:[%s3 + $0x260] sm:$0xff]
    %v3337 = vld [vmem:[%s3 + $0x268] sm:$0xff]
    %v3338 = vld [vmem:[%s3 + $0x270] sm:$0xff]
    %v3339 = vld [vmem:[%s3 + $0x278] sm:$0xff]
    %v3340 = vld [vmem:[%s3 + $0x280] sm:$0xff]
    %v3341 = vld [vmem:[%s3 + $0x288] sm:$0xff]
    %v3342 = vld [vmem:[%s3 + $0x290] sm:$0xff]
    %v3343 = vld [vmem:[%s3 + $0x298] sm:$0xff]
    %v3344 = vld [vmem:[%s3 + $0x2a0] sm:$0xff]
    %v3345 = vld [vmem:[%s3 + $0x2a8] sm:$0xff]
    %v3346 = vld [vmem:[%s3 + $0x2b0] sm:$0xff]
    %v3347 = vld [vmem:[%s3 + $0x2b8] sm:$0xff]
    %v3348 = vld [vmem:[%s3 + $0x2c0] sm:$0xff]
    %v3349 = vld [vmem:[%s3 + $0x2c8] sm:$0xff]
    %v3350 = vld [vmem:[%s3 + $0x2d0] sm:$0xff]
    %v3351 = vld [vmem:[%s3 + $0x2d8] sm:$0xff]
    %v3352 = vld [vmem:[%s3 + $0x2e0] sm:$0xff]
    %v3353 = vld [vmem:[%s3 + $0x2e8] sm:$0xff]
    %v3354 = vld [vmem:[%s3 + $0x2f0] sm:$0xff]
    %v3355 = vld [vmem:[%s3 + $0x2f8] sm:$0xff]
    %v3356 = vld [vmem:[%s3 + $0x300] sm:$0xff]
    %v3357 = vld [vmem:[%s3 + $0x308] sm:$0xff]
    %v3358 = vld [vmem:[%s3 + $0x310] sm:$0xff]
    %v3359 = vld [vmem:[%s3 + $0x318] sm:$0xff]
    %v3360 = vld [vmem:[%s3 + $0x320] sm:$0xff]
    %v3361 = vld [vmem:[%s3 + $0x328] sm:$0xff]
    %v3362 = vld [vmem:[%s3 + $0x330] sm:$0xff]
    %v3363 = vld [vmem:[%s3 + $0x338] sm:$0xff]
    %v3364 = vld [vmem:[%s3 + $0x340] sm:$0xff]
    %v3365 = vld [vmem:[%s3 + $0x348] sm:$0xff]
    %v3366 = vld [vmem:[%s3 + $0x350] sm:$0xff]
    %v3367 = vld [vmem:[%s3 + $0x358] sm:$0xff]
    %v3368 = vld [vmem:[%s3 + $0x360] sm:$0xff]
    %v3369 = vld [vmem:[%s3 + $0x368] sm:$0xff]
    %v3370 = vld [vmem:[%s3 + $0x370] sm:$0xff]
    %v3371 = vld [vmem:[%s3 + $0x378] sm:$0xff]
    %v3372 = vld [vmem:[%s3 + $0x380] sm:$0xff]
    %v3373 = vld [vmem:[%s3 + $0x388] sm:$0xff]
    %v3374 = vld [vmem:[%s3 + $0x390] sm:$0xff]
    %v3375 = vld [vmem:[%s3 + $0x398] sm:$0xff]
    %v3376 = vld [vmem:[%s3 + $0x3a0] sm:$0xff]
    %v3377 = vld [vmem:[%s3 + $0x3a8] sm:$0xff]
    %v3378 = vld [vmem:[%s3 + $0x3b0] sm:$0xff]
    %v3379 = vld [vmem:[%s3 + $0x3b8] sm:$0xff]
    %v3380 = vld [vmem:[%s3 + $0x3c0] sm:$0xff]
    %v3381 = vld [vmem:[%s3 + $0x3c8] sm:$0xff]
    %v3382 = vld [vmem:[%s3 + $0x3d0] sm:$0xff]
    %v3383 = vld [vmem:[%s3 + $0x3d8] sm:$0xff]
    %v3384 = vld [vmem:[%s3 + $0x3e0] sm:$0xff]
    %v3385 = vld [vmem:[%s3 + $0x3e8] sm:$0xff]
    %v3386 = vld [vmem:[%s3 + $0x3f0] sm:$0xff]
    %v3387 = vld [vmem:[%s3 + $0x3f8] sm:$0xff]
    %v3388 = vld [vmem:[%s4] sm:$0xf]
    %v3390 = vlaneseq
    %v3391 = vshrl.u32 %v3390, 7
    %v3392 = vsub.s32 0, %v3391
    %v3393 = vrot.slane %v3388, %v3392
    %v3394 = vlaneseq
    %v3395 = vshrl.u32 %v3394, 7
    %v3396 = vsub.s32 1, %v3395
    %v3397 = vrot.slane %v3388, %v3396
    %v3398 = vlaneseq
    %v3399 = vshrl.u32 %v3398, 7
    %v3400 = vsub.s32 2, %v3399
    %v3401 = vrot.slane %v3388, %v3400
    %v3402 = vlaneseq
    %v3403 = vshrl.u32 %v3402, 7
    %v3404 = vsub.s32 3, %v3403
    %v3405 = vrot.slane %v3388, %v3404
    %3410 = vmatprep.subr.mxu0 %v3261
    %3411 = vmatpush1.msra.mxu0 %v3260
    %3412 = vmatprep.subr.mxu0 %v3265
    %3413 = vmatpush1.msra.mxu0 %v3264
    %3414 = vmatprep.subr.mxu0 %v3269
    %3415 = vmatpush1.msra.mxu0 %v3268
    %3416 = vmatprep.subr.mxu0 %v3273
    %3417 = vmatpush1.msra.mxu0 %v3272
    %3418 = vmatprep.subr.mxu0 %v3277
    %3419 = vmatpush1.msra.mxu0 %v3276
    %3420 = vmatprep.subr.mxu0 %v3281
    %3421 = vmatpush1.msra.mxu0 %v3280
    %3422 = vmatprep.subr.mxu0 %v3285
    %3423 = vmatpush1.msra.mxu0 %v3284
    %3424 = vmatprep.subr.mxu0 %v3289
    %3425 = vmatpush1.msra.mxu0 %v3288
    %3426 = vmatprep.subr.mxu0 %v3293
    %3427 = vmatpush1.msra.mxu0 %v3292
    %3428 = vmatprep.subr.mxu0 %v3297
    %3429 = vmatpush1.msra.mxu0 %v3296
    %3430 = vmatprep.subr.mxu0 %v3301
    %3431 = vmatpush1.msra.mxu0 %v3300
    %3432 = vmatprep.subr.mxu0 %v3305
    %3433 = vmatpush1.msra.mxu0 %v3304
    %3434 = vmatprep.subr.mxu0 %v3309
    %3435 = vmatpush1.msra.mxu0 %v3308
    %3436 = vmatprep.subr.mxu0 %v3313
    %3437 = vmatpush1.msra.mxu0 %v3312
    %3438 = vmatprep.subr.mxu0 %v3317
    %3439 = vmatpush1.msra.mxu0 %v3316
    %3440 = vmatprep.subr.mxu0 %v3321
    %3441 = vmatpush1.msra.mxu0 %v3320
    %3442 = vmatprep.subr.mxu0 %v3325
    %3443 = vmatpush1.msra.mxu0 %v3324
    %3444 = vmatprep.subr.mxu0 %v3329
    %3445 = vmatpush1.msra.mxu0 %v3328
    %3446 = vmatprep.subr.mxu0 %v3333
    %3447 = vmatpush1.msra.mxu0 %v3332
    %3448 = vmatprep.subr.mxu0 %v3337
    %3449 = vmatpush1.msra.mxu0 %v3336
    %3450 = vmatprep.subr.mxu0 %v3341
    %3451 = vmatpush1.msra.mxu0 %v3340
    %3452 = vmatprep.subr.mxu0 %v3345
    %3453 = vmatpush1.msra.mxu0 %v3344
    %3454 = vmatprep.subr.mxu0 %v3349
    %3455 = vmatpush1.msra.mxu0 %v3348
    %3456 = vmatprep.subr.mxu0 %v3353
    %3457 = vmatpush1.msra.mxu0 %v3352
    %3458 = vmatprep.subr.mxu0 %v3357
    %3459 = vmatpush1.msra.mxu0 %v3356
    %3460 = vmatprep.subr.mxu0 %v3361
    %3461 = vmatpush1.msra.mxu0 %v3360
    %3462 = vmatprep.subr.mxu0 %v3365
    %3463 = vmatpush1.msra.mxu0 %v3364
    %3464 = vmatprep.subr.mxu0 %v3369
    %3465 = vmatpush1.msra.mxu0 %v3368
    %3466 = vmatprep.subr.mxu0 %v3373
    %3467 = vmatpush1.msra.mxu0 %v3372
    %3468 = vmatprep.subr.mxu0 %v3377
    %3469 = vmatpush1.msra.mxu0 %v3376
    %3470 = vmatprep.subr.mxu0 %v3381
    %3471 = vmatpush1.msra.mxu0 %v3380
    %3472 = vmatprep.subr.mxu0 %v3385
    %3473 = vmatpush1.msra.mxu0 %v3384
    %3474 = vmatprep.mubr.f32.mxu0 %v3258
    %3475 = vmatmul.mubr.f32.gmra.mrb[0].mxu0 %v3255
    %v3476 = vpop.f32.mrb[0].mxu0
    %v3477 = vadd.f32 %v3393, %v3476
    %v3478 = vpop.f32.mrb[0].mxu0
    %v3479 = vadd.f32 %v3397, %v3478
    %3480 = vdwg.mxu0
    %3481 = vmatprep.subr.mxu0 %v3263
    %3482 = vmatpush1.msra.mxu0 %v3262
    %3483 = vmatprep.subr.mxu0 %v3267
    %3484 = vmatpush1.msra.mxu0 %v3266
    %3485 = vmatprep.subr.mxu0 %v3271
    %3486 = vmatpush1.msra.mxu0 %v3270
    %3487 = vmatprep.subr.mxu0 %v3275
    %3488 = vmatpush1.msra.mxu0 %v3274
    %3489 = vmatprep.subr.mxu0 %v3279
    %3490 = vmatpush1.msra.mxu0 %v3278
    %3491 = vmatprep.subr.mxu0 %v3283
    %3492 = vmatpush1.msra.mxu0 %v3282
    %3493 = vmatprep.subr.mxu0 %v3287
    %3494 = vmatpush1.msra.mxu0 %v3286
    %3495 = vmatprep.subr.mxu0 %v3291
    %3496 = vmatpush1.msra.mxu0 %v3290
    %3497 = vmatprep.subr.mxu0 %v3295
    %3498 = vmatpush1.msra.mxu0 %v3294
    %3499 = vmatprep.subr.mxu0 %v3299
    %3500 = vmatpush1.msra.mxu0 %v3298
    %3501 = vmatprep.subr.mxu0 %v3303
    %3502 = vmatpush1.msra.mxu0 %v3302
    %3503 = vmatprep.subr.mxu0 %v3307
    %3504 = vmatpush1.msra.mxu0 %v3306
    %3505 = vmatprep.subr.mxu0 %v3311
    %3506 = vmatpush1.msra.mxu0 %v3310
    %3507 = vmatprep.subr.mxu0 %v3315
    %3508 = vmatpush1.msra.mxu0 %v3314
    %3509 = vmatprep.subr.mxu0 %v3319
    %3510 = vmatpush1.msra.mxu0 %v3318
    %3511 = vmatprep.subr.mxu0 %v3323
    %3512 = vmatpush1.msra.mxu0 %v3322
    %3513 = vmatprep.subr.mxu0 %v3327
    %3514 = vmatpush1.msra.mxu0 %v3326
    %3515 = vmatprep.subr.mxu0 %v3331
    %3516 = vmatpush1.msra.mxu0 %v3330
    %3517 = vmatprep.subr.mxu0 %v3335
    %3518 = vmatpush1.msra.mxu0 %v3334
    %3519 = vmatprep.subr.mxu0 %v3339
    %3520 = vmatpush1.msra.mxu0 %v3338
    %3521 = vmatprep.subr.mxu0 %v3343
    %3522 = vmatpush1.msra.mxu0 %v3342
    %3523 = vmatprep.subr.mxu0 %v3347
    %3524 = vmatpush1.msra.mxu0 %v3346
    %3525 = vmatprep.subr.mxu0 %v3351
    %3526 = vmatpush1.msra.mxu0 %v3350
    %3527 = vmatprep.subr.mxu0 %v3355
    %3528 = vmatpush1.msra.mxu0 %v3354
    %3529 = vmatprep.subr.mxu0 %v3359
    %3530 = vmatpush1.msra.mxu0 %v3358
    %3531 = vmatprep.subr.mxu0 %v3363
    %3532 = vmatpush1.msra.mxu0 %v3362
    %3533 = vmatprep.subr.mxu0 %v3367
    %3534 = vmatpush1.msra.mxu0 %v3366
    %3535 = vmatprep.subr.mxu0 %v3371
    %3536 = vmatpush1.msra.mxu0 %v3370
    %3537 = vmatprep.subr.mxu0 %v3375
    %3538 = vmatpush1.msra.mxu0 %v3374
    %3539 = vmatprep.subr.mxu0 %v3379
    %3540 = vmatpush1.msra.mxu0 %v3378
    %3541 = vmatprep.subr.mxu0 %v3383
    %3542 = vmatpush1.msra.mxu0 %v3382
    %3543 = vmatprep.subr.mxu0 %v3387
    %3544 = vmatpush1.msra.mxu0 %v3386
    %3545 = vmatprep.mubr.f32.mxu0 %v3258
    %3546 = vmatmul.mubr.f32.gmra.mrb[0].mxu0 %v3255
    %v3547 = vpop.f32.mrb[0].mxu0
    %v3548 = vadd.f32 %v3401, %v3547
    %v3549 = vpop.f32.mrb[0].mxu0
    %v3550 = vadd.f32 %v3405, %v3549
    %3551 = vdwg.mxu0
    %v3552 = vxor.u32 %v3477, 2147483648
    %v3553 = vmul.f32 %v3552, 1.442695
    %v3554 = vpow.pop %v3553
    %v3555 = vadd.f32 %v3554, 1.0
    %v3556 = vrcp.pop %v3555
    %v3557 = vmul.f32 1.0, %v3556
    %v3558 = vxor.u32 %v3479, 2147483648
    %v3559 = vmul.f32 %v3558, 1.442695
    %v3560 = vpow.pop %v3559
    %v3561 = vadd.f32 %v3560, 1.0
    %v3562 = vrcp.pop %v3561
    %v3563 = vmul.f32 1.0, %v3562
    %v3564 = vtanh.pop %v3548
    %v3565 = vxor.u32 %v3550, 2147483648
    %v3566 = vmul.f32 %v3565, 1.442695
    %v3567 = vpow.pop %v3566
    %v3568 = vadd.f32 %v3567, 1.0
    %v3569 = vrcp.pop %v3568
    %v3570 = vmul.f32 1.0, %v3569
    %v3571 = vmul.f32 %v3563, %v3259
    %v3572 = vmul.f32 %v3557, %v3564
    %v3573 = vadd.f32 %v3571, %v3572
    %v3574 = vtanh.pop %v3573
    %v3575 = vmul.f32 %v3570, %v3574
    %v3576 = vsel %vm3253, %v3573, %v3259
    %3577 = vst [vmem:[#allocation5] sm:$0xf] %v3576
    %v3578 = vsel %vm3253, %v3575, %v3258
    %3579 = vst [vmem:[#allocation4] sm:$0xf] %v3578
    %v3580 = vsel %vm3253, %v3575, 0.0
    %s3581 = scalar_lea.vmem %s7, 20
    %3582 = vst [vmem:[%s3581] sm:$0xf] %v3580
    %v3583 = vld [vmem:[#allocation6] sm:$0xf]
    %v3584 = vmax.f32 %v3583, %v3580
    %3585 = vst [vmem:[#allocation6] sm:$0xf] %v3584
    %s3586 = sadd.s32 %s42, 6
    %v3587 = vstv %s3586
    %vm3588 = vcmp.lt.s32.totalorder %v3587, %v41
    %v3589 = vld [vmem:[#allocation2] sm:$0xf]
    %v3590 = vld [vmem:[#allocation3] sm:$0xf]
    %s3591 = scalar_lea.vmem %s0, 96
    %v3592 = vld [vmem:[%s3591] sm:$0xff]
    %v3593 = vld [vmem:[%s3591 + $0x8] sm:$0xff]
    %v3594 = vld [vmem:[%s2] sm:$0xff]
    %v3595 = vld [vmem:[%s2 + $0x8] sm:$0xff]
    %v3596 = vld [vmem:[%s2 + $0x10] sm:$0xff]
    %v3597 = vld [vmem:[%s2 + $0x18] sm:$0xff]
    %v3598 = vld [vmem:[%s2 + $0x20] sm:$0xff]
    %v3599 = vld [vmem:[%s2 + $0x28] sm:$0xff]
    %v3600 = vld [vmem:[%s2 + $0x30] sm:$0xff]
    %v3601 = vld [vmem:[%s2 + $0x38] sm:$0xff]
    %v3602 = vld [vmem:[%s2 + $0x40] sm:$0xff]
    %v3603 = vld [vmem:[%s2 + $0x48] sm:$0xff]
    %v3604 = vld [vmem:[%s2 + $0x50] sm:$0xff]
    %v3605 = vld [vmem:[%s2 + $0x58] sm:$0xff]
    %v3606 = vld [vmem:[%s2 + $0x60] sm:$0xff]
    %v3607 = vld [vmem:[%s2 + $0x68] sm:$0xff]
    %v3608 = vld [vmem:[%s2 + $0x70] sm:$0xff]
    %v3609 = vld [vmem:[%s2 + $0x78] sm:$0xff]
    %v3610 = vld [vmem:[%s2 + $0x80] sm:$0xff]
    %v3611 = vld [vmem:[%s2 + $0x88] sm:$0xff]
    %v3612 = vld [vmem:[%s2 + $0x90] sm:$0xff]
    %v3613 = vld [vmem:[%s2 + $0x98] sm:$0xff]
    %v3614 = vld [vmem:[%s2 + $0xa0] sm:$0xff]
    %v3615 = vld [vmem:[%s2 + $0xa8] sm:$0xff]
    %v3616 = vld [vmem:[%s2 + $0xb0] sm:$0xff]
    %v3617 = vld [vmem:[%s2 + $0xb8] sm:$0xff]
    %v3618 = vld [vmem:[%s2 + $0xc0] sm:$0xff]
    %v3619 = vld [vmem:[%s2 + $0xc8] sm:$0xff]
    %v3620 = vld [vmem:[%s2 + $0xd0] sm:$0xff]
    %v3621 = vld [vmem:[%s2 + $0xd8] sm:$0xff]
    %v3622 = vld [vmem:[%s2 + $0xe0] sm:$0xff]
    %v3623 = vld [vmem:[%s2 + $0xe8] sm:$0xff]
    %v3624 = vld [vmem:[%s2 + $0xf0] sm:$0xff]
    %v3625 = vld [vmem:[%s2 + $0xf8] sm:$0xff]
    %v3626 = vld [vmem:[%s2 + $0x100] sm:$0xff]
    %v3627 = vld [vmem:[%s2 + $0x108] sm:$0xff]
    %v3628 = vld [vmem:[%s2 + $0x110] sm:$0xff]
    %v3629 = vld [vmem:[%s2 + $0x118] sm:$0xff]
    %v3630 = vld [vmem:[%s2 + $0x120] sm:$0xff]
    %v3631 = vld [vmem:[%s2 + $0x128] sm:$0xff]
    %v3632 = vld [vmem:[%s2 + $0x130] sm:$0xff]
    %v3633 = vld [vmem:[%s2 + $0x138] sm:$0xff]
    %v3634 = vld [vmem:[%s2 + $0x140] sm:$0xff]
    %v3635 = vld [vmem:[%s2 + $0x148] sm:$0xff]
    %v3636 = vld [vmem:[%s2 + $0x150] sm:$0xff]
    %v3637 = vld [vmem:[%s2 + $0x158] sm:$0xff]
    %v3638 = vld [vmem:[%s2 + $0x160] sm:$0xff]
    %v3639 = vld [vmem:[%s2 + $0x168] sm:$0xff]
    %v3640 = vld [vmem:[%s2 + $0x170] sm:$0xff]
    %v3641 = vld [vmem:[%s2 + $0x178] sm:$0xff]
    %v3642 = vld [vmem:[%s2 + $0x180] sm:$0xff]
    %v3643 = vld [vmem:[%s2 + $0x188] sm:$0xff]
    %v3644 = vld [vmem:[%s2 + $0x190] sm:$0xff]
    %v3645 = vld [vmem:[%s2 + $0x198] sm:$0xff]
    %v3646 = vld [vmem:[%s2 + $0x1a0] sm:$0xff]
    %v3647 = vld [vmem:[%s2 + $0x1a8] sm:$0xff]
    %v3648 = vld [vmem:[%s2 + $0x1b0] sm:$0xff]
    %v3649 = vld [vmem:[%s2 + $0x1b8] sm:$0xff]
    %v3650 = vld [vmem:[%s2 + $0x1c0] sm:$0xff]
    %v3651 = vld [vmem:[%s2 + $0x1c8] sm:$0xff]
    %v3652 = vld [vmem:[%s2 + $0x1d0] sm:$0xff]
    %v3653 = vld [vmem:[%s2 + $0x1d8] sm:$0xff]
    %v3654 = vld [vmem:[%s2 + $0x1e0] sm:$0xff]
    %v3655 = vld [vmem:[%s2 + $0x1e8] sm:$0xff]
    %v3656 = vld [vmem:[%s2 + $0x1f0] sm:$0xff]
    %v3657 = vld [vmem:[%s2 + $0x1f8] sm:$0xff]
    %3658 = vmatprep.subr.mxu0 %v3595
    %3659 = vmatpush1.msra.mxu0 %v3594
    %3660 = vmatprep.subr.mxu0 %v3599
    %3661 = vmatpush1.msra.mxu0 %v3598
    %3662 = vmatprep.subr.mxu0 %v3603
    %3663 = vmatpush1.msra.mxu0 %v3602
    %3664 = vmatprep.subr.mxu0 %v3607
    %3665 = vmatpush1.msra.mxu0 %v3606
    %3666 = vmatprep.subr.mxu0 %v3611
    %3667 = vmatpush1.msra.mxu0 %v3610
    %3668 = vmatprep.subr.mxu0 %v3615
    %3669 = vmatpush1.msra.mxu0 %v3614
    %3670 = vmatprep.subr.mxu0 %v3619
    %3671 = vmatpush1.msra.mxu0 %v3618
    %3672 = vmatprep.subr.mxu0 %v3623
    %3673 = vmatpush1.msra.mxu0 %v3622
    %3674 = vmatprep.subr.mxu0 %v3627
    %3675 = vmatpush1.msra.mxu0 %v3626
    %3676 = vmatprep.subr.mxu0 %v3631
    %3677 = vmatpush1.msra.mxu0 %v3630
    %3678 = vmatprep.subr.mxu0 %v3635
    %3679 = vmatpush1.msra.mxu0 %v3634
    %3680 = vmatprep.subr.mxu0 %v3639
    %3681 = vmatpush1.msra.mxu0 %v3638
    %3682 = vmatprep.subr.mxu0 %v3643
    %3683 = vmatpush1.msra.mxu0 %v3642
    %3684 = vmatprep.subr.mxu0 %v3647
    %3685 = vmatpush1.msra.mxu0 %v3646
    %3686 = vmatprep.subr.mxu0 %v3651
    %3687 = vmatpush1.msra.mxu0 %v3650
    %3688 = vmatprep.subr.mxu0 %v3655
    %3689 = vmatpush1.msra.mxu0 %v3654
    %3690 = vmatprep.subr.mxu0 0.0
    %3691 = vmatpush1.msra.mxu0 0.0
    %3692 = vmatprep.subr.mxu0 0.0
    %3693 = vmatpush1.msra.mxu0 0.0
    %3694 = vmatprep.subr.mxu0 0.0
    %3695 = vmatpush1.msra.mxu0 0.0
    %3696 = vmatprep.subr.mxu0 0.0
    %3697 = vmatpush1.msra.mxu0 0.0
    %3698 = vmatprep.subr.mxu0 0.0
    %3699 = vmatpush1.msra.mxu0 0.0
    %3700 = vmatprep.subr.mxu0 0.0
    %3701 = vmatpush1.msra.mxu0 0.0
    %3702 = vmatprep.subr.mxu0 0.0
    %3703 = vmatpush1.msra.mxu0 0.0
    %3704 = vmatprep.subr.mxu0 0.0
    %3705 = vmatpush1.msra.mxu0 0.0
    %3706 = vmatprep.subr.mxu0 0.0
    %3707 = vmatpush1.msra.mxu0 0.0
    %3708 = vmatprep.subr.mxu0 0.0
    %3709 = vmatpush1.msra.mxu0 0.0
    %3710 = vmatprep.subr.mxu0 0.0
    %3711 = vmatpush1.msra.mxu0 0.0
    %3712 = vmatprep.subr.mxu0 0.0
    %3713 = vmatpush1.msra.mxu0 0.0
    %3714 = vmatprep.subr.mxu0 0.0
    %3715 = vmatpush1.msra.mxu0 0.0
    %3716 = vmatprep.subr.mxu0 0.0
    %3717 = vmatpush1.msra.mxu0 0.0
    %3718 = vmatprep.subr.mxu0 0.0
    %3719 = vmatpush1.msra.mxu0 0.0
    %3720 = vmatprep.subr.mxu0 0.0
    %3721 = vmatpush1.msra.mxu0 0.0
    %3722 = vmatprep.mubr.f32.mxu0 0.0
    %3723 = vmatmul.mubr.f32.gmra.mrb[0].mxu0 %v3589
    %v3724 = vpop.f32.mrb[0].mxu0
    %v3725 = vadd.f32 0.0, %v3724
    %v3726 = vpop.f32.mrb[0].mxu0
    %v3727 = vadd.f32 0.0, %v3726
    %3728 = vdwg.mxu0
    %3729 = vmatprep.subr.mxu0 %v3597
    %3730 = vmatpush1.msra.mxu0 %v3596
    %3731 = vmatprep.subr.mxu0 %v3601
    %3732 = vmatpush1.msra.mxu0 %v3600
    %3733 = vmatprep.subr.mxu0 %v3605
    %3734 = vmatpush1.msra.mxu0 %v3604
    %3735 = vmatprep.subr.mxu0 %v3609
    %3736 = vmatpush1.msra.mxu0 %v3608
    %3737 = vmatprep.subr.mxu0 %v3613
    %3738 = vmatpush1.msra.mxu0 %v3612
    %3739 = vmatprep.subr.mxu0 %v3617
    %3740 = vmatpush1.msra.mxu0 %v3616
    %3741 = vmatprep.subr.mxu0 %v3621
    %3742 = vmatpush1.msra.mxu0 %v3620
    %3743 = vmatprep.subr.mxu0 %v3625
    %3744 = vmatpush1.msra.mxu0 %v3624
    %3745 = vmatprep.subr.mxu0 %v3629
    %3746 = vmatpush1.msra.mxu0 %v3628
    %3747 = vmatprep.subr.mxu0 %v3633
    %3748 = vmatpush1.msra.mxu0 %v3632
    %3749 = vmatprep.subr.mxu0 %v3637
    %3750 = vmatpush1.msra.mxu0 %v3636
    %3751 = vmatprep.subr.mxu0 %v3641
    %3752 = vmatpush1.msra.mxu0 %v3640
    %3753 = vmatprep.subr.mxu0 %v3645
    %3754 = vmatpush1.msra.mxu0 %v3644
    %3755 = vmatprep.subr.mxu0 %v3649
    %3756 = vmatpush1.msra.mxu0 %v3648
    %3757 = vmatprep.subr.mxu0 %v3653
    %3758 = vmatpush1.msra.mxu0 %v3652
    %3759 = vmatprep.subr.mxu0 %v3657
    %3760 = vmatpush1.msra.mxu0 %v3656
    %3761 = vmatprep.subr.mxu0 0.0
    %3762 = vmatpush1.msra.mxu0 0.0
    %3763 = vmatprep.subr.mxu0 0.0
    %3764 = vmatpush1.msra.mxu0 0.0
    %3765 = vmatprep.subr.mxu0 0.0
    %3766 = vmatpush1.msra.mxu0 0.0
    %3767 = vmatprep.subr.mxu0 0.0
    %3768 = vmatpush1.msra.mxu0 0.0
    %3769 = vmatprep.subr.mxu0 0.0
    %3770 = vmatpush1.msra.mxu0 0.0
    %3771 = vmatprep.subr.mxu0 0.0
    %3772 = vmatpush1.msra.mxu0 0.0
    %3773 = vmatprep.subr.mxu0 0.0
    %3774 = vmatpush1.msra.mxu0 0.0
    %3775 = vmatprep.subr.mxu0 0.0
    %3776 = vmatpush1.msra.mxu0 0.0
    %3777 = vmatprep.subr.mxu0 0.0
    %3778 = vmatpush1.msra.mxu0 0.0
    %3779 = vmatprep.subr.mxu0 0.0
    %3780 = vmatpush1.msra.mxu0 0.0
    %3781 = vmatprep.subr.mxu0 0.0
    %3782 = vmatpush1.msra.mxu0 0.0
    %3783 = vmatprep.subr.mxu0 0.0
    %3784 = vmatpush1.msra.mxu0 0.0
    %3785 = vmatprep.subr.mxu0 0.0
    %3786 = vmatpush1.msra.mxu0 0.0
    %3787 = vmatprep.subr.mxu0 0.0
    %3788 = vmatpush1.msra.mxu0 0.0
    %3789 = vmatprep.subr.mxu0 0.0
    %3790 = vmatpush1.msra.mxu0 0.0
    %3791 = vmatprep.subr.mxu0 0.0
    %3792 = vmatpush1.msra.mxu0 0.0
    %3793 = vmatprep.mubr.f32.mxu0 0.0
    %3794 = vmatmul.mubr.f32.gmra.mrb[0].mxu0 %v3589
    %v3795 = vpop.f32.mrb[0].mxu0
    %v3796 = vadd.f32 0.0, %v3795
    %v3797 = vpop.f32.mrb[0].mxu0
    %v3798 = vadd.f32 0.0, %v3797
    %3799 = vdwg.mxu0
    %v3804 = vcombine.low %v3725, %v3727
    %v3805 = vcombine.low %v3796, %v3798
    %v3808 = vadd.f32 %v3592, %v3804
    %v3809 = vadd.f32 %v3593, %v3805
    %v3810 = vxor.u32 %v3808, 2147483648
    %v3811 = vmul.f32 %v3810, 1.442695
    %v3812 = vpow.pop %v3811
    %v3813 = vadd.f32 %v3812, 1.0
    %v3814 = vrcp.pop %v3813
    %v3815 = vmul.f32 1.0, %v3814
    %v3817 = vrot.slane %v3808, 4
    %v3819 = vxor.u32 %v3817, 2147483648
    %v3820 = vmul.f32 %v3819, 1.442695
    %v3821 = vpow.pop %v3820
    %v3822 = vadd.f32 %v3821, 1.0
    %v3823 = vrcp.pop %v3822
    %v3824 = vmul.f32 1.0, %v3823
    %v3825 = vtanh.pop %v3809
    %v3827 = vrot.slane %v3809, 4
    %v3829 = vxor.u32 %v3827, 2147483648
    %v3830 = vmul.f32 %v3829, 1.442695
    %v3831 = vpow.pop %v3830
    %v3832 = vadd.f32 %v3831, 1.0
    %v3833 = vrcp.pop %v3832
    %v3834 = vmul.f32 1.0, %v3833
    %v3835 = vmul.f32 %v3824, %v3590
    %v3836 = vmul.f32 %v3815, %v3825
    %v3837 = vadd.f32 %v3835, %v3836
    %v3838 = vtanh.pop %v3837
    %v3839 = vmul.f32 %v3834, %v3838
    %v3840 = vsel %vm3588, 1, 0
    %3841 = vset.pattern.permute.xlu0 0
    %3842 = vperm.xlu0 %3841, %v3840
    %v3843 = vpop.permute.xlu0 %3842
    %vm3844 = vcmp.eq.s32.totalorder %v3843, 1
    %v3845 = vsel %vm3844, %v3837, %v3590
    %v3846 = vsel %vm3844, %v3839, %v3589
    %3847 = vst [vmem:[#allocation3] sm:$0xf] %v3845
    %3848 = vst [vmem:[#allocation2] sm:$0xf] %v3846
    %v3849 = vld [vmem:[#allocation4] sm:$0xf]
    %v3850 = vld [vmem:[#allocation5] sm:$0xf]
    %v3851 = vld [vmem:[%s3] sm:$0xff]
    %v3852 = vld [vmem:[%s3 + $0x8] sm:$0xff]
    %v3853 = vld [vmem:[%s3 + $0x10] sm:$0xff]
    %v3854 = vld [vmem:[%s3 + $0x18] sm:$0xff]
    %v3855 = vld [vmem:[%s3 + $0x20] sm:$0xff]
    %v3856 = vld [vmem:[%s3 + $0x28] sm:$0xff]
    %v3857 = vld [vmem:[%s3 + $0x30] sm:$0xff]
    %v3858 = vld [vmem:[%s3 + $0x38] sm:$0xff]
    %v3859 = vld [vmem:[%s3 + $0x40] sm:$0xff]
    %v3860 = vld [vmem:[%s3 + $0x48] sm:$0xff]
    %v3861 = vld [vmem:[%s3 + $0x50] sm:$0xff]
    %v3862 = vld [vmem:[%s3 + $0x58] sm:$0xff]
    %v3863 = vld [vmem:[%s3 + $0x60] sm:$0xff]
    %v3864 = vld [vmem:[%s3 + $0x68] sm:$0xff]
    %v3865 = vld [vmem:[%s3 + $0x70] sm:$0xff]
    %v3866 = vld [vmem:[%s3 + $0x78] sm:$0xff]
    %v3867 = vld [vmem:[%s3 + $0x80] sm:$0xff]
    %v3868 = vld [vmem:[%s3 + $0x88] sm:$0xff]
    %v3869 = vld [vmem:[%s3 + $0x90] sm:$0xff]
    %v3870 = vld [vmem:[%s3 + $0x98] sm:$0xff]
    %v3871 = vld [vmem:[%s3 + $0xa0] sm:$0xff]
    %v3872 = vld [vmem:[%s3 + $0xa8] sm:$0xff]
    %v3873 = vld [vmem:[%s3 + $0xb0] sm:$0xff]
    %v3874 = vld [vmem:[%s3 + $0xb8] sm:$0xff]
    %v3875 = vld [vmem:[%s3 + $0xc0] sm:$0xff]
    %v3876 = vld [vmem:[%s3 + $0xc8] sm:$0xff]
    %v3877 = vld [vmem:[%s3 + $0xd0] sm:$0xff]
    %v3878 = vld [vmem:[%s3 + $0xd8] sm:$0xff]
    %v3879 = vld [vmem:[%s3 + $0xe0] sm:$0xff]
    %v3880 = vld [vmem:[%s3 + $0xe8] sm:$0xff]
    %v3881 = vld [vmem:[%s3 + $0xf0] sm:$0xff]
    %v3882 = vld [vmem:[%s3 + $0xf8] sm:$0xff]
    %v3883 = vld [vmem:[%s3 + $0x100] sm:$0xff]
    %v3884 = vld [vmem:[%s3 + $0x108] sm:$0xff]
    %v3885 = vld [vmem:[%s3 + $0x110] sm:$0xff]
    %v3886 = vld [vmem:[%s3 + $0x118] sm:$0xff]
    %v3887 = vld [vmem:[%s3 + $0x120] sm:$0xff]
    %v3888 = vld [vmem:[%s3 + $0x128] sm:$0xff]
    %v3889 = vld [vmem:[%s3 + $0x130] sm:$0xff]
    %v3890 = vld [vmem:[%s3 + $0x138] sm:$0xff]
    %v3891 = vld [vmem:[%s3 + $0x140] sm:$0xff]
    %v3892 = vld [vmem:[%s3 + $0x148] sm:$0xff]
    %v3893 = vld [vmem:[%s3 + $0x150] sm:$0xff]
    %v3894 = vld [vmem:[%s3 + $0x158] sm:$0xff]
    %v3895 = vld [vmem:[%s3 + $0x160] sm:$0xff]
    %v3896 = vld [vmem:[%s3 + $0x168] sm:$0xff]
    %v3897 = vld [vmem:[%s3 + $0x170] sm:$0xff]
    %v3898 = vld [vmem:[%s3 + $0x178] sm:$0xff]
    %v3899 = vld [vmem:[%s3 + $0x180] sm:$0xff]
    %v3900 = vld [vmem:[%s3 + $0x188] sm:$0xff]
    %v3901 = vld [vmem:[%s3 + $0x190] sm:$0xff]
    %v3902 = vld [vmem:[%s3 + $0x198] sm:$0xff]
    %v3903 = vld [vmem:[%s3 + $0x1a0] sm:$0xff]
    %v3904 = vld [vmem:[%s3 + $0x1a8] sm:$0xff]
    %v3905 = vld [vmem:[%s3 + $0x1b0] sm:$0xff]
    %v3906 = vld [vmem:[%s3 + $0x1b8] sm:$0xff]
    %v3907 = vld [vmem:[%s3 + $0x1c0] sm:$0xff]
    %v3908 = vld [vmem:[%s3 + $0x1c8] sm:$0xff]
    %v3909 = vld [vmem:[%s3 + $0x1d0] sm:$0xff]
    %v3910 = vld [vmem:[%s3 + $0x1d8] sm:$0xff]
    %v3911 = vld [vmem:[%s3 + $0x1e0] sm:$0xff]
    %v3912 = vld [vmem:[%s3 + $0x1e8] sm:$0xff]
    %v3913 = vld [vmem:[%s3 + $0x1f0] sm:$0xff]
    %v3914 = vld [vmem:[%s3 + $0x1f8] sm:$0xff]
    %v3915 = vld [vmem:[%s3 + $0x200] sm:$0xff]
    %v3916 = vld [vmem:[%s3 + $0x208] sm:$0xff]
    %v3917 = vld [vmem:[%s3 + $0x210] sm:$0xff]
    %v3918 = vld [vmem:[%s3 + $0x218] sm:$0xff]
    %v3919 = vld [vmem:[%s3 + $0x220] sm:$0xff]
    %v3920 = vld [vmem:[%s3 + $0x228] sm:$0xff]
    %v3921 = vld [vmem:[%s3 + $0x230] sm:$0xff]
    %v3922 = vld [vmem:[%s3 + $0x238] sm:$0xff]
    %v3923 = vld [vmem:[%s3 + $0x240] sm:$0xff]
    %v3924 = vld [vmem:[%s3 + $0x248] sm:$0xff]
    %v3925 = vld [vmem:[%s3 + $0x250] sm:$0xff]
    %v3926 = vld [vmem:[%s3 + $0x258] sm:$0xff]
    %v3927 = vld [vmem:[%s3 + $0x260] sm:$0xff]
    %v3928 = vld [vmem:[%s3 + $0x268] sm:$0xff]
    %v3929 = vld [vmem:[%s3 + $0x270] sm:$0xff]
    %v3930 = vld [vmem:[%s3 + $0x278] sm:$0xff]
    %v3931 = vld [vmem:[%s3 + $0x280] sm:$0xff]
    %v3932 = vld [vmem:[%s3 + $0x288] sm:$0xff]
    %v3933 = vld [vmem:[%s3 + $0x290] sm:$0xff]
    %v3934 = vld [vmem:[%s3 + $0x298] sm:$0xff]
    %v3935 = vld [vmem:[%s3 + $0x2a0] sm:$0xff]
    %v3936 = vld [vmem:[%s3 + $0x2a8] sm:$0xff]
    %v3937 = vld [vmem:[%s3 + $0x2b0] sm:$0xff]
    %v3938 = vld [vmem:[%s3 + $0x2b8] sm:$0xff]
    %v3939 = vld [vmem:[%s3 + $0x2c0] sm:$0xff]
    %v3940 = vld [vmem:[%s3 + $0x2c8] sm:$0xff]
    %v3941 = vld [vmem:[%s3 + $0x2d0] sm:$0xff]
    %v3942 = vld [vmem:[%s3 + $0x2d8] sm:$0xff]
    %v3943 = vld [vmem:[%s3 + $0x2e0] sm:$0xff]
    %v3944 = vld [vmem:[%s3 + $0x2e8] sm:$0xff]
    %v3945 = vld [vmem:[%s3 + $0x2f0] sm:$0xff]
    %v3946 = vld [vmem:[%s3 + $0x2f8] sm:$0xff]
    %v3947 = vld [vmem:[%s3 + $0x300] sm:$0xff]
    %v3948 = vld [vmem:[%s3 + $0x308] sm:$0xff]
    %v3949 = vld [vmem:[%s3 + $0x310] sm:$0xff]
    %v3950 = vld [vmem:[%s3 + $0x318] sm:$0xff]
    %v3951 = vld [vmem:[%s3 + $0x320] sm:$0xff]
    %v3952 = vld [vmem:[%s3 + $0x328] sm:$0xff]
    %v3953 = vld [vmem:[%s3 + $0x330] sm:$0xff]
    %v3954 = vld [vmem:[%s3 + $0x338] sm:$0xff]
    %v3955 = vld [vmem:[%s3 + $0x340] sm:$0xff]
    %v3956 = vld [vmem:[%s3 + $0x348] sm:$0xff]
    %v3957 = vld [vmem:[%s3 + $0x350] sm:$0xff]
    %v3958 = vld [vmem:[%s3 + $0x358] sm:$0xff]
    %v3959 = vld [vmem:[%s3 + $0x360] sm:$0xff]
    %v3960 = vld [vmem:[%s3 + $0x368] sm:$0xff]
    %v3961 = vld [vmem:[%s3 + $0x370] sm:$0xff]
    %v3962 = vld [vmem:[%s3 + $0x378] sm:$0xff]
    %v3963 = vld [vmem:[%s3 + $0x380] sm:$0xff]
    %v3964 = vld [vmem:[%s3 + $0x388] sm:$0xff]
    %v3965 = vld [vmem:[%s3 + $0x390] sm:$0xff]
    %v3966 = vld [vmem:[%s3 + $0x398] sm:$0xff]
    %v3967 = vld [vmem:[%s3 + $0x3a0] sm:$0xff]
    %v3968 = vld [vmem:[%s3 + $0x3a8] sm:$0xff]
    %v3969 = vld [vmem:[%s3 + $0x3b0] sm:$0xff]
    %v3970 = vld [vmem:[%s3 + $0x3b8] sm:$0xff]
    %v3971 = vld [vmem:[%s3 + $0x3c0] sm:$0xff]
    %v3972 = vld [vmem:[%s3 + $0x3c8] sm:$0xff]
    %v3973 = vld [vmem:[%s3 + $0x3d0] sm:$0xff]
    %v3974 = vld [vmem:[%s3 + $0x3d8] sm:$0xff]
    %v3975 = vld [vmem:[%s3 + $0x3e0] sm:$0xff]
    %v3976 = vld [vmem:[%s3 + $0x3e8] sm:$0xff]
    %v3977 = vld [vmem:[%s3 + $0x3f0] sm:$0xff]
    %v3978 = vld [vmem:[%s3 + $0x3f8] sm:$0xff]
    %v3979 = vld [vmem:[%s4] sm:$0xf]
    %v3981 = vlaneseq
    %v3982 = vshrl.u32 %v3981, 7
    %v3983 = vsub.s32 0, %v3982
    %v3984 = vrot.slane %v3979, %v3983
    %v3985 = vlaneseq
    %v3986 = vshrl.u32 %v3985, 7
    %v3987 = vsub.s32 1, %v3986
    %v3988 = vrot.slane %v3979, %v3987
    %v3989 = vlaneseq
    %v3990 = vshrl.u32 %v3989, 7
    %v3991 = vsub.s32 2, %v3990
    %v3992 = vrot.slane %v3979, %v3991
    %v3993 = vlaneseq
    %v3994 = vshrl.u32 %v3993, 7
    %v3995 = vsub.s32 3, %v3994
    %v3996 = vrot.slane %v3979, %v3995
    %4001 = vmatprep.subr.mxu0 %v3852
    %4002 = vmatpush1.msra.mxu0 %v3851
    %4003 = vmatprep.subr.mxu0 %v3856
    %4004 = vmatpush1.msra.mxu0 %v3855
    %4005 = vmatprep.subr.mxu0 %v3860
    %4006 = vmatpush1.msra.mxu0 %v3859
    %4007 = vmatprep.subr.mxu0 %v3864
    %4008 = vmatpush1.msra.mxu0 %v3863
    %4009 = vmatprep.subr.mxu0 %v3868
    %4010 = vmatpush1.msra.mxu0 %v3867
    %4011 = vmatprep.subr.mxu0 %v3872
    %4012 = vmatpush1.msra.mxu0 %v3871
    %4013 = vmatprep.subr.mxu0 %v3876
    %4014 = vmatpush1.msra.mxu0 %v3875
    %4015 = vmatprep.subr.mxu0 %v3880
    %4016 = vmatpush1.msra.mxu0 %v3879
    %4017 = vmatprep.subr.mxu0 %v3884
    %4018 = vmatpush1.msra.mxu0 %v3883
    %4019 = vmatprep.subr.mxu0 %v3888
    %4020 = vmatpush1.msra.mxu0 %v3887
    %4021 = vmatprep.subr.mxu0 %v3892
    %4022 = vmatpush1.msra.mxu0 %v3891
    %4023 = vmatprep.subr.mxu0 %v3896
    %4024 = vmatpush1.msra.mxu0 %v3895
    %4025 = vmatprep.subr.mxu0 %v3900
    %4026 = vmatpush1.msra.mxu0 %v3899
    %4027 = vmatprep.subr.mxu0 %v3904
    %4028 = vmatpush1.msra.mxu0 %v3903
    %4029 = vmatprep.subr.mxu0 %v3908
    %4030 = vmatpush1.msra.mxu0 %v3907
    %4031 = vmatprep.subr.mxu0 %v3912
    %4032 = vmatpush1.msra.mxu0 %v3911
    %4033 = vmatprep.subr.mxu0 %v3916
    %4034 = vmatpush1.msra.mxu0 %v3915
    %4035 = vmatprep.subr.mxu0 %v3920
    %4036 = vmatpush1.msra.mxu0 %v3919
    %4037 = vmatprep.subr.mxu0 %v3924
    %4038 = vmatpush1.msra.mxu0 %v3923
    %4039 = vmatprep.subr.mxu0 %v3928
    %4040 = vmatpush1.msra.mxu0 %v3927
    %4041 = vmatprep.subr.mxu0 %v3932
    %4042 = vmatpush1.msra.mxu0 %v3931
    %4043 = vmatprep.subr.mxu0 %v3936
    %4044 = vmatpush1.msra.mxu0 %v3935
    %4045 = vmatprep.subr.mxu0 %v3940
    %4046 = vmatpush1.msra.mxu0 %v3939
    %4047 = vmatprep.subr.mxu0 %v3944
    %4048 = vmatpush1.msra.mxu0 %v3943
    %4049 = vmatprep.subr.mxu0 %v3948
    %4050 = vmatpush1.msra.mxu0 %v3947
    %4051 = vmatprep.subr.mxu0 %v3952
    %4052 = vmatpush1.msra.mxu0 %v3951
    %4053 = vmatprep.subr.mxu0 %v3956
    %4054 = vmatpush1.msra.mxu0 %v3955
    %4055 = vmatprep.subr.mxu0 %v3960
    %4056 = vmatpush1.msra.mxu0 %v3959
    %4057 = vmatprep.subr.mxu0 %v3964
    %4058 = vmatpush1.msra.mxu0 %v3963
    %4059 = vmatprep.subr.mxu0 %v3968
    %4060 = vmatpush1.msra.mxu0 %v3967
    %4061 = vmatprep.subr.mxu0 %v3972
    %4062 = vmatpush1.msra.mxu0 %v3971
    %4063 = vmatprep.subr.mxu0 %v3976
    %4064 = vmatpush1.msra.mxu0 %v3975
    %4065 = vmatprep.mubr.f32.mxu0 %v3849
    %4066 = vmatmul.mubr.f32.gmra.mrb[0].mxu0 %v3846
    %v4067 = vpop.f32.mrb[0].mxu0
    %v4068 = vadd.f32 %v3984, %v4067
    %v4069 = vpop.f32.mrb[0].mxu0
    %v4070 = vadd.f32 %v3988, %v4069
    %4071 = vdwg.mxu0
    %4072 = vmatprep.subr.mxu0 %v3854
    %4073 = vmatpush1.msra.mxu0 %v3853
    %4074 = vmatprep.subr.mxu0 %v3858
    %4075 = vmatpush1.msra.mxu0 %v3857
    %4076 = vmatprep.subr.mxu0 %v3862
    %4077 = vmatpush1.msra.mxu0 %v3861
    %4078 = vmatprep.subr.mxu0 %v3866
    %4079 = vmatpush1.msra.mxu0 %v3865
    %4080 = vmatprep.subr.mxu0 %v3870
    %4081 = vmatpush1.msra.mxu0 %v3869
    %4082 = vmatprep.subr.mxu0 %v3874
    %4083 = vmatpush1.msra.mxu0 %v3873
    %4084 = vmatprep.subr.mxu0 %v3878
    %4085 = vmatpush1.msra.mxu0 %v3877
    %4086 = vmatprep.subr.mxu0 %v3882
    %4087 = vmatpush1.msra.mxu0 %v3881
    %4088 = vmatprep.subr.mxu0 %v3886
    %4089 = vmatpush1.msra.mxu0 %v3885
    %4090 = vmatprep.subr.mxu0 %v3890
    %4091 = vmatpush1.msra.mxu0 %v3889
    %4092 = vmatprep.subr.mxu0 %v3894
    %4093 = vmatpush1.msra.mxu0 %v3893
    %4094 = vmatprep.subr.mxu0 %v3898
    %4095 = vmatpush1.msra.mxu0 %v3897
    %4096 = vmatprep.subr.mxu0 %v3902
    %4097 = vmatpush1.msra.mxu0 %v3901
    %4098 = vmatprep.subr.mxu0 %v3906
    %4099 = vmatpush1.msra.mxu0 %v3905
    %4100 = vmatprep.subr.mxu0 %v3910
    %4101 = vmatpush1.msra.mxu0 %v3909
    %4102 = vmatprep.subr.mxu0 %v3914
    %4103 = vmatpush1.msra.mxu0 %v3913
    %4104 = vmatprep.subr.mxu0 %v3918
    %4105 = vmatpush1.msra.mxu0 %v3917
    %4106 = vmatprep.subr.mxu0 %v3922
    %4107 = vmatpush1.msra.mxu0 %v3921
    %4108 = vmatprep.subr.mxu0 %v3926
    %4109 = vmatpush1.msra.mxu0 %v3925
    %4110 = vmatprep.subr.mxu0 %v3930
    %4111 = vmatpush1.msra.mxu0 %v3929
    %4112 = vmatprep.subr.mxu0 %v3934
    %4113 = vmatpush1.msra.mxu0 %v3933
    %4114 = vmatprep.subr.mxu0 %v3938
    %4115 = vmatpush1.msra.mxu0 %v3937
    %4116 = vmatprep.subr.mxu0 %v3942
    %4117 = vmatpush1.msra.mxu0 %v3941
    %4118 = vmatprep.subr.mxu0 %v3946
    %4119 = vmatpush1.msra.mxu0 %v3945
    %4120 = vmatprep.subr.mxu0 %v3950
    %4121 = vmatpush1.msra.mxu0 %v3949
    %4122 = vmatprep.subr.mxu0 %v3954
    %4123 = vmatpush1.msra.mxu0 %v3953
    %4124 = vmatprep.subr.mxu0 %v3958
    %4125 = vmatpush1.msra.mxu0 %v3957
    %4126 = vmatprep.subr.mxu0 %v3962
    %4127 = vmatpush1.msra.mxu0 %v3961
    %4128 = vmatprep.subr.mxu0 %v3966
    %4129 = vmatpush1.msra.mxu0 %v3965
    %4130 = vmatprep.subr.mxu0 %v3970
    %4131 = vmatpush1.msra.mxu0 %v3969
    %4132 = vmatprep.subr.mxu0 %v3974
    %4133 = vmatpush1.msra.mxu0 %v3973
    %4134 = vmatprep.subr.mxu0 %v3978
    %4135 = vmatpush1.msra.mxu0 %v3977
    %4136 = vmatprep.mubr.f32.mxu0 %v3849
    %4137 = vmatmul.mubr.f32.gmra.mrb[0].mxu0 %v3846
    %v4138 = vpop.f32.mrb[0].mxu0
    %v4139 = vadd.f32 %v3992, %v4138
    %v4140 = vpop.f32.mrb[0].mxu0
    %v4141 = vadd.f32 %v3996, %v4140
    %4142 = vdwg.mxu0
    %v4143 = vxor.u32 %v4068, 2147483648
    %v4144 = vmul.f32 %v4143, 1.442695
    %v4145 = vpow.pop %v4144
    %v4146 = vadd.f32 %v4145, 1.0
    %v4147 = vrcp.pop %v4146
    %v4148 = vmul.f32 1.0, %v4147
    %v4149 = vxor.u32 %v4070, 2147483648
    %v4150 = vmul.f32 %v4149, 1.442695
    %v4151 = vpow.pop %v4150
    %v4152 = vadd.f32 %v4151, 1.0
    %v4153 = vrcp.pop %v4152
    %v4154 = vmul.f32 1.0, %v4153
    %v4155 = vtanh.pop %v4139
    %v4156 = vxor.u32 %v4141, 2147483648
    %v4157 = vmul.f32 %v4156, 1.442695
    %v4158 = vpow.pop %v4157
    %v4159 = vadd.f32 %v4158, 1.0
    %v4160 = vrcp.pop %v4159
    %v4161 = vmul.f32 1.0, %v4160
    %v4162 = vmul.f32 %v4154, %v3850
    %v4163 = vmul.f32 %v4148, %v4155
    %v4164 = vadd.f32 %v4162, %v4163
    %v4165 = vtanh.pop %v4164
    %v4166 = vmul.f32 %v4161, %v4165
    %v4167 = vsel %vm3844, %v4164, %v3850
    %4168 = vst [vmem:[#allocation5] sm:$0xf] %v4167
    %v4169 = vsel %vm3844, %v4166, %v3849
    %4170 = vst [vmem:[#allocation4] sm:$0xf] %v4169
    %v4171 = vsel %vm3844, %v4166, 0.0
    %s4172 = scalar_lea.vmem %s7, 24
    %4173 = vst [vmem:[%s4172] sm:$0xf] %v4171
    %v4174 = vld [vmem:[#allocation6] sm:$0xf]
    %v4175 = vmax.f32 %v4174, %v4171
    %4176 = vst [vmem:[#allocation6] sm:$0xf] %v4175
    %s4177 = sadd.s32 %s42, 7
    %v4178 = vstv %s4177
    %vm4179 = vcmp.lt.s32.totalorder %v4178, %v41
    %v4180 = vld [vmem:[#allocation2] sm:$0xf]
    %v4181 = vld [vmem:[#allocation3] sm:$0xf]
    %s4182 = scalar_lea.vmem %s0, 112
    %v4183 = vld [vmem:[%s4182] sm:$0xff]
    %v4184 = vld [vmem:[%s4182 + $0x8] sm:$0xff]
    %v4185 = vld [vmem:[%s2] sm:$0xff]
    %v4186 = vld [vmem:[%s2 + $0x8] sm:$0xff]
    %v4187 = vld [vmem:[%s2 + $0x10] sm:$0xff]
    %v4188 = vld [vmem:[%s2 + $0x18] sm:$0xff]
    %v4189 = vld [vmem:[%s2 + $0x20] sm:$0xff]
    %v4190 = vld [vmem:[%s2 + $0x28] sm:$0xff]
    %v4191 = vld [vmem:[%s2 + $0x30] sm:$0xff]
    %v4192 = vld [vmem:[%s2 + $0x38] sm:$0xff]
    %v4193 = vld [vmem:[%s2 + $0x40] sm:$0xff]
    %v4194 = vld [vmem:[%s2 + $0x48] sm:$0xff]
    %v4195 = vld [vmem:[%s2 + $0x50] sm:$0xff]
    %v4196 = vld [vmem:[%s2 + $0x58] sm:$0xff]
    %v4197 = vld [vmem:[%s2 + $0x60] sm:$0xff]
    %v4198 = vld [vmem:[%s2 + $0x68] sm:$0xff]
    %v4199 = vld [vmem:[%s2 + $0x70] sm:$0xff]
    %v4200 = vld [vmem:[%s2 + $0x78] sm:$0xff]
    %v4201 = vld [vmem:[%s2 + $0x80] sm:$0xff]
    %v4202 = vld [vmem:[%s2 + $0x88] sm:$0xff]
    %v4203 = vld [vmem:[%s2 + $0x90] sm:$0xff]
    %v4204 = vld [vmem:[%s2 + $0x98] sm:$0xff]
    %v4205 = vld [vmem:[%s2 + $0xa0] sm:$0xff]
    %v4206 = vld [vmem:[%s2 + $0xa8] sm:$0xff]
    %v4207 = vld [vmem:[%s2 + $0xb0] sm:$0xff]
    %v4208 = vld [vmem:[%s2 + $0xb8] sm:$0xff]
    %v4209 = vld [vmem:[%s2 + $0xc0] sm:$0xff]
    %v4210 = vld [vmem:[%s2 + $0xc8] sm:$0xff]
    %v4211 = vld [vmem:[%s2 + $0xd0] sm:$0xff]
    %v4212 = vld [vmem:[%s2 + $0xd8] sm:$0xff]
    %v4213 = vld [vmem:[%s2 + $0xe0] sm:$0xff]
    %v4214 = vld [vmem:[%s2 + $0xe8] sm:$0xff]
    %v4215 = vld [vmem:[%s2 + $0xf0] sm:$0xff]
    %v4216 = vld [vmem:[%s2 + $0xf8] sm:$0xff]
    %v4217 = vld [vmem:[%s2 + $0x100] sm:$0xff]
    %v4218 = vld [vmem:[%s2 + $0x108] sm:$0xff]
    %v4219 = vld [vmem:[%s2 + $0x110] sm:$0xff]
    %v4220 = vld [vmem:[%s2 + $0x118] sm:$0xff]
    %v4221 = vld [vmem:[%s2 + $0x120] sm:$0xff]
    %v4222 = vld [vmem:[%s2 + $0x128] sm:$0xff]
    %v4223 = vld [vmem:[%s2 + $0x130] sm:$0xff]
    %v4224 = vld [vmem:[%s2 + $0x138] sm:$0xff]
    %v4225 = vld [vmem:[%s2 + $0x140] sm:$0xff]
    %v4226 = vld [vmem:[%s2 + $0x148] sm:$0xff]
    %v4227 = vld [vmem:[%s2 + $0x150] sm:$0xff]
    %v4228 = vld [vmem:[%s2 + $0x158] sm:$0xff]
    %v4229 = vld [vmem:[%s2 + $0x160] sm:$0xff]
    %v4230 = vld [vmem:[%s2 + $0x168] sm:$0xff]
    %v4231 = vld [vmem:[%s2 + $0x170] sm:$0xff]
    %v4232 = vld [vmem:[%s2 + $0x178] sm:$0xff]
    %v4233 = vld [vmem:[%s2 + $0x180] sm:$0xff]
    %v4234 = vld [vmem:[%s2 + $0x188] sm:$0xff]
    %v4235 = vld [vmem:[%s2 + $0x190] sm:$0xff]
    %v4236 = vld [vmem:[%s2 + $0x198] sm:$0xff]
    %v4237 = vld [vmem:[%s2 + $0x1a0] sm:$0xff]
    %v4238 = vld [vmem:[%s2 + $0x1a8] sm:$0xff]
    %v4239 = vld [vmem:[%s2 + $0x1b0] sm:$0xff]
    %v4240 = vld [vmem:[%s2 + $0x1b8] sm:$0xff]
    %v4241 = vld [vmem:[%s2 + $0x1c0] sm:$0xff]
    %v4242 = vld [vmem:[%s2 + $0x1c8] sm:$0xff]
    %v4243 = vld [vmem:[%s2 + $0x1d0] sm:$0xff]
    %v4244 = vld [vmem:[%s2 + $0x1d8] sm:$0xff]
    %v4245 = vld [vmem:[%s2 + $0x1e0] sm:$0xff]
    %v4246 = vld [vmem:[%s2 + $0x1e8] sm:$0xff]
    %v4247 = vld [vmem:[%s2 + $0x1f0] sm:$0xff]
    %v4248 = vld [vmem:[%s2 + $0x1f8] sm:$0xff]
    %4249 = vmatprep.subr.mxu0 %v4186
    %4250 = vmatpush1.msra.mxu0 %v4185
    %4251 = vmatprep.subr.mxu0 %v4190
    %4252 = vmatpush1.msra.mxu0 %v4189
    %4253 = vmatprep.subr.mxu0 %v4194
    %4254 = vmatpush1.msra.mxu0 %v4193
    %4255 = vmatprep.subr.mxu0 %v4198
    %4256 = vmatpush1.msra.mxu0 %v4197
    %4257 = vmatprep.subr.mxu0 %v4202
    %4258 = vmatpush1.msra.mxu0 %v4201
    %4259 = vmatprep.subr.mxu0 %v4206
    %4260 = vmatpush1.msra.mxu0 %v4205
    %4261 = vmatprep.subr.mxu0 %v4210
    %4262 = vmatpush1.msra.mxu0 %v4209
    %4263 = vmatprep.subr.mxu0 %v4214
    %4264 = vmatpush1.msra.mxu0 %v4213
    %4265 = vmatprep.subr.mxu0 %v4218
    %4266 = vmatpush1.msra.mxu0 %v4217
    %4267 = vmatprep.subr.mxu0 %v4222
    %4268 = vmatpush1.msra.mxu0 %v4221
    %4269 = vmatprep.subr.mxu0 %v4226
    %4270 = vmatpush1.msra.mxu0 %v4225
    %4271 = vmatprep.subr.mxu0 %v4230
    %4272 = vmatpush1.msra.mxu0 %v4229
    %4273 = vmatprep.subr.mxu0 %v4234
    %4274 = vmatpush1.msra.mxu0 %v4233
    %4275 = vmatprep.subr.mxu0 %v4238
    %4276 = vmatpush1.msra.mxu0 %v4237
    %4277 = vmatprep.subr.mxu0 %v4242
    %4278 = vmatpush1.msra.mxu0 %v4241
    %4279 = vmatprep.subr.mxu0 %v4246
    %4280 = vmatpush1.msra.mxu0 %v4245
    %4281 = vmatprep.subr.mxu0 0.0
    %4282 = vmatpush1.msra.mxu0 0.0
    %4283 = vmatprep.subr.mxu0 0.0
    %4284 = vmatpush1.msra.mxu0 0.0
    %4285 = vmatprep.subr.mxu0 0.0
    %4286 = vmatpush1.msra.mxu0 0.0
    %4287 = vmatprep.subr.mxu0 0.0
    %4288 = vmatpush1.msra.mxu0 0.0
    %4289 = vmatprep.subr.mxu0 0.0
    %4290 = vmatpush1.msra.mxu0 0.0
    %4291 = vmatprep.subr.mxu0 0.0
    %4292 = vmatpush1.msra.mxu0 0.0
    %4293 = vmatprep.subr.mxu0 0.0
    %4294 = vmatpush1.msra.mxu0 0.0
    %4295 = vmatprep.subr.mxu0 0.0
    %4296 = vmatpush1.msra.mxu0 0.0
    %4297 = vmatprep.subr.mxu0 0.0
    %4298 = vmatpush1.msra.mxu0 0.0
    %4299 = vmatprep.subr.mxu0 0.0
    %4300 = vmatpush1.msra.mxu0 0.0
    %4301 = vmatprep.subr.mxu0 0.0
    %4302 = vmatpush1.msra.mxu0 0.0
    %4303 = vmatprep.subr.mxu0 0.0
    %4304 = vmatpush1.msra.mxu0 0.0
    %4305 = vmatprep.subr.mxu0 0.0
    %4306 = vmatpush1.msra.mxu0 0.0
    %4307 = vmatprep.subr.mxu0 0.0
    %4308 = vmatpush1.msra.mxu0 0.0
    %4309 = vmatprep.subr.mxu0 0.0
    %4310 = vmatpush1.msra.mxu0 0.0
    %4311 = vmatprep.subr.mxu0 0.0
    %4312 = vmatpush1.msra.mxu0 0.0
    %4313 = vmatprep.mubr.f32.mxu0 0.0
    %4314 = vmatmul.mubr.f32.gmra.mrb[0].mxu0 %v4180
    %v4315 = vpop.f32.mrb[0].mxu0
    %v4316 = vadd.f32 0.0, %v4315
    %v4317 = vpop.f32.mrb[0].mxu0
    %v4318 = vadd.f32 0.0, %v4317
    %4319 = vdwg.mxu0
    %4320 = vmatprep.subr.mxu0 %v4188
    %4321 = vmatpush1.msra.mxu0 %v4187
    %4322 = vmatprep.subr.mxu0 %v4192
    %4323 = vmatpush1.msra.mxu0 %v4191
    %4324 = vmatprep.subr.mxu0 %v4196
    %4325 = vmatpush1.msra.mxu0 %v4195
    %4326 = vmatprep.subr.mxu0 %v4200
    %4327 = vmatpush1.msra.mxu0 %v4199
    %4328 = vmatprep.subr.mxu0 %v4204
    %4329 = vmatpush1.msra.mxu0 %v4203
    %4330 = vmatprep.subr.mxu0 %v4208
    %4331 = vmatpush1.msra.mxu0 %v4207
    %4332 = vmatprep.subr.mxu0 %v4212
    %4333 = vmatpush1.msra.mxu0 %v4211
    %4334 = vmatprep.subr.mxu0 %v4216
    %4335 = vmatpush1.msra.mxu0 %v4215
    %4336 = vmatprep.subr.mxu0 %v4220
    %4337 = vmatpush1.msra.mxu0 %v4219
    %4338 = vmatprep.subr.mxu0 %v4224
    %4339 = vmatpush1.msra.mxu0 %v4223
    %4340 = vmatprep.subr.mxu0 %v4228
    %4341 = vmatpush1.msra.mxu0 %v4227
    %4342 = vmatprep.subr.mxu0 %v4232
    %4343 = vmatpush1.msra.mxu0 %v4231
    %4344 = vmatprep.subr.mxu0 %v4236
    %4345 = vmatpush1.msra.mxu0 %v4235
    %4346 = vmatprep.subr.mxu0 %v4240
    %4347 = vmatpush1.msra.mxu0 %v4239
    %4348 = vmatprep.subr.mxu0 %v4244
    %4349 = vmatpush1.msra.mxu0 %v4243
    %4350 = vmatprep.subr.mxu0 %v4248
    %4351 = vmatpush1.msra.mxu0 %v4247
    %4352 = vmatprep.subr.mxu0 0.0
    %4353 = vmatpush1.msra.mxu0 0.0
    %4354 = vmatprep.subr.mxu0 0.0
    %4355 = vmatpush1.msra.mxu0 0.0
    %4356 = vmatprep.subr.mxu0 0.0
    %4357 = vmatpush1.msra.mxu0 0.0
    %4358 = vmatprep.subr.mxu0 0.0
    %4359 = vmatpush1.msra.mxu0 0.0
    %4360 = vmatprep.subr.mxu0 0.0
    %4361 = vmatpush1.msra.mxu0 0.0
    %4362 = vmatprep.subr.mxu0 0.0
    %4363 = vmatpush1.msra.mxu0 0.0
    %4364 = vmatprep.subr.mxu0 0.0
    %4365 = vmatpush1.msra.mxu0 0.0
    %4366 = vmatprep.subr.mxu0 0.0
    %4367 = vmatpush1.msra.mxu0 0.0
    %4368 = vmatprep.subr.mxu0 0.0
    %4369 = vmatpush1.msra.mxu0 0.0
    %4370 = vmatprep.subr.mxu0 0.0
    %4371 = vmatpush1.msra.mxu0 0.0
    %4372 = vmatprep.subr.mxu0 0.0
    %4373 = vmatpush1.msra.mxu0 0.0
    %4374 = vmatprep.subr.mxu0 0.0
    %4375 = vmatpush1.msra.mxu0 0.0
    %4376 = vmatprep.subr.mxu0 0.0
    %4377 = vmatpush1.msra.mxu0 0.0
    %4378 = vmatprep.subr.mxu0 0.0
    %4379 = vmatpush1.msra.mxu0 0.0
    %4380 = vmatprep.subr.mxu0 0.0
    %4381 = vmatpush1.msra.mxu0 0.0
    %4382 = vmatprep.subr.mxu0 0.0
    %4383 = vmatpush1.msra.mxu0 0.0
    %4384 = vmatprep.mubr.f32.mxu0 0.0
    %4385 = vmatmul.mubr.f32.gmra.mrb[0].mxu0 %v4180
    %v4386 = vpop.f32.mrb[0].mxu0
    %v4387 = vadd.f32 0.0, %v4386
    %v4388 = vpop.f32.mrb[0].mxu0
    %v4389 = vadd.f32 0.0, %v4388
    %4390 = vdwg.mxu0
    %v4395 = vcombine.low %v4316, %v4318
    %v4396 = vcombine.low %v4387, %v4389
    %v4399 = vadd.f32 %v4183, %v4395
    %v4400 = vadd.f32 %v4184, %v4396
    %v4401 = vxor.u32 %v4399, 2147483648
    %v4402 = vmul.f32 %v4401, 1.442695
    %v4403 = vpow.pop %v4402
    %v4404 = vadd.f32 %v4403, 1.0
    %v4405 = vrcp.pop %v4404
    %v4406 = vmul.f32 1.0, %v4405
    %v4408 = vrot.slane %v4399, 4
    %v4410 = vxor.u32 %v4408, 2147483648
    %v4411 = vmul.f32 %v4410, 1.442695
    %v4412 = vpow.pop %v4411
    %v4413 = vadd.f32 %v4412, 1.0
    %v4414 = vrcp.pop %v4413
    %v4415 = vmul.f32 1.0, %v4414
    %v4416 = vtanh.pop %v4400
    %v4418 = vrot.slane %v4400, 4
    %v4420 = vxor.u32 %v4418, 2147483648
    %v4421 = vmul.f32 %v4420, 1.442695
    %v4422 = vpow.pop %v4421
    %v4423 = vadd.f32 %v4422, 1.0
    %v4424 = vrcp.pop %v4423
    %v4425 = vmul.f32 1.0, %v4424
    %v4426 = vmul.f32 %v4415, %v4181
    %v4427 = vmul.f32 %v4406, %v4416
    %v4428 = vadd.f32 %v4426, %v4427
    %v4429 = vtanh.pop %v4428
    %v4430 = vmul.f32 %v4425, %v4429
    %v4431 = vsel %vm4179, 1, 0
    %4432 = vset.pattern.permute.xlu0 0
    %4433 = vperm.xlu0 %4432, %v4431
    %v4434 = vpop.permute.xlu0 %4433
    %vm4435 = vcmp.eq.s32.totalorder %v4434, 1
    %v4436 = vsel %vm4435, %v4428, %v4181
    %v4437 = vsel %vm4435, %v4430, %v4180
    %4438 = vst [vmem:[#allocation3] sm:$0xf] %v4436
    %4439 = vst [vmem:[#allocation2] sm:$0xf] %v4437
    %v4440 = vld [vmem:[#allocation4] sm:$0xf]
    %v4441 = vld [vmem:[#allocation5] sm:$0xf]
    %v4442 = vld [vmem:[%s3] sm:$0xff]
    %v4443 = vld [vmem:[%s3 + $0x8] sm:$0xff]
    %v4444 = vld [vmem:[%s3 + $0x10] sm:$0xff]
    %v4445 = vld [vmem:[%s3 + $0x18] sm:$0xff]
    %v4446 = vld [vmem:[%s3 + $0x20] sm:$0xff]
    %v4447 = vld [vmem:[%s3 + $0x28] sm:$0xff]
    %v4448 = vld [vmem:[%s3 + $0x30] sm:$0xff]
    %v4449 = vld [vmem:[%s3 + $0x38] sm:$0xff]
    %v4450 = vld [vmem:[%s3 + $0x40] sm:$0xff]
    %v4451 = vld [vmem:[%s3 + $0x48] sm:$0xff]
    %v4452 = vld [vmem:[%s3 + $0x50] sm:$0xff]
    %v4453 = vld [vmem:[%s3 + $0x58] sm:$0xff]
    %v4454 = vld [vmem:[%s3 + $0x60] sm:$0xff]
    %v4455 = vld [vmem:[%s3 + $0x68] sm:$0xff]
    %v4456 = vld [vmem:[%s3 + $0x70] sm:$0xff]
    %v4457 = vld [vmem:[%s3 + $0x78] sm:$0xff]
    %v4458 = vld [vmem:[%s3 + $0x80] sm:$0xff]
    %v4459 = vld [vmem:[%s3 + $0x88] sm:$0xff]
    %v4460 = vld [vmem:[%s3 + $0x90] sm:$0xff]
    %v4461 = vld [vmem:[%s3 + $0x98] sm:$0xff]
    %v4462 = vld [vmem:[%s3 + $0xa0] sm:$0xff]
    %v4463 = vld [vmem:[%s3 + $0xa8] sm:$0xff]
    %v4464 = vld [vmem:[%s3 + $0xb0] sm:$0xff]
    %v4465 = vld [vmem:[%s3 + $0xb8] sm:$0xff]
    %v4466 = vld [vmem:[%s3 + $0xc0] sm:$0xff]
    %v4467 = vld [vmem:[%s3 + $0xc8] sm:$0xff]
    %v4468 = vld [vmem:[%s3 + $0xd0] sm:$0xff]
    %v4469 = vld [vmem:[%s3 + $0xd8] sm:$0xff]
    %v4470 = vld [vmem:[%s3 + $0xe0] sm:$0xff]
    %v4471 = vld [vmem:[%s3 + $0xe8] sm:$0xff]
    %v4472 = vld [vmem:[%s3 + $0xf0] sm:$0xff]
    %v4473 = vld [vmem:[%s3 + $0xf8] sm:$0xff]
    %v4474 = vld [vmem:[%s3 + $0x100] sm:$0xff]
    %v4475 = vld [vmem:[%s3 + $0x108] sm:$0xff]
    %v4476 = vld [vmem:[%s3 + $0x110] sm:$0xff]
    %v4477 = vld [vmem:[%s3 + $0x118] sm:$0xff]
    %v4478 = vld [vmem:[%s3 + $0x120] sm:$0xff]
    %v4479 = vld [vmem:[%s3 + $0x128] sm:$0xff]
    %v4480 = vld [vmem:[%s3 + $0x130] sm:$0xff]
    %v4481 = vld [vmem:[%s3 + $0x138] sm:$0xff]
    %v4482 = vld [vmem:[%s3 + $0x140] sm:$0xff]
    %v4483 = vld [vmem:[%s3 + $0x148] sm:$0xff]
    %v4484 = vld [vmem:[%s3 + $0x150] sm:$0xff]
    %v4485 = vld [vmem:[%s3 + $0x158] sm:$0xff]
    %v4486 = vld [vmem:[%s3 + $0x160] sm:$0xff]
    %v4487 = vld [vmem:[%s3 + $0x168] sm:$0xff]
    %v4488 = vld [vmem:[%s3 + $0x170] sm:$0xff]
    %v4489 = vld [vmem:[%s3 + $0x178] sm:$0xff]
    %v4490 = vld [vmem:[%s3 + $0x180] sm:$0xff]
    %v4491 = vld [vmem:[%s3 + $0x188] sm:$0xff]
    %v4492 = vld [vmem:[%s3 + $0x190] sm:$0xff]
    %v4493 = vld [vmem:[%s3 + $0x198] sm:$0xff]
    %v4494 = vld [vmem:[%s3 + $0x1a0] sm:$0xff]
    %v4495 = vld [vmem:[%s3 + $0x1a8] sm:$0xff]
    %v4496 = vld [vmem:[%s3 + $0x1b0] sm:$0xff]
    %v4497 = vld [vmem:[%s3 + $0x1b8] sm:$0xff]
    %v4498 = vld [vmem:[%s3 + $0x1c0] sm:$0xff]
    %v4499 = vld [vmem:[%s3 + $0x1c8] sm:$0xff]
    %v4500 = vld [vmem:[%s3 + $0x1d0] sm:$0xff]
    %v4501 = vld [vmem:[%s3 + $0x1d8] sm:$0xff]
    %v4502 = vld [vmem:[%s3 + $0x1e0] sm:$0xff]
    %v4503 = vld [vmem:[%s3 + $0x1e8] sm:$0xff]
    %v4504 = vld [vmem:[%s3 + $0x1f0] sm:$0xff]
    %v4505 = vld [vmem:[%s3 + $0x1f8] sm:$0xff]
    %v4506 = vld [vmem:[%s3 + $0x200] sm:$0xff]
    %v4507 = vld [vmem:[%s3 + $0x208] sm:$0xff]
    %v4508 = vld [vmem:[%s3 + $0x210] sm:$0xff]
    %v4509 = vld [vmem:[%s3 + $0x218] sm:$0xff]
    %v4510 = vld [vmem:[%s3 + $0x220] sm:$0xff]
    %v4511 = vld [vmem:[%s3 + $0x228] sm:$0xff]
    %v4512 = vld [vmem:[%s3 + $0x230] sm:$0xff]
    %v4513 = vld [vmem:[%s3 + $0x238] sm:$0xff]
    %v4514 = vld [vmem:[%s3 + $0x240] sm:$0xff]
    %v4515 = vld [vmem:[%s3 + $0x248] sm:$0xff]
    %v4516 = vld [vmem:[%s3 + $0x250] sm:$0xff]
    %v4517 = vld [vmem:[%s3 + $0x258] sm:$0xff]
    %v4518 = vld [vmem:[%s3 + $0x260] sm:$0xff]
    %v4519 = vld [vmem:[%s3 + $0x268] sm:$0xff]
    %v4520 = vld [vmem:[%s3 + $0x270] sm:$0xff]
    %v4521 = vld [vmem:[%s3 + $0x278] sm:$0xff]
    %v4522 = vld [vmem:[%s3 + $0x280] sm:$0xff]
    %v4523 = vld [vmem:[%s3 + $0x288] sm:$0xff]
    %v4524 = vld [vmem:[%s3 + $0x290] sm:$0xff]
    %v4525 = vld [vmem:[%s3 + $0x298] sm:$0xff]
    %v4526 = vld [vmem:[%s3 + $0x2a0] sm:$0xff]
    %v4527 = vld [vmem:[%s3 + $0x2a8] sm:$0xff]
    %v4528 = vld [vmem:[%s3 + $0x2b0] sm:$0xff]
    %v4529 = vld [vmem:[%s3 + $0x2b8] sm:$0xff]
    %v4530 = vld [vmem:[%s3 + $0x2c0] sm:$0xff]
    %v4531 = vld [vmem:[%s3 + $0x2c8] sm:$0xff]
    %v4532 = vld [vmem:[%s3 + $0x2d0] sm:$0xff]
    %v4533 = vld [vmem:[%s3 + $0x2d8] sm:$0xff]
    %v4534 = vld [vmem:[%s3 + $0x2e0] sm:$0xff]
    %v4535 = vld [vmem:[%s3 + $0x2e8] sm:$0xff]
    %v4536 = vld [vmem:[%s3 + $0x2f0] sm:$0xff]
    %v4537 = vld [vmem:[%s3 + $0x2f8] sm:$0xff]
    %v4538 = vld [vmem:[%s3 + $0x300] sm:$0xff]
    %v4539 = vld [vmem:[%s3 + $0x308] sm:$0xff]
    %v4540 = vld [vmem:[%s3 + $0x310] sm:$0xff]
    %v4541 = vld [vmem:[%s3 + $0x318] sm:$0xff]
    %v4542 = vld [vmem:[%s3 + $0x320] sm:$0xff]
    %v4543 = vld [vmem:[%s3 + $0x328] sm:$0xff]
    %v4544 = vld [vmem:[%s3 + $0x330] sm:$0xff]
    %v4545 = vld [vmem:[%s3 + $0x338] sm:$0xff]
    %v4546 = vld [vmem:[%s3 + $0x340] sm:$0xff]
    %v4547 = vld [vmem:[%s3 + $0x348] sm:$0xff]
    %v4548 = vld [vmem:[%s3 + $0x350] sm:$0xff]
    %v4549 = vld [vmem:[%s3 + $0x358] sm:$0xff]
    %v4550 = vld [vmem:[%s3 + $0x360] sm:$0xff]
    %v4551 = vld [vmem:[%s3 + $0x368] sm:$0xff]
    %v4552 = vld [vmem:[%s3 + $0x370] sm:$0xff]
    %v4553 = vld [vmem:[%s3 + $0x378] sm:$0xff]
    %v4554 = vld [vmem:[%s3 + $0x380] sm:$0xff]
    %v4555 = vld [vmem:[%s3 + $0x388] sm:$0xff]
    %v4556 = vld [vmem:[%s3 + $0x390] sm:$0xff]
    %v4557 = vld [vmem:[%s3 + $0x398] sm:$0xff]
    %v4558 = vld [vmem:[%s3 + $0x3a0] sm:$0xff]
    %v4559 = vld [vmem:[%s3 + $0x3a8] sm:$0xff]
    %v4560 = vld [vmem:[%s3 + $0x3b0] sm:$0xff]
    %v4561 = vld [vmem:[%s3 + $0x3b8] sm:$0xff]
    %v4562 = vld [vmem:[%s3 + $0x3c0] sm:$0xff]
    %v4563 = vld [vmem:[%s3 + $0x3c8] sm:$0xff]
    %v4564 = vld [vmem:[%s3 + $0x3d0] sm:$0xff]
    %v4565 = vld [vmem:[%s3 + $0x3d8] sm:$0xff]
    %v4566 = vld [vmem:[%s3 + $0x3e0] sm:$0xff]
    %v4567 = vld [vmem:[%s3 + $0x3e8] sm:$0xff]
    %v4568 = vld [vmem:[%s3 + $0x3f0] sm:$0xff]
    %v4569 = vld [vmem:[%s3 + $0x3f8] sm:$0xff]
    %v4570 = vld [vmem:[%s4] sm:$0xf]
    %v4572 = vlaneseq
    %v4573 = vshrl.u32 %v4572, 7
    %v4574 = vsub.s32 0, %v4573
    %v4575 = vrot.slane %v4570, %v4574
    %v4576 = vlaneseq
    %v4577 = vshrl.u32 %v4576, 7
    %v4578 = vsub.s32 1, %v4577
    %v4579 = vrot.slane %v4570, %v4578
    %v4580 = vlaneseq
    %v4581 = vshrl.u32 %v4580, 7
    %v4582 = vsub.s32 2, %v4581
    %v4583 = vrot.slane %v4570, %v4582
    %v4584 = vlaneseq
    %v4585 = vshrl.u32 %v4584, 7
    %v4586 = vsub.s32 3, %v4585
    %v4587 = vrot.slane %v4570, %v4586
    %4592 = vmatprep.subr.mxu0 %v4443
    %4593 = vmatpush1.msra.mxu0 %v4442
    %4594 = vmatprep.subr.mxu0 %v4447
    %4595 = vmatpush1.msra.mxu0 %v4446
    %4596 = vmatprep.subr.mxu0 %v4451
    %4597 = vmatpush1.msra.mxu0 %v4450
    %4598 = vmatprep.subr.mxu0 %v4455
    %4599 = vmatpush1.msra.mxu0 %v4454
    %4600 = vmatprep.subr.mxu0 %v4459
    %4601 = vmatpush1.msra.mxu0 %v4458
    %4602 = vmatprep.subr.mxu0 %v4463
    %4603 = vmatpush1.msra.mxu0 %v4462
    %4604 = vmatprep.subr.mxu0 %v4467
    %4605 = vmatpush1.msra.mxu0 %v4466
    %4606 = vmatprep.subr.mxu0 %v4471
    %4607 = vmatpush1.msra.mxu0 %v4470
    %4608 = vmatprep.subr.mxu0 %v4475
    %4609 = vmatpush1.msra.mxu0 %v4474
    %4610 = vmatprep.subr.mxu0 %v4479
    %4611 = vmatpush1.msra.mxu0 %v4478
    %4612 = vmatprep.subr.mxu0 %v4483
    %4613 = vmatpush1.msra.mxu0 %v4482
    %4614 = vmatprep.subr.mxu0 %v4487
    %4615 = vmatpush1.msra.mxu0 %v4486
    %4616 = vmatprep.subr.mxu0 %v4491
    %4617 = vmatpush1.msra.mxu0 %v4490
    %4618 = vmatprep.subr.mxu0 %v4495
    %4619 = vmatpush1.msra.mxu0 %v4494
    %4620 = vmatprep.subr.mxu0 %v4499
    %4621 = vmatpush1.msra.mxu0 %v4498
    %4622 = vmatprep.subr.mxu0 %v4503
    %4623 = vmatpush1.msra.mxu0 %v4502
    %4624 = vmatprep.subr.mxu0 %v4507
    %4625 = vmatpush1.msra.mxu0 %v4506
    %4626 = vmatprep.subr.mxu0 %v4511
    %4627 = vmatpush1.msra.mxu0 %v4510
    %4628 = vmatprep.subr.mxu0 %v4515
    %4629 = vmatpush1.msra.mxu0 %v4514
    %4630 = vmatprep.subr.mxu0 %v4519
    %4631 = vmatpush1.msra.mxu0 %v4518
    %4632 = vmatprep.subr.mxu0 %v4523
    %4633 = vmatpush1.msra.mxu0 %v4522
    %4634 = vmatprep.subr.mxu0 %v4527
    %4635 = vmatpush1.msra.mxu0 %v4526
    %4636 = vmatprep.subr.mxu0 %v4531
    %4637 = vmatpush1.msra.mxu0 %v4530
    %4638 = vmatprep.subr.mxu0 %v4535
    %4639 = vmatpush1.msra.mxu0 %v4534
    %4640 = vmatprep.subr.mxu0 %v4539
    %4641 = vmatpush1.msra.mxu0 %v4538
    %4642 = vmatprep.subr.mxu0 %v4543
    %4643 = vmatpush1.msra.mxu0 %v4542
    %4644 = vmatprep.subr.mxu0 %v4547
    %4645 = vmatpush1.msra.mxu0 %v4546
    %4646 = vmatprep.subr.mxu0 %v4551
    %4647 = vmatpush1.msra.mxu0 %v4550
    %4648 = vmatprep.subr.mxu0 %v4555
    %4649 = vmatpush1.msra.mxu0 %v4554
    %4650 = vmatprep.subr.mxu0 %v4559
    %4651 = vmatpush1.msra.mxu0 %v4558
    %4652 = vmatprep.subr.mxu0 %v4563
    %4653 = vmatpush1.msra.mxu0 %v4562
    %4654 = vmatprep.subr.mxu0 %v4567
    %4655 = vmatpush1.msra.mxu0 %v4566
    %4656 = vmatprep.mubr.f32.mxu0 %v4440
    %4657 = vmatmul.mubr.f32.gmra.mrb[0].mxu0 %v4437
    %v4658 = vpop.f32.mrb[0].mxu0
    %v4659 = vadd.f32 %v4575, %v4658
    %v4660 = vpop.f32.mrb[0].mxu0
    %v4661 = vadd.f32 %v4579, %v4660
    %4662 = vdwg.mxu0
    %4663 = vmatprep.subr.mxu0 %v4445
    %4664 = vmatpush1.msra.mxu0 %v4444
    %4665 = vmatprep.subr.mxu0 %v4449
    %4666 = vmatpush1.msra.mxu0 %v4448
    %4667 = vmatprep.subr.mxu0 %v4453
    %4668 = vmatpush1.msra.mxu0 %v4452
    %4669 = vmatprep.subr.mxu0 %v4457
    %4670 = vmatpush1.msra.mxu0 %v4456
    %4671 = vmatprep.subr.mxu0 %v4461
    %4672 = vmatpush1.msra.mxu0 %v4460
    %4673 = vmatprep.subr.mxu0 %v4465
    %4674 = vmatpush1.msra.mxu0 %v4464
    %4675 = vmatprep.subr.mxu0 %v4469
    %4676 = vmatpush1.msra.mxu0 %v4468
    %4677 = vmatprep.subr.mxu0 %v4473
    %4678 = vmatpush1.msra.mxu0 %v4472
    %4679 = vmatprep.subr.mxu0 %v4477
    %4680 = vmatpush1.msra.mxu0 %v4476
    %4681 = vmatprep.subr.mxu0 %v4481
    %4682 = vmatpush1.msra.mxu0 %v4480
    %4683 = vmatprep.subr.mxu0 %v4485
    %4684 = vmatpush1.msra.mxu0 %v4484
    %4685 = vmatprep.subr.mxu0 %v4489
    %4686 = vmatpush1.msra.mxu0 %v4488
    %4687 = vmatprep.subr.mxu0 %v4493
    %4688 = vmatpush1.msra.mxu0 %v4492
    %4689 = vmatprep.subr.mxu0 %v4497
    %4690 = vmatpush1.msra.mxu0 %v4496
    %4691 = vmatprep.subr.mxu0 %v4501
    %4692 = vmatpush1.msra.mxu0 %v4500
    %4693 = vmatprep.subr.mxu0 %v4505
    %4694 = vmatpush1.msra.mxu0 %v4504
    %4695 = vmatprep.subr.mxu0 %v4509
    %4696 = vmatpush1.msra.mxu0 %v4508
    %4697 = vmatprep.subr.mxu0 %v4513
    %4698 = vmatpush1.msra.mxu0 %v4512
    %4699 = vmatprep.subr.mxu0 %v4517
    %4700 = vmatpush1.msra.mxu0 %v4516
    %4701 = vmatprep.subr.mxu0 %v4521
    %4702 = vmatpush1.msra.mxu0 %v4520
    %4703 = vmatprep.subr.mxu0 %v4525
    %4704 = vmatpush1.msra.mxu0 %v4524
    %4705 = vmatprep.subr.mxu0 %v4529
    %4706 = vmatpush1.msra.mxu0 %v4528
    %4707 = vmatprep.subr.mxu0 %v4533
    %4708 = vmatpush1.msra.mxu0 %v4532
    %4709 = vmatprep.subr.mxu0 %v4537
    %4710 = vmatpush1.msra.mxu0 %v4536
    %4711 = vmatprep.subr.mxu0 %v4541
    %4712 = vmatpush1.msra.mxu0 %v4540
    %4713 = vmatprep.subr.mxu0 %v4545
    %4714 = vmatpush1.msra.mxu0 %v4544
    %4715 = vmatprep.subr.mxu0 %v4549
    %4716 = vmatpush1.msra.mxu0 %v4548
    %4717 = vmatprep.subr.mxu0 %v4553
    %4718 = vmatpush1.msra.mxu0 %v4552
    %4719 = vmatprep.subr.mxu0 %v4557
    %4720 = vmatpush1.msra.mxu0 %v4556
    %4721 = vmatprep.subr.mxu0 %v4561
    %4722 = vmatpush1.msra.mxu0 %v4560
    %4723 = vmatprep.subr.mxu0 %v4565
    %4724 = vmatpush1.msra.mxu0 %v4564
    %4725 = vmatprep.subr.mxu0 %v4569
    %4726 = vmatpush1.msra.mxu0 %v4568
    %4727 = vmatprep.mubr.f32.mxu0 %v4440
    %4728 = vmatmul.mubr.f32.gmra.mrb[0].mxu0 %v4437
    %v4729 = vpop.f32.mrb[0].mxu0
    %v4730 = vadd.f32 %v4583, %v4729
    %v4731 = vpop.f32.mrb[0].mxu0
    %v4732 = vadd.f32 %v4587, %v4731
    %4733 = vdwg.mxu0
    %v4734 = vxor.u32 %v4659, 2147483648
    %v4735 = vmul.f32 %v4734, 1.442695
    %v4736 = vpow.pop %v4735
    %v4737 = vadd.f32 %v4736, 1.0
    %v4738 = vrcp.pop %v4737
    %v4739 = vmul.f32 1.0, %v4738
    %v4740 = vxor.u32 %v4661, 2147483648
    %v4741 = vmul.f32 %v4740, 1.442695
    %v4742 = vpow.pop %v4741
    %v4743 = vadd.f32 %v4742, 1.0
    %v4744 = vrcp.pop %v4743
    %v4745 = vmul.f32 1.0, %v4744
    %v4746 = vtanh.pop %v4730
    %v4747 = vxor.u32 %v4732, 2147483648
    %v4748 = vmul.f32 %v4747, 1.442695
    %v4749 = vpow.pop %v4748
    %v4750 = vadd.f32 %v4749, 1.0
    %v4751 = vrcp.pop %v4750
    %v4752 = vmul.f32 1.0, %v4751
    %v4753 = vmul.f32 %v4745, %v4441
    %v4754 = vmul.f32 %v4739, %v4746
    %v4755 = vadd.f32 %v4753, %v4754
    %v4756 = vtanh.pop %v4755
    %v4757 = vmul.f32 %v4752, %v4756
    %v4758 = vsel %vm4435, %v4755, %v4441
    %4759 = vst [vmem:[#allocation5] sm:$0xf] %v4758
    %v4760 = vsel %vm4435, %v4757, %v4440
    %4761 = vst [vmem:[#allocation4] sm:$0xf] %v4760
    %v4762 = vsel %vm4435, %v4757, 0.0
    %s4763 = scalar_lea.vmem %s7, 28
    %4764 = vst [vmem:[%s4763] sm:$0xf] %v4762
    %v4765 = vld [vmem:[#allocation6] sm:$0xf]
    %v4766 = vmax.f32 %v4765, %v4762
    %4767 = vst [vmem:[#allocation6] sm:$0xf] %v4766
    // Predicated region
    $region34: #{lang_vision_encoder_forward.1} parent=1 // pred_check
      %p4768 = pneg %p32
    $region35: #{lang_vision_encoder_forward.1} parent=1 // pred_check_branch
      %4770 = sbr.rel (%p4768) target = $region37
    $region36: #{lang_vision_encoder_forward.1} parent=1 // pred_region
      %v4771 = vld [vmem:[#allocation5] sm:$0xf]
      %4772 = vst [vmem:[#allocation7] sm:$0xf] %v4771
      %v4773 = vld [vmem:[#allocation6] sm:$0xf]
      %v4774 = vld [vmem:[%s5] sm:$0xff]
      %v4775 = vld [vmem:[%s5 + $0x8] sm:$0xff]
      %v4776 = vld [vmem:[%s5 + $0x10] sm:$0xff]
      %v4777 = vld [vmem:[%s5 + $0x18] sm:$0xff]
      %v4778 = vld [vmem:[%s5 + $0x20] sm:$0xff]
      %v4779 = vld [vmem:[%s5 + $0x28] sm:$0xff]
      %v4780 = vld [vmem:[%s5 + $0x30] sm:$0xff]
      %v4781 = vld [vmem:[%s5 + $0x38] sm:$0xff]
      %v4782 = vld [vmem:[%s5 + $0x40] sm:$0xff]
      %v4783 = vld [vmem:[%s5 + $0x48] sm:$0xff]
      %v4784 = vld [vmem:[%s5 + $0x50] sm:$0xff]
      %v4785 = vld [vmem:[%s5 + $0x58] sm:$0xff]
      %v4786 = vld [vmem:[%s5 + $0x60] sm:$0xff]
      %v4787 = vld [vmem:[%s5 + $0x68] sm:$0xff]
      %v4788 = vld [vmem:[%s5 + $0x70] sm:$0xff]
      %v4789 = vld [vmem:[%s5 + $0x78] sm:$0xff]
      %v4790 = vld [vmem:[%s5 + $0x80] sm:$0xff]
      %v4791 = vld [vmem:[%s5 + $0x88] sm:$0xff]
      %v4792 = vld [vmem:[%s5 + $0x90] sm:$0xff]
      %v4793 = vld [vmem:[%s5 + $0x98] sm:$0xff]
      %v4794 = vld [vmem:[%s5 + $0xa0] sm:$0xff]
      %v4795 = vld [vmem:[%s5 + $0xa8] sm:$0xff]
      %v4796 = vld [vmem:[%s5 + $0xb0] sm:$0xff]
      %v4797 = vld [vmem:[%s5 + $0xb8] sm:$0xff]
      %v4798 = vld [vmem:[%s5 + $0xc0] sm:$0xff]
      %v4799 = vld [vmem:[%s5 + $0xc8] sm:$0xff]
      %v4800 = vld [vmem:[%s5 + $0xd0] sm:$0xff]
      %v4801 = vld [vmem:[%s5 + $0xd8] sm:$0xff]
      %v4802 = vld [vmem:[%s5 + $0xe0] sm:$0xff]
      %v4803 = vld [vmem:[%s5 + $0xe8] sm:$0xff]
      %v4804 = vld [vmem:[%s5 + $0xf0] sm:$0xff]
      %v4805 = vld [vmem:[%s5 + $0xf8] sm:$0xff]
      %v4806 = vld [vmem:[%s6] sm:$0x3]
      %v4808 = vlaneseq
      %v4809 = vshrl.u32 %v4808, 7
      %v4810 = vsub.s32 0, %v4809
      %v4811 = vrot.slane %v4806, %v4810
      %v4812 = vlaneseq
      %v4813 = vshrl.u32 %v4812, 7
      %v4814 = vsub.s32 1, %v4813
      %v4815 = vrot.slane %v4806, %v4814
      %4818 = vmatprep.subr.mxu0 %v4775
      %4819 = vmatpush1.msra.mxu0 %v4774
      %4820 = vmatprep.subr.mxu0 %v4777
      %4821 = vmatpush1.msra.mxu0 %v4776
      %4822 = vmatprep.subr.mxu0 %v4779
      %4823 = vmatpush1.msra.mxu0 %v4778
      %4824 = vmatprep.subr.mxu0 %v4781
      %4825 = vmatpush1.msra.mxu0 %v4780
      %4826 = vmatprep.subr.mxu0 %v4783
      %4827 = vmatpush1.msra.mxu0 %v4782
      %4828 = vmatprep.subr.mxu0 %v4785
      %4829 = vmatpush1.msra.mxu0 %v4784
      %4830 = vmatprep.subr.mxu0 %v4787
      %4831 = vmatpush1.msra.mxu0 %v4786
      %4832 = vmatprep.subr.mxu0 %v4789
      %4833 = vmatpush1.msra.mxu0 %v4788
      %4834 = vmatprep.subr.mxu0 %v4791
      %4835 = vmatpush1.msra.mxu0 %v4790
      %4836 = vmatprep.subr.mxu0 %v4793
      %4837 = vmatpush1.msra.mxu0 %v4792
      %4838 = vmatprep.subr.mxu0 %v4795
      %4839 = vmatpush1.msra.mxu0 %v4794
      %4840 = vmatprep.subr.mxu0 %v4797
      %4841 = vmatpush1.msra.mxu0 %v4796
      %4842 = vmatprep.subr.mxu0 %v4799
      %4843 = vmatpush1.msra.mxu0 %v4798
      %4844 = vmatprep.subr.mxu0 %v4801
      %4845 = vmatpush1.msra.mxu0 %v4800
      %4846 = vmatprep.subr.mxu0 %v4803
      %4847 = vmatpush1.msra.mxu0 %v4802
      %4848 = vmatprep.subr.mxu0 %v4805
      %4849 = vmatpush1.msra.mxu0 %v4804
      %4850 = vmatprep.subr.mxu0 0.0
      %4851 = vmatpush1.msra.mxu0 0.0
      %4852 = vmatprep.subr.mxu0 0.0
      %4853 = vmatpush1.msra.mxu0 0.0
      %4854 = vmatprep.subr.mxu0 0.0
      %4855 = vmatpush1.msra.mxu0 0.0
      %4856 = vmatprep.subr.mxu0 0.0
      %4857 = vmatpush1.msra.mxu0 0.0
      %4858 = vmatprep.subr.mxu0 0.0
      %4859 = vmatpush1.msra.mxu0 0.0
      %4860 = vmatprep.subr.mxu0 0.0
      %4861 = vmatpush1.msra.mxu0 0.0
      %4862 = vmatprep.subr.mxu0 0.0
      %4863 = vmatpush1.msra.mxu0 0.0
      %4864 = vmatprep.subr.mxu0 0.0
      %4865 = vmatpush1.msra.mxu0 0.0
      %4866 = vmatprep.subr.mxu0 0.0
      %4867 = vmatpush1.msra.mxu0 0.0
      %4868 = vmatprep.subr.mxu0 0.0
      %4869 = vmatpush1.msra.mxu0 0.0
      %4870 = vmatprep.subr.mxu0 0.0
      %4871 = vmatpush1.msra.mxu0 0.0
      %4872 = vmatprep.subr.mxu0 0.0
      %4873 = vmatpush1.msra.mxu0 0.0
      %4874 = vmatprep.subr.mxu0 0.0
      %4875 = vmatpush1.msra.mxu0 0.0
      %4876 = vmatprep.subr.mxu0 0.0
      %4877 = vmatpush1.msra.mxu0 0.0
      %4878 = vmatprep.subr.mxu0 0.0
      %4879 = vmatpush1.msra.mxu0 0.0
      %4880 = vmatprep.subr.mxu0 0.0
      %4881 = vmatpush1.msra.mxu0 0.0
      %4882 = vmatprep.mubr.f32.mxu0 0.0
      %4883 = vmatmul.mubr.f32.gmra.mrb[0].mxu0 %v4773
      %v4884 = vpop.f32.mrb[0].mxu0
      %v4885 = vadd.f32 %v4811, %v4884
      %v4886 = vpop.f32.mrb[0].mxu0
      %v4887 = vadd.f32 %v4815, %v4886
      %4888 = vdwg.mxu0
      %v4889 = vtanh.pop %v4885
      %v4890 = vtanh.pop %v4887
      %4891 = vst [vmem:[#allocation9] sm:$0xf] %v4889
      %4892 = vst [vmem:[#allocation11] sm:$0xf] %v4890
    $region37: #{lang_vision_encoder_forward.1} parent=1 // pred_fallthru
      _
    // Predicated region
    $region38: #{lang_vision_encoder_forward.1} parent=1 // pred_check
      _
    $region39: #{lang_vision_encoder_forward.1} parent=1 // pred_check_branch
      %4894 = sbr.rel (0) target = $region41
    $region40: #{lang_vision_encoder_forward.1} parent=1 // pred_region
      _
    $region41: #{lang_vision_encoder_forward.1} parent=1 // pred_fallthru
      _
    // Predicated region
    $region42: #{lang_vision_encoder_forward.1} parent=1 // pred_check
      _
    $region43: #{lang_vision_encoder_forward.1} parent=1 // pred_check_branch
      %4896 = sbr.rel (0) target = $region45
    $region44: #{lang_vision_encoder_forward.1} parent=1 // pred_region
      %s4898 = ssub.s32 64, 64
      %4899 = vsyncadd [#allocation8], %s4898
      %s4901 = sshll.u32 [#allocation7], 4
      %s4902 = int_to_ptr.vmem [resolvable:$true] %s4901
      %4904 = dma.vmem_to_hbm [thread:$0]  %s4902, 64, %s8, [#allocation8]
    $region45: #{lang_vision_encoder_forward.1} parent=1 // pred_fallthru
      _
    // Predicated region
    $region46: #{lang_vision_encoder_forward.1} parent=1 // pred_check
      _
    $region47: #{lang_vision_encoder_forward.1} parent=1 // pred_check_branch
      %4906 = sbr.rel (0) target = $region49
    $region48: #{lang_vision_encoder_forward.1} parent=1 // pred_region
      %s4908 = ssub.s32 64, 64
      %4909 = vsyncadd [#allocation10], %s4908
      %s4911 = sshll.u32 [#allocation9], 4
      %s4912 = int_to_ptr.vmem [resolvable:$true] %s4911
      %4914 = dma.vmem_to_hbm [thread:$0]  %s4912, 64, %s9, [#allocation10]
    $region49: #{lang_vision_encoder_forward.1} parent=1 // pred_fallthru
      _
    // Predicated region
    $region50: #{lang_vision_encoder_forward.1} parent=1 // pred_check
      _
    $region51: #{lang_vision_encoder_forward.1} parent=1 // pred_check_branch
      %4916 = sbr.rel (0) target = $region53
    $region52: #{lang_vision_encoder_forward.1} parent=1 // pred_region
      %s4918 = ssub.s32 64, 64
      %4919 = vsyncadd [#allocation10], %s4918
      %s4921 = sshll.u32 [#allocation11], 4
      %s4922 = int_to_ptr.vmem [resolvable:$true] %s4921
      %4924 = dma.vmem_to_hbm [thread:$0]  %s4922, 64, %s10, [#allocation10]
    $region53: #{lang_vision_encoder_forward.1} parent=1 // pred_fallthru
      _
    // Predicated region
    $region54: #{lang_vision_encoder_forward.1} parent=1 // pred_check
      _
    $region55: #{lang_vision_encoder_forward.1} parent=1 // pred_check_branch
      %4926 = sbr.rel (0) target = $region57
    $region56: #{lang_vision_encoder_forward.1} parent=1 // pred_region
      _
    $region57: #{lang_vision_encoder_forward.1} parent=1 // pred_fallthru
      _
    // Predicated region
    $region58: #{lang_vision_encoder_forward.1} parent=1 // pred_check
      _
    $region59: #{lang_vision_encoder_forward.1} parent=1 // pred_check_branch
      %4928 = sbr.rel (0) target = $region61
    $region60: #{lang_vision_encoder_forward.1} parent=1 // pred_region
      %4929 = dma.done [#allocation8], 64
    $region61: #{lang_vision_encoder_forward.1} parent=1 // pred_fallthru
      _
    // Predicated region
    $region62: #{lang_vision_encoder_forward.1} parent=1 // pred_check
      _
    $region63: #{lang_vision_encoder_forward.1} parent=1 // pred_check_branch
      %4931 = sbr.rel (0) target = $region65
    $region64: #{lang_vision_encoder_forward.1} parent=1 // pred_region
      %4932 = dma.done [#allocation10], 64
    $region65: #{lang_vision_encoder_forward.1} parent=1 // pred_fallthru
      _
    // Predicated region
    $region66: #{lang_vision_encoder_forward.1} parent=1 // pred_check
      _
    $region67: #{lang_vision_encoder_forward.1} parent=1 // pred_check_branch
      %4934 = sbr.rel (0) target = $region69
    $region68: #{lang_vision_encoder_forward.1} parent=1 // pred_region
      %4935 = dma.done [#allocation10], 64
    $region69: #{lang_vision_encoder_forward.1} parent=1 // pred_fallthru
      _
    %4936 = vsyncpa [#allocation8], 1
    %4937 = vsyncpa [#allocation10], 1

</llo_original>
